<compile_context>
chip_gen: v5e
topology: v5e:2x2
jax: 0.10.0
libtpu: 0.0.40
codegen_flags: <defaults>
</compile_context>

<pallas_src>
import jax
import jax.numpy as jnp
from jax import lax
from jax.experimental import pallas as pl
from jax.experimental.pallas import tpu as pltpu


# ----------------------------------------------------------------------------
# Scaled-down VGG definition + deterministic parameter init
# ----------------------------------------------------------------------------
FEATURE_CFG = [8, "M", 16, "M", 32, 32, "M"]   # 'M' = 2x2 max pool
CLASSIFIER_HIDDEN = 128                         # stands in for 4096 (lane-dense)


def init_params(key, in_channels=3, spatial=16):
    params = {"features": [], "classifier": []}
    cin = in_channels
    s = spatial
    for cfg in FEATURE_CFG:
        if cfg == "M":
            params["features"].append("M")
            s //= 2
        else:
            cout = cfg
            key, kw, kb = jax.random.split(key, 3)
            scale = 1.0 / jnp.sqrt(3.0 * 3.0 * cin)
            w = jax.random.normal(kw, (3, 3, cin, cout), jnp.float32) * scale
            b = jax.random.normal(kb, (cout,), jnp.float32) * 0.01
            params["features"].append((w, b))
            cin = cout
    in_features = cin * s * s   # == model_vgg.classifier[6].in_features (scaled)
    dims = [in_features, CLASSIFIER_HIDDEN, CLASSIFIER_HIDDEN]
    for i in range(2):
        key, kw, kb = jax.random.split(key, 3)
        scale = 1.0 / jnp.sqrt(float(dims[i]))
        w = jax.random.normal(kw, (dims[i], dims[i + 1]), jnp.float32) * scale
        b = jax.random.normal(kb, (dims[i + 1],), jnp.float32) * 0.01
        params["classifier"].append((w, b))
    return params, in_features


# ----------------------------------------------------------------------------
# In-kernel building blocks (all operate on VMEM-resident values / scratch)
# ----------------------------------------------------------------------------
def _conv3x3_relu(act, pad_ref, w_ref, b_ref, h, w):
    """3x3 conv (padding=1, stride 1) + bias + ReLU on a flattened image.

    act    : (h*w, cin) f32 value, row p = y*w + x.
    pad_ref: (h*w + 2*w + 2, cin) f32 VMEM scratch (one zero halo row top and
             bottom, flattened).
    w_ref  : (9, cin, cout) ref; tap t = ky*3 + kx (HWIO order).
    b_ref  : (1, cout) ref.
    returns: (h*w, cout) f32 value.
    """
    s = h * w
    cin = act.shape[1]
    cout = w_ref.shape[2]

    # Zero the halo rows, then place the image at flat offset w+1 so that tap
    # (ky, kx) is simply the contiguous slice starting at ky*w + kx.  Vertical
    # out-of-bounds reads land in the zero halo; horizontal ones are masked.
    zeros_halo = jnp.zeros((w + 1, cin), jnp.float32)
    pad_ref[pl.ds(0, w + 1), :] = zeros_halo
    pad_ref[pl.ds(s + w + 1, w + 1), :] = zeros_halo
    pad_ref[pl.ds(w + 1, s), :] = act

    # x-coordinate of every flattened row (for masking the left/right border).
    col = lax.broadcasted_iota(jnp.int32, (s, 1), 0) % w

    acc = jnp.zeros((s, cout), jnp.float32)
    for ky in range(3):
        for kx in range(3):
            tap = pad_ref[pl.ds(ky * w + kx, s), :]
            if kx == 0:                        # reads x-1: invalid at x == 0
                tap = jnp.where(col >= 1, tap, 0.0)
            elif kx == 2:                      # reads x+1: invalid at x == w-1
                tap = jnp.where(col <= w - 2, tap, 0.0)
            acc = acc + jnp.dot(tap, w_ref[ky * 3 + kx],
                                preferred_element_type=jnp.float32)
    # Bias broadcast once on the f32 accumulator, then ReLU (f32 epilogue).
    return jnp.maximum(acc + b_ref[...], 0.0)


def _maxpool2x2(act, buf_ref, h, w):
    """2x2 / stride-2 max pool on a flattened (h*w, c) activation.

    act    : (h*w, c) f32 value, row p = y*w + x.
    buf_ref: (h*w, c) f32 VMEM scratch (needed for strided sublane reads).
    returns: (h*w//4, c) f32 value, row q = yo*(w//2) + xo.
    """
    s = h * w
    ho, wo = h // 2, w // 2
    buf_ref[...] = act
    # Horizontal pair max: even-x rows vs odd-x rows (two strided reads; with
    # w even, flat index parity == x parity).  Row r of hmax = y*wo + xo.
    even_x = buf_ref[pl.ds(0, s // 2, stride=2), :]
    odd_x = buf_ref[pl.ds(1, s // 2, stride=2), :]
    hmax = jnp.maximum(even_x, odd_x)                      # (h*wo, c)
    # Vertical pair max: y = 2*yo block vs y = 2*yo+1 block (static slices).
    rows = []
    for yo in range(ho):
        top = hmax[2 * yo * wo:(2 * yo + 1) * wo, :]
        bot = hmax[(2 * yo + 1) * wo:(2 * yo + 2) * wo, :]
        rows.append(jnp.maximum(top, bot))
    return jnp.concatenate(rows, axis=0)                   # (ho*wo, c)


def _classifier(feat, w1p_ref, b1_ref, w2_ref, b2_ref):
    """Linear -> ReLU -> Dropout(id) -> Linear -> ReLU -> Dropout(id).

    feat   : (s3, c3) f32 value (flattened final feature map, spatial-major).
    w1p_ref: (s3, c3, f) ref with w1p[p, c, :] == W1[c*s3 + p, :], i.e. the
             first Linear's weight regrouped to absorb PyTorch's view(N,-1)
             (C, H, W) flatten order.
    """
    s3 = feat.shape[0]
    f = w1p_ref.shape[2]
    y = jnp.zeros((1, f), jnp.float32)
    for p in range(s3):                                    # s3 is tiny (4)
        y = y + jnp.dot(feat[p:p + 1, :], w1p_ref[p],
                        preferred_element_type=jnp.float32)
    y = jnp.maximum(y + b1_ref[...], 0.0)
    # TODO(synk): nn.Dropout is identity (eval mode); training-mode random
    # dropout is not reproduced.
    y = jnp.dot(y, w2_ref[...], preferred_element_type=jnp.float32) + b2_ref[...]
    return jnp.maximum(y, 0.0)


def _make_fused_kernel(plan, n_conv, n_pool):
    """plan: tuple of ("conv" | "pool", spatial_size) in execution order."""

    def kernel(*refs):
        x_ref = refs[0]
        conv_refs = refs[1:1 + 2 * n_conv]
        base = 1 + 2 * n_conv
        wc1_ref, bc1_ref, wc2_ref, bc2_ref = refs[base:base + 4]
        o_ref = refs[base + 4]
        scratch = refs[base + 5:]
        pad_refs = scratch[:n_conv]
        pool_refs = scratch[n_conv:n_conv + n_pool]

        act = x_ref[0]                                     # (H*W, Cin)
        ci = 0
        pi = 0
        for kind, sp in plan:
            if kind == "conv":
                act = _conv3x3_relu(act, pad_refs[ci],
                                    conv_refs[2 * ci], conv_refs[2 * ci + 1],
                                    sp, sp)
                ci += 1
            else:                                          # "pool"
                act = _maxpool2x2(act, pool_refs[pi], sp, sp)
                pi += 1
        o_ref[0] = _classifier(act, wc1_ref, bc1_ref,
                               wc2_ref, bc2_ref).astype(o_ref.dtype)

    return kernel


# ----------------------------------------------------------------------------
# Host wrapper: ONE fused pallas_call for the whole forward pass
# ----------------------------------------------------------------------------
def vgg_base_forward(params, x_nchw):
    """Matches VGGBase.forward: features -> view(N, -1) -> classifier[0:6]."""
    n, cin, h, w0 = x_nchw.shape
    assert h == w0 and h % 2 == 0
    # NCHW -> flattened spatial-major (N, H*W, Cin): spatial -> sublanes,
    # channels -> lanes inside the kernel.
    x = jnp.transpose(x_nchw, (0, 2, 3, 1)).reshape(n, h * w0, cin)

    plan = []
    weight_args = []
    weight_specs = []
    pad_shapes = []
    pool_shapes = []
    s, c = h, cin
    for layer in params["features"]:
        if isinstance(layer, str):                         # "M"
            plan.append(("pool", s))
            pool_shapes.append(pltpu.VMEM((s * s, c), jnp.float32))
            s //= 2
        else:
            w_hwio, b = layer
            ci_l, co_l = w_hwio.shape[2], w_hwio.shape[3]
            plan.append(("conv", s))
            weight_args += [w_hwio.reshape(9, ci_l, co_l), b.reshape(1, co_l)]
            weight_specs += [
                pl.BlockSpec((9, ci_l, co_l), lambda i: (0, 0, 0)),
                pl.BlockSpec((1, co_l), lambda i: (0, 0)),
            ]
            # flattened image + one halo row top & bottom (+2 for corner taps)
            pad_shapes.append(
                pltpu.VMEM((s * s + 2 * s + 2, ci_l), jnp.float32))
            c = co_l
    n_conv = len(pad_shapes)
    n_pool = len(pool_shapes)

    (w1, b1), (w2, b2) = params["classifier"]
    s3 = s                         # final spatial size after the feature stack
    sp3 = s3 * s3
    c3 = c
    f1 = w1.shape[1]
    f_out = w2.shape[1]
    # Regroup W1 rows so w1p[p, c, :] == W1[c*sp3 + p, :]  (PyTorch view(N,-1)
    # flattens the (C, H, W) feature map channel-major).
    w1p = w1.reshape(c3, sp3, f1).transpose(1, 0, 2)
    cls_args = [w1p, b1.reshape(1, f1), w2, b2.reshape(1, f_out)]
    cls_specs = [
        pl.BlockSpec((sp3, c3, f1), lambda i: (0, 0, 0)),
        pl.BlockSpec((1, f1), lambda i: (0, 0)),
        pl.BlockSpec((w2.shape[0], f_out), lambda i: (0, 0)),
        pl.BlockSpec((1, f_out), lambda i: (0, 0)),
    ]

    out = pl.pallas_call(
        _make_fused_kernel(tuple(plan), n_conv, n_pool),
        out_shape=jax.ShapeDtypeStruct((n, 1, f_out), jnp.float32),
        grid=(n,),                                         # batch on the grid
        in_specs=[pl.BlockSpec((1, h * w0, cin), lambda i: (i, 0, 0))]
        + weight_specs + cls_specs,
        out_specs=pl.BlockSpec((1, 1, f_out), lambda i: (i, 0, 0)),
        scratch_shapes=pad_shapes + pool_shapes,
        compiler_params=pltpu.CompilerParams(
            dimension_semantics=("parallel",)),            # v7x: 2 TCs
    )(x, *weight_args, *cls_args)
    return out.reshape(n, f_out)


# ----------------------------------------------------------------------------
# Pure-JAX reference (correctness check only)
# ----------------------------------------------------------------------------
def reference_forward(params, x_nchw):
    x = jnp.transpose(x_nchw, (0, 2, 3, 1))                # NHWC
    for layer in params["features"]:
        if isinstance(layer, str):
            x = lax.reduce_window(x, -jnp.inf, lax.max,
                                  (1, 2, 2, 1), (1, 2, 2, 1), "VALID")
        else:
            w, b = layer
            x = lax.conv_general_dilated(
                x, w, window_strides=(1, 1), padding=((1, 1), (1, 1)),
                dimension_numbers=("NHWC", "HWIO", "NHWC"),
                precision=lax.Precision.HIGHEST)
            x = jnp.maximum(x + b, 0.0)
    n = x.shape[0]
    x = jnp.transpose(x, (0, 3, 1, 2)).reshape(n, -1)      # PyTorch view(N,-1)
    (w1, b1), (w2, b2) = params["classifier"]
    x = jnp.maximum(jnp.dot(x, w1, precision=lax.Precision.HIGHEST) + b1, 0.0)
    x = jnp.maximum(jnp.dot(x, w2, precision=lax.Precision.HIGHEST) + b2, 0.0)
    return x


# ----------------------------------------------------------------------------
if __name__ == "__main__":
    key = jax.random.PRNGKey(0)
    kx, kp = jax.random.split(key)
    # PyTorch-convention NCHW input at small shapes.
    x = jax.random.normal(kx, (2, 3, 16, 16), jnp.float32)
    params, in_features = init_params(kp, in_channels=3, spatial=16)

    out = jax.block_until_ready(vgg_base_forward(params, x))
    ref = jax.block_until_ready(reference_forward(params, x))

    assert out.shape == (2, CLASSIFIER_HIDDEN), out.shape
    assert out.dtype == jnp.float32
    assert bool(jnp.all(jnp.isfinite(out)))
    max_err = float(jnp.max(jnp.abs(out - ref)))
    assert max_err < 2e-2, f"mismatch vs pure-JAX reference: {max_err}"
    print("KERNEL_OK")
</pallas_src>

<mosaic_0001>
module attributes {stable_mosaic.version = 11 : i64} {
  func.func @kernel(%arg0: i32, %arg1: memref<1x256x3xf32, #tpu.memory_space<vmem>>, %arg2: memref<9x3x8xf32, #tpu.memory_space<vmem>>, %arg3: memref<1x8xf32, #tpu.memory_space<vmem>>, %arg4: memref<9x8x16xf32, #tpu.memory_space<vmem>>, %arg5: memref<1x16xf32, #tpu.memory_space<vmem>>, %arg6: memref<9x16x32xf32, #tpu.memory_space<vmem>>, %arg7: memref<1x32xf32, #tpu.memory_space<vmem>>, %arg8: memref<9x32x32xf32, #tpu.memory_space<vmem>>, %arg9: memref<1x32xf32, #tpu.memory_space<vmem>>, %arg10: memref<4x32x128xf32, #tpu.memory_space<vmem>>, %arg11: memref<1x128xf32, #tpu.memory_space<vmem>>, %arg12: memref<128x128xf32, #tpu.memory_space<vmem>>, %arg13: memref<1x128xf32, #tpu.memory_space<vmem>>, %arg14: memref<1x1x128xf32, #tpu.memory_space<vmem>>, %arg15: memref<290x3xf32, #tpu.memory_space<vmem>>, %arg16: memref<82x8xf32, #tpu.memory_space<vmem>>, %arg17: memref<26x16xf32, #tpu.memory_space<vmem>>, %arg18: memref<26x32xf32, #tpu.memory_space<vmem>>, %arg19: memref<256x8xf32, #tpu.memory_space<vmem>>, %arg20: memref<64x16xf32, #tpu.memory_space<vmem>>, %arg21: memref<16x32xf32, #tpu.memory_space<vmem>>) attributes {dimension_semantics = [#tpu.dimension_semantics<parallel>], iteration_bounds = array<i64: 2>, scalar_prefetch = 0 : i64, scratch_operands = 7 : i64, tpu.core_type = #tpu.core_type<tc>, window_params = [{transform_indices = @transform_0, window_bounds = array<i64: 1, 256, 3>}, {pipeline_mode = #tpu.pipeline_mode<synchronous>, transform_indices = @transform_1, window_bounds = array<i64: 9, 3, 8>}, {pipeline_mode = #tpu.pipeline_mode<synchronous>, transform_indices = @transform_2, window_bounds = array<i64: 1, 8>}, {pipeline_mode = #tpu.pipeline_mode<synchronous>, transform_indices = @transform_3, window_bounds = array<i64: 9, 8, 16>}, {pipeline_mode = #tpu.pipeline_mode<synchronous>, transform_indices = @transform_4, window_bounds = array<i64: 1, 16>}, {pipeline_mode = #tpu.pipeline_mode<synchronous>, transform_indices = @transform_5, window_bounds = array<i64: 9, 16, 32>}, {pipeline_mode = #tpu.pipeline_mode<synchronous>, transform_indices = @transform_6, window_bounds = array<i64: 1, 32>}, {pipeline_mode = #tpu.pipeline_mode<synchronous>, transform_indices = @transform_7, window_bounds = array<i64: 9, 32, 32>}, {pipeline_mode = #tpu.pipeline_mode<synchronous>, transform_indices = @transform_8, window_bounds = array<i64: 1, 32>}, {pipeline_mode = #tpu.pipeline_mode<synchronous>, transform_indices = @transform_9, window_bounds = array<i64: 4, 32, 128>}, {pipeline_mode = #tpu.pipeline_mode<synchronous>, transform_indices = @transform_10, window_bounds = array<i64: 1, 128>}, {pipeline_mode = #tpu.pipeline_mode<synchronous>, transform_indices = @transform_11, window_bounds = array<i64: 128, 128>}, {pipeline_mode = #tpu.pipeline_mode<synchronous>, transform_indices = @transform_12, window_bounds = array<i64: 1, 128>}, {transform_indices = @transform_13, window_bounds = array<i64: 1, 1, 128>}]} {
    %c0 = arith.constant 0 : index
    %c0_0 = arith.constant 0 : index
    %c0_1 = arith.constant 0 : index
    %0 = vector.load %arg1[%c0, %c0_0, %c0_1] : memref<1x256x3xf32, #tpu.memory_space<vmem>>, vector<1x256x3xf32>
    %1 = vector.shape_cast %0 : vector<1x256x3xf32> to vector<256x3xf32>
    %cst = arith.constant 0.000000e+00 : f32
    %2 = vector.broadcast %cst : f32 to vector<17x3xf32>
    %c0_2 = arith.constant 0 : index
    %c0_3 = arith.constant 0 : index
    %3 = vector.load %arg15[%c0_2, %c0_3] : memref<290x3xf32, #tpu.memory_space<vmem>>, vector<17x3xf32>
    tpu.vector_store %arg15[%c0_2, %c0_3], %2 {strides = array<i32>} : memref<290x3xf32, #tpu.memory_space<vmem>>, vector<17x3xf32>,
    %c273 = arith.constant 273 : index
    %c0_4 = arith.constant 0 : index
    %4 = vector.load %arg15[%c273, %c0_4] : memref<290x3xf32, #tpu.memory_space<vmem>>, vector<17x3xf32>
    tpu.vector_store %arg15[%c273, %c0_4], %2 {strides = array<i32>} : memref<290x3xf32, #tpu.memory_space<vmem>>, vector<17x3xf32>,
    %c17 = arith.constant 17 : index
    %c0_5 = arith.constant 0 : index
    %5 = vector.load %arg15[%c17, %c0_5] : memref<290x3xf32, #tpu.memory_space<vmem>>, vector<256x3xf32>
    tpu.vector_store %arg15[%c17, %c0_5], %1 {strides = array<i32>} : memref<290x3xf32, #tpu.memory_space<vmem>>, vector<256x3xf32>,
    %6 = tpu.iota {dimensions = array<i32: 0>} : vector<256x1xi32>
    %c16_i32 = arith.constant 16 : i32
    %c0_i32 = arith.constant 0 : i32
    %7 = arith.cmpi eq, %c16_i32, %c0_i32 : i32
    %c1_i32 = arith.constant 1 : i32
    %8 = arith.select %7, %c1_i32, %c16_i32 : i32
    %9 = vector.broadcast %8 : i32 to vector<256x1xi32>
    %10 = arith.remsi %6, %9 : vector<256x1xi32>
    %c0_i32_6 = arith.constant 0 : i32
    %11 = vector.broadcast %c0_i32_6 : i32 to vector<256x1xi32>
    %12 = arith.cmpi ne, %10, %11 : vector<256x1xi32>
    %c0_i32_7 = arith.constant 0 : i32
    %13 = vector.broadcast %c0_i32_7 : i32 to vector<256x1xi32>
    %14 = arith.cmpi slt, %10, %13 : vector<256x1xi32>
    %c0_i32_8 = arith.constant 0 : i32
    %15 = arith.cmpi slt, %8, %c0_i32_8 : i32
    %16 = vector.broadcast %15 : i1 to vector<256x1xi1>
    %17 = vector.broadcast %16 : vector<256x1xi1> to vector<256x1xi1>
    %18 = arith.xori %14, %17 : vector<256x1xi1>
    %19 = arith.andi %18, %12 : vector<256x1xi1>
    %20 = vector.broadcast %8 : i32 to vector<256x1xi32>
    %21 = arith.addi %10, %20 : vector<256x1xi32>
    %22 = arith.select %19, %21, %10 : vector<256x1xi1>, vector<256x1xi32>
    %cst_9 = arith.constant 0.000000e+00 : f32
    %23 = vector.broadcast %cst_9 : f32 to vector<256x8xf32>
    %c0_10 = arith.constant 0 : index
    %c0_11 = arith.constant 0 : index
    %24 = vector.load %arg15[%c0_10, %c0_11] : memref<290x3xf32, #tpu.memory_space<vmem>>, vector<256x3xf32>
    %c1_i32_12 = arith.constant 1 : i32
    %25 = vector.broadcast %c1_i32_12 : i32 to vector<256x1xi32>
    %26 = arith.cmpi sge, %22, %25 : vector<256x1xi32>
    %cst_13 = arith.constant 0.000000e+00 : f32
    %27 = vector.shape_cast %26 : vector<256x1xi1> to vector<256x1xi1>
    %28 = vector.broadcast %27 : vector<256x1xi1> to vector<256x3xi1>
    %29 = vector.broadcast %cst_13 : f32 to vector<256x3xf32>
    %30 = arith.select %28, %24, %29 : vector<256x3xi1>, vector<256x3xf32>
    %c0_14 = arith.constant 0 : index
    %c0_15 = arith.constant 0 : index
    %c0_16 = arith.constant 0 : index
    %31 = vector.load %arg2[%c0_14, %c0_15, %c0_16] : memref<9x3x8xf32, #tpu.memory_space<vmem>>, vector<1x3x8xf32>
    %32 = vector.shape_cast %31 : vector<1x3x8xf32> to vector<3x8xf32>
    %cst_17 = arith.constant dense<0.000000e+00> : vector<256x8xf32>
    %33 = tpu.matmul %30, %32, %cst_17 {dimension_numbers = #tpu.dot_dimension_numbers<[1], [0], [0], [1], [0, 0, 1, 1], [], []>} : vector<256x3xf32>, vector<3x8xf32>, vector<256x8xf32> -> vector<256x8xf32>
    %34 = arith.addf %23, %33 : vector<256x8xf32>
    %c1 = arith.constant 1 : index
    %c0_18 = arith.constant 0 : index
    %35 = vector.load %arg15[%c1, %c0_18] : memref<290x3xf32, #tpu.memory_space<vmem>>, vector<256x3xf32>
    %c1_19 = arith.constant 1 : index
    %c0_20 = arith.constant 0 : index
    %c0_21 = arith.constant 0 : index
    %36 = vector.load %arg2[%c1_19, %c0_20, %c0_21] : memref<9x3x8xf32, #tpu.memory_space<vmem>>, vector<1x3x8xf32>
    %37 = vector.shape_cast %36 : vector<1x3x8xf32> to vector<3x8xf32>
    %cst_22 = arith.constant dense<0.000000e+00> : vector<256x8xf32>
    %38 = tpu.matmul %35, %37, %cst_22 {dimension_numbers = #tpu.dot_dimension_numbers<[1], [0], [0], [1], [0, 0, 1, 1], [], []>} : vector<256x3xf32>, vector<3x8xf32>, vector<256x8xf32> -> vector<256x8xf32>
    %39 = arith.addf %34, %38 : vector<256x8xf32>
    %c2 = arith.constant 2 : index
    %c0_23 = arith.constant 0 : index
    %40 = vector.load %arg15[%c2, %c0_23] : memref<290x3xf32, #tpu.memory_space<vmem>>, vector<256x3xf32>
    %c14_i32 = arith.constant 14 : i32
    %41 = vector.broadcast %c14_i32 : i32 to vector<256x1xi32>
    %42 = arith.cmpi sle, %22, %41 : vector<256x1xi32>
    %cst_24 = arith.constant 0.000000e+00 : f32
    %43 = vector.shape_cast %42 : vector<256x1xi1> to vector<256x1xi1>
    %44 = vector.broadcast %43 : vector<256x1xi1> to vector<256x3xi1>
    %45 = vector.broadcast %cst_24 : f32 to vector<256x3xf32>
    %46 = arith.select %44, %40, %45 : vector<256x3xi1>, vector<256x3xf32>
    %c2_25 = arith.constant 2 : index
    %c0_26 = arith.constant 0 : index
    %c0_27 = arith.constant 0 : index
    %47 = vector.load %arg2[%c2_25, %c0_26, %c0_27] : memref<9x3x8xf32, #tpu.memory_space<vmem>>, vector<1x3x8xf32>
    %48 = vector.shape_cast %47 : vector<1x3x8xf32> to vector<3x8xf32>
    %cst_28 = arith.constant dense<0.000000e+00> : vector<256x8xf32>
    %49 = tpu.matmul %46, %48, %cst_28 {dimension_numbers = #tpu.dot_dimension_numbers<[1], [0], [0], [1], [0, 0, 1, 1], [], []>} : vector<256x3xf32>, vector<3x8xf32>, vector<256x8xf32> -> vector<256x8xf32>
    %50 = arith.addf %39, %49 : vector<256x8xf32>
    %c16 = arith.constant 16 : index
    %c0_29 = arith.constant 0 : index
    %51 = vector.load %arg15[%c16, %c0_29] : memref<290x3xf32, #tpu.memory_space<vmem>>, vector<256x3xf32>
    %c1_i32_30 = arith.constant 1 : i32
    %52 = vector.broadcast %c1_i32_30 : i32 to vector<256x1xi32>
    %53 = arith.cmpi sge, %22, %52 : vector<256x1xi32>
    %cst_31 = arith.constant 0.000000e+00 : f32
    %54 = vector.shape_cast %53 : vector<256x1xi1> to vector<256x1xi1>
    %55 = vector.broadcast %54 : vector<256x1xi1> to vector<256x3xi1>
    %56 = vector.broadcast %cst_31 : f32 to vector<256x3xf32>
    %57 = arith.select %55, %51, %56 : vector<256x3xi1>, vector<256x3xf32>
    %c3 = arith.constant 3 : index
    %c0_32 = arith.constant 0 : index
    %c0_33 = arith.constant 0 : index
    %58 = vector.load %arg2[%c3, %c0_32, %c0_33] : memref<9x3x8xf32, #tpu.memory_space<vmem>>, vector<1x3x8xf32>
    %59 = vector.shape_cast %58 : vector<1x3x8xf32> to vector<3x8xf32>
    %cst_34 = arith.constant dense<0.000000e+00> : vector<256x8xf32>
    %60 = tpu.matmul %57, %59, %cst_34 {dimension_numbers = #tpu.dot_dimension_numbers<[1], [0], [0], [1], [0, 0, 1, 1], [], []>} : vector<256x3xf32>, vector<3x8xf32>, vector<256x8xf32> -> vector<256x8xf32>
    %61 = arith.addf %50, %60 : vector<256x8xf32>
    %c17_35 = arith.constant 17 : index
    %c0_36 = arith.constant 0 : index
    %62 = vector.load %arg15[%c17_35, %c0_36] : memref<290x3xf32, #tpu.memory_space<vmem>>, vector<256x3xf32>
    %c4 = arith.constant 4 : index
    %c0_37 = arith.constant 0 : index
    %c0_38 = arith.constant 0 : index
    %63 = vector.load %arg2[%c4, %c0_37, %c0_38] : memref<9x3x8xf32, #tpu.memory_space<vmem>>, vector<1x3x8xf32>
    %64 = vector.shape_cast %63 : vector<1x3x8xf32> to vector<3x8xf32>
    %cst_39 = arith.constant dense<0.000000e+00> : vector<256x8xf32>
    %65 = tpu.matmul %62, %64, %cst_39 {dimension_numbers = #tpu.dot_dimension_numbers<[1], [0], [0], [1], [0, 0, 1, 1], [], []>} : vector<256x3xf32>, vector<3x8xf32>, vector<256x8xf32> -> vector<256x8xf32>
    %66 = arith.addf %61, %65 : vector<256x8xf32>
    %c18 = arith.constant 18 : index
    %c0_40 = arith.constant 0 : index
    %67 = vector.load %arg15[%c18, %c0_40] : memref<290x3xf32, #tpu.memory_space<vmem>>, vector<256x3xf32>
    %c14_i32_41 = arith.constant 14 : i32
    %68 = vector.broadcast %c14_i32_41 : i32 to vector<256x1xi32>
    %69 = arith.cmpi sle, %22, %68 : vector<256x1xi32>
    %cst_42 = arith.constant 0.000000e+00 : f32
    %70 = vector.shape_cast %69 : vector<256x1xi1> to vector<256x1xi1>
    %71 = vector.broadcast %70 : vector<256x1xi1> to vector<256x3xi1>
    %72 = vector.broadcast %cst_42 : f32 to vector<256x3xf32>
    %73 = arith.select %71, %67, %72 : vector<256x3xi1>, vector<256x3xf32>
    %c5 = arith.constant 5 : index
    %c0_43 = arith.constant 0 : index
    %c0_44 = arith.constant 0 : index
    %74 = vector.load %arg2[%c5, %c0_43, %c0_44] : memref<9x3x8xf32, #tpu.memory_space<vmem>>, vector<1x3x8xf32>
    %75 = vector.shape_cast %74 : vector<1x3x8xf32> to vector<3x8xf32>
    %cst_45 = arith.constant dense<0.000000e+00> : vector<256x8xf32>
    %76 = tpu.matmul %73, %75, %cst_45 {dimension_numbers = #tpu.dot_dimension_numbers<[1], [0], [0], [1], [0, 0, 1, 1], [], []>} : vector<256x3xf32>, vector<3x8xf32>, vector<256x8xf32> -> vector<256x8xf32>
    %77 = arith.addf %66, %76 : vector<256x8xf32>
    %c32 = arith.constant 32 : index
    %c0_46 = arith.constant 0 : index
    %78 = vector.load %arg15[%c32, %c0_46] : memref<290x3xf32, #tpu.memory_space<vmem>>, vector<256x3xf32>
    %c1_i32_47 = arith.constant 1 : i32
    %79 = vector.broadcast %c1_i32_47 : i32 to vector<256x1xi32>
    %80 = arith.cmpi sge, %22, %79 : vector<256x1xi32>
    %cst_48 = arith.constant 0.000000e+00 : f32
    %81 = vector.shape_cast %80 : vector<256x1xi1> to vector<256x1xi1>
    %82 = vector.broadcast %81 : vector<256x1xi1> to vector<256x3xi1>
    %83 = vector.broadcast %cst_48 : f32 to vector<256x3xf32>
    %84 = arith.select %82, %78, %83 : vector<256x3xi1>, vector<256x3xf32>
    %c6 = arith.constant 6 : index
    %c0_49 = arith.constant 0 : index
    %c0_50 = arith.constant 0 : index
    %85 = vector.load %arg2[%c6, %c0_49, %c0_50] : memref<9x3x8xf32, #tpu.memory_space<vmem>>, vector<1x3x8xf32>
    %86 = vector.shape_cast %85 : vector<1x3x8xf32> to vector<3x8xf32>
    %cst_51 = arith.constant dense<0.000000e+00> : vector<256x8xf32>
    %87 = tpu.matmul %84, %86, %cst_51 {dimension_numbers = #tpu.dot_dimension_numbers<[1], [0], [0], [1], [0, 0, 1, 1], [], []>} : vector<256x3xf32>, vector<3x8xf32>, vector<256x8xf32> -> vector<256x8xf32>
    %88 = arith.addf %77, %87 : vector<256x8xf32>
    %c33 = arith.constant 33 : index
    %c0_52 = arith.constant 0 : index
    %89 = vector.load %arg15[%c33, %c0_52] : memref<290x3xf32, #tpu.memory_space<vmem>>, vector<256x3xf32>
    %c7 = arith.constant 7 : index
    %c0_53 = arith.constant 0 : index
    %c0_54 = arith.constant 0 : index
    %90 = vector.load %arg2[%c7, %c0_53, %c0_54] : memref<9x3x8xf32, #tpu.memory_space<vmem>>, vector<1x3x8xf32>
    %91 = vector.shape_cast %90 : vector<1x3x8xf32> to vector<3x8xf32>
    %cst_55 = arith.constant dense<0.000000e+00> : vector<256x8xf32>
    %92 = tpu.matmul %89, %91, %cst_55 {dimension_numbers = #tpu.dot_dimension_numbers<[1], [0], [0], [1], [0, 0, 1, 1], [], []>} : vector<256x3xf32>, vector<3x8xf32>, vector<256x8xf32> -> vector<256x8xf32>
    %93 = arith.addf %88, %92 : vector<256x8xf32>
    %c34 = arith.constant 34 : index
    %c0_56 = arith.constant 0 : index
    %94 = vector.load %arg15[%c34, %c0_56] : memref<290x3xf32, #tpu.memory_space<vmem>>, vector<256x3xf32>
    %c14_i32_57 = arith.constant 14 : i32
    %95 = vector.broadcast %c14_i32_57 : i32 to vector<256x1xi32>
    %96 = arith.cmpi sle, %22, %95 : vector<256x1xi32>
    %cst_58 = arith.constant 0.000000e+00 : f32
    %97 = vector.shape_cast %96 : vector<256x1xi1> to vector<256x1xi1>
    %98 = vector.broadcast %97 : vector<256x1xi1> to vector<256x3xi1>
    %99 = vector.broadcast %cst_58 : f32 to vector<256x3xf32>
    %100 = arith.select %98, %94, %99 : vector<256x3xi1>, vector<256x3xf32>
    %c8 = arith.constant 8 : index
    %c0_59 = arith.constant 0 : index
    %c0_60 = arith.constant 0 : index
    %101 = vector.load %arg2[%c8, %c0_59, %c0_60] : memref<9x3x8xf32, #tpu.memory_space<vmem>>, vector<1x3x8xf32>
    %102 = vector.shape_cast %101 : vector<1x3x8xf32> to vector<3x8xf32>
    %cst_61 = arith.constant dense<0.000000e+00> : vector<256x8xf32>
    %103 = tpu.matmul %100, %102, %cst_61 {dimension_numbers = #tpu.dot_dimension_numbers<[1], [0], [0], [1], [0, 0, 1, 1], [], []>} : vector<256x3xf32>, vector<3x8xf32>, vector<256x8xf32> -> vector<256x8xf32>
    %104 = arith.addf %93, %103 : vector<256x8xf32>
    %c0_62 = arith.constant 0 : index
    %c0_63 = arith.constant 0 : index
    %105 = vector.load %arg3[%c0_62, %c0_63] : memref<1x8xf32, #tpu.memory_space<vmem>>, vector<1x8xf32>
    %106 = vector.broadcast %105 : vector<1x8xf32> to vector<256x8xf32>
    %107 = arith.addf %104, %106 : vector<256x8xf32>
    %cst_64 = arith.constant 0.000000e+00 : f32
    %108 = vector.broadcast %cst_64 : f32 to vector<256x8xf32>
    %109 = arith.maximumf %107, %108 : vector<256x8xf32>
    %c0_65 = arith.constant 0 : index
    %c0_66 = arith.constant 0 : index
    %110 = vector.load %arg19[%c0_65, %c0_66] : memref<256x8xf32, #tpu.memory_space<vmem>>, vector<256x8xf32>
    tpu.vector_store %arg19[%c0_65, %c0_66], %109 {strides = array<i32>} : memref<256x8xf32, #tpu.memory_space<vmem>>, vector<256x8xf32>,
    %c0_67 = arith.constant 0 : index
    %c0_68 = arith.constant 0 : index
    %111 = tpu.strided_load %arg19[%c0_67, %c0_68] {strides = array<i32: 2, 1>} : memref<256x8xf32, #tpu.memory_space<vmem>>, vector<128x8xf32>
    %c1_69 = arith.constant 1 : index
    %c0_70 = arith.constant 0 : index
    %112 = tpu.strided_load %arg19[%c1_69, %c0_70] {strides = array<i32: 2, 1>} : memref<256x8xf32, #tpu.memory_space<vmem>>, vector<128x8xf32>
    %113 = arith.maximumf %111, %112 : vector<128x8xf32>
    %114 = vector.extract_strided_slice %113 {offsets = [0, 0], sizes = [8, 8], strides = [1, 1]} : vector<128x8xf32> to vector<8x8xf32>
    %115 = vector.extract_strided_slice %113 {offsets = [8, 0], sizes = [8, 8], strides = [1, 1]} : vector<128x8xf32> to vector<8x8xf32>
    %116 = arith.maximumf %114, %115 : vector<8x8xf32>
    %117 = vector.extract_strided_slice %113 {offsets = [16, 0], sizes = [8, 8], strides = [1, 1]} : vector<128x8xf32> to vector<8x8xf32>
    %118 = vector.extract_strided_slice %113 {offsets = [24, 0], sizes = [8, 8], strides = [1, 1]} : vector<128x8xf32> to vector<8x8xf32>
    %119 = arith.maximumf %117, %118 : vector<8x8xf32>
    %120 = vector.extract_strided_slice %113 {offsets = [32, 0], sizes = [8, 8], strides = [1, 1]} : vector<128x8xf32> to vector<8x8xf32>
    %121 = vector.extract_strided_slice %113 {offsets = [40, 0], sizes = [8, 8], strides = [1, 1]} : vector<128x8xf32> to vector<8x8xf32>
    %122 = arith.maximumf %120, %121 : vector<8x8xf32>
    %123 = vector.extract_strided_slice %113 {offsets = [48, 0], sizes = [8, 8], strides = [1, 1]} : vector<128x8xf32> to vector<8x8xf32>
    %124 = vector.extract_strided_slice %113 {offsets = [56, 0], sizes = [8, 8], strides = [1, 1]} : vector<128x8xf32> to vector<8x8xf32>
    %125 = arith.maximumf %123, %124 : vector<8x8xf32>
    %126 = vector.extract_strided_slice %113 {offsets = [64, 0], sizes = [8, 8], strides = [1, 1]} : vector<128x8xf32> to vector<8x8xf32>
    %127 = vector.extract_strided_slice %113 {offsets = [72, 0], sizes = [8, 8], strides = [1, 1]} : vector<128x8xf32> to vector<8x8xf32>
    %128 = arith.maximumf %126, %127 : vector<8x8xf32>
    %129 = vector.extract_strided_slice %113 {offsets = [80, 0], sizes = [8, 8], strides = [1, 1]} : vector<128x8xf32> to vector<8x8xf32>
    %130 = vector.extract_strided_slice %113 {offsets = [88, 0], sizes = [8, 8], strides = [1, 1]} : vector<128x8xf32> to vector<8x8xf32>
    %131 = arith.maximumf %129, %130 : vector<8x8xf32>
    %132 = vector.extract_strided_slice %113 {offsets = [96, 0], sizes = [8, 8], strides = [1, 1]} : vector<128x8xf32> to vector<8x8xf32>
    %133 = vector.extract_strided_slice %113 {offsets = [104, 0], sizes = [8, 8], strides = [1, 1]} : vector<128x8xf32> to vector<8x8xf32>
    %134 = arith.maximumf %132, %133 : vector<8x8xf32>
    %135 = vector.extract_strided_slice %113 {offsets = [112, 0], sizes = [8, 8], strides = [1, 1]} : vector<128x8xf32> to vector<8x8xf32>
    %136 = vector.extract_strided_slice %113 {offsets = [120, 0], sizes = [8, 8], strides = [1, 1]} : vector<128x8xf32> to vector<8x8xf32>
    %137 = arith.maximumf %135, %136 : vector<8x8xf32>
    %138 = tpu.concatenate %116, %119, %122, %125, %128, %131, %134, %137 in 0 : vector<8x8xf32>, vector<8x8xf32>, vector<8x8xf32>, vector<8x8xf32>, vector<8x8xf32>, vector<8x8xf32>, vector<8x8xf32>, vector<8x8xf32> -> vector<64x8xf32>
    %cst_71 = arith.constant 0.000000e+00 : f32
    %139 = vector.broadcast %cst_71 : f32 to vector<9x8xf32>
    %c0_72 = arith.constant 0 : index
    %c0_73 = arith.constant 0 : index
    %140 = vector.load %arg16[%c0_72, %c0_73] : memref<82x8xf32, #tpu.memory_space<vmem>>, vector<9x8xf32>
    tpu.vector_store %arg16[%c0_72, %c0_73], %139 {strides = array<i32>} : memref<82x8xf32, #tpu.memory_space<vmem>>, vector<9x8xf32>,
    %c73 = arith.constant 73 : index
    %c0_74 = arith.constant 0 : index
    %141 = vector.load %arg16[%c73, %c0_74] : memref<82x8xf32, #tpu.memory_space<vmem>>, vector<9x8xf32>
    tpu.vector_store %arg16[%c73, %c0_74], %139 {strides = array<i32>} : memref<82x8xf32, #tpu.memory_space<vmem>>, vector<9x8xf32>,
    %c9 = arith.constant 9 : index
    %c0_75 = arith.constant 0 : index
    %142 = vector.load %arg16[%c9, %c0_75] : memref<82x8xf32, #tpu.memory_space<vmem>>, vector<64x8xf32>
    tpu.vector_store %arg16[%c9, %c0_75], %138 {strides = array<i32>} : memref<82x8xf32, #tpu.memory_space<vmem>>, vector<64x8xf32>,
    %143 = tpu.iota {dimensions = array<i32: 0>} : vector<64x1xi32>
    %c8_i32 = arith.constant 8 : i32
    %c0_i32_76 = arith.constant 0 : i32
    %144 = arith.cmpi eq, %c8_i32, %c0_i32_76 : i32
    %c1_i32_77 = arith.constant 1 : i32
    %145 = arith.select %144, %c1_i32_77, %c8_i32 : i32
    %146 = vector.broadcast %145 : i32 to vector<64x1xi32>
    %147 = arith.remsi %143, %146 : vector<64x1xi32>
    %c0_i32_78 = arith.constant 0 : i32
    %148 = vector.broadcast %c0_i32_78 : i32 to vector<64x1xi32>
    %149 = arith.cmpi ne, %147, %148 : vector<64x1xi32>
    %c0_i32_79 = arith.constant 0 : i32
    %150 = vector.broadcast %c0_i32_79 : i32 to vector<64x1xi32>
    %151 = arith.cmpi slt, %147, %150 : vector<64x1xi32>
    %c0_i32_80 = arith.constant 0 : i32
    %152 = arith.cmpi slt, %145, %c0_i32_80 : i32
    %153 = vector.broadcast %152 : i1 to vector<64x1xi1>
    %154 = vector.broadcast %153 : vector<64x1xi1> to vector<64x1xi1>
    %155 = arith.xori %151, %154 : vector<64x1xi1>
    %156 = arith.andi %155, %149 : vector<64x1xi1>
    %157 = vector.broadcast %145 : i32 to vector<64x1xi32>
    %158 = arith.addi %147, %157 : vector<64x1xi32>
    %159 = arith.select %156, %158, %147 : vector<64x1xi1>, vector<64x1xi32>
    %cst_81 = arith.constant 0.000000e+00 : f32
    %160 = vector.broadcast %cst_81 : f32 to vector<64x16xf32>
    %c0_82 = arith.constant 0 : index
    %c0_83 = arith.constant 0 : index
    %161 = vector.load %arg16[%c0_82, %c0_83] : memref<82x8xf32, #tpu.memory_space<vmem>>, vector<64x8xf32>
    %c1_i32_84 = arith.constant 1 : i32
    %162 = vector.broadcast %c1_i32_84 : i32 to vector<64x1xi32>
    %163 = arith.cmpi sge, %159, %162 : vector<64x1xi32>
    %cst_85 = arith.constant 0.000000e+00 : f32
    %164 = vector.shape_cast %163 : vector<64x1xi1> to vector<64x1xi1>
    %165 = vector.broadcast %164 : vector<64x1xi1> to vector<64x8xi1>
    %166 = vector.broadcast %cst_85 : f32 to vector<64x8xf32>
    %167 = arith.select %165, %161, %166 : vector<64x8xi1>, vector<64x8xf32>
    %c0_86 = arith.constant 0 : index
    %c0_87 = arith.constant 0 : index
    %c0_88 = arith.constant 0 : index
    %168 = vector.load %arg4[%c0_86, %c0_87, %c0_88] : memref<9x8x16xf32, #tpu.memory_space<vmem>>, vector<1x8x16xf32>
    %169 = vector.shape_cast %168 : vector<1x8x16xf32> to vector<8x16xf32>
    %cst_89 = arith.constant dense<0.000000e+00> : vector<64x16xf32>
    %170 = tpu.matmul %167, %169, %cst_89 {dimension_numbers = #tpu.dot_dimension_numbers<[1], [0], [0], [1], [0, 0, 1, 1], [], []>} : vector<64x8xf32>, vector<8x16xf32>, vector<64x16xf32> -> vector<64x16xf32>
    %171 = arith.addf %160, %170 : vector<64x16xf32>
    %c1_90 = arith.constant 1 : index
    %c0_91 = arith.constant 0 : index
    %172 = vector.load %arg16[%c1_90, %c0_91] : memref<82x8xf32, #tpu.memory_space<vmem>>, vector<64x8xf32>
    %c1_92 = arith.constant 1 : index
    %c0_93 = arith.constant 0 : index
    %c0_94 = arith.constant 0 : index
    %173 = vector.load %arg4[%c1_92, %c0_93, %c0_94] : memref<9x8x16xf32, #tpu.memory_space<vmem>>, vector<1x8x16xf32>
    %174 = vector.shape_cast %173 : vector<1x8x16xf32> to vector<8x16xf32>
    %cst_95 = arith.constant dense<0.000000e+00> : vector<64x16xf32>
    %175 = tpu.matmul %172, %174, %cst_95 {dimension_numbers = #tpu.dot_dimension_numbers<[1], [0], [0], [1], [0, 0, 1, 1], [], []>} : vector<64x8xf32>, vector<8x16xf32>, vector<64x16xf32> -> vector<64x16xf32>
    %176 = arith.addf %171, %175 : vector<64x16xf32>
    %c2_96 = arith.constant 2 : index
    %c0_97 = arith.constant 0 : index
    %177 = vector.load %arg16[%c2_96, %c0_97] : memref<82x8xf32, #tpu.memory_space<vmem>>, vector<64x8xf32>
    %c6_i32 = arith.constant 6 : i32
    %178 = vector.broadcast %c6_i32 : i32 to vector<64x1xi32>
    %179 = arith.cmpi sle, %159, %178 : vector<64x1xi32>
    %cst_98 = arith.constant 0.000000e+00 : f32
    %180 = vector.shape_cast %179 : vector<64x1xi1> to vector<64x1xi1>
    %181 = vector.broadcast %180 : vector<64x1xi1> to vector<64x8xi1>
    %182 = vector.broadcast %cst_98 : f32 to vector<64x8xf32>
    %183 = arith.select %181, %177, %182 : vector<64x8xi1>, vector<64x8xf32>
    %c2_99 = arith.constant 2 : index
    %c0_100 = arith.constant 0 : index
    %c0_101 = arith.constant 0 : index
    %184 = vector.load %arg4[%c2_99, %c0_100, %c0_101] : memref<9x8x16xf32, #tpu.memory_space<vmem>>, vector<1x8x16xf32>
    %185 = vector.shape_cast %184 : vector<1x8x16xf32> to vector<8x16xf32>
    %cst_102 = arith.constant dense<0.000000e+00> : vector<64x16xf32>
    %186 = tpu.matmul %183, %185, %cst_102 {dimension_numbers = #tpu.dot_dimension_numbers<[1], [0], [0], [1], [0, 0, 1, 1], [], []>} : vector<64x8xf32>, vector<8x16xf32>, vector<64x16xf32> -> vector<64x16xf32>
    %187 = arith.addf %176, %186 : vector<64x16xf32>
    %c8_103 = arith.constant 8 : index
    %c0_104 = arith.constant 0 : index
    %188 = vector.load %arg16[%c8_103, %c0_104] : memref<82x8xf32, #tpu.memory_space<vmem>>, vector<64x8xf32>
    %c1_i32_105 = arith.constant 1 : i32
    %189 = vector.broadcast %c1_i32_105 : i32 to vector<64x1xi32>
    %190 = arith.cmpi sge, %159, %189 : vector<64x1xi32>
    %cst_106 = arith.constant 0.000000e+00 : f32
    %191 = vector.shape_cast %190 : vector<64x1xi1> to vector<64x1xi1>
    %192 = vector.broadcast %191 : vector<64x1xi1> to vector<64x8xi1>
    %193 = vector.broadcast %cst_106 : f32 to vector<64x8xf32>
    %194 = arith.select %192, %188, %193 : vector<64x8xi1>, vector<64x8xf32>
    %c3_107 = arith.constant 3 : index
    %c0_108 = arith.constant 0 : index
    %c0_109 = arith.constant 0 : index
    %195 = vector.load %arg4[%c3_107, %c0_108, %c0_109] : memref<9x8x16xf32, #tpu.memory_space<vmem>>, vector<1x8x16xf32>
    %196 = vector.shape_cast %195 : vector<1x8x16xf32> to vector<8x16xf32>
    %cst_110 = arith.constant dense<0.000000e+00> : vector<64x16xf32>
    %197 = tpu.matmul %194, %196, %cst_110 {dimension_numbers = #tpu.dot_dimension_numbers<[1], [0], [0], [1], [0, 0, 1, 1], [], []>} : vector<64x8xf32>, vector<8x16xf32>, vector<64x16xf32> -> vector<64x16xf32>
    %198 = arith.addf %187, %197 : vector<64x16xf32>
    %c9_111 = arith.constant 9 : index
    %c0_112 = arith.constant 0 : index
    %199 = vector.load %arg16[%c9_111, %c0_112] : memref<82x8xf32, #tpu.memory_space<vmem>>, vector<64x8xf32>
    %c4_113 = arith.constant 4 : index
    %c0_114 = arith.constant 0 : index
    %c0_115 = arith.constant 0 : index
    %200 = vector.load %arg4[%c4_113, %c0_114, %c0_115] : memref<9x8x16xf32, #tpu.memory_space<vmem>>, vector<1x8x16xf32>
    %201 = vector.shape_cast %200 : vector<1x8x16xf32> to vector<8x16xf32>
    %cst_116 = arith.constant dense<0.000000e+00> : vector<64x16xf32>
    %202 = tpu.matmul %199, %201, %cst_116 {dimension_numbers = #tpu.dot_dimension_numbers<[1], [0], [0], [1], [0, 0, 1, 1], [], []>} : vector<64x8xf32>, vector<8x16xf32>, vector<64x16xf32> -> vector<64x16xf32>
    %203 = arith.addf %198, %202 : vector<64x16xf32>
    %c10 = arith.constant 10 : index
    %c0_117 = arith.constant 0 : index
    %204 = vector.load %arg16[%c10, %c0_117] : memref<82x8xf32, #tpu.memory_space<vmem>>, vector<64x8xf32>
    %c6_i32_118 = arith.constant 6 : i32
    %205 = vector.broadcast %c6_i32_118 : i32 to vector<64x1xi32>
    %206 = arith.cmpi sle, %159, %205 : vector<64x1xi32>
    %cst_119 = arith.constant 0.000000e+00 : f32
    %207 = vector.shape_cast %206 : vector<64x1xi1> to vector<64x1xi1>
    %208 = vector.broadcast %207 : vector<64x1xi1> to vector<64x8xi1>
    %209 = vector.broadcast %cst_119 : f32 to vector<64x8xf32>
    %210 = arith.select %208, %204, %209 : vector<64x8xi1>, vector<64x8xf32>
    %c5_120 = arith.constant 5 : index
    %c0_121 = arith.constant 0 : index
    %c0_122 = arith.constant 0 : index
    %211 = vector.load %arg4[%c5_120, %c0_121, %c0_122] : memref<9x8x16xf32, #tpu.memory_space<vmem>>, vector<1x8x16xf32>
    %212 = vector.shape_cast %211 : vector<1x8x16xf32> to vector<8x16xf32>
    %cst_123 = arith.constant dense<0.000000e+00> : vector<64x16xf32>
    %213 = tpu.matmul %210, %212, %cst_123 {dimension_numbers = #tpu.dot_dimension_numbers<[1], [0], [0], [1], [0, 0, 1, 1], [], []>} : vector<64x8xf32>, vector<8x16xf32>, vector<64x16xf32> -> vector<64x16xf32>
    %214 = arith.addf %203, %213 : vector<64x16xf32>
    %c16_124 = arith.constant 16 : index
    %c0_125 = arith.constant 0 : index
    %215 = vector.load %arg16[%c16_124, %c0_125] : memref<82x8xf32, #tpu.memory_space<vmem>>, vector<64x8xf32>
    %c1_i32_126 = arith.constant 1 : i32
    %216 = vector.broadcast %c1_i32_126 : i32 to vector<64x1xi32>
    %217 = arith.cmpi sge, %159, %216 : vector<64x1xi32>
    %cst_127 = arith.constant 0.000000e+00 : f32
    %218 = vector.shape_cast %217 : vector<64x1xi1> to vector<64x1xi1>
    %219 = vector.broadcast %218 : vector<64x1xi1> to vector<64x8xi1>
    %220 = vector.broadcast %cst_127 : f32 to vector<64x8xf32>
    %221 = arith.select %219, %215, %220 : vector<64x8xi1>, vector<64x8xf32>
    %c6_128 = arith.constant 6 : index
    %c0_129 = arith.constant 0 : index
    %c0_130 = arith.constant 0 : index
    %222 = vector.load %arg4[%c6_128, %c0_129, %c0_130] : memref<9x8x16xf32, #tpu.memory_space<vmem>>, vector<1x8x16xf32>
    %223 = vector.shape_cast %222 : vector<1x8x16xf32> to vector<8x16xf32>
    %cst_131 = arith.constant dense<0.000000e+00> : vector<64x16xf32>
    %224 = tpu.matmul %221, %223, %cst_131 {dimension_numbers = #tpu.dot_dimension_numbers<[1], [0], [0], [1], [0, 0, 1, 1], [], []>} : vector<64x8xf32>, vector<8x16xf32>, vector<64x16xf32> -> vector<64x16xf32>
    %225 = arith.addf %214, %224 : vector<64x16xf32>
    %c17_132 = arith.constant 17 : index
    %c0_133 = arith.constant 0 : index
    %226 = vector.load %arg16[%c17_132, %c0_133] : memref<82x8xf32, #tpu.memory_space<vmem>>, vector<64x8xf32>
    %c7_134 = arith.constant 7 : index
    %c0_135 = arith.constant 0 : index
    %c0_136 = arith.constant 0 : index
    %227 = vector.load %arg4[%c7_134, %c0_135, %c0_136] : memref<9x8x16xf32, #tpu.memory_space<vmem>>, vector<1x8x16xf32>
    %228 = vector.shape_cast %227 : vector<1x8x16xf32> to vector<8x16xf32>
    %cst_137 = arith.constant dense<0.000000e+00> : vector<64x16xf32>
    %229 = tpu.matmul %226, %228, %cst_137 {dimension_numbers = #tpu.dot_dimension_numbers<[1], [0], [0], [1], [0, 0, 1, 1], [], []>} : vector<64x8xf32>, vector<8x16xf32>, vector<64x16xf32> -> vector<64x16xf32>
    %230 = arith.addf %225, %229 : vector<64x16xf32>
    %c18_138 = arith.constant 18 : index
    %c0_139 = arith.constant 0 : index
    %231 = vector.load %arg16[%c18_138, %c0_139] : memref<82x8xf32, #tpu.memory_space<vmem>>, vector<64x8xf32>
    %c6_i32_140 = arith.constant 6 : i32
    %232 = vector.broadcast %c6_i32_140 : i32 to vector<64x1xi32>
    %233 = arith.cmpi sle, %159, %232 : vector<64x1xi32>
    %cst_141 = arith.constant 0.000000e+00 : f32
    %234 = vector.shape_cast %233 : vector<64x1xi1> to vector<64x1xi1>
    %235 = vector.broadcast %234 : vector<64x1xi1> to vector<64x8xi1>
    %236 = vector.broadcast %cst_141 : f32 to vector<64x8xf32>
    %237 = arith.select %235, %231, %236 : vector<64x8xi1>, vector<64x8xf32>
    %c8_142 = arith.constant 8 : index
    %c0_143 = arith.constant 0 : index
    %c0_144 = arith.constant 0 : index
    %238 = vector.load %arg4[%c8_142, %c0_143, %c0_144] : memref<9x8x16xf32, #tpu.memory_space<vmem>>, vector<1x8x16xf32>
    %239 = vector.shape_cast %238 : vector<1x8x16xf32> to vector<8x16xf32>
    %cst_145 = arith.constant dense<0.000000e+00> : vector<64x16xf32>
    %240 = tpu.matmul %237, %239, %cst_145 {dimension_numbers = #tpu.dot_dimension_numbers<[1], [0], [0], [1], [0, 0, 1, 1], [], []>} : vector<64x8xf32>, vector<8x16xf32>, vector<64x16xf32> -> vector<64x16xf32>
    %241 = arith.addf %230, %240 : vector<64x16xf32>
    %c0_146 = arith.constant 0 : index
    %c0_147 = arith.constant 0 : index
    %242 = vector.load %arg5[%c0_146, %c0_147] : memref<1x16xf32, #tpu.memory_space<vmem>>, vector<1x16xf32>
    %243 = vector.broadcast %242 : vector<1x16xf32> to vector<64x16xf32>
    %244 = arith.addf %241, %243 : vector<64x16xf32>
    %cst_148 = arith.constant 0.000000e+00 : f32
    %245 = vector.broadcast %cst_148 : f32 to vector<64x16xf32>
    %246 = arith.maximumf %244, %245 : vector<64x16xf32>
    %c0_149 = arith.constant 0 : index
    %c0_150 = arith.constant 0 : index
    %247 = vector.load %arg20[%c0_149, %c0_150] : memref<64x16xf32, #tpu.memory_space<vmem>>, vector<64x16xf32>
    tpu.vector_store %arg20[%c0_149, %c0_150], %246 {strides = array<i32>} : memref<64x16xf32, #tpu.memory_space<vmem>>, vector<64x16xf32>,
    %c0_151 = arith.constant 0 : index
    %c0_152 = arith.constant 0 : index
    %248 = tpu.strided_load %arg20[%c0_151, %c0_152] {strides = array<i32: 2, 1>} : memref<64x16xf32, #tpu.memory_space<vmem>>, vector<32x16xf32>
    %c1_153 = arith.constant 1 : index
    %c0_154 = arith.constant 0 : index
    %249 = tpu.strided_load %arg20[%c1_153, %c0_154] {strides = array<i32: 2, 1>} : memref<64x16xf32, #tpu.memory_space<vmem>>, vector<32x16xf32>
    %250 = arith.maximumf %248, %249 : vector<32x16xf32>
    %251 = vector.extract_strided_slice %250 {offsets = [0, 0], sizes = [4, 16], strides = [1, 1]} : vector<32x16xf32> to vector<4x16xf32>
    %252 = vector.extract_strided_slice %250 {offsets = [4, 0], sizes = [4, 16], strides = [1, 1]} : vector<32x16xf32> to vector<4x16xf32>
    %253 = arith.maximumf %251, %252 : vector<4x16xf32>
    %254 = vector.extract_strided_slice %250 {offsets = [8, 0], sizes = [4, 16], strides = [1, 1]} : vector<32x16xf32> to vector<4x16xf32>
    %255 = vector.extract_strided_slice %250 {offsets = [12, 0], sizes = [4, 16], strides = [1, 1]} : vector<32x16xf32> to vector<4x16xf32>
    %256 = arith.maximumf %254, %255 : vector<4x16xf32>
    %257 = vector.extract_strided_slice %250 {offsets = [16, 0], sizes = [4, 16], strides = [1, 1]} : vector<32x16xf32> to vector<4x16xf32>
    %258 = vector.extract_strided_slice %250 {offsets = [20, 0], sizes = [4, 16], strides = [1, 1]} : vector<32x16xf32> to vector<4x16xf32>
    %259 = arith.maximumf %257, %258 : vector<4x16xf32>
    %260 = vector.extract_strided_slice %250 {offsets = [24, 0], sizes = [4, 16], strides = [1, 1]} : vector<32x16xf32> to vector<4x16xf32>
    %261 = vector.extract_strided_slice %250 {offsets = [28, 0], sizes = [4, 16], strides = [1, 1]} : vector<32x16xf32> to vector<4x16xf32>
    %262 = arith.maximumf %260, %261 : vector<4x16xf32>
    %263 = tpu.concatenate %253, %256, %259, %262 in 0 : vector<4x16xf32>, vector<4x16xf32>, vector<4x16xf32>, vector<4x16xf32> -> vector<16x16xf32>
    %cst_155 = arith.constant 0.000000e+00 : f32
    %264 = vector.broadcast %cst_155 : f32 to vector<5x16xf32>
    %c0_156 = arith.constant 0 : index
    %c0_157 = arith.constant 0 : index
    %265 = vector.load %arg17[%c0_156, %c0_157] : memref<26x16xf32, #tpu.memory_space<vmem>>, vector<5x16xf32>
    tpu.vector_store %arg17[%c0_156, %c0_157], %264 {strides = array<i32>} : memref<26x16xf32, #tpu.memory_space<vmem>>, vector<5x16xf32>,
    %c21 = arith.constant 21 : index
    %c0_158 = arith.constant 0 : index
    %266 = vector.load %arg17[%c21, %c0_158] : memref<26x16xf32, #tpu.memory_space<vmem>>, vector<5x16xf32>
    tpu.vector_store %arg17[%c21, %c0_158], %264 {strides = array<i32>} : memref<26x16xf32, #tpu.memory_space<vmem>>, vector<5x16xf32>,
    %c5_159 = arith.constant 5 : index
    %c0_160 = arith.constant 0 : index
    %267 = vector.load %arg17[%c5_159, %c0_160] : memref<26x16xf32, #tpu.memory_space<vmem>>, vector<16x16xf32>
    tpu.vector_store %arg17[%c5_159, %c0_160], %263 {strides = array<i32>} : memref<26x16xf32, #tpu.memory_space<vmem>>, vector<16x16xf32>,
    %268 = tpu.iota {dimensions = array<i32: 0>} : vector<16x1xi32>
    %c4_i32 = arith.constant 4 : i32
    %c0_i32_161 = arith.constant 0 : i32
    %269 = arith.cmpi eq, %c4_i32, %c0_i32_161 : i32
    %c1_i32_162 = arith.constant 1 : i32
    %270 = arith.select %269, %c1_i32_162, %c4_i32 : i32
    %271 = vector.broadcast %270 : i32 to vector<16x1xi32>
    %272 = arith.remsi %268, %271 : vector<16x1xi32>
    %c0_i32_163 = arith.constant 0 : i32
    %273 = vector.broadcast %c0_i32_163 : i32 to vector<16x1xi32>
    %274 = arith.cmpi ne, %272, %273 : vector<16x1xi32>
    %c0_i32_164 = arith.constant 0 : i32
    %275 = vector.broadcast %c0_i32_164 : i32 to vector<16x1xi32>
    %276 = arith.cmpi slt, %272, %275 : vector<16x1xi32>
    %c0_i32_165 = arith.constant 0 : i32
    %277 = arith.cmpi slt, %270, %c0_i32_165 : i32
    %278 = vector.broadcast %277 : i1 to vector<16x1xi1>
    %279 = vector.broadcast %278 : vector<16x1xi1> to vector<16x1xi1>
    %280 = arith.xori %276, %279 : vector<16x1xi1>
    %281 = arith.andi %280, %274 : vector<16x1xi1>
    %282 = vector.broadcast %270 : i32 to vector<16x1xi32>
    %283 = arith.addi %272, %282 : vector<16x1xi32>
    %284 = arith.select %281, %283, %272 : vector<16x1xi1>, vector<16x1xi32>
    %cst_166 = arith.constant 0.000000e+00 : f32
    %285 = vector.broadcast %cst_166 : f32 to vector<16x32xf32>
    %c0_167 = arith.constant 0 : index
    %c0_168 = arith.constant 0 : index
    %286 = vector.load %arg17[%c0_167, %c0_168] : memref<26x16xf32, #tpu.memory_space<vmem>>, vector<16x16xf32>
    %c1_i32_169 = arith.constant 1 : i32
    %287 = vector.broadcast %c1_i32_169 : i32 to vector<16x1xi32>
    %288 = arith.cmpi sge, %284, %287 : vector<16x1xi32>
    %cst_170 = arith.constant 0.000000e+00 : f32
    %289 = vector.shape_cast %288 : vector<16x1xi1> to vector<16x1xi1>
    %290 = vector.broadcast %289 : vector<16x1xi1> to vector<16x16xi1>
    %291 = vector.broadcast %cst_170 : f32 to vector<16x16xf32>
    %292 = arith.select %290, %286, %291 : vector<16x16xi1>, vector<16x16xf32>
    %c0_171 = arith.constant 0 : index
    %c0_172 = arith.constant 0 : index
    %c0_173 = arith.constant 0 : index
    %293 = vector.load %arg6[%c0_171, %c0_172, %c0_173] : memref<9x16x32xf32, #tpu.memory_space<vmem>>, vector<1x16x32xf32>
    %294 = vector.shape_cast %293 : vector<1x16x32xf32> to vector<16x32xf32>
    %cst_174 = arith.constant dense<0.000000e+00> : vector<16x32xf32>
    %295 = tpu.matmul %292, %294, %cst_174 {dimension_numbers = #tpu.dot_dimension_numbers<[1], [0], [0], [1], [0, 0, 1, 1], [], []>} : vector<16x16xf32>, vector<16x32xf32>, vector<16x32xf32> -> vector<16x32xf32>
    %296 = arith.addf %285, %295 : vector<16x32xf32>
    %c1_175 = arith.constant 1 : index
    %c0_176 = arith.constant 0 : index
    %297 = vector.load %arg17[%c1_175, %c0_176] : memref<26x16xf32, #tpu.memory_space<vmem>>, vector<16x16xf32>
    %c1_177 = arith.constant 1 : index
    %c0_178 = arith.constant 0 : index
    %c0_179 = arith.constant 0 : index
    %298 = vector.load %arg6[%c1_177, %c0_178, %c0_179] : memref<9x16x32xf32, #tpu.memory_space<vmem>>, vector<1x16x32xf32>
    %299 = vector.shape_cast %298 : vector<1x16x32xf32> to vector<16x32xf32>
    %cst_180 = arith.constant dense<0.000000e+00> : vector<16x32xf32>
    %300 = tpu.matmul %297, %299, %cst_180 {dimension_numbers = #tpu.dot_dimension_numbers<[1], [0], [0], [1], [0, 0, 1, 1], [], []>} : vector<16x16xf32>, vector<16x32xf32>, vector<16x32xf32> -> vector<16x32xf32>
    %301 = arith.addf %296, %300 : vector<16x32xf32>
    %c2_181 = arith.constant 2 : index
    %c0_182 = arith.constant 0 : index
    %302 = vector.load %arg17[%c2_181, %c0_182] : memref<26x16xf32, #tpu.memory_space<vmem>>, vector<16x16xf32>
    %c2_i32 = arith.constant 2 : i32
    %303 = vector.broadcast %c2_i32 : i32 to vector<16x1xi32>
    %304 = arith.cmpi sle, %284, %303 : vector<16x1xi32>
    %cst_183 = arith.constant 0.000000e+00 : f32
    %305 = vector.shape_cast %304 : vector<16x1xi1> to vector<16x1xi1>
    %306 = vector.broadcast %305 : vector<16x1xi1> to vector<16x16xi1>
    %307 = vector.broadcast %cst_183 : f32 to vector<16x16xf32>
    %308 = arith.select %306, %302, %307 : vector<16x16xi1>, vector<16x16xf32>
    %c2_184 = arith.constant 2 : index
    %c0_185 = arith.constant 0 : index
    %c0_186 = arith.constant 0 : index
    %309 = vector.load %arg6[%c2_184, %c0_185, %c0_186] : memref<9x16x32xf32, #tpu.memory_space<vmem>>, vector<1x16x32xf32>
    %310 = vector.shape_cast %309 : vector<1x16x32xf32> to vector<16x32xf32>
    %cst_187 = arith.constant dense<0.000000e+00> : vector<16x32xf32>
    %311 = tpu.matmul %308, %310, %cst_187 {dimension_numbers = #tpu.dot_dimension_numbers<[1], [0], [0], [1], [0, 0, 1, 1], [], []>} : vector<16x16xf32>, vector<16x32xf32>, vector<16x32xf32> -> vector<16x32xf32>
    %312 = arith.addf %301, %311 : vector<16x32xf32>
    %c4_188 = arith.constant 4 : index
    %c0_189 = arith.constant 0 : index
    %313 = vector.load %arg17[%c4_188, %c0_189] : memref<26x16xf32, #tpu.memory_space<vmem>>, vector<16x16xf32>
    %c1_i32_190 = arith.constant 1 : i32
    %314 = vector.broadcast %c1_i32_190 : i32 to vector<16x1xi32>
    %315 = arith.cmpi sge, %284, %314 : vector<16x1xi32>
    %cst_191 = arith.constant 0.000000e+00 : f32
    %316 = vector.shape_cast %315 : vector<16x1xi1> to vector<16x1xi1>
    %317 = vector.broadcast %316 : vector<16x1xi1> to vector<16x16xi1>
    %318 = vector.broadcast %cst_191 : f32 to vector<16x16xf32>
    %319 = arith.select %317, %313, %318 : vector<16x16xi1>, vector<16x16xf32>
    %c3_192 = arith.constant 3 : index
    %c0_193 = arith.constant 0 : index
    %c0_194 = arith.constant 0 : index
    %320 = vector.load %arg6[%c3_192, %c0_193, %c0_194] : memref<9x16x32xf32, #tpu.memory_space<vmem>>, vector<1x16x32xf32>
    %321 = vector.shape_cast %320 : vector<1x16x32xf32> to vector<16x32xf32>
    %cst_195 = arith.constant dense<0.000000e+00> : vector<16x32xf32>
    %322 = tpu.matmul %319, %321, %cst_195 {dimension_numbers = #tpu.dot_dimension_numbers<[1], [0], [0], [1], [0, 0, 1, 1], [], []>} : vector<16x16xf32>, vector<16x32xf32>, vector<16x32xf32> -> vector<16x32xf32>
    %323 = arith.addf %312, %322 : vector<16x32xf32>
    %c5_196 = arith.constant 5 : index
    %c0_197 = arith.constant 0 : index
    %324 = vector.load %arg17[%c5_196, %c0_197] : memref<26x16xf32, #tpu.memory_space<vmem>>, vector<16x16xf32>
    %c4_198 = arith.constant 4 : index
    %c0_199 = arith.constant 0 : index
    %c0_200 = arith.constant 0 : index
    %325 = vector.load %arg6[%c4_198, %c0_199, %c0_200] : memref<9x16x32xf32, #tpu.memory_space<vmem>>, vector<1x16x32xf32>
    %326 = vector.shape_cast %325 : vector<1x16x32xf32> to vector<16x32xf32>
    %cst_201 = arith.constant dense<0.000000e+00> : vector<16x32xf32>
    %327 = tpu.matmul %324, %326, %cst_201 {dimension_numbers = #tpu.dot_dimension_numbers<[1], [0], [0], [1], [0, 0, 1, 1], [], []>} : vector<16x16xf32>, vector<16x32xf32>, vector<16x32xf32> -> vector<16x32xf32>
    %328 = arith.addf %323, %327 : vector<16x32xf32>
    %c6_202 = arith.constant 6 : index
    %c0_203 = arith.constant 0 : index
    %329 = vector.load %arg17[%c6_202, %c0_203] : memref<26x16xf32, #tpu.memory_space<vmem>>, vector<16x16xf32>
    %c2_i32_204 = arith.constant 2 : i32
    %330 = vector.broadcast %c2_i32_204 : i32 to vector<16x1xi32>
    %331 = arith.cmpi sle, %284, %330 : vector<16x1xi32>
    %cst_205 = arith.constant 0.000000e+00 : f32
    %332 = vector.shape_cast %331 : vector<16x1xi1> to vector<16x1xi1>
    %333 = vector.broadcast %332 : vector<16x1xi1> to vector<16x16xi1>
    %334 = vector.broadcast %cst_205 : f32 to vector<16x16xf32>
    %335 = arith.select %333, %329, %334 : vector<16x16xi1>, vector<16x16xf32>
    %c5_206 = arith.constant 5 : index
    %c0_207 = arith.constant 0 : index
    %c0_208 = arith.constant 0 : index
    %336 = vector.load %arg6[%c5_206, %c0_207, %c0_208] : memref<9x16x32xf32, #tpu.memory_space<vmem>>, vector<1x16x32xf32>
    %337 = vector.shape_cast %336 : vector<1x16x32xf32> to vector<16x32xf32>
    %cst_209 = arith.constant dense<0.000000e+00> : vector<16x32xf32>
    %338 = tpu.matmul %335, %337, %cst_209 {dimension_numbers = #tpu.dot_dimension_numbers<[1], [0], [0], [1], [0, 0, 1, 1], [], []>} : vector<16x16xf32>, vector<16x32xf32>, vector<16x32xf32> -> vector<16x32xf32>
    %339 = arith.addf %328, %338 : vector<16x32xf32>
    %c8_210 = arith.constant 8 : index
    %c0_211 = arith.constant 0 : index
    %340 = vector.load %arg17[%c8_210, %c0_211] : memref<26x16xf32, #tpu.memory_space<vmem>>, vector<16x16xf32>
    %c1_i32_212 = arith.constant 1 : i32
    %341 = vector.broadcast %c1_i32_212 : i32 to vector<16x1xi32>
    %342 = arith.cmpi sge, %284, %341 : vector<16x1xi32>
    %cst_213 = arith.constant 0.000000e+00 : f32
    %343 = vector.shape_cast %342 : vector<16x1xi1> to vector<16x1xi1>
    %344 = vector.broadcast %343 : vector<16x1xi1> to vector<16x16xi1>
    %345 = vector.broadcast %cst_213 : f32 to vector<16x16xf32>
    %346 = arith.select %344, %340, %345 : vector<16x16xi1>, vector<16x16xf32>
    %c6_214 = arith.constant 6 : index
    %c0_215 = arith.constant 0 : index
    %c0_216 = arith.constant 0 : index
    %347 = vector.load %arg6[%c6_214, %c0_215, %c0_216] : memref<9x16x32xf32, #tpu.memory_space<vmem>>, vector<1x16x32xf32>
    %348 = vector.shape_cast %347 : vector<1x16x32xf32> to vector<16x32xf32>
    %cst_217 = arith.constant dense<0.000000e+00> : vector<16x32xf32>
    %349 = tpu.matmul %346, %348, %cst_217 {dimension_numbers = #tpu.dot_dimension_numbers<[1], [0], [0], [1], [0, 0, 1, 1], [], []>} : vector<16x16xf32>, vector<16x32xf32>, vector<16x32xf32> -> vector<16x32xf32>
    %350 = arith.addf %339, %349 : vector<16x32xf32>
    %c9_218 = arith.constant 9 : index
    %c0_219 = arith.constant 0 : index
    %351 = vector.load %arg17[%c9_218, %c0_219] : memref<26x16xf32, #tpu.memory_space<vmem>>, vector<16x16xf32>
    %c7_220 = arith.constant 7 : index
    %c0_221 = arith.constant 0 : index
    %c0_222 = arith.constant 0 : index
    %352 = vector.load %arg6[%c7_220, %c0_221, %c0_222] : memref<9x16x32xf32, #tpu.memory_space<vmem>>, vector<1x16x32xf32>
    %353 = vector.shape_cast %352 : vector<1x16x32xf32> to vector<16x32xf32>
    %cst_223 = arith.constant dense<0.000000e+00> : vector<16x32xf32>
    %354 = tpu.matmul %351, %353, %cst_223 {dimension_numbers = #tpu.dot_dimension_numbers<[1], [0], [0], [1], [0, 0, 1, 1], [], []>} : vector<16x16xf32>, vector<16x32xf32>, vector<16x32xf32> -> vector<16x32xf32>
    %355 = arith.addf %350, %354 : vector<16x32xf32>
    %c10_224 = arith.constant 10 : index
    %c0_225 = arith.constant 0 : index
    %356 = vector.load %arg17[%c10_224, %c0_225] : memref<26x16xf32, #tpu.memory_space<vmem>>, vector<16x16xf32>
    %c2_i32_226 = arith.constant 2 : i32
    %357 = vector.broadcast %c2_i32_226 : i32 to vector<16x1xi32>
    %358 = arith.cmpi sle, %284, %357 : vector<16x1xi32>
    %cst_227 = arith.constant 0.000000e+00 : f32
    %359 = vector.shape_cast %358 : vector<16x1xi1> to vector<16x1xi1>
    %360 = vector.broadcast %359 : vector<16x1xi1> to vector<16x16xi1>
    %361 = vector.broadcast %cst_227 : f32 to vector<16x16xf32>
    %362 = arith.select %360, %356, %361 : vector<16x16xi1>, vector<16x16xf32>
    %c8_228 = arith.constant 8 : index
    %c0_229 = arith.constant 0 : index
    %c0_230 = arith.constant 0 : index
    %363 = vector.load %arg6[%c8_228, %c0_229, %c0_230] : memref<9x16x32xf32, #tpu.memory_space<vmem>>, vector<1x16x32xf32>
    %364 = vector.shape_cast %363 : vector<1x16x32xf32> to vector<16x32xf32>
    %cst_231 = arith.constant dense<0.000000e+00> : vector<16x32xf32>
    %365 = tpu.matmul %362, %364, %cst_231 {dimension_numbers = #tpu.dot_dimension_numbers<[1], [0], [0], [1], [0, 0, 1, 1], [], []>} : vector<16x16xf32>, vector<16x32xf32>, vector<16x32xf32> -> vector<16x32xf32>
    %366 = arith.addf %355, %365 : vector<16x32xf32>
    %c0_232 = arith.constant 0 : index
    %c0_233 = arith.constant 0 : index
    %367 = vector.load %arg7[%c0_232, %c0_233] : memref<1x32xf32, #tpu.memory_space<vmem>>, vector<1x32xf32>
    %368 = vector.broadcast %367 : vector<1x32xf32> to vector<16x32xf32>
    %369 = arith.addf %366, %368 : vector<16x32xf32>
    %cst_234 = arith.constant 0.000000e+00 : f32
    %370 = vector.broadcast %cst_234 : f32 to vector<16x32xf32>
    %371 = arith.maximumf %369, %370 : vector<16x32xf32>
    %cst_235 = arith.constant 0.000000e+00 : f32
    %372 = vector.broadcast %cst_235 : f32 to vector<5x32xf32>
    %c0_236 = arith.constant 0 : index
    %c0_237 = arith.constant 0 : index
    %373 = vector.load %arg18[%c0_236, %c0_237] : memref<26x32xf32, #tpu.memory_space<vmem>>, vector<5x32xf32>
    tpu.vector_store %arg18[%c0_236, %c0_237], %372 {strides = array<i32>} : memref<26x32xf32, #tpu.memory_space<vmem>>, vector<5x32xf32>,
    %c21_238 = arith.constant 21 : index
    %c0_239 = arith.constant 0 : index
    %374 = vector.load %arg18[%c21_238, %c0_239] : memref<26x32xf32, #tpu.memory_space<vmem>>, vector<5x32xf32>
    tpu.vector_store %arg18[%c21_238, %c0_239], %372 {strides = array<i32>} : memref<26x32xf32, #tpu.memory_space<vmem>>, vector<5x32xf32>,
    %c5_240 = arith.constant 5 : index
    %c0_241 = arith.constant 0 : index
    %375 = vector.load %arg18[%c5_240, %c0_241] : memref<26x32xf32, #tpu.memory_space<vmem>>, vector<16x32xf32>
    tpu.vector_store %arg18[%c5_240, %c0_241], %371 {strides = array<i32>} : memref<26x32xf32, #tpu.memory_space<vmem>>, vector<16x32xf32>,
    %376 = tpu.iota {dimensions = array<i32: 0>} : vector<16x1xi32>
    %c4_i32_242 = arith.constant 4 : i32
    %c0_i32_243 = arith.constant 0 : i32
    %377 = arith.cmpi eq, %c4_i32_242, %c0_i32_243 : i32
    %c1_i32_244 = arith.constant 1 : i32
    %378 = arith.select %377, %c1_i32_244, %c4_i32_242 : i32
    %379 = vector.broadcast %378 : i32 to vector<16x1xi32>
    %380 = arith.remsi %376, %379 : vector<16x1xi32>
    %c0_i32_245 = arith.constant 0 : i32
    %381 = vector.broadcast %c0_i32_245 : i32 to vector<16x1xi32>
    %382 = arith.cmpi ne, %380, %381 : vector<16x1xi32>
    %c0_i32_246 = arith.constant 0 : i32
    %383 = vector.broadcast %c0_i32_246 : i32 to vector<16x1xi32>
    %384 = arith.cmpi slt, %380, %383 : vector<16x1xi32>
    %c0_i32_247 = arith.constant 0 : i32
    %385 = arith.cmpi slt, %378, %c0_i32_247 : i32
    %386 = vector.broadcast %385 : i1 to vector<16x1xi1>
    %387 = vector.broadcast %386 : vector<16x1xi1> to vector<16x1xi1>
    %388 = arith.xori %384, %387 : vector<16x1xi1>
    %389 = arith.andi %388, %382 : vector<16x1xi1>
    %390 = vector.broadcast %378 : i32 to vector<16x1xi32>
    %391 = arith.addi %380, %390 : vector<16x1xi32>
    %392 = arith.select %389, %391, %380 : vector<16x1xi1>, vector<16x1xi32>
    %cst_248 = arith.constant 0.000000e+00 : f32
    %393 = vector.broadcast %cst_248 : f32 to vector<16x32xf32>
    %c0_249 = arith.constant 0 : index
    %c0_250 = arith.constant 0 : index
    %394 = vector.load %arg18[%c0_249, %c0_250] : memref<26x32xf32, #tpu.memory_space<vmem>>, vector<16x32xf32>
    %c1_i32_251 = arith.constant 1 : i32
    %395 = vector.broadcast %c1_i32_251 : i32 to vector<16x1xi32>
    %396 = arith.cmpi sge, %392, %395 : vector<16x1xi32>
    %cst_252 = arith.constant 0.000000e+00 : f32
    %397 = vector.shape_cast %396 : vector<16x1xi1> to vector<16x1xi1>
    %398 = vector.broadcast %397 : vector<16x1xi1> to vector<16x32xi1>
    %399 = vector.broadcast %cst_252 : f32 to vector<16x32xf32>
    %400 = arith.select %398, %394, %399 : vector<16x32xi1>, vector<16x32xf32>
    %c0_253 = arith.constant 0 : index
    %c0_254 = arith.constant 0 : index
    %c0_255 = arith.constant 0 : index
    %401 = vector.load %arg8[%c0_253, %c0_254, %c0_255] : memref<9x32x32xf32, #tpu.memory_space<vmem>>, vector<1x32x32xf32>
    %402 = vector.shape_cast %401 : vector<1x32x32xf32> to vector<32x32xf32>
    %cst_256 = arith.constant dense<0.000000e+00> : vector<16x32xf32>
    %403 = tpu.matmul %400, %402, %cst_256 {dimension_numbers = #tpu.dot_dimension_numbers<[1], [0], [0], [1], [0, 0, 1, 1], [], []>} : vector<16x32xf32>, vector<32x32xf32>, vector<16x32xf32> -> vector<16x32xf32>
    %404 = arith.addf %393, %403 : vector<16x32xf32>
    %c1_257 = arith.constant 1 : index
    %c0_258 = arith.constant 0 : index
    %405 = vector.load %arg18[%c1_257, %c0_258] : memref<26x32xf32, #tpu.memory_space<vmem>>, vector<16x32xf32>
    %c1_259 = arith.constant 1 : index
    %c0_260 = arith.constant 0 : index
    %c0_261 = arith.constant 0 : index
    %406 = vector.load %arg8[%c1_259, %c0_260, %c0_261] : memref<9x32x32xf32, #tpu.memory_space<vmem>>, vector<1x32x32xf32>
    %407 = vector.shape_cast %406 : vector<1x32x32xf32> to vector<32x32xf32>
    %cst_262 = arith.constant dense<0.000000e+00> : vector<16x32xf32>
    %408 = tpu.matmul %405, %407, %cst_262 {dimension_numbers = #tpu.dot_dimension_numbers<[1], [0], [0], [1], [0, 0, 1, 1], [], []>} : vector<16x32xf32>, vector<32x32xf32>, vector<16x32xf32> -> vector<16x32xf32>
    %409 = arith.addf %404, %408 : vector<16x32xf32>
    %c2_263 = arith.constant 2 : index
    %c0_264 = arith.constant 0 : index
    %410 = vector.load %arg18[%c2_263, %c0_264] : memref<26x32xf32, #tpu.memory_space<vmem>>, vector<16x32xf32>
    %c2_i32_265 = arith.constant 2 : i32
    %411 = vector.broadcast %c2_i32_265 : i32 to vector<16x1xi32>
    %412 = arith.cmpi sle, %392, %411 : vector<16x1xi32>
    %cst_266 = arith.constant 0.000000e+00 : f32
    %413 = vector.shape_cast %412 : vector<16x1xi1> to vector<16x1xi1>
    %414 = vector.broadcast %413 : vector<16x1xi1> to vector<16x32xi1>
    %415 = vector.broadcast %cst_266 : f32 to vector<16x32xf32>
    %416 = arith.select %414, %410, %415 : vector<16x32xi1>, vector<16x32xf32>
    %c2_267 = arith.constant 2 : index
    %c0_268 = arith.constant 0 : index
    %c0_269 = arith.constant 0 : index
    %417 = vector.load %arg8[%c2_267, %c0_268, %c0_269] : memref<9x32x32xf32, #tpu.memory_space<vmem>>, vector<1x32x32xf32>
    %418 = vector.shape_cast %417 : vector<1x32x32xf32> to vector<32x32xf32>
    %cst_270 = arith.constant dense<0.000000e+00> : vector<16x32xf32>
    %419 = tpu.matmul %416, %418, %cst_270 {dimension_numbers = #tpu.dot_dimension_numbers<[1], [0], [0], [1], [0, 0, 1, 1], [], []>} : vector<16x32xf32>, vector<32x32xf32>, vector<16x32xf32> -> vector<16x32xf32>
    %420 = arith.addf %409, %419 : vector<16x32xf32>
    %c4_271 = arith.constant 4 : index
    %c0_272 = arith.constant 0 : index
    %421 = vector.load %arg18[%c4_271, %c0_272] : memref<26x32xf32, #tpu.memory_space<vmem>>, vector<16x32xf32>
    %c1_i32_273 = arith.constant 1 : i32
    %422 = vector.broadcast %c1_i32_273 : i32 to vector<16x1xi32>
    %423 = arith.cmpi sge, %392, %422 : vector<16x1xi32>
    %cst_274 = arith.constant 0.000000e+00 : f32
    %424 = vector.shape_cast %423 : vector<16x1xi1> to vector<16x1xi1>
    %425 = vector.broadcast %424 : vector<16x1xi1> to vector<16x32xi1>
    %426 = vector.broadcast %cst_274 : f32 to vector<16x32xf32>
    %427 = arith.select %425, %421, %426 : vector<16x32xi1>, vector<16x32xf32>
    %c3_275 = arith.constant 3 : index
    %c0_276 = arith.constant 0 : index
    %c0_277 = arith.constant 0 : index
    %428 = vector.load %arg8[%c3_275, %c0_276, %c0_277] : memref<9x32x32xf32, #tpu.memory_space<vmem>>, vector<1x32x32xf32>
    %429 = vector.shape_cast %428 : vector<1x32x32xf32> to vector<32x32xf32>
    %cst_278 = arith.constant dense<0.000000e+00> : vector<16x32xf32>
    %430 = tpu.matmul %427, %429, %cst_278 {dimension_numbers = #tpu.dot_dimension_numbers<[1], [0], [0], [1], [0, 0, 1, 1], [], []>} : vector<16x32xf32>, vector<32x32xf32>, vector<16x32xf32> -> vector<16x32xf32>
    %431 = arith.addf %420, %430 : vector<16x32xf32>
    %c5_279 = arith.constant 5 : index
    %c0_280 = arith.constant 0 : index
    %432 = vector.load %arg18[%c5_279, %c0_280] : memref<26x32xf32, #tpu.memory_space<vmem>>, vector<16x32xf32>
    %c4_281 = arith.constant 4 : index
    %c0_282 = arith.constant 0 : index
    %c0_283 = arith.constant 0 : index
    %433 = vector.load %arg8[%c4_281, %c0_282, %c0_283] : memref<9x32x32xf32, #tpu.memory_space<vmem>>, vector<1x32x32xf32>
    %434 = vector.shape_cast %433 : vector<1x32x32xf32> to vector<32x32xf32>
    %cst_284 = arith.constant dense<0.000000e+00> : vector<16x32xf32>
    %435 = tpu.matmul %432, %434, %cst_284 {dimension_numbers = #tpu.dot_dimension_numbers<[1], [0], [0], [1], [0, 0, 1, 1], [], []>} : vector<16x32xf32>, vector<32x32xf32>, vector<16x32xf32> -> vector<16x32xf32>
    %436 = arith.addf %431, %435 : vector<16x32xf32>
    %c6_285 = arith.constant 6 : index
    %c0_286 = arith.constant 0 : index
    %437 = vector.load %arg18[%c6_285, %c0_286] : memref<26x32xf32, #tpu.memory_space<vmem>>, vector<16x32xf32>
    %c2_i32_287 = arith.constant 2 : i32
    %438 = vector.broadcast %c2_i32_287 : i32 to vector<16x1xi32>
    %439 = arith.cmpi sle, %392, %438 : vector<16x1xi32>
    %cst_288 = arith.constant 0.000000e+00 : f32
    %440 = vector.shape_cast %439 : vector<16x1xi1> to vector<16x1xi1>
    %441 = vector.broadcast %440 : vector<16x1xi1> to vector<16x32xi1>
    %442 = vector.broadcast %cst_288 : f32 to vector<16x32xf32>
    %443 = arith.select %441, %437, %442 : vector<16x32xi1>, vector<16x32xf32>
    %c5_289 = arith.constant 5 : index
    %c0_290 = arith.constant 0 : index
    %c0_291 = arith.constant 0 : index
    %444 = vector.load %arg8[%c5_289, %c0_290, %c0_291] : memref<9x32x32xf32, #tpu.memory_space<vmem>>, vector<1x32x32xf32>
    %445 = vector.shape_cast %444 : vector<1x32x32xf32> to vector<32x32xf32>
    %cst_292 = arith.constant dense<0.000000e+00> : vector<16x32xf32>
    %446 = tpu.matmul %443, %445, %cst_292 {dimension_numbers = #tpu.dot_dimension_numbers<[1], [0], [0], [1], [0, 0, 1, 1], [], []>} : vector<16x32xf32>, vector<32x32xf32>, vector<16x32xf32> -> vector<16x32xf32>
    %447 = arith.addf %436, %446 : vector<16x32xf32>
    %c8_293 = arith.constant 8 : index
    %c0_294 = arith.constant 0 : index
    %448 = vector.load %arg18[%c8_293, %c0_294] : memref<26x32xf32, #tpu.memory_space<vmem>>, vector<16x32xf32>
    %c1_i32_295 = arith.constant 1 : i32
    %449 = vector.broadcast %c1_i32_295 : i32 to vector<16x1xi32>
    %450 = arith.cmpi sge, %392, %449 : vector<16x1xi32>
    %cst_296 = arith.constant 0.000000e+00 : f32
    %451 = vector.shape_cast %450 : vector<16x1xi1> to vector<16x1xi1>
    %452 = vector.broadcast %451 : vector<16x1xi1> to vector<16x32xi1>
    %453 = vector.broadcast %cst_296 : f32 to vector<16x32xf32>
    %454 = arith.select %452, %448, %453 : vector<16x32xi1>, vector<16x32xf32>
    %c6_297 = arith.constant 6 : index
    %c0_298 = arith.constant 0 : index
    %c0_299 = arith.constant 0 : index
    %455 = vector.load %arg8[%c6_297, %c0_298, %c0_299] : memref<9x32x32xf32, #tpu.memory_space<vmem>>, vector<1x32x32xf32>
    %456 = vector.shape_cast %455 : vector<1x32x32xf32> to vector<32x32xf32>
    %cst_300 = arith.constant dense<0.000000e+00> : vector<16x32xf32>
    %457 = tpu.matmul %454, %456, %cst_300 {dimension_numbers = #tpu.dot_dimension_numbers<[1], [0], [0], [1], [0, 0, 1, 1], [], []>} : vector<16x32xf32>, vector<32x32xf32>, vector<16x32xf32> -> vector<16x32xf32>
    %458 = arith.addf %447, %457 : vector<16x32xf32>
    %c9_301 = arith.constant 9 : index
    %c0_302 = arith.constant 0 : index
    %459 = vector.load %arg18[%c9_301, %c0_302] : memref<26x32xf32, #tpu.memory_space<vmem>>, vector<16x32xf32>
    %c7_303 = arith.constant 7 : index
    %c0_304 = arith.constant 0 : index
    %c0_305 = arith.constant 0 : index
    %460 = vector.load %arg8[%c7_303, %c0_304, %c0_305] : memref<9x32x32xf32, #tpu.memory_space<vmem>>, vector<1x32x32xf32>
    %461 = vector.shape_cast %460 : vector<1x32x32xf32> to vector<32x32xf32>
    %cst_306 = arith.constant dense<0.000000e+00> : vector<16x32xf32>
    %462 = tpu.matmul %459, %461, %cst_306 {dimension_numbers = #tpu.dot_dimension_numbers<[1], [0], [0], [1], [0, 0, 1, 1], [], []>} : vector<16x32xf32>, vector<32x32xf32>, vector<16x32xf32> -> vector<16x32xf32>
    %463 = arith.addf %458, %462 : vector<16x32xf32>
    %c10_307 = arith.constant 10 : index
    %c0_308 = arith.constant 0 : index
    %464 = vector.load %arg18[%c10_307, %c0_308] : memref<26x32xf32, #tpu.memory_space<vmem>>, vector<16x32xf32>
    %c2_i32_309 = arith.constant 2 : i32
    %465 = vector.broadcast %c2_i32_309 : i32 to vector<16x1xi32>
    %466 = arith.cmpi sle, %392, %465 : vector<16x1xi32>
    %cst_310 = arith.constant 0.000000e+00 : f32
    %467 = vector.shape_cast %466 : vector<16x1xi1> to vector<16x1xi1>
    %468 = vector.broadcast %467 : vector<16x1xi1> to vector<16x32xi1>
    %469 = vector.broadcast %cst_310 : f32 to vector<16x32xf32>
    %470 = arith.select %468, %464, %469 : vector<16x32xi1>, vector<16x32xf32>
    %c8_311 = arith.constant 8 : index
    %c0_312 = arith.constant 0 : index
    %c0_313 = arith.constant 0 : index
    %471 = vector.load %arg8[%c8_311, %c0_312, %c0_313] : memref<9x32x32xf32, #tpu.memory_space<vmem>>, vector<1x32x32xf32>
    %472 = vector.shape_cast %471 : vector<1x32x32xf32> to vector<32x32xf32>
    %cst_314 = arith.constant dense<0.000000e+00> : vector<16x32xf32>
    %473 = tpu.matmul %470, %472, %cst_314 {dimension_numbers = #tpu.dot_dimension_numbers<[1], [0], [0], [1], [0, 0, 1, 1], [], []>} : vector<16x32xf32>, vector<32x32xf32>, vector<16x32xf32> -> vector<16x32xf32>
    %474 = arith.addf %463, %473 : vector<16x32xf32>
    %c0_315 = arith.constant 0 : index
    %c0_316 = arith.constant 0 : index
    %475 = vector.load %arg9[%c0_315, %c0_316] : memref<1x32xf32, #tpu.memory_space<vmem>>, vector<1x32xf32>
    %476 = vector.broadcast %475 : vector<1x32xf32> to vector<16x32xf32>
    %477 = arith.addf %474, %476 : vector<16x32xf32>
    %cst_317 = arith.constant 0.000000e+00 : f32
    %478 = vector.broadcast %cst_317 : f32 to vector<16x32xf32>
    %479 = arith.maximumf %477, %478 : vector<16x32xf32>
    %c0_318 = arith.constant 0 : index
    %c0_319 = arith.constant 0 : index
    %480 = vector.load %arg21[%c0_318, %c0_319] : memref<16x32xf32, #tpu.memory_space<vmem>>, vector<16x32xf32>
    tpu.vector_store %arg21[%c0_318, %c0_319], %479 {strides = array<i32>} : memref<16x32xf32, #tpu.memory_space<vmem>>, vector<16x32xf32>,
    %c0_320 = arith.constant 0 : index
    %c0_321 = arith.constant 0 : index
    %481 = tpu.strided_load %arg21[%c0_320, %c0_321] {strides = array<i32: 2, 1>} : memref<16x32xf32, #tpu.memory_space<vmem>>, vector<8x32xf32>
    %c1_322 = arith.constant 1 : index
    %c0_323 = arith.constant 0 : index
    %482 = tpu.strided_load %arg21[%c1_322, %c0_323] {strides = array<i32: 2, 1>} : memref<16x32xf32, #tpu.memory_space<vmem>>, vector<8x32xf32>
    %483 = arith.maximumf %481, %482 : vector<8x32xf32>
    %484 = vector.extract_strided_slice %483 {offsets = [0, 0], sizes = [2, 32], strides = [1, 1]} : vector<8x32xf32> to vector<2x32xf32>
    %485 = vector.extract_strided_slice %483 {offsets = [2, 0], sizes = [2, 32], strides = [1, 1]} : vector<8x32xf32> to vector<2x32xf32>
    %486 = arith.maximumf %484, %485 : vector<2x32xf32>
    %487 = vector.extract_strided_slice %483 {offsets = [4, 0], sizes = [2, 32], strides = [1, 1]} : vector<8x32xf32> to vector<2x32xf32>
    %488 = vector.extract_strided_slice %483 {offsets = [6, 0], sizes = [2, 32], strides = [1, 1]} : vector<8x32xf32> to vector<2x32xf32>
    %489 = arith.maximumf %487, %488 : vector<2x32xf32>
    %490 = tpu.concatenate %486, %489 in 0 : vector<2x32xf32>, vector<2x32xf32> -> vector<4x32xf32>
    %cst_324 = arith.constant 0.000000e+00 : f32
    %491 = vector.broadcast %cst_324 : f32 to vector<1x128xf32>
    %492 = vector.extract_strided_slice %490 {offsets = [0, 0], sizes = [1, 32], strides = [1, 1]} : vector<4x32xf32> to vector<1x32xf32>
    %c0_325 = arith.constant 0 : index
    %c0_326 = arith.constant 0 : index
    %c0_327 = arith.constant 0 : index
    %493 = vector.load %arg10[%c0_325, %c0_326, %c0_327] : memref<4x32x128xf32, #tpu.memory_space<vmem>>, vector<1x32x128xf32>
    %494 = vector.shape_cast %493 : vector<1x32x128xf32> to vector<32x128xf32>
    %cst_328 = arith.constant dense<0.000000e+00> : vector<1x128xf32>
    %495 = tpu.matmul %492, %494, %cst_328 {dimension_numbers = #tpu.dot_dimension_numbers<[1], [0], [0], [1], [0, 0, 1, 1], [], []>} : vector<1x32xf32>, vector<32x128xf32>, vector<1x128xf32> -> vector<1x128xf32>
    %496 = arith.addf %491, %495 : vector<1x128xf32>
    %497 = vector.extract_strided_slice %490 {offsets = [1, 0], sizes = [1, 32], strides = [1, 1]} : vector<4x32xf32> to vector<1x32xf32>
    %c1_329 = arith.constant 1 : index
    %c0_330 = arith.constant 0 : index
    %c0_331 = arith.constant 0 : index
    %498 = vector.load %arg10[%c1_329, %c0_330, %c0_331] : memref<4x32x128xf32, #tpu.memory_space<vmem>>, vector<1x32x128xf32>
    %499 = vector.shape_cast %498 : vector<1x32x128xf32> to vector<32x128xf32>
    %cst_332 = arith.constant dense<0.000000e+00> : vector<1x128xf32>
    %500 = tpu.matmul %497, %499, %cst_332 {dimension_numbers = #tpu.dot_dimension_numbers<[1], [0], [0], [1], [0, 0, 1, 1], [], []>} : vector<1x32xf32>, vector<32x128xf32>, vector<1x128xf32> -> vector<1x128xf32>
    %501 = arith.addf %496, %500 : vector<1x128xf32>
    %502 = vector.extract_strided_slice %490 {offsets = [2, 0], sizes = [1, 32], strides = [1, 1]} : vector<4x32xf32> to vector<1x32xf32>
    %c2_333 = arith.constant 2 : index
    %c0_334 = arith.constant 0 : index
    %c0_335 = arith.constant 0 : index
    %503 = vector.load %arg10[%c2_333, %c0_334, %c0_335] : memref<4x32x128xf32, #tpu.memory_space<vmem>>, vector<1x32x128xf32>
    %504 = vector.shape_cast %503 : vector<1x32x128xf32> to vector<32x128xf32>
    %cst_336 = arith.constant dense<0.000000e+00> : vector<1x128xf32>
    %505 = tpu.matmul %502, %504, %cst_336 {dimension_numbers = #tpu.dot_dimension_numbers<[1], [0], [0], [1], [0, 0, 1, 1], [], []>} : vector<1x32xf32>, vector<32x128xf32>, vector<1x128xf32> -> vector<1x128xf32>
    %506 = arith.addf %501, %505 : vector<1x128xf32>
    %507 = vector.extract_strided_slice %490 {offsets = [3, 0], sizes = [1, 32], strides = [1, 1]} : vector<4x32xf32> to vector<1x32xf32>
    %c3_337 = arith.constant 3 : index
    %c0_338 = arith.constant 0 : index
    %c0_339 = arith.constant 0 : index
    %508 = vector.load %arg10[%c3_337, %c0_338, %c0_339] : memref<4x32x128xf32, #tpu.memory_space<vmem>>, vector<1x32x128xf32>
    %509 = vector.shape_cast %508 : vector<1x32x128xf32> to vector<32x128xf32>
    %cst_340 = arith.constant dense<0.000000e+00> : vector<1x128xf32>
    %510 = tpu.matmul %507, %509, %cst_340 {dimension_numbers = #tpu.dot_dimension_numbers<[1], [0], [0], [1], [0, 0, 1, 1], [], []>} : vector<1x32xf32>, vector<32x128xf32>, vector<1x128xf32> -> vector<1x128xf32>
    %511 = arith.addf %506, %510 : vector<1x128xf32>
    %c0_341 = arith.constant 0 : index
    %c0_342 = arith.constant 0 : index
    %512 = vector.load %arg11[%c0_341, %c0_342] : memref<1x128xf32, #tpu.memory_space<vmem>>, vector<1x128xf32>
    %513 = arith.addf %511, %512 : vector<1x128xf32>
    %cst_343 = arith.constant 0.000000e+00 : f32
    %514 = vector.broadcast %cst_343 : f32 to vector<1x128xf32>
    %515 = arith.maximumf %513, %514 : vector<1x128xf32>
    %c0_344 = arith.constant 0 : index
    %c0_345 = arith.constant 0 : index
    %516 = vector.load %arg12[%c0_344, %c0_345] : memref<128x128xf32, #tpu.memory_space<vmem>>, vector<128x128xf32>
    %cst_346 = arith.constant dense<0.000000e+00> : vector<1x128xf32>
    %517 = tpu.matmul %515, %516, %cst_346 {dimension_numbers = #tpu.dot_dimension_numbers<[1], [0], [0], [1], [0, 0, 1, 1], [], []>} : vector<1x128xf32>, vector<128x128xf32>, vector<1x128xf32> -> vector<1x128xf32>
    %c0_347 = arith.constant 0 : index
    %c0_348 = arith.constant 0 : index
    %518 = vector.load %arg13[%c0_347, %c0_348] : memref<1x128xf32, #tpu.memory_space<vmem>>, vector<1x128xf32>
    %519 = arith.addf %517, %518 : vector<1x128xf32>
    %cst_349 = arith.constant 0.000000e+00 : f32
    %520 = vector.broadcast %cst_349 : f32 to vector<1x128xf32>
    %521 = arith.maximumf %519, %520 : vector<1x128xf32>
    %c0_350 = arith.constant 0 : index
    %c0_351 = arith.constant 0 : index
    %c0_352 = arith.constant 0 : index
    %522 = vector.load %arg14[%c0_350, %c0_351, %c0_352] : memref<1x1x128xf32, #tpu.memory_space<vmem>>, vector<1x1x128xf32>
    %523 = vector.shape_cast %522 : vector<1x1x128xf32> to vector<1x128xf32>
    %524 = vector.shape_cast %521 : vector<1x128xf32> to vector<1x1x128xf32>
    tpu.vector_store %arg14[%c0_350, %c0_351, %c0_352], %524 {strides = array<i32>} : memref<1x1x128xf32, #tpu.memory_space<vmem>>, vector<1x1x128xf32>,
    return
  }
  func.func @transform_0(%arg0: i32) -> (i32, i32, i32) {
    %c0_i32 = arith.constant 0 : i32
    %c0_i32_0 = arith.constant 0 : i32
    %c0_i32_1 = arith.constant 0 : i32
    return %arg0, %c0_i32, %c0_i32_0 : i32, i32, i32
  }
  func.func @transform_1(%arg0: i32) -> (i32, i32, i32) {
    %c0_i32 = arith.constant 0 : i32
    %c0_i32_0 = arith.constant 0 : i32
    %c0_i32_1 = arith.constant 0 : i32
    %c0_i32_2 = arith.constant 0 : i32
    return %c0_i32, %c0_i32_0, %c0_i32_1 : i32, i32, i32
  }
  func.func @transform_2(%arg0: i32) -> (i32, i32) {
    %c0_i32 = arith.constant 0 : i32
    %c0_i32_0 = arith.constant 0 : i32
    %c0_i32_1 = arith.constant 0 : i32
    return %c0_i32, %c0_i32_0 : i32, i32
  }
  func.func @transform_3(%arg0: i32) -> (i32, i32, i32) {
    %c0_i32 = arith.constant 0 : i32
    %c0_i32_0 = arith.constant 0 : i32
    %c0_i32_1 = arith.constant 0 : i32
    %c0_i32_2 = arith.constant 0 : i32
    return %c0_i32, %c0_i32_0, %c0_i32_1 : i32, i32, i32
  }
  func.func @transform_4(%arg0: i32) -> (i32, i32) {
    %c0_i32 = arith.constant 0 : i32
    %c0_i32_0 = arith.constant 0 : i32
    %c0_i32_1 = arith.constant 0 : i32
    return %c0_i32, %c0_i32_0 : i32, i32
  }
  func.func @transform_5(%arg0: i32) -> (i32, i32, i32) {
    %c0_i32 = arith.constant 0 : i32
    %c0_i32_0 = arith.constant 0 : i32
    %c0_i32_1 = arith.constant 0 : i32
    %c0_i32_2 = arith.constant 0 : i32
    return %c0_i32, %c0_i32_0, %c0_i32_1 : i32, i32, i32
  }
  func.func @transform_6(%arg0: i32) -> (i32, i32) {
    %c0_i32 = arith.constant 0 : i32
    %c0_i32_0 = arith.constant 0 : i32
    %c0_i32_1 = arith.constant 0 : i32
    return %c0_i32, %c0_i32_0 : i32, i32
  }
  func.func @transform_7(%arg0: i32) -> (i32, i32, i32) {
    %c0_i32 = arith.constant 0 : i32
    %c0_i32_0 = arith.constant 0 : i32
    %c0_i32_1 = arith.constant 0 : i32
    %c0_i32_2 = arith.constant 0 : i32
    return %c0_i32, %c0_i32_0, %c0_i32_1 : i32, i32, i32
  }
  func.func @transform_8(%arg0: i32) -> (i32, i32) {
    %c0_i32 = arith.constant 0 : i32
    %c0_i32_0 = arith.constant 0 : i32
    %c0_i32_1 = arith.constant 0 : i32
    return %c0_i32, %c0_i32_0 : i32, i32
  }
  func.func @transform_9(%arg0: i32) -> (i32, i32, i32) {
    %c0_i32 = arith.constant 0 : i32
    %c0_i32_0 = arith.constant 0 : i32
    %c0_i32_1 = arith.constant 0 : i32
    %c0_i32_2 = arith.constant 0 : i32
    return %c0_i32, %c0_i32_0, %c0_i32_1 : i32, i32, i32
  }
  func.func @transform_10(%arg0: i32) -> (i32, i32) {
    %c0_i32 = arith.constant 0 : i32
    %c0_i32_0 = arith.constant 0 : i32
    %c0_i32_1 = arith.constant 0 : i32
    return %c0_i32, %c0_i32_0 : i32, i32
  }
  func.func @transform_11(%arg0: i32) -> (i32, i32) {
    %c0_i32 = arith.constant 0 : i32
    %c0_i32_0 = arith.constant 0 : i32
    %c0_i32_1 = arith.constant 0 : i32
    return %c0_i32, %c0_i32_0 : i32, i32
  }
  func.func @transform_12(%arg0: i32) -> (i32, i32) {
    %c0_i32 = arith.constant 0 : i32
    %c0_i32_0 = arith.constant 0 : i32
    %c0_i32_1 = arith.constant 0 : i32
    return %c0_i32, %c0_i32_0 : i32, i32
  }
  func.func @transform_13(%arg0: i32) -> (i32, i32, i32) {
    %c0_i32 = arith.constant 0 : i32
    %c0_i32_0 = arith.constant 0 : i32
    %c0_i32_1 = arith.constant 0 : i32
    return %arg0, %c0_i32, %c0_i32_0 : i32, i32, i32
  }
}

</mosaic_0001>

<llo_original>
// kernel: tpu_custom_call.1
$region0: #{tpu_custom_call.1}
  #allocation0 [shape = 'u32[]', space=smem, size = 0x4, offset = 0x4, fixed_abs, tag = 'smem constant byte address 0x4 - core index']
  #allocation1 [shape = 'u32[72,128]{1,0:T(1,128)}', space=vmem, size = 0x9000, scoped, tag = 'internal scratch']
  #allocation2 [shape = 'f32[290,3]{1,0:T(8,128)}', space=vmem, size = 0x25000, scoped, tag = 'scratch operand']
  #allocation3 [shape = 'f32[82,8]{1,0:T(8,128)}', space=vmem, size = 0xb000, scoped, tag = 'scratch operand']
  #allocation4 [shape = 'f32[26,16]{1,0:T(8,128)}', space=vmem, size = 0x4000, scoped, tag = 'scratch operand']
  #allocation5 [shape = 'f32[26,32]{1,0:T(8,128)}', space=vmem, size = 0x4000, scoped, tag = 'scratch operand']
  #allocation6 [shape = 'f32[256,8]{1,0:T(8,128)}', space=vmem, size = 0x20000, scoped, tag = 'scratch operand']
  #allocation7 [shape = 'f32[64,16]{1,0:T(8,128)}', space=vmem, size = 0x8000, scoped, tag = 'scratch operand']
  #allocation8 [shape = 'f32[16,32]{1,0:T(8,128)}', space=vmem, size = 0x2000, scoped, tag = 'scratch operand']
  %s0 = inlined_call_operand.vmem [shape: f32[2,256,3], index: 0, kind: input, shape index: {}]
  %s1 = inlined_call_operand.vmem [shape: f32[9,3,8], index: 1, kind: input, shape index: {}]
  %s2 = inlined_call_operand.vmem [shape: f32[1,8], index: 2, kind: input, shape index: {}]
  %s3 = inlined_call_operand.hbm [shape: f32[9,8,16], index: 3, kind: input, shape index: {}]
  %s4 = inlined_call_operand.vmem [shape: f32[1,16], index: 4, kind: input, shape index: {}]
  %s5 = inlined_call_operand.vmem [shape: f32[9,16,32], index: 5, kind: input, shape index: {}]
  %s6 = inlined_call_operand.vmem [shape: f32[1,32], index: 6, kind: input, shape index: {}]
  %s7 = inlined_call_operand.vmem [shape: f32[9,32,32], index: 7, kind: input, shape index: {}]
  %s8 = inlined_call_operand.vmem [shape: f32[1,32], index: 8, kind: input, shape index: {}]
  %s9 = inlined_call_operand.vmem [shape: f32[4,32,128], index: 9, kind: input, shape index: {}]
  %s10 = inlined_call_operand.vmem [shape: f32[1,128], index: 10, kind: input, shape index: {}]
  %s11 = inlined_call_operand.hbm [shape: f32[128,128], index: 11, kind: input, shape index: {}]
  %s12 = inlined_call_operand.vmem [shape: f32[1,128], index: 12, kind: input, shape index: {}]
  %s13 = inlined_call_operand.hbm [shape: f32[2,1,128], index: 13, kind: output, shape index: {}]
  %s14 = sld [smem:[#allocation0]]
  $region93: #{tpu_custom_call.1} parent=0
    _
  %s16 = ssub.s32 1, %s14
  %s17 = scalar_select 0, %s16, %s14
  $region1: #{tpu_custom_call.1} parent=0
    #allocation9 [shape = 'u8[36864]{0}', space=vmem, size = 0x9000, scoped, tag = 'input window, operand 3, single buffered']
    #allocation10 [shape = 's32[2]{0}', space=sflag, size = 0x8, scoped, tag = 'scoped memory for tpu_custom_call.1']
    #allocation11 [shape = 's32[2]{0}', space=sflag, size = 0x8, scoped, tag = 'scoped memory for tpu_custom_call.1']
    #allocation12 [shape = 'u8[65536]{0}', space=vmem, size = 0x10000, scoped, tag = 'input window, operand 11, single buffered']
    #allocation13 [shape = 's32[1]{0}', space=sflag, size = 0x4, scoped, tag = 'scoped memory for tpu_custom_call.1']
    #allocation14 [shape = 'u8[1024]{0}', space=vmem, size = 0x400, scoped, tag = 'output window, operand 0']
    %18 = vsyncpa [#allocation10], 0
    %19 = vsyncpa [#allocation13], 0
    %20 = vsyncpa [#allocation11], 0
    %s21 = scalar_lea.sflag [#allocation11], 1
    %22 = vsyncpa %s21, 0
    loop: start=0, step=1, limit=4
    $region2: #{tpu_custom_call.1} parent=1 // loop_pre_header
      _
    $region3: #{tpu_custom_call.1} parent=1 // loop_header
      %s24 = sphi 0, %s28
      %p25 = scmp.ge.s32.totalorder %s24, 4
      %s34 = sphi 0, %s36
      %s37 = sphi 0, %s34
      %s38 = sphi 0, %s37
      %s54 = sphi 0, %s38
      %s58 = sphi 0, %s58
      %s60 = sphi 0, %s58
      %s61 = sphi 0, %s60
      %s75 = sphi 0, %s61
      %s79 = sphi 0, %s79
      %s81 = sphi 0, %s79
      %s82 = sphi 0, %s81
      %s96 = sphi 0, %s82
      %s100 = sphi 0, %s100
      %s102 = sphi 0, %s100
      %s103 = sphi 0, %s102
      %s117 = sphi 0, %s103
      %s121 = sphi 0, %s121
      %s123 = sphi 0, %s121
      %s124 = sphi 0, %s123
      %s138 = sphi 0, %s124
      %s142 = sphi 0, %s142
      %s144 = sphi 0, %s142
      %s145 = sphi 0, %s144
      %s159 = sphi 0, %s145
      %s163 = sphi 0, %s163
      %s165 = sphi 0, %s163
      %s166 = sphi 0, %s165
      %s180 = sphi 0, %s166
      %s184 = sphi 0, %s184
      %s186 = sphi 0, %s184
      %s187 = sphi 0, %s186
      %s201 = sphi 0, %s187
      %s205 = sphi 0, %s205
      %s207 = sphi 0, %s205
      %s208 = sphi 0, %s207
      %s222 = sphi 0, %s208
      %s226 = sphi 0, %s226
      %s228 = sphi 0, %s226
      %s229 = sphi 0, %s228
      %s243 = sphi 0, %s229
      %s247 = sphi 0, %s247
      %s249 = sphi 0, %s247
      %s250 = sphi 0, %s249
      %s264 = sphi 0, %s250
      %s268 = sphi 0, %s268
      %s270 = sphi 0, %s268
      %s271 = sphi 0, %s270
      %s285 = sphi 0, %s271
      %s289 = sphi 0, %s289
      %s291 = sphi 0, %s289
      %s292 = sphi 0, %s291
      %s306 = sphi 0, %s292
      %s312 = sphi 0, %s314
      %s315 = sphi 0, %s312
      %s316 = sphi 0, %s315
      %s332 = sphi 0, %s316
    $region4: #{tpu_custom_call.1} parent=1 // loop_header_branch
      %27 = sbr.rel (%p25) target = $region8
    $region5: #{tpu_custom_call.1} parent=1 // loop_body
      %s29 = ssub.s32 %s24, 1
      %s30 = ssub.s32 %s24, 2
      %s31 = sadd.s32 %s24, 1
      %s32 = ssub.s32 %s24, %s31
      %p33 = scmp.eq.s32.totalorder %s32, 0
      %s35 = sadd.s32 %s34, 1
      %s36 = scalar_select %p33, %s34, %s35
      %p39 = pneg %p33
      %p40 = scmp.eq.s32.totalorder %s24, 1
      %p41 = por %p39, %p40
      %p42 = scmp.ne.s32.totalorder %s34, %s37
      %p43 = scmp.eq.s32.totalorder %s24, 0
      %p44 = por %p42, %p43
      %p45 = scmp.ne.s32.totalorder %s34, %s37
      %p46 = scmp.eq.s32.totalorder %s29, 1
      %p47 = por %p45, %p46
      %p48 = scmp.ne.s32.totalorder %s37, %s38
      %p49 = scmp.eq.s32.totalorder %s29, 0
      %p50 = por %p48, %p49
      %p51 = scmp.ne.s32.totalorder %s37, %s38
      %p52 = scmp.eq.s32.totalorder %s30, 1
      %p53 = por %p51, %p52
      %p55 = scmp.ne.s32.totalorder %s38, %s54
      %p56 = scmp.eq.s32.totalorder %s30, 0
      %p57 = por %p55, %p56
      %s59 = sadd.s32 %s58, 1
      %p62 = scmp.eq.s32.totalorder %s24, 1
      %p63 = scmp.ne.s32.totalorder %s58, %s60
      %p64 = scmp.eq.s32.totalorder %s24, 0
      %p65 = por %p63, %p64
      %p66 = scmp.ne.s32.totalorder %s58, %s60
      %p67 = scmp.eq.s32.totalorder %s29, 1
      %p68 = por %p66, %p67
      %p69 = scmp.ne.s32.totalorder %s60, %s61
      %p70 = scmp.eq.s32.totalorder %s29, 0
      %p71 = por %p69, %p70
      %p72 = scmp.ne.s32.totalorder %s60, %s61
      %p73 = scmp.eq.s32.totalorder %s30, 1
      %p74 = por %p72, %p73
      %p76 = scmp.ne.s32.totalorder %s61, %s75
      %p77 = scmp.eq.s32.totalorder %s30, 0
      %p78 = por %p76, %p77
      %s80 = sadd.s32 %s79, 1
      %p83 = scmp.eq.s32.totalorder %s24, 1
      %p84 = scmp.ne.s32.totalorder %s79, %s81
      %p85 = scmp.eq.s32.totalorder %s24, 0
      %p86 = por %p84, %p85
      %p87 = scmp.ne.s32.totalorder %s79, %s81
      %p88 = scmp.eq.s32.totalorder %s29, 1
      %p89 = por %p87, %p88
      %p90 = scmp.ne.s32.totalorder %s81, %s82
      %p91 = scmp.eq.s32.totalorder %s29, 0
      %p92 = por %p90, %p91
      %p93 = scmp.ne.s32.totalorder %s81, %s82
      %p94 = scmp.eq.s32.totalorder %s30, 1
      %p95 = por %p93, %p94
      %p97 = scmp.ne.s32.totalorder %s82, %s96
      %p98 = scmp.eq.s32.totalorder %s30, 0
      %p99 = por %p97, %p98
      %s101 = sadd.s32 %s100, 1
      %p104 = scmp.eq.s32.totalorder %s24, 1
      %p105 = scmp.ne.s32.totalorder %s100, %s102
      %p106 = scmp.eq.s32.totalorder %s24, 0
      %p107 = por %p105, %p106
      %p108 = scmp.ne.s32.totalorder %s100, %s102
      %p109 = scmp.eq.s32.totalorder %s29, 1
      %p110 = por %p108, %p109
      %p111 = scmp.ne.s32.totalorder %s102, %s103
      %p112 = scmp.eq.s32.totalorder %s29, 0
      %p113 = por %p111, %p112
      %p114 = scmp.ne.s32.totalorder %s102, %s103
      %p115 = scmp.eq.s32.totalorder %s30, 1
      %p116 = por %p114, %p115
      %p118 = scmp.ne.s32.totalorder %s103, %s117
      %p119 = scmp.eq.s32.totalorder %s30, 0
      %p120 = por %p118, %p119
      %s122 = sadd.s32 %s121, 1
      %p125 = scmp.eq.s32.totalorder %s24, 1
      %p126 = scmp.ne.s32.totalorder %s121, %s123
      %p127 = scmp.eq.s32.totalorder %s24, 0
      %p128 = por %p126, %p127
      %p129 = scmp.ne.s32.totalorder %s121, %s123
      %p130 = scmp.eq.s32.totalorder %s29, 1
      %p131 = por %p129, %p130
      %p132 = scmp.ne.s32.totalorder %s123, %s124
      %p133 = scmp.eq.s32.totalorder %s29, 0
      %p134 = por %p132, %p133
      %p135 = scmp.ne.s32.totalorder %s123, %s124
      %p136 = scmp.eq.s32.totalorder %s30, 1
      %p137 = por %p135, %p136
      %p139 = scmp.ne.s32.totalorder %s124, %s138
      %p140 = scmp.eq.s32.totalorder %s30, 0
      %p141 = por %p139, %p140
      %s143 = sadd.s32 %s142, 1
      %p146 = scmp.eq.s32.totalorder %s24, 1
      %p147 = scmp.ne.s32.totalorder %s142, %s144
      %p148 = scmp.eq.s32.totalorder %s24, 0
      %p149 = por %p147, %p148
      %p150 = scmp.ne.s32.totalorder %s142, %s144
      %p151 = scmp.eq.s32.totalorder %s29, 1
      %p152 = por %p150, %p151
      %p153 = scmp.ne.s32.totalorder %s144, %s145
      %p154 = scmp.eq.s32.totalorder %s29, 0
      %p155 = por %p153, %p154
      %p156 = scmp.ne.s32.totalorder %s144, %s145
      %p157 = scmp.eq.s32.totalorder %s30, 1
      %p158 = por %p156, %p157
      %p160 = scmp.ne.s32.totalorder %s145, %s159
      %p161 = scmp.eq.s32.totalorder %s30, 0
      %p162 = por %p160, %p161
      %s164 = sadd.s32 %s163, 1
      %p167 = scmp.eq.s32.totalorder %s24, 1
      %p168 = scmp.ne.s32.totalorder %s163, %s165
      %p169 = scmp.eq.s32.totalorder %s24, 0
      %p170 = por %p168, %p169
      %p171 = scmp.ne.s32.totalorder %s163, %s165
      %p172 = scmp.eq.s32.totalorder %s29, 1
      %p173 = por %p171, %p172
      %p174 = scmp.ne.s32.totalorder %s165, %s166
      %p175 = scmp.eq.s32.totalorder %s29, 0
      %p176 = por %p174, %p175
      %p177 = scmp.ne.s32.totalorder %s165, %s166
      %p178 = scmp.eq.s32.totalorder %s30, 1
      %p179 = por %p177, %p178
      %p181 = scmp.ne.s32.totalorder %s166, %s180
      %p182 = scmp.eq.s32.totalorder %s30, 0
      %p183 = por %p181, %p182
      %s185 = sadd.s32 %s184, 1
      %p188 = scmp.eq.s32.totalorder %s24, 1
      %p189 = scmp.ne.s32.totalorder %s184, %s186
      %p190 = scmp.eq.s32.totalorder %s24, 0
      %p191 = por %p189, %p190
      %p192 = scmp.ne.s32.totalorder %s184, %s186
      %p193 = scmp.eq.s32.totalorder %s29, 1
      %p194 = por %p192, %p193
      %p195 = scmp.ne.s32.totalorder %s186, %s187
      %p196 = scmp.eq.s32.totalorder %s29, 0
      %p197 = por %p195, %p196
      %p198 = scmp.ne.s32.totalorder %s186, %s187
      %p199 = scmp.eq.s32.totalorder %s30, 1
      %p200 = por %p198, %p199
      %p202 = scmp.ne.s32.totalorder %s187, %s201
      %p203 = scmp.eq.s32.totalorder %s30, 0
      %p204 = por %p202, %p203
      %s206 = sadd.s32 %s205, 1
      %p209 = scmp.eq.s32.totalorder %s24, 1
      %p210 = scmp.ne.s32.totalorder %s205, %s207
      %p211 = scmp.eq.s32.totalorder %s24, 0
      %p212 = por %p210, %p211
      %p213 = scmp.ne.s32.totalorder %s205, %s207
      %p214 = scmp.eq.s32.totalorder %s29, 1
      %p215 = por %p213, %p214
      %p216 = scmp.ne.s32.totalorder %s207, %s208
      %p217 = scmp.eq.s32.totalorder %s29, 0
      %p218 = por %p216, %p217
      %p219 = scmp.ne.s32.totalorder %s207, %s208
      %p220 = scmp.eq.s32.totalorder %s30, 1
      %p221 = por %p219, %p220
      %p223 = scmp.ne.s32.totalorder %s208, %s222
      %p224 = scmp.eq.s32.totalorder %s30, 0
      %p225 = por %p223, %p224
      %s227 = sadd.s32 %s226, 1
      %p230 = scmp.eq.s32.totalorder %s24, 1
      %p231 = scmp.ne.s32.totalorder %s226, %s228
      %p232 = scmp.eq.s32.totalorder %s24, 0
      %p233 = por %p231, %p232
      %p234 = scmp.ne.s32.totalorder %s226, %s228
      %p235 = scmp.eq.s32.totalorder %s29, 1
      %p236 = por %p234, %p235
      %p237 = scmp.ne.s32.totalorder %s228, %s229
      %p238 = scmp.eq.s32.totalorder %s29, 0
      %p239 = por %p237, %p238
      %p240 = scmp.ne.s32.totalorder %s228, %s229
      %p241 = scmp.eq.s32.totalorder %s30, 1
      %p242 = por %p240, %p241
      %p244 = scmp.ne.s32.totalorder %s229, %s243
      %p245 = scmp.eq.s32.totalorder %s30, 0
      %p246 = por %p244, %p245
      %s248 = sadd.s32 %s247, 1
      %p251 = scmp.eq.s32.totalorder %s24, 1
      %p252 = scmp.ne.s32.totalorder %s247, %s249
      %p253 = scmp.eq.s32.totalorder %s24, 0
      %p254 = por %p252, %p253
      %p255 = scmp.ne.s32.totalorder %s247, %s249
      %p256 = scmp.eq.s32.totalorder %s29, 1
      %p257 = por %p255, %p256
      %p258 = scmp.ne.s32.totalorder %s249, %s250
      %p259 = scmp.eq.s32.totalorder %s29, 0
      %p260 = por %p258, %p259
      %p261 = scmp.ne.s32.totalorder %s249, %s250
      %p262 = scmp.eq.s32.totalorder %s30, 1
      %p263 = por %p261, %p262
      %p265 = scmp.ne.s32.totalorder %s250, %s264
      %p266 = scmp.eq.s32.totalorder %s30, 0
      %p267 = por %p265, %p266
      %s269 = sadd.s32 %s268, 1
      %p272 = scmp.eq.s32.totalorder %s24, 1
      %p273 = scmp.ne.s32.totalorder %s268, %s270
      %p274 = scmp.eq.s32.totalorder %s24, 0
      %p275 = por %p273, %p274
      %p276 = scmp.ne.s32.totalorder %s268, %s270
      %p277 = scmp.eq.s32.totalorder %s29, 1
      %p278 = por %p276, %p277
      %p279 = scmp.ne.s32.totalorder %s270, %s271
      %p280 = scmp.eq.s32.totalorder %s29, 0
      %p281 = por %p279, %p280
      %p282 = scmp.ne.s32.totalorder %s270, %s271
      %p283 = scmp.eq.s32.totalorder %s30, 1
      %p284 = por %p282, %p283
      %p286 = scmp.ne.s32.totalorder %s271, %s285
      %p287 = scmp.eq.s32.totalorder %s30, 0
      %p288 = por %p286, %p287
      %s290 = sadd.s32 %s289, 1
      %p293 = scmp.eq.s32.totalorder %s24, 1
      %p294 = scmp.ne.s32.totalorder %s289, %s291
      %p295 = scmp.eq.s32.totalorder %s24, 0
      %p296 = por %p294, %p295
      %p297 = scmp.ne.s32.totalorder %s289, %s291
      %p298 = scmp.eq.s32.totalorder %s29, 1
      %p299 = por %p297, %p298
      %p300 = scmp.ne.s32.totalorder %s291, %s292
      %p301 = scmp.eq.s32.totalorder %s29, 0
      %p302 = por %p300, %p301
      %p303 = scmp.ne.s32.totalorder %s291, %s292
      %p304 = scmp.eq.s32.totalorder %s30, 1
      %p305 = por %p303, %p304
      %p307 = scmp.ne.s32.totalorder %s292, %s306
      %p308 = scmp.eq.s32.totalorder %s30, 0
      %p309 = por %p307, %p308
      %s310 = ssub.s32 %s24, %s31
      %p311 = scmp.eq.s32.totalorder %s310, 0
      %s313 = sadd.s32 %s312, 1
      %s314 = scalar_select %p311, %s312, %s313
      %p317 = pneg %p311
      %p318 = scmp.eq.s32.totalorder %s24, 1
      %p319 = por %p317, %p318
      %p320 = scmp.ne.s32.totalorder %s312, %s315
      %p321 = scmp.eq.s32.totalorder %s24, 0
      %p322 = por %p320, %p321
      %p323 = scmp.ne.s32.totalorder %s312, %s315
      %p324 = scmp.eq.s32.totalorder %s29, 1
      %p325 = por %p323, %p324
      %p326 = scmp.ne.s32.totalorder %s315, %s316
      %p327 = scmp.eq.s32.totalorder %s29, 0
      %p328 = por %p326, %p327
      %p329 = scmp.ne.s32.totalorder %s315, %s316
      %p330 = scmp.eq.s32.totalorder %s30, 1
      %p331 = por %p329, %p330
      %p333 = scmp.ne.s32.totalorder %s316, %s332
      %p334 = scmp.eq.s32.totalorder %s30, 0
      %p335 = por %p333, %p334
      %p336 = scmp.le.s32.totalorder 1, %s24
      %p337 = scmp.lt.s32.totalorder %s24, 3
      %p338 = pnand %p336, %p337
      %p339 = pneg %p338
      // Predicated region
      $region9: #{tpu_custom_call.1} parent=5 // pred_check
        _
      $region10: #{tpu_custom_call.1} parent=5 // pred_check_branch
        %341 = sbr.rel (%p338) target = $region12
      $region11: #{tpu_custom_call.1} parent=5 // pred_region
        %s342 = ssub.s32 %s24, 1
        // Predicated region
        $region13: #{tpu_custom_call.1} parent=11 // pred_check
          %p343 = pneg %p71
        $region14: #{tpu_custom_call.1} parent=11 // pred_check_branch
          %345 = sbr.rel (%p343) target = $region16
        $region15: #{tpu_custom_call.1} parent=11 // pred_region
          _
        $region16: #{tpu_custom_call.1} parent=11 // pred_fallthru
          _
        // Predicated region
        $region17: #{tpu_custom_call.1} parent=11 // pred_check
          %p346 = pneg %p92
        $region18: #{tpu_custom_call.1} parent=11 // pred_check_branch
          %348 = sbr.rel (%p346) target = $region20
        $region19: #{tpu_custom_call.1} parent=11 // pred_region
          _
        $region20: #{tpu_custom_call.1} parent=11 // pred_fallthru
          _
        // Predicated region
        $region21: #{tpu_custom_call.1} parent=11 // pred_check
          %p349 = pneg %p113
        $region22: #{tpu_custom_call.1} parent=11 // pred_check_branch
          %351 = sbr.rel (%p349) target = $region24
        $region23: #{tpu_custom_call.1} parent=11 // pred_region
          %353 = vsyncadd [#allocation10], 0
          %s354 = sshll.u32 %s3, 4
          %s355 = int_to_ptr.hbm [resolvable:$true] %s354
          %s356 = sshll.u32 [#allocation9], 4
          %s357 = int_to_ptr.vmem [resolvable:$true] %s356
          %362 = dma.hbm_to_vmem [thread:$0]  %s355, 1152, %s357, [#allocation10], 128, 128, 8
        $region24: #{tpu_custom_call.1} parent=11 // pred_fallthru
          _
        // Predicated region
        $region25: #{tpu_custom_call.1} parent=11 // pred_check
          %p363 = pneg %p134
        $region26: #{tpu_custom_call.1} parent=11 // pred_check_branch
          %365 = sbr.rel (%p363) target = $region28
        $region27: #{tpu_custom_call.1} parent=11 // pred_region
          _
        $region28: #{tpu_custom_call.1} parent=11 // pred_fallthru
          _
        // Predicated region
        $region29: #{tpu_custom_call.1} parent=11 // pred_check
          %p366 = pneg %p155
        $region30: #{tpu_custom_call.1} parent=11 // pred_check_branch
          %368 = sbr.rel (%p366) target = $region32
        $region31: #{tpu_custom_call.1} parent=11 // pred_region
          _
        $region32: #{tpu_custom_call.1} parent=11 // pred_fallthru
          _
        // Predicated region
        $region33: #{tpu_custom_call.1} parent=11 // pred_check
          %p369 = pneg %p176
        $region34: #{tpu_custom_call.1} parent=11 // pred_check_branch
          %371 = sbr.rel (%p369) target = $region36
        $region35: #{tpu_custom_call.1} parent=11 // pred_region
          _
        $region36: #{tpu_custom_call.1} parent=11 // pred_fallthru
          _
        // Predicated region
        $region37: #{tpu_custom_call.1} parent=11 // pred_check
          %p372 = pneg %p197
        $region38: #{tpu_custom_call.1} parent=11 // pred_check_branch
          %374 = sbr.rel (%p372) target = $region40
        $region39: #{tpu_custom_call.1} parent=11 // pred_region
          _
        $region40: #{tpu_custom_call.1} parent=11 // pred_fallthru
          _
        // Predicated region
        $region41: #{tpu_custom_call.1} parent=11 // pred_check
          %p375 = pneg %p218
        $region42: #{tpu_custom_call.1} parent=11 // pred_check_branch
          %377 = sbr.rel (%p375) target = $region44
        $region43: #{tpu_custom_call.1} parent=11 // pred_region
          _
        $region44: #{tpu_custom_call.1} parent=11 // pred_fallthru
          _
        // Predicated region
        $region45: #{tpu_custom_call.1} parent=11 // pred_check
          %p378 = pneg %p239
        $region46: #{tpu_custom_call.1} parent=11 // pred_check_branch
          %380 = sbr.rel (%p378) target = $region48
        $region47: #{tpu_custom_call.1} parent=11 // pred_region
          _
        $region48: #{tpu_custom_call.1} parent=11 // pred_fallthru
          _
        // Predicated region
        $region49: #{tpu_custom_call.1} parent=11 // pred_check
          %p381 = pneg %p260
        $region50: #{tpu_custom_call.1} parent=11 // pred_check_branch
          %383 = sbr.rel (%p381) target = $region52
        $region51: #{tpu_custom_call.1} parent=11 // pred_region
          _
        $region52: #{tpu_custom_call.1} parent=11 // pred_fallthru
          _
        // Predicated region
        $region53: #{tpu_custom_call.1} parent=11 // pred_check
          %p384 = pneg %p281
        $region54: #{tpu_custom_call.1} parent=11 // pred_check_branch
          %386 = sbr.rel (%p384) target = $region56
        $region55: #{tpu_custom_call.1} parent=11 // pred_region
          %388 = vsyncadd [#allocation13], 0
          %s389 = sshll.u32 %s11, 4
          %s390 = int_to_ptr.hbm [resolvable:$true] %s389
          %s391 = sshll.u32 [#allocation12], 4
          %s392 = int_to_ptr.vmem [resolvable:$true] %s391
          %397 = dma.hbm_to_vmem [thread:$0]  %s390, 2048, %s392, [#allocation13], 128, 128, 8
        $region56: #{tpu_custom_call.1} parent=11 // pred_fallthru
          _
        // Predicated region
        $region57: #{tpu_custom_call.1} parent=11 // pred_check
          %p398 = pneg %p302
        $region58: #{tpu_custom_call.1} parent=11 // pred_check_branch
          %400 = sbr.rel (%p398) target = $region60
        $region59: #{tpu_custom_call.1} parent=11 // pred_region
          _
        $region60: #{tpu_custom_call.1} parent=11 // pred_fallthru
          _
      $region12: #{tpu_custom_call.1} parent=5 // pred_fallthru
        _
      %p401 = scmp.lt.s32.totalorder %s24, 2
      // Predicated region
      $region61: #{tpu_custom_call.1} parent=5 // pred_check
        %p402 = pneg %p401
      $region62: #{tpu_custom_call.1} parent=5 // pred_check_branch
        %404 = sbr.rel (%p402) target = $region64
      $region63: #{tpu_custom_call.1} parent=5 // pred_region
        // Predicated region
        $region65: #{tpu_custom_call.1} parent=63 // pred_check
          %p405 = pneg %p44
        $region66: #{tpu_custom_call.1} parent=63 // pred_check_branch
          %407 = sbr.rel (%p405) target = $region68
        $region67: #{tpu_custom_call.1} parent=63 // pred_region
          %p408 = scmp.lt.s32.totalorder %s24, 1
          %s409 = scalar_select %p408, %s24, 1
          %s410 = smul.addr %s409, 32
          %s411 = smul.addr %s410, 8
          %s412 = scalar_lea.vmem %s0, %s411
        $region68: #{tpu_custom_call.1} parent=63 // pred_fallthru
          _
      $region64: #{tpu_custom_call.1} parent=5 // pred_fallthru
        _
      %p413 = scmp.le.s32.totalorder 1, %s24
      %p414 = scmp.lt.s32.totalorder %s24, 3
      %p415 = pnand %p413, %p414
      %p416 = pneg %p415
      // Predicated region
      $region69: #{tpu_custom_call.1} parent=5 // pred_check
        _
      $region70: #{tpu_custom_call.1} parent=5 // pred_check_branch
        %418 = sbr.rel (%p415) target = $region72
      $region71: #{tpu_custom_call.1} parent=5 // pred_region
        %s419 = ssub.s32 %s24, 1
        // Predicated region
        $region73: #{tpu_custom_call.1} parent=71 // pred_check
          %p420 = pneg %p113
        $region74: #{tpu_custom_call.1} parent=71 // pred_check_branch
          %422 = sbr.rel (%p420) target = $region76
        $region75: #{tpu_custom_call.1} parent=71 // pred_region
          %424 = dma.done [#allocation10], 1152
        $region76: #{tpu_custom_call.1} parent=71 // pred_fallthru
          _
        // Predicated region
        $region77: #{tpu_custom_call.1} parent=71 // pred_check
          %p425 = pneg %p281
        $region78: #{tpu_custom_call.1} parent=71 // pred_check_branch
          %427 = sbr.rel (%p425) target = $region80
        $region79: #{tpu_custom_call.1} parent=71 // pred_region
          %429 = dma.done [#allocation13], 2048
        $region80: #{tpu_custom_call.1} parent=71 // pred_fallthru
          _
        %p430 = scmp.lt.s32.totalorder %s29, 1
        %s431 = scalar_select %p430, %s29, 1
        %s432 = smul.addr %s431, 32
        %s433 = smul.addr %s432, 8
        %s434 = scalar_lea.vmem %s0, %s433
        %p435 = pneg %p50
        %p436 = pneg %p47
        %p437 = pneg %p71
        %p438 = pneg %p68
        %p439 = pneg %p92
        %p440 = pneg %p89
        %p441 = pneg %p113
        %p442 = pneg %p110
        %p443 = pneg %p134
        %p444 = pneg %p131
        %p445 = pneg %p155
        %p446 = pneg %p152
        %p447 = pneg %p176
        %p448 = pneg %p173
        %p449 = pneg %p197
        %p450 = pneg %p194
        %p451 = pneg %p218
        %p452 = pneg %p215
        %p453 = pneg %p239
        %p454 = pneg %p236
        %p455 = pneg %p260
        %p456 = pneg %p257
        %p457 = pneg %p281
        %p458 = pneg %p278
        %p459 = pneg %p302
        %p460 = pneg %p299
        %p461 = pneg %p328
        %p462 = pneg %p325
        %s463 = sand.u32 %s315, 1
        %s464 = scalar_lea.sflag [#allocation11], %s463
        %s465 = sand.u32 %s315, 1
        %s466 = scalar_lea.vmem [#allocation14], %s465
        %p467 = scmp.lt.s32.totalorder %s29, 1
        %s468 = scalar_select %p467, %s29, 1
        %s469 = smul.addr %s468, 32
        %s470 = smul.addr %s469, 8
        %s471 = scalar_lea.vmem %s0, %s470
        %v472 = vld [vmem:[%s471] sm:$0xff]
        %v473 = vld [vmem:[%s471 + $0x8] sm:$0xff]
        %v474 = vld [vmem:[%s471 + $0x10] sm:$0xff]
        %v475 = vld [vmem:[%s471 + $0x18] sm:$0xff]
        %v476 = vld [vmem:[%s471 + $0x20] sm:$0xff]
        %v477 = vld [vmem:[%s471 + $0x28] sm:$0xff]
        %v478 = vld [vmem:[%s471 + $0x30] sm:$0xff]
        %v479 = vld [vmem:[%s471 + $0x38] sm:$0xff]
        %v480 = vld [vmem:[%s471 + $0x40] sm:$0xff]
        %v481 = vld [vmem:[%s471 + $0x48] sm:$0xff]
        %v482 = vld [vmem:[%s471 + $0x50] sm:$0xff]
        %v483 = vld [vmem:[%s471 + $0x58] sm:$0xff]
        %v484 = vld [vmem:[%s471 + $0x60] sm:$0xff]
        %v485 = vld [vmem:[%s471 + $0x68] sm:$0xff]
        %v486 = vld [vmem:[%s471 + $0x70] sm:$0xff]
        %v487 = vld [vmem:[%s471 + $0x78] sm:$0xff]
        %v488 = vld [vmem:[%s471 + $0x80] sm:$0xff]
        %v489 = vld [vmem:[%s471 + $0x88] sm:$0xff]
        %v490 = vld [vmem:[%s471 + $0x90] sm:$0xff]
        %v491 = vld [vmem:[%s471 + $0x98] sm:$0xff]
        %v492 = vld [vmem:[%s471 + $0xa0] sm:$0xff]
        %v493 = vld [vmem:[%s471 + $0xa8] sm:$0xff]
        %v494 = vld [vmem:[%s471 + $0xb0] sm:$0xff]
        %v495 = vld [vmem:[%s471 + $0xb8] sm:$0xff]
        %v496 = vld [vmem:[%s471 + $0xc0] sm:$0xff]
        %v497 = vld [vmem:[%s471 + $0xc8] sm:$0xff]
        %v498 = vld [vmem:[%s471 + $0xd0] sm:$0xff]
        %v499 = vld [vmem:[%s471 + $0xd8] sm:$0xff]
        %v500 = vld [vmem:[%s471 + $0xe0] sm:$0xff]
        %v501 = vld [vmem:[%s471 + $0xe8] sm:$0xff]
        %v502 = vld [vmem:[%s471 + $0xf0] sm:$0xff]
        %v503 = vld [vmem:[%s471 + $0xf8] sm:$0xff]
        %vm504 = vcmask 23552
        %505 = vst.msk [vmem:[#allocation2] sm:$0xff] %vm504, 0.0
        %506 = vst.msk [vmem:[#allocation2 + $0x8] sm:$0xff] %vm504, 0.0
        %vm507 = vcmask 16384
        %508 = vst.msk [vmem:[#allocation2 + $0x10] sm:$0x1] %vm507, 0.0
        %509 = vst.msk [vmem:[#allocation2 + $0x111] sm:$0xff] %vm504, 0.0
        %510 = vst.msk [vmem:[#allocation2 + $0x119] sm:$0xff] %vm504, 0.0
        %511 = vst.msk [vmem:[#allocation2 + $0x121] sm:$0x1] %vm507, 0.0
        %512 = vst.msk [vmem:[#allocation2 + $0x11] sm:$0xff] %vm504, %v472
        %513 = vst.msk [vmem:[#allocation2 + $0x19] sm:$0xff] %vm504, %v473
        %514 = vst.msk [vmem:[#allocation2 + $0x21] sm:$0xff] %vm504, %v474
        %515 = vst.msk [vmem:[#allocation2 + $0x29] sm:$0xff] %vm504, %v475
        %516 = vst.msk [vmem:[#allocation2 + $0x31] sm:$0xff] %vm504, %v476
        %517 = vst.msk [vmem:[#allocation2 + $0x39] sm:$0xff] %vm504, %v477
        %518 = vst.msk [vmem:[#allocation2 + $0x41] sm:$0xff] %vm504, %v478
        %519 = vst.msk [vmem:[#allocation2 + $0x49] sm:$0xff] %vm504, %v479
        %520 = vst.msk [vmem:[#allocation2 + $0x51] sm:$0xff] %vm504, %v480
        %521 = vst.msk [vmem:[#allocation2 + $0x59] sm:$0xff] %vm504, %v481
        %522 = vst.msk [vmem:[#allocation2 + $0x61] sm:$0xff] %vm504, %v482
        %523 = vst.msk [vmem:[#allocation2 + $0x69] sm:$0xff] %vm504, %v483
        %524 = vst.msk [vmem:[#allocation2 + $0x71] sm:$0xff] %vm504, %v484
        %525 = vst.msk [vmem:[#allocation2 + $0x79] sm:$0xff] %vm504, %v485
        %526 = vst.msk [vmem:[#allocation2 + $0x81] sm:$0xff] %vm504, %v486
        %527 = vst.msk [vmem:[#allocation2 + $0x89] sm:$0xff] %vm504, %v487
        %528 = vst.msk [vmem:[#allocation2 + $0x91] sm:$0xff] %vm504, %v488
        %529 = vst.msk [vmem:[#allocation2 + $0x99] sm:$0xff] %vm504, %v489
        %530 = vst.msk [vmem:[#allocation2 + $0xa1] sm:$0xff] %vm504, %v490
        %531 = vst.msk [vmem:[#allocation2 + $0xa9] sm:$0xff] %vm504, %v491
        %532 = vst.msk [vmem:[#allocation2 + $0xb1] sm:$0xff] %vm504, %v492
        %533 = vst.msk [vmem:[#allocation2 + $0xb9] sm:$0xff] %vm504, %v493
        %534 = vst.msk [vmem:[#allocation2 + $0xc1] sm:$0xff] %vm504, %v494
        %535 = vst.msk [vmem:[#allocation2 + $0xc9] sm:$0xff] %vm504, %v495
        %536 = vst.msk [vmem:[#allocation2 + $0xd1] sm:$0xff] %vm504, %v496
        %537 = vst.msk [vmem:[#allocation2 + $0xd9] sm:$0xff] %vm504, %v497
        %538 = vst.msk [vmem:[#allocation2 + $0xe1] sm:$0xff] %vm504, %v498
        %539 = vst.msk [vmem:[#allocation2 + $0xe9] sm:$0xff] %vm504, %v499
        %540 = vst.msk [vmem:[#allocation2 + $0xf1] sm:$0xff] %vm504, %v500
        %541 = vst.msk [vmem:[#allocation2 + $0xf9] sm:$0xff] %vm504, %v501
        %542 = vst.msk [vmem:[#allocation2 + $0x101] sm:$0xff] %vm504, %v502
        %543 = vst.msk [vmem:[#allocation2 + $0x109] sm:$0xff] %vm504, %v503
        %v544 = vlaneseq
        %v545 = vshrl.u32 %v544, 7
        %v546 = vadd.s32 %v545, 8
        %v547 = vadd.s32 %v545, 16
        %v548 = vadd.s32 %v545, 24
        %v549 = vadd.s32 %v545, 32
        %v550 = vadd.s32 %v545, 40
        %v551 = vadd.s32 %v545, 48
        %v552 = vadd.s32 %v545, 56
        %v553 = vadd.s32 %v545, 64
        %v554 = vadd.s32 %v545, 72
        %v555 = vadd.s32 %v545, 80
        %v556 = vadd.s32 %v545, 88
        %v557 = vadd.s32 %v545, 96
        %v558 = vadd.s32 %v545, 104
        %v559 = vadd.s32 %v545, 112
        %v560 = vadd.s32 %v545, 120
        %v561 = vadd.s32 %v545, 128
        %v562 = vadd.s32 %v545, 136
        %v563 = vadd.s32 %v545, 144
        %v564 = vadd.s32 %v545, 152
        %v565 = vadd.s32 %v545, 160
        %v566 = vadd.s32 %v545, 168
        %v567 = vadd.s32 %v545, 176
        %v568 = vadd.s32 %v545, 184
        %v569 = vadd.s32 %v545, 192
        %v570 = vadd.s32 %v545, 200
        %v571 = vadd.s32 %v545, 208
        %v572 = vadd.s32 %v545, 216
        %v573 = vadd.s32 %v545, 224
        %v574 = vadd.s32 %v545, 232
        %v575 = vadd.s32 %v545, 240
        %v576 = vadd.s32 %v545, 248
        %vm577 = vcmp.lt.s32.totalorder %v545, 0
        %v578 = vsub.s32 0, %v545
        %v579 = vsel %vm577, %v578, %v545
        %v580 = vshrl.u32 %v579, 4
        %v581 = vand.u32 %v579, 15
        %v582 = vsub.s32 0, %v581
        %v583 = vsel %vm577, %v582, %v581
        %vm584 = vcmp.lt.s32.totalorder %v546, 0
        %v585 = vsub.s32 0, %v546
        %v586 = vsel %vm584, %v585, %v546
        %v587 = vshrl.u32 %v586, 4
        %v588 = vand.u32 %v586, 15
        %v589 = vsub.s32 0, %v588
        %v590 = vsel %vm584, %v589, %v588
        %vm591 = vcmp.lt.s32.totalorder %v547, 0
        %v592 = vsub.s32 0, %v547
        %v593 = vsel %vm591, %v592, %v547
        %v594 = vshrl.u32 %v593, 4
        %v595 = vand.u32 %v593, 15
        %v596 = vsub.s32 0, %v595
        %v597 = vsel %vm591, %v596, %v595
        %vm598 = vcmp.lt.s32.totalorder %v548, 0
        %v599 = vsub.s32 0, %v548
        %v600 = vsel %vm598, %v599, %v548
        %v601 = vshrl.u32 %v600, 4
        %v602 = vand.u32 %v600, 15
        %v603 = vsub.s32 0, %v602
        %v604 = vsel %vm598, %v603, %v602
        %vm605 = vcmp.lt.s32.totalorder %v549, 0
        %v606 = vsub.s32 0, %v549
        %v607 = vsel %vm605, %v606, %v549
        %v608 = vshrl.u32 %v607, 4
        %v609 = vand.u32 %v607, 15
        %v610 = vsub.s32 0, %v609
        %v611 = vsel %vm605, %v610, %v609
        %vm612 = vcmp.lt.s32.totalorder %v550, 0
        %v613 = vsub.s32 0, %v550
        %v614 = vsel %vm612, %v613, %v550
        %v615 = vshrl.u32 %v614, 4
        %v616 = vand.u32 %v614, 15
        %v617 = vsub.s32 0, %v616
        %v618 = vsel %vm612, %v617, %v616
        %vm619 = vcmp.lt.s32.totalorder %v551, 0
        %v620 = vsub.s32 0, %v551
        %v621 = vsel %vm619, %v620, %v551
        %v622 = vshrl.u32 %v621, 4
        %v623 = vand.u32 %v621, 15
        %v624 = vsub.s32 0, %v623
        %v625 = vsel %vm619, %v624, %v623
        %vm626 = vcmp.lt.s32.totalorder %v552, 0
        %v627 = vsub.s32 0, %v552
        %v628 = vsel %vm626, %v627, %v552
        %v629 = vshrl.u32 %v628, 4
        %v630 = vand.u32 %v628, 15
        %v631 = vsub.s32 0, %v630
        %v632 = vsel %vm626, %v631, %v630
        %vm633 = vcmp.lt.s32.totalorder %v553, 0
        %v634 = vsub.s32 0, %v553
        %v635 = vsel %vm633, %v634, %v553
        %v636 = vshrl.u32 %v635, 4
        %v637 = vand.u32 %v635, 15
        %v638 = vsub.s32 0, %v637
        %v639 = vsel %vm633, %v638, %v637
        %vm640 = vcmp.lt.s32.totalorder %v554, 0
        %v641 = vsub.s32 0, %v554
        %v642 = vsel %vm640, %v641, %v554
        %v643 = vshrl.u32 %v642, 4
        %v644 = vand.u32 %v642, 15
        %v645 = vsub.s32 0, %v644
        %v646 = vsel %vm640, %v645, %v644
        %vm647 = vcmp.lt.s32.totalorder %v555, 0
        %v648 = vsub.s32 0, %v555
        %v649 = vsel %vm647, %v648, %v555
        %v650 = vshrl.u32 %v649, 4
        %v651 = vand.u32 %v649, 15
        %v652 = vsub.s32 0, %v651
        %v653 = vsel %vm647, %v652, %v651
        %vm654 = vcmp.lt.s32.totalorder %v556, 0
        %v655 = vsub.s32 0, %v556
        %v656 = vsel %vm654, %v655, %v556
        %v657 = vshrl.u32 %v656, 4
        %v658 = vand.u32 %v656, 15
        %v659 = vsub.s32 0, %v658
        %v660 = vsel %vm654, %v659, %v658
        %vm661 = vcmp.lt.s32.totalorder %v557, 0
        %v662 = vsub.s32 0, %v557
        %v663 = vsel %vm661, %v662, %v557
        %v664 = vshrl.u32 %v663, 4
        %v665 = vand.u32 %v663, 15
        %v666 = vsub.s32 0, %v665
        %v667 = vsel %vm661, %v666, %v665
        %vm668 = vcmp.lt.s32.totalorder %v558, 0
        %v669 = vsub.s32 0, %v558
        %v670 = vsel %vm668, %v669, %v558
        %v671 = vshrl.u32 %v670, 4
        %v672 = vand.u32 %v670, 15
        %v673 = vsub.s32 0, %v672
        %v674 = vsel %vm668, %v673, %v672
        %vm675 = vcmp.lt.s32.totalorder %v559, 0
        %v676 = vsub.s32 0, %v559
        %v677 = vsel %vm675, %v676, %v559
        %v678 = vshrl.u32 %v677, 4
        %v679 = vand.u32 %v677, 15
        %v680 = vsub.s32 0, %v679
        %v681 = vsel %vm675, %v680, %v679
        %vm682 = vcmp.lt.s32.totalorder %v560, 0
        %v683 = vsub.s32 0, %v560
        %v684 = vsel %vm682, %v683, %v560
        %v685 = vshrl.u32 %v684, 4
        %v686 = vand.u32 %v684, 15
        %v687 = vsub.s32 0, %v686
        %v688 = vsel %vm682, %v687, %v686
        %vm689 = vcmp.lt.s32.totalorder %v561, 0
        %v690 = vsub.s32 0, %v561
        %v691 = vsel %vm689, %v690, %v561
        %v692 = vshrl.u32 %v691, 4
        %v693 = vand.u32 %v691, 15
        %v694 = vsub.s32 0, %v693
        %v695 = vsel %vm689, %v694, %v693
        %vm696 = vcmp.lt.s32.totalorder %v562, 0
        %v697 = vsub.s32 0, %v562
        %v698 = vsel %vm696, %v697, %v562
        %v699 = vshrl.u32 %v698, 4
        %v700 = vand.u32 %v698, 15
        %v701 = vsub.s32 0, %v700
        %v702 = vsel %vm696, %v701, %v700
        %vm703 = vcmp.lt.s32.totalorder %v563, 0
        %v704 = vsub.s32 0, %v563
        %v705 = vsel %vm703, %v704, %v563
        %v706 = vshrl.u32 %v705, 4
        %v707 = vand.u32 %v705, 15
        %v708 = vsub.s32 0, %v707
        %v709 = vsel %vm703, %v708, %v707
        %vm710 = vcmp.lt.s32.totalorder %v564, 0
        %v711 = vsub.s32 0, %v564
        %v712 = vsel %vm710, %v711, %v564
        %v713 = vshrl.u32 %v712, 4
        %v714 = vand.u32 %v712, 15
        %v715 = vsub.s32 0, %v714
        %v716 = vsel %vm710, %v715, %v714
        %vm717 = vcmp.lt.s32.totalorder %v565, 0
        %v718 = vsub.s32 0, %v565
        %v719 = vsel %vm717, %v718, %v565
        %v720 = vshrl.u32 %v719, 4
        %v721 = vand.u32 %v719, 15
        %v722 = vsub.s32 0, %v721
        %v723 = vsel %vm717, %v722, %v721
        %vm724 = vcmp.lt.s32.totalorder %v566, 0
        %v725 = vsub.s32 0, %v566
        %v726 = vsel %vm724, %v725, %v566
        %v727 = vshrl.u32 %v726, 4
        %v728 = vand.u32 %v726, 15
        %v729 = vsub.s32 0, %v728
        %v730 = vsel %vm724, %v729, %v728
        %vm731 = vcmp.lt.s32.totalorder %v567, 0
        %v732 = vsub.s32 0, %v567
        %v733 = vsel %vm731, %v732, %v567
        %v734 = vshrl.u32 %v733, 4
        %v735 = vand.u32 %v733, 15
        %v736 = vsub.s32 0, %v735
        %v737 = vsel %vm731, %v736, %v735
        %vm738 = vcmp.lt.s32.totalorder %v568, 0
        %v739 = vsub.s32 0, %v568
        %v740 = vsel %vm738, %v739, %v568
        %v741 = vshrl.u32 %v740, 4
        %v742 = vand.u32 %v740, 15
        %v743 = vsub.s32 0, %v742
        %v744 = vsel %vm738, %v743, %v742
        %vm745 = vcmp.lt.s32.totalorder %v569, 0
        %v746 = vsub.s32 0, %v569
        %v747 = vsel %vm745, %v746, %v569
        %v748 = vshrl.u32 %v747, 4
        %v749 = vand.u32 %v747, 15
        %v750 = vsub.s32 0, %v749
        %v751 = vsel %vm745, %v750, %v749
        %vm752 = vcmp.lt.s32.totalorder %v570, 0
        %v753 = vsub.s32 0, %v570
        %v754 = vsel %vm752, %v753, %v570
        %v755 = vshrl.u32 %v754, 4
        %v756 = vand.u32 %v754, 15
        %v757 = vsub.s32 0, %v756
        %v758 = vsel %vm752, %v757, %v756
        %vm759 = vcmp.lt.s32.totalorder %v571, 0
        %v760 = vsub.s32 0, %v571
        %v761 = vsel %vm759, %v760, %v571
        %v762 = vshrl.u32 %v761, 4
        %v763 = vand.u32 %v761, 15
        %v764 = vsub.s32 0, %v763
        %v765 = vsel %vm759, %v764, %v763
        %vm766 = vcmp.lt.s32.totalorder %v572, 0
        %v767 = vsub.s32 0, %v572
        %v768 = vsel %vm766, %v767, %v572
        %v769 = vshrl.u32 %v768, 4
        %v770 = vand.u32 %v768, 15
        %v771 = vsub.s32 0, %v770
        %v772 = vsel %vm766, %v771, %v770
        %vm773 = vcmp.lt.s32.totalorder %v573, 0
        %v774 = vsub.s32 0, %v573
        %v775 = vsel %vm773, %v774, %v573
        %v776 = vshrl.u32 %v775, 4
        %v777 = vand.u32 %v775, 15
        %v778 = vsub.s32 0, %v777
        %v779 = vsel %vm773, %v778, %v777
        %vm780 = vcmp.lt.s32.totalorder %v574, 0
        %v781 = vsub.s32 0, %v574
        %v782 = vsel %vm780, %v781, %v574
        %v783 = vshrl.u32 %v782, 4
        %v784 = vand.u32 %v782, 15
        %v785 = vsub.s32 0, %v784
        %v786 = vsel %vm780, %v785, %v784
        %vm787 = vcmp.lt.s32.totalorder %v575, 0
        %v788 = vsub.s32 0, %v575
        %v789 = vsel %vm787, %v788, %v575
        %v790 = vshrl.u32 %v789, 4
        %v791 = vand.u32 %v789, 15
        %v792 = vsub.s32 0, %v791
        %v793 = vsel %vm787, %v792, %v791
        %vm794 = vcmp.lt.s32.totalorder %v576, 0
        %v795 = vsub.s32 0, %v576
        %v796 = vsel %vm794, %v795, %v576
        %v797 = vshrl.u32 %v796, 4
        %v798 = vand.u32 %v796, 15
        %v799 = vsub.s32 0, %v798
        %v800 = vsel %vm794, %v799, %v798
        %vm801 = vcmp.ne.s32.totalorder %v583, 0
        %vm802 = vcmp.ne.s32.totalorder %v590, 0
        %vm803 = vcmp.ne.s32.totalorder %v597, 0
        %vm804 = vcmp.ne.s32.totalorder %v604, 0
        %vm805 = vcmp.ne.s32.totalorder %v611, 0
        %vm806 = vcmp.ne.s32.totalorder %v618, 0
        %vm807 = vcmp.ne.s32.totalorder %v625, 0
        %vm808 = vcmp.ne.s32.totalorder %v632, 0
        %vm809 = vcmp.ne.s32.totalorder %v639, 0
        %vm810 = vcmp.ne.s32.totalorder %v646, 0
        %vm811 = vcmp.ne.s32.totalorder %v653, 0
        %vm812 = vcmp.ne.s32.totalorder %v660, 0
        %vm813 = vcmp.ne.s32.totalorder %v667, 0
        %vm814 = vcmp.ne.s32.totalorder %v674, 0
        %vm815 = vcmp.ne.s32.totalorder %v681, 0
        %vm816 = vcmp.ne.s32.totalorder %v688, 0
        %vm817 = vcmp.ne.s32.totalorder %v695, 0
        %vm818 = vcmp.ne.s32.totalorder %v702, 0
        %vm819 = vcmp.ne.s32.totalorder %v709, 0
        %vm820 = vcmp.ne.s32.totalorder %v716, 0
        %vm821 = vcmp.ne.s32.totalorder %v723, 0
        %vm822 = vcmp.ne.s32.totalorder %v730, 0
        %vm823 = vcmp.ne.s32.totalorder %v737, 0
        %vm824 = vcmp.ne.s32.totalorder %v744, 0
        %vm825 = vcmp.ne.s32.totalorder %v751, 0
        %vm826 = vcmp.ne.s32.totalorder %v758, 0
        %vm827 = vcmp.ne.s32.totalorder %v765, 0
        %vm828 = vcmp.ne.s32.totalorder %v772, 0
        %vm829 = vcmp.ne.s32.totalorder %v779, 0
        %vm830 = vcmp.ne.s32.totalorder %v786, 0
        %vm831 = vcmp.ne.s32.totalorder %v793, 0
        %vm832 = vcmp.ne.s32.totalorder %v800, 0
        %vm833 = vcmp.lt.s32.totalorder %v583, 0
        %vm834 = vcmp.lt.s32.totalorder %v590, 0
        %vm835 = vcmp.lt.s32.totalorder %v597, 0
        %vm836 = vcmp.lt.s32.totalorder %v604, 0
        %vm837 = vcmp.lt.s32.totalorder %v611, 0
        %vm838 = vcmp.lt.s32.totalorder %v618, 0
        %vm839 = vcmp.lt.s32.totalorder %v625, 0
        %vm840 = vcmp.lt.s32.totalorder %v632, 0
        %vm841 = vcmp.lt.s32.totalorder %v639, 0
        %vm842 = vcmp.lt.s32.totalorder %v646, 0
        %vm843 = vcmp.lt.s32.totalorder %v653, 0
        %vm844 = vcmp.lt.s32.totalorder %v660, 0
        %vm845 = vcmp.lt.s32.totalorder %v667, 0
        %vm846 = vcmp.lt.s32.totalorder %v674, 0
        %vm847 = vcmp.lt.s32.totalorder %v681, 0
        %vm848 = vcmp.lt.s32.totalorder %v688, 0
        %vm849 = vcmp.lt.s32.totalorder %v695, 0
        %vm850 = vcmp.lt.s32.totalorder %v702, 0
        %vm851 = vcmp.lt.s32.totalorder %v709, 0
        %vm852 = vcmp.lt.s32.totalorder %v716, 0
        %vm853 = vcmp.lt.s32.totalorder %v723, 0
        %vm854 = vcmp.lt.s32.totalorder %v730, 0
        %vm855 = vcmp.lt.s32.totalorder %v737, 0
        %vm856 = vcmp.lt.s32.totalorder %v744, 0
        %vm857 = vcmp.lt.s32.totalorder %v751, 0
        %vm858 = vcmp.lt.s32.totalorder %v758, 0
        %vm859 = vcmp.lt.s32.totalorder %v765, 0
        %vm860 = vcmp.lt.s32.totalorder %v772, 0
        %vm861 = vcmp.lt.s32.totalorder %v779, 0
        %vm862 = vcmp.lt.s32.totalorder %v786, 0
        %vm863 = vcmp.lt.s32.totalorder %v793, 0
        %vm864 = vcmp.lt.s32.totalorder %v800, 0
        %vm865 = vmand %vm833, %vm801
        %vm866 = vmand %vm834, %vm802
        %vm867 = vmand %vm835, %vm803
        %vm868 = vmand %vm836, %vm804
        %vm869 = vmand %vm837, %vm805
        %vm870 = vmand %vm838, %vm806
        %vm871 = vmand %vm839, %vm807
        %vm872 = vmand %vm840, %vm808
        %vm873 = vmand %vm841, %vm809
        %vm874 = vmand %vm842, %vm810
        %vm875 = vmand %vm843, %vm811
        %vm876 = vmand %vm844, %vm812
        %vm877 = vmand %vm845, %vm813
        %vm878 = vmand %vm846, %vm814
        %vm879 = vmand %vm847, %vm815
        %vm880 = vmand %vm848, %vm816
        %vm881 = vmand %vm849, %vm817
        %vm882 = vmand %vm850, %vm818
        %vm883 = vmand %vm851, %vm819
        %vm884 = vmand %vm852, %vm820
        %vm885 = vmand %vm853, %vm821
        %vm886 = vmand %vm854, %vm822
        %vm887 = vmand %vm855, %vm823
        %vm888 = vmand %vm856, %vm824
        %vm889 = vmand %vm857, %vm825
        %vm890 = vmand %vm858, %vm826
        %vm891 = vmand %vm859, %vm827
        %vm892 = vmand %vm860, %vm828
        %vm893 = vmand %vm861, %vm829
        %vm894 = vmand %vm862, %vm830
        %vm895 = vmand %vm863, %vm831
        %vm896 = vmand %vm864, %vm832
        %v897 = vadd.s32 %v583, 16
        %v898 = vadd.s32 %v590, 16
        %v899 = vadd.s32 %v597, 16
        %v900 = vadd.s32 %v604, 16
        %v901 = vadd.s32 %v611, 16
        %v902 = vadd.s32 %v618, 16
        %v903 = vadd.s32 %v625, 16
        %v904 = vadd.s32 %v632, 16
        %v905 = vadd.s32 %v639, 16
        %v906 = vadd.s32 %v646, 16
        %v907 = vadd.s32 %v653, 16
        %v908 = vadd.s32 %v660, 16
        %v909 = vadd.s32 %v667, 16
        %v910 = vadd.s32 %v674, 16
        %v911 = vadd.s32 %v681, 16
        %v912 = vadd.s32 %v688, 16
        %v913 = vadd.s32 %v695, 16
        %v914 = vadd.s32 %v702, 16
        %v915 = vadd.s32 %v709, 16
        %v916 = vadd.s32 %v716, 16
        %v917 = vadd.s32 %v723, 16
        %v918 = vadd.s32 %v730, 16
        %v919 = vadd.s32 %v737, 16
        %v920 = vadd.s32 %v744, 16
        %v921 = vadd.s32 %v751, 16
        %v922 = vadd.s32 %v758, 16
        %v923 = vadd.s32 %v765, 16
        %v924 = vadd.s32 %v772, 16
        %v925 = vadd.s32 %v779, 16
        %v926 = vadd.s32 %v786, 16
        %v927 = vadd.s32 %v793, 16
        %v928 = vadd.s32 %v800, 16
        %v929 = vsel %vm865, %v897, %v583
        %v930 = vsel %vm866, %v898, %v590
        %v931 = vsel %vm867, %v899, %v597
        %v932 = vsel %vm868, %v900, %v604
        %v933 = vsel %vm869, %v901, %v611
        %v934 = vsel %vm870, %v902, %v618
        %v935 = vsel %vm871, %v903, %v625
        %v936 = vsel %vm872, %v904, %v632
        %v937 = vsel %vm873, %v905, %v639
        %v938 = vsel %vm874, %v906, %v646
        %v939 = vsel %vm875, %v907, %v653
        %v940 = vsel %vm876, %v908, %v660
        %v941 = vsel %vm877, %v909, %v667
        %v942 = vsel %vm878, %v910, %v674
        %v943 = vsel %vm879, %v911, %v681
        %v944 = vsel %vm880, %v912, %v688
        %v945 = vsel %vm881, %v913, %v695
        %v946 = vsel %vm882, %v914, %v702
        %v947 = vsel %vm883, %v915, %v709
        %v948 = vsel %vm884, %v916, %v716
        %v949 = vsel %vm885, %v917, %v723
        %v950 = vsel %vm886, %v918, %v730
        %v951 = vsel %vm887, %v919, %v737
        %v952 = vsel %vm888, %v920, %v744
        %v953 = vsel %vm889, %v921, %v751
        %v954 = vsel %vm890, %v922, %v758
        %v955 = vsel %vm891, %v923, %v765
        %v956 = vsel %vm892, %v924, %v772
        %v957 = vsel %vm893, %v925, %v779
        %v958 = vsel %vm894, %v926, %v786
        %v959 = vsel %vm895, %v927, %v793
        %v960 = vsel %vm896, %v928, %v800
        %v961 = vld [vmem:[#allocation2] sm:$0xff]
        %v962 = vld [vmem:[#allocation2 + $0x8] sm:$0xff]
        %v963 = vld [vmem:[#allocation2 + $0x10] sm:$0xff]
        %v964 = vld [vmem:[#allocation2 + $0x18] sm:$0xff]
        %v965 = vld [vmem:[#allocation2 + $0x20] sm:$0xff]
        %v966 = vld [vmem:[#allocation2 + $0x28] sm:$0xff]
        %v967 = vld [vmem:[#allocation2 + $0x30] sm:$0xff]
        %v968 = vld [vmem:[#allocation2 + $0x38] sm:$0xff]
        %v969 = vld [vmem:[#allocation2 + $0x40] sm:$0xff]
        %v970 = vld [vmem:[#allocation2 + $0x48] sm:$0xff]
        %v971 = vld [vmem:[#allocation2 + $0x50] sm:$0xff]
        %v972 = vld [vmem:[#allocation2 + $0x58] sm:$0xff]
        %v973 = vld [vmem:[#allocation2 + $0x60] sm:$0xff]
        %v974 = vld [vmem:[#allocation2 + $0x68] sm:$0xff]
        %v975 = vld [vmem:[#allocation2 + $0x70] sm:$0xff]
        %v976 = vld [vmem:[#allocation2 + $0x78] sm:$0xff]
        %v977 = vld [vmem:[#allocation2 + $0x80] sm:$0xff]
        %v978 = vld [vmem:[#allocation2 + $0x88] sm:$0xff]
        %v979 = vld [vmem:[#allocation2 + $0x90] sm:$0xff]
        %v980 = vld [vmem:[#allocation2 + $0x98] sm:$0xff]
        %v981 = vld [vmem:[#allocation2 + $0xa0] sm:$0xff]
        %v982 = vld [vmem:[#allocation2 + $0xa8] sm:$0xff]
        %v983 = vld [vmem:[#allocation2 + $0xb0] sm:$0xff]
        %v984 = vld [vmem:[#allocation2 + $0xb8] sm:$0xff]
        %v985 = vld [vmem:[#allocation2 + $0xc0] sm:$0xff]
        %v986 = vld [vmem:[#allocation2 + $0xc8] sm:$0xff]
        %v987 = vld [vmem:[#allocation2 + $0xd0] sm:$0xff]
        %v988 = vld [vmem:[#allocation2 + $0xd8] sm:$0xff]
        %v989 = vld [vmem:[#allocation2 + $0xe0] sm:$0xff]
        %v990 = vld [vmem:[#allocation2 + $0xe8] sm:$0xff]
        %v991 = vld [vmem:[#allocation2 + $0xf0] sm:$0xff]
        %v992 = vld [vmem:[#allocation2 + $0xf8] sm:$0xff]
        %vm993 = vcmp.ge.s32.totalorder %v929, 1
        %vm994 = vcmp.ge.s32.totalorder %v930, 1
        %vm995 = vcmp.ge.s32.totalorder %v931, 1
        %vm996 = vcmp.ge.s32.totalorder %v932, 1
        %vm997 = vcmp.ge.s32.totalorder %v933, 1
        %vm998 = vcmp.ge.s32.totalorder %v934, 1
        %vm999 = vcmp.ge.s32.totalorder %v935, 1
        %vm1000 = vcmp.ge.s32.totalorder %v936, 1
        %vm1001 = vcmp.ge.s32.totalorder %v937, 1
        %vm1002 = vcmp.ge.s32.totalorder %v938, 1
        %vm1003 = vcmp.ge.s32.totalorder %v939, 1
        %vm1004 = vcmp.ge.s32.totalorder %v940, 1
        %vm1005 = vcmp.ge.s32.totalorder %v941, 1
        %vm1006 = vcmp.ge.s32.totalorder %v942, 1
        %vm1007 = vcmp.ge.s32.totalorder %v943, 1
        %vm1008 = vcmp.ge.s32.totalorder %v944, 1
        %vm1009 = vcmp.ge.s32.totalorder %v945, 1
        %vm1010 = vcmp.ge.s32.totalorder %v946, 1
        %vm1011 = vcmp.ge.s32.totalorder %v947, 1
        %vm1012 = vcmp.ge.s32.totalorder %v948, 1
        %vm1013 = vcmp.ge.s32.totalorder %v949, 1
        %vm1014 = vcmp.ge.s32.totalorder %v950, 1
        %vm1015 = vcmp.ge.s32.totalorder %v951, 1
        %vm1016 = vcmp.ge.s32.totalorder %v952, 1
        %vm1017 = vcmp.ge.s32.totalorder %v953, 1
        %vm1018 = vcmp.ge.s32.totalorder %v954, 1
        %vm1019 = vcmp.ge.s32.totalorder %v955, 1
        %vm1020 = vcmp.ge.s32.totalorder %v956, 1
        %vm1021 = vcmp.ge.s32.totalorder %v957, 1
        %vm1022 = vcmp.ge.s32.totalorder %v958, 1
        %vm1023 = vcmp.ge.s32.totalorder %v959, 1
        %vm1024 = vcmp.ge.s32.totalorder %v960, 1
        %v1025 = vsel %vm993, 1, 0
        %v1026 = vsel %vm994, 1, 0
        %v1027 = vsel %vm995, 1, 0
        %v1028 = vsel %vm996, 1, 0
        %v1029 = vsel %vm997, 1, 0
        %v1030 = vsel %vm998, 1, 0
        %v1031 = vsel %vm999, 1, 0
        %v1032 = vsel %vm1000, 1, 0
        %v1033 = vsel %vm1001, 1, 0
        %v1034 = vsel %vm1002, 1, 0
        %v1035 = vsel %vm1003, 1, 0
        %v1036 = vsel %vm1004, 1, 0
        %v1037 = vsel %vm1005, 1, 0
        %v1038 = vsel %vm1006, 1, 0
        %v1039 = vsel %vm1007, 1, 0
        %v1040 = vsel %vm1008, 1, 0
        %v1041 = vsel %vm1009, 1, 0
        %v1042 = vsel %vm1010, 1, 0
        %v1043 = vsel %vm1011, 1, 0
        %v1044 = vsel %vm1012, 1, 0
        %v1045 = vsel %vm1013, 1, 0
        %v1046 = vsel %vm1014, 1, 0
        %v1047 = vsel %vm1015, 1, 0
        %v1048 = vsel %vm1016, 1, 0
        %v1049 = vsel %vm1017, 1, 0
        %v1050 = vsel %vm1018, 1, 0
        %v1051 = vsel %vm1019, 1, 0
        %v1052 = vsel %vm1020, 1, 0
        %v1053 = vsel %vm1021, 1, 0
        %v1054 = vsel %vm1022, 1, 0
        %v1055 = vsel %vm1023, 1, 0
        %v1056 = vsel %vm1024, 1, 0
        %vm1057 = vcmp.eq.s32.totalorder %v1025, 1
        %vm1058 = vcmp.eq.s32.totalorder %v1026, 1
        %vm1059 = vcmp.eq.s32.totalorder %v1027, 1
        %vm1060 = vcmp.eq.s32.totalorder %v1028, 1
        %vm1061 = vcmp.eq.s32.totalorder %v1029, 1
        %vm1062 = vcmp.eq.s32.totalorder %v1030, 1
        %vm1063 = vcmp.eq.s32.totalorder %v1031, 1
        %vm1064 = vcmp.eq.s32.totalorder %v1032, 1
        %vm1065 = vcmp.eq.s32.totalorder %v1033, 1
        %vm1066 = vcmp.eq.s32.totalorder %v1034, 1
        %vm1067 = vcmp.eq.s32.totalorder %v1035, 1
        %vm1068 = vcmp.eq.s32.totalorder %v1036, 1
        %vm1069 = vcmp.eq.s32.totalorder %v1037, 1
        %vm1070 = vcmp.eq.s32.totalorder %v1038, 1
        %vm1071 = vcmp.eq.s32.totalorder %v1039, 1
        %vm1072 = vcmp.eq.s32.totalorder %v1040, 1
        %vm1073 = vcmp.eq.s32.totalorder %v1041, 1
        %vm1074 = vcmp.eq.s32.totalorder %v1042, 1
        %vm1075 = vcmp.eq.s32.totalorder %v1043, 1
        %vm1076 = vcmp.eq.s32.totalorder %v1044, 1
        %vm1077 = vcmp.eq.s32.totalorder %v1045, 1
        %vm1078 = vcmp.eq.s32.totalorder %v1046, 1
        %vm1079 = vcmp.eq.s32.totalorder %v1047, 1
        %vm1080 = vcmp.eq.s32.totalorder %v1048, 1
        %vm1081 = vcmp.eq.s32.totalorder %v1049, 1
        %vm1082 = vcmp.eq.s32.totalorder %v1050, 1
        %vm1083 = vcmp.eq.s32.totalorder %v1051, 1
        %vm1084 = vcmp.eq.s32.totalorder %v1052, 1
        %vm1085 = vcmp.eq.s32.totalorder %v1053, 1
        %vm1086 = vcmp.eq.s32.totalorder %v1054, 1
        %vm1087 = vcmp.eq.s32.totalorder %v1055, 1
        %vm1088 = vcmp.eq.s32.totalorder %v1056, 1
        %v1089 = vsel %vm1057, %v961, 0.0
        %v1090 = vsel %vm1058, %v962, 0.0
        %v1091 = vsel %vm1059, %v963, 0.0
        %v1092 = vsel %vm1060, %v964, 0.0
        %v1093 = vsel %vm1061, %v965, 0.0
        %v1094 = vsel %vm1062, %v966, 0.0
        %v1095 = vsel %vm1063, %v967, 0.0
        %v1096 = vsel %vm1064, %v968, 0.0
        %v1097 = vsel %vm1065, %v969, 0.0
        %v1098 = vsel %vm1066, %v970, 0.0
        %v1099 = vsel %vm1067, %v971, 0.0
        %v1100 = vsel %vm1068, %v972, 0.0
        %v1101 = vsel %vm1069, %v973, 0.0
        %v1102 = vsel %vm1070, %v974, 0.0
        %v1103 = vsel %vm1071, %v975, 0.0
        %v1104 = vsel %vm1072, %v976, 0.0
        %v1105 = vsel %vm1073, %v977, 0.0
        %v1106 = vsel %vm1074, %v978, 0.0
        %v1107 = vsel %vm1075, %v979, 0.0
        %v1108 = vsel %vm1076, %v980, 0.0
        %v1109 = vsel %vm1077, %v981, 0.0
        %v1110 = vsel %vm1078, %v982, 0.0
        %v1111 = vsel %vm1079, %v983, 0.0
        %v1112 = vsel %vm1080, %v984, 0.0
        %v1113 = vsel %vm1081, %v985, 0.0
        %v1114 = vsel %vm1082, %v986, 0.0
        %v1115 = vsel %vm1083, %v987, 0.0
        %v1116 = vsel %vm1084, %v988, 0.0
        %v1117 = vsel %vm1085, %v989, 0.0
        %v1118 = vsel %vm1086, %v990, 0.0
        %v1119 = vsel %vm1087, %v991, 0.0
        %v1120 = vsel %vm1088, %v992, 0.0
        %v1121 = vld [vmem:[%s1] sm:$0x7]
        %v1122 = vld [vmem:[#allocation2 + $0x1] sm:$0xff]
        %v1123 = vld [vmem:[#allocation2 + $0x9] sm:$0xff]
        %v1124 = vld [vmem:[#allocation2 + $0x11] sm:$0xff]
        %v1125 = vld [vmem:[#allocation2 + $0x19] sm:$0xff]
        %v1126 = vld [vmem:[#allocation2 + $0x21] sm:$0xff]
        %v1127 = vld [vmem:[#allocation2 + $0x29] sm:$0xff]
        %v1128 = vld [vmem:[#allocation2 + $0x31] sm:$0xff]
        %v1129 = vld [vmem:[#allocation2 + $0x39] sm:$0xff]
        %v1130 = vld [vmem:[#allocation2 + $0x41] sm:$0xff]
        %v1131 = vld [vmem:[#allocation2 + $0x49] sm:$0xff]
        %v1132 = vld [vmem:[#allocation2 + $0x51] sm:$0xff]
        %v1133 = vld [vmem:[#allocation2 + $0x59] sm:$0xff]
        %v1134 = vld [vmem:[#allocation2 + $0x61] sm:$0xff]
        %v1135 = vld [vmem:[#allocation2 + $0x69] sm:$0xff]
        %v1136 = vld [vmem:[#allocation2 + $0x71] sm:$0xff]
        %v1137 = vld [vmem:[#allocation2 + $0x79] sm:$0xff]
        %v1138 = vld [vmem:[#allocation2 + $0x81] sm:$0xff]
        %v1139 = vld [vmem:[#allocation2 + $0x89] sm:$0xff]
        %v1140 = vld [vmem:[#allocation2 + $0x91] sm:$0xff]
        %v1141 = vld [vmem:[#allocation2 + $0x99] sm:$0xff]
        %v1142 = vld [vmem:[#allocation2 + $0xa1] sm:$0xff]
        %v1143 = vld [vmem:[#allocation2 + $0xa9] sm:$0xff]
        %v1144 = vld [vmem:[#allocation2 + $0xb1] sm:$0xff]
        %v1145 = vld [vmem:[#allocation2 + $0xb9] sm:$0xff]
        %v1146 = vld [vmem:[#allocation2 + $0xc1] sm:$0xff]
        %v1147 = vld [vmem:[#allocation2 + $0xc9] sm:$0xff]
        %v1148 = vld [vmem:[#allocation2 + $0xd1] sm:$0xff]
        %v1149 = vld [vmem:[#allocation2 + $0xd9] sm:$0xff]
        %v1150 = vld [vmem:[#allocation2 + $0xe1] sm:$0xff]
        %v1151 = vld [vmem:[#allocation2 + $0xe9] sm:$0xff]
        %v1152 = vld [vmem:[#allocation2 + $0xf1] sm:$0xff]
        %v1153 = vld [vmem:[#allocation2 + $0xf9] sm:$0xff]
        %s1154 = scalar_lea.vmem %s1, 4
        %v1155 = vld [vmem:[%s1154] sm:$0x7]
        %v1157 = vsel %vm504, %v1122, 0
        %v1160 = vsel %vm504, %v1123, 0
        %v1163 = vsel %vm504, %v1124, 0
        %v1166 = vsel %vm504, %v1125, 0
        %v1169 = vsel %vm504, %v1126, 0
        %v1172 = vsel %vm504, %v1127, 0
        %v1175 = vsel %vm504, %v1128, 0
        %v1178 = vsel %vm504, %v1129, 0
        %v1181 = vsel %vm504, %v1130, 0
        %v1184 = vsel %vm504, %v1131, 0
        %v1187 = vsel %vm504, %v1132, 0
        %v1190 = vsel %vm504, %v1133, 0
        %v1193 = vsel %vm504, %v1134, 0
        %v1196 = vsel %vm504, %v1135, 0
        %v1199 = vsel %vm504, %v1136, 0
        %v1202 = vsel %vm504, %v1137, 0
        %v1205 = vsel %vm504, %v1138, 0
        %v1208 = vsel %vm504, %v1139, 0
        %v1211 = vsel %vm504, %v1140, 0
        %v1214 = vsel %vm504, %v1141, 0
        %v1217 = vsel %vm504, %v1142, 0
        %v1220 = vsel %vm504, %v1143, 0
        %v1223 = vsel %vm504, %v1144, 0
        %v1226 = vsel %vm504, %v1145, 0
        %v1229 = vsel %vm504, %v1146, 0
        %v1232 = vsel %vm504, %v1147, 0
        %v1235 = vsel %vm504, %v1148, 0
        %v1238 = vsel %vm504, %v1149, 0
        %v1241 = vsel %vm504, %v1150, 0
        %v1244 = vsel %vm504, %v1151, 0
        %v1247 = vsel %vm504, %v1152, 0
        %v1250 = vsel %vm504, %v1153, 0
        %vm1252 = vcmask 1042432
        %v1254 = vsel %vm1252, %v1155, 0
        %1256 = vmatpush.msra.mxu0 0.0
        %1257 = vmatpush.msra.mxu0 0.0
        %1258 = vmatpush.msra.mxu0 0.0
        %1259 = vmatpush.msra.mxu0 0.0
        %1260 = vmatpush.msra.mxu0 0.0
        %1261 = vmatpush.msra.mxu0 0.0
        %1262 = vmatpush.msra.mxu0 0.0
        %1263 = vmatpush.msra.mxu0 0.0
        %1264 = vmatpush.msra.mxu0 0.0
        %1265 = vmatpush.msra.mxu0 0.0
        %1266 = vmatpush.msra.mxu0 0.0
        %1267 = vmatpush.msra.mxu0 0.0
        %1268 = vmatpush.msra.mxu0 0.0
        %1269 = vmatpush.msra.mxu0 0.0
        %1270 = vmatpush.msra.mxu0 0.0
        %1271 = vmatpush.msra.mxu0 %v1254
        %1272 = vmatmul.f32.gmra.mxu0 %v1157
        %v1273 = vpop.f32.mrf.mxu0
        %v1274 = vadd.f32 0.0, %v1273
        %1275 = vmatmul.f32.gmra.mxu0 %v1160
        %v1276 = vpop.f32.mrf.mxu0
        %v1277 = vadd.f32 0.0, %v1276
        %1278 = vmatmul.f32.gmra.mxu0 %v1163
        %v1279 = vpop.f32.mrf.mxu0
        %v1280 = vadd.f32 0.0, %v1279
        %1281 = vmatmul.f32.gmra.mxu0 %v1166
        %v1282 = vpop.f32.mrf.mxu0
        %v1283 = vadd.f32 0.0, %v1282
        %1284 = vmatmul.f32.gmra.mxu0 %v1169
        %v1285 = vpop.f32.mrf.mxu0
        %v1286 = vadd.f32 0.0, %v1285
        %1287 = vmatmul.f32.gmra.mxu0 %v1172
        %v1288 = vpop.f32.mrf.mxu0
        %v1289 = vadd.f32 0.0, %v1288
        %1290 = vmatmul.f32.gmra.mxu0 %v1175
        %v1291 = vpop.f32.mrf.mxu0
        %v1292 = vadd.f32 0.0, %v1291
        %1293 = vmatmul.f32.gmra.mxu0 %v1178
        %v1294 = vpop.f32.mrf.mxu0
        %v1295 = vadd.f32 0.0, %v1294
        %1296 = vmatmul.f32.gmra.mxu0 %v1181
        %v1297 = vpop.f32.mrf.mxu0
        %v1298 = vadd.f32 0.0, %v1297
        %1299 = vmatmul.f32.gmra.mxu0 %v1184
        %v1300 = vpop.f32.mrf.mxu0
        %v1301 = vadd.f32 0.0, %v1300
        %1302 = vmatmul.f32.gmra.mxu0 %v1187
        %v1303 = vpop.f32.mrf.mxu0
        %v1304 = vadd.f32 0.0, %v1303
        %1305 = vmatmul.f32.gmra.mxu0 %v1190
        %v1306 = vpop.f32.mrf.mxu0
        %v1307 = vadd.f32 0.0, %v1306
        %1308 = vmatmul.f32.gmra.mxu0 %v1193
        %v1309 = vpop.f32.mrf.mxu0
        %v1310 = vadd.f32 0.0, %v1309
        %1311 = vmatmul.f32.gmra.mxu0 %v1196
        %v1312 = vpop.f32.mrf.mxu0
        %v1313 = vadd.f32 0.0, %v1312
        %1314 = vmatmul.f32.gmra.mxu0 %v1199
        %v1315 = vpop.f32.mrf.mxu0
        %v1316 = vadd.f32 0.0, %v1315
        %1317 = vmatmul.f32.gmra.mxu0 %v1202
        %v1318 = vpop.f32.mrf.mxu0
        %v1319 = vadd.f32 0.0, %v1318
        %1320 = vmatmul.f32.gmra.mxu0 %v1205
        %v1321 = vpop.f32.mrf.mxu0
        %v1322 = vadd.f32 0.0, %v1321
        %1323 = vmatmul.f32.gmra.mxu0 %v1208
        %v1324 = vpop.f32.mrf.mxu0
        %v1325 = vadd.f32 0.0, %v1324
        %1326 = vmatmul.f32.gmra.mxu0 %v1211
        %v1327 = vpop.f32.mrf.mxu0
        %v1328 = vadd.f32 0.0, %v1327
        %1329 = vmatmul.f32.gmra.mxu0 %v1214
        %v1330 = vpop.f32.mrf.mxu0
        %v1331 = vadd.f32 0.0, %v1330
        %1332 = vmatmul.f32.gmra.mxu0 %v1217
        %v1333 = vpop.f32.mrf.mxu0
        %v1334 = vadd.f32 0.0, %v1333
        %1335 = vmatmul.f32.gmra.mxu0 %v1220
        %v1336 = vpop.f32.mrf.mxu0
        %v1337 = vadd.f32 0.0, %v1336
        %1338 = vmatmul.f32.gmra.mxu0 %v1223
        %v1339 = vpop.f32.mrf.mxu0
        %v1340 = vadd.f32 0.0, %v1339
        %1341 = vmatmul.f32.gmra.mxu0 %v1226
        %v1342 = vpop.f32.mrf.mxu0
        %v1343 = vadd.f32 0.0, %v1342
        %1344 = vmatmul.f32.gmra.mxu0 %v1229
        %v1345 = vpop.f32.mrf.mxu0
        %v1346 = vadd.f32 0.0, %v1345
        %1347 = vmatmul.f32.gmra.mxu0 %v1232
        %v1348 = vpop.f32.mrf.mxu0
        %v1349 = vadd.f32 0.0, %v1348
        %1350 = vmatmul.f32.gmra.mxu0 %v1235
        %v1351 = vpop.f32.mrf.mxu0
        %v1352 = vadd.f32 0.0, %v1351
        %1353 = vmatmul.f32.gmra.mxu0 %v1238
        %v1354 = vpop.f32.mrf.mxu0
        %v1355 = vadd.f32 0.0, %v1354
        %1356 = vmatmul.f32.gmra.mxu0 %v1241
        %v1357 = vpop.f32.mrf.mxu0
        %v1358 = vadd.f32 0.0, %v1357
        %1359 = vmatmul.f32.gmra.mxu0 %v1244
        %v1360 = vpop.f32.mrf.mxu0
        %v1361 = vadd.f32 0.0, %v1360
        %1362 = vmatmul.f32.gmra.mxu0 %v1247
        %v1363 = vpop.f32.mrf.mxu0
        %v1364 = vadd.f32 0.0, %v1363
        %1365 = vmatmul.f32.gmra.mxu0 %v1250
        %v1366 = vpop.f32.mrf.mxu0
        %v1367 = vadd.f32 0.0, %v1366
        %1368 = vdwg.mxu0
        %v1370 = vsel %vm504, %v1089, 0
        %v1373 = vsel %vm504, %v1090, 0
        %v1376 = vsel %vm504, %v1091, 0
        %v1379 = vsel %vm504, %v1092, 0
        %v1382 = vsel %vm504, %v1093, 0
        %v1385 = vsel %vm504, %v1094, 0
        %v1388 = vsel %vm504, %v1095, 0
        %v1391 = vsel %vm504, %v1096, 0
        %v1394 = vsel %vm504, %v1097, 0
        %v1397 = vsel %vm504, %v1098, 0
        %v1400 = vsel %vm504, %v1099, 0
        %v1403 = vsel %vm504, %v1100, 0
        %v1406 = vsel %vm504, %v1101, 0
        %v1409 = vsel %vm504, %v1102, 0
        %v1412 = vsel %vm504, %v1103, 0
        %v1415 = vsel %vm504, %v1104, 0
        %v1418 = vsel %vm504, %v1105, 0
        %v1421 = vsel %vm504, %v1106, 0
        %v1424 = vsel %vm504, %v1107, 0
        %v1427 = vsel %vm504, %v1108, 0
        %v1430 = vsel %vm504, %v1109, 0
        %v1433 = vsel %vm504, %v1110, 0
        %v1436 = vsel %vm504, %v1111, 0
        %v1439 = vsel %vm504, %v1112, 0
        %v1442 = vsel %vm504, %v1113, 0
        %v1445 = vsel %vm504, %v1114, 0
        %v1448 = vsel %vm504, %v1115, 0
        %v1451 = vsel %vm504, %v1116, 0
        %v1454 = vsel %vm504, %v1117, 0
        %v1457 = vsel %vm504, %v1118, 0
        %v1460 = vsel %vm504, %v1119, 0
        %v1463 = vsel %vm504, %v1120, 0
        %v1466 = vsel %vm1252, %v1121, 0
        %1468 = vmatpush.msra.mxu0 0.0
        %1469 = vmatpush.msra.mxu0 0.0
        %1470 = vmatpush.msra.mxu0 0.0
        %1471 = vmatpush.msra.mxu0 0.0
        %1472 = vmatpush.msra.mxu0 0.0
        %1473 = vmatpush.msra.mxu0 0.0
        %1474 = vmatpush.msra.mxu0 0.0
        %1475 = vmatpush.msra.mxu0 0.0
        %1476 = vmatpush.msra.mxu0 0.0
        %1477 = vmatpush.msra.mxu0 0.0
        %1478 = vmatpush.msra.mxu0 0.0
        %1479 = vmatpush.msra.mxu0 0.0
        %1480 = vmatpush.msra.mxu0 0.0
        %1481 = vmatpush.msra.mxu0 0.0
        %1482 = vmatpush.msra.mxu0 0.0
        %1483 = vmatpush.msra.mxu0 %v1466
        %1484 = vmatmul.f32.gmra.mxu0 %v1370
        %v1485 = vpop.f32.mrf.mxu0
        %v1486 = vadd.f32 %v1274, %v1485
        %1487 = vmatmul.f32.gmra.mxu0 %v1373
        %v1488 = vpop.f32.mrf.mxu0
        %v1489 = vadd.f32 %v1277, %v1488
        %1490 = vmatmul.f32.gmra.mxu0 %v1376
        %v1491 = vpop.f32.mrf.mxu0
        %v1492 = vadd.f32 %v1280, %v1491
        %1493 = vmatmul.f32.gmra.mxu0 %v1379
        %v1494 = vpop.f32.mrf.mxu0
        %v1495 = vadd.f32 %v1283, %v1494
        %1496 = vmatmul.f32.gmra.mxu0 %v1382
        %v1497 = vpop.f32.mrf.mxu0
        %v1498 = vadd.f32 %v1286, %v1497
        %1499 = vmatmul.f32.gmra.mxu0 %v1385
        %v1500 = vpop.f32.mrf.mxu0
        %v1501 = vadd.f32 %v1289, %v1500
        %1502 = vmatmul.f32.gmra.mxu0 %v1388
        %v1503 = vpop.f32.mrf.mxu0
        %v1504 = vadd.f32 %v1292, %v1503
        %1505 = vmatmul.f32.gmra.mxu0 %v1391
        %v1506 = vpop.f32.mrf.mxu0
        %v1507 = vadd.f32 %v1295, %v1506
        %1508 = vmatmul.f32.gmra.mxu0 %v1394
        %v1509 = vpop.f32.mrf.mxu0
        %v1510 = vadd.f32 %v1298, %v1509
        %1511 = vmatmul.f32.gmra.mxu0 %v1397
        %v1512 = vpop.f32.mrf.mxu0
        %v1513 = vadd.f32 %v1301, %v1512
        %1514 = vmatmul.f32.gmra.mxu0 %v1400
        %v1515 = vpop.f32.mrf.mxu0
        %v1516 = vadd.f32 %v1304, %v1515
        %1517 = vmatmul.f32.gmra.mxu0 %v1403
        %v1518 = vpop.f32.mrf.mxu0
        %v1519 = vadd.f32 %v1307, %v1518
        %1520 = vmatmul.f32.gmra.mxu0 %v1406
        %v1521 = vpop.f32.mrf.mxu0
        %v1522 = vadd.f32 %v1310, %v1521
        %1523 = vmatmul.f32.gmra.mxu0 %v1409
        %v1524 = vpop.f32.mrf.mxu0
        %v1525 = vadd.f32 %v1313, %v1524
        %1526 = vmatmul.f32.gmra.mxu0 %v1412
        %v1527 = vpop.f32.mrf.mxu0
        %v1528 = vadd.f32 %v1316, %v1527
        %1529 = vmatmul.f32.gmra.mxu0 %v1415
        %v1530 = vpop.f32.mrf.mxu0
        %v1531 = vadd.f32 %v1319, %v1530
        %1532 = vmatmul.f32.gmra.mxu0 %v1418
        %v1533 = vpop.f32.mrf.mxu0
        %v1534 = vadd.f32 %v1322, %v1533
        %1535 = vmatmul.f32.gmra.mxu0 %v1421
        %v1536 = vpop.f32.mrf.mxu0
        %v1537 = vadd.f32 %v1325, %v1536
        %1538 = vmatmul.f32.gmra.mxu0 %v1424
        %v1539 = vpop.f32.mrf.mxu0
        %v1540 = vadd.f32 %v1328, %v1539
        %1541 = vmatmul.f32.gmra.mxu0 %v1427
        %v1542 = vpop.f32.mrf.mxu0
        %v1543 = vadd.f32 %v1331, %v1542
        %1544 = vmatmul.f32.gmra.mxu0 %v1430
        %v1545 = vpop.f32.mrf.mxu0
        %v1546 = vadd.f32 %v1334, %v1545
        %1547 = vmatmul.f32.gmra.mxu0 %v1433
        %v1548 = vpop.f32.mrf.mxu0
        %v1549 = vadd.f32 %v1337, %v1548
        %1550 = vmatmul.f32.gmra.mxu0 %v1436
        %v1551 = vpop.f32.mrf.mxu0
        %v1552 = vadd.f32 %v1340, %v1551
        %1553 = vmatmul.f32.gmra.mxu0 %v1439
        %v1554 = vpop.f32.mrf.mxu0
        %v1555 = vadd.f32 %v1343, %v1554
        %1556 = vmatmul.f32.gmra.mxu0 %v1442
        %v1557 = vpop.f32.mrf.mxu0
        %v1558 = vadd.f32 %v1346, %v1557
        %1559 = vmatmul.f32.gmra.mxu0 %v1445
        %v1560 = vpop.f32.mrf.mxu0
        %v1561 = vadd.f32 %v1349, %v1560
        %1562 = vmatmul.f32.gmra.mxu0 %v1448
        %v1563 = vpop.f32.mrf.mxu0
        %v1564 = vadd.f32 %v1352, %v1563
        %1565 = vmatmul.f32.gmra.mxu0 %v1451
        %v1566 = vpop.f32.mrf.mxu0
        %v1567 = vadd.f32 %v1355, %v1566
        %1568 = vmatmul.f32.gmra.mxu0 %v1454
        %v1569 = vpop.f32.mrf.mxu0
        %v1570 = vadd.f32 %v1358, %v1569
        %1571 = vmatmul.f32.gmra.mxu0 %v1457
        %v1572 = vpop.f32.mrf.mxu0
        %v1573 = vadd.f32 %v1361, %v1572
        %1574 = vmatmul.f32.gmra.mxu0 %v1460
        %v1575 = vpop.f32.mrf.mxu0
        %v1576 = vadd.f32 %v1364, %v1575
        %1577 = vmatmul.f32.gmra.mxu0 %v1463
        %v1578 = vpop.f32.mrf.mxu0
        %v1579 = vadd.f32 %v1367, %v1578
        %1580 = vdwg.mxu0
        %v1581 = vld [vmem:[#allocation2 + $0x2] sm:$0xff]
        %v1582 = vld [vmem:[#allocation2 + $0xa] sm:$0xff]
        %v1583 = vld [vmem:[#allocation2 + $0x12] sm:$0xff]
        %v1584 = vld [vmem:[#allocation2 + $0x1a] sm:$0xff]
        %v1585 = vld [vmem:[#allocation2 + $0x22] sm:$0xff]
        %v1586 = vld [vmem:[#allocation2 + $0x2a] sm:$0xff]
        %v1587 = vld [vmem:[#allocation2 + $0x32] sm:$0xff]
        %v1588 = vld [vmem:[#allocation2 + $0x3a] sm:$0xff]
        %v1589 = vld [vmem:[#allocation2 + $0x42] sm:$0xff]
        %v1590 = vld [vmem:[#allocation2 + $0x4a] sm:$0xff]
        %v1591 = vld [vmem:[#allocation2 + $0x52] sm:$0xff]
        %v1592 = vld [vmem:[#allocation2 + $0x5a] sm:$0xff]
        %v1593 = vld [vmem:[#allocation2 + $0x62] sm:$0xff]
        %v1594 = vld [vmem:[#allocation2 + $0x6a] sm:$0xff]
        %v1595 = vld [vmem:[#allocation2 + $0x72] sm:$0xff]
        %v1596 = vld [vmem:[#allocation2 + $0x7a] sm:$0xff]
        %v1597 = vld [vmem:[#allocation2 + $0x82] sm:$0xff]
        %v1598 = vld [vmem:[#allocation2 + $0x8a] sm:$0xff]
        %v1599 = vld [vmem:[#allocation2 + $0x92] sm:$0xff]
        %v1600 = vld [vmem:[#allocation2 + $0x9a] sm:$0xff]
        %v1601 = vld [vmem:[#allocation2 + $0xa2] sm:$0xff]
        %v1602 = vld [vmem:[#allocation2 + $0xaa] sm:$0xff]
        %v1603 = vld [vmem:[#allocation2 + $0xb2] sm:$0xff]
        %v1604 = vld [vmem:[#allocation2 + $0xba] sm:$0xff]
        %v1605 = vld [vmem:[#allocation2 + $0xc2] sm:$0xff]
        %v1606 = vld [vmem:[#allocation2 + $0xca] sm:$0xff]
        %v1607 = vld [vmem:[#allocation2 + $0xd2] sm:$0xff]
        %v1608 = vld [vmem:[#allocation2 + $0xda] sm:$0xff]
        %v1609 = vld [vmem:[#allocation2 + $0xe2] sm:$0xff]
        %v1610 = vld [vmem:[#allocation2 + $0xea] sm:$0xff]
        %v1611 = vld [vmem:[#allocation2 + $0xf2] sm:$0xff]
        %v1612 = vld [vmem:[#allocation2 + $0xfa] sm:$0xff]
        %vm1613 = vcmp.le.s32.totalorder %v929, 14
        %vm1614 = vcmp.le.s32.totalorder %v930, 14
        %vm1615 = vcmp.le.s32.totalorder %v931, 14
        %vm1616 = vcmp.le.s32.totalorder %v932, 14
        %vm1617 = vcmp.le.s32.totalorder %v933, 14
        %vm1618 = vcmp.le.s32.totalorder %v934, 14
        %vm1619 = vcmp.le.s32.totalorder %v935, 14
        %vm1620 = vcmp.le.s32.totalorder %v936, 14
        %vm1621 = vcmp.le.s32.totalorder %v937, 14
        %vm1622 = vcmp.le.s32.totalorder %v938, 14
        %vm1623 = vcmp.le.s32.totalorder %v939, 14
        %vm1624 = vcmp.le.s32.totalorder %v940, 14
        %vm1625 = vcmp.le.s32.totalorder %v941, 14
        %vm1626 = vcmp.le.s32.totalorder %v942, 14
        %vm1627 = vcmp.le.s32.totalorder %v943, 14
        %vm1628 = vcmp.le.s32.totalorder %v944, 14
        %vm1629 = vcmp.le.s32.totalorder %v945, 14
        %vm1630 = vcmp.le.s32.totalorder %v946, 14
        %vm1631 = vcmp.le.s32.totalorder %v947, 14
        %vm1632 = vcmp.le.s32.totalorder %v948, 14
        %vm1633 = vcmp.le.s32.totalorder %v949, 14
        %vm1634 = vcmp.le.s32.totalorder %v950, 14
        %vm1635 = vcmp.le.s32.totalorder %v951, 14
        %vm1636 = vcmp.le.s32.totalorder %v952, 14
        %vm1637 = vcmp.le.s32.totalorder %v953, 14
        %vm1638 = vcmp.le.s32.totalorder %v954, 14
        %vm1639 = vcmp.le.s32.totalorder %v955, 14
        %vm1640 = vcmp.le.s32.totalorder %v956, 14
        %vm1641 = vcmp.le.s32.totalorder %v957, 14
        %vm1642 = vcmp.le.s32.totalorder %v958, 14
        %vm1643 = vcmp.le.s32.totalorder %v959, 14
        %vm1644 = vcmp.le.s32.totalorder %v960, 14
        %v1645 = vsel %vm1613, 1, 0
        %v1646 = vsel %vm1614, 1, 0
        %v1647 = vsel %vm1615, 1, 0
        %v1648 = vsel %vm1616, 1, 0
        %v1649 = vsel %vm1617, 1, 0
        %v1650 = vsel %vm1618, 1, 0
        %v1651 = vsel %vm1619, 1, 0
        %v1652 = vsel %vm1620, 1, 0
        %v1653 = vsel %vm1621, 1, 0
        %v1654 = vsel %vm1622, 1, 0
        %v1655 = vsel %vm1623, 1, 0
        %v1656 = vsel %vm1624, 1, 0
        %v1657 = vsel %vm1625, 1, 0
        %v1658 = vsel %vm1626, 1, 0
        %v1659 = vsel %vm1627, 1, 0
        %v1660 = vsel %vm1628, 1, 0
        %v1661 = vsel %vm1629, 1, 0
        %v1662 = vsel %vm1630, 1, 0
        %v1663 = vsel %vm1631, 1, 0
        %v1664 = vsel %vm1632, 1, 0
        %v1665 = vsel %vm1633, 1, 0
        %v1666 = vsel %vm1634, 1, 0
        %v1667 = vsel %vm1635, 1, 0
        %v1668 = vsel %vm1636, 1, 0
        %v1669 = vsel %vm1637, 1, 0
        %v1670 = vsel %vm1638, 1, 0
        %v1671 = vsel %vm1639, 1, 0
        %v1672 = vsel %vm1640, 1, 0
        %v1673 = vsel %vm1641, 1, 0
        %v1674 = vsel %vm1642, 1, 0
        %v1675 = vsel %vm1643, 1, 0
        %v1676 = vsel %vm1644, 1, 0
        %vm1677 = vcmp.eq.s32.totalorder %v1645, 1
        %vm1678 = vcmp.eq.s32.totalorder %v1646, 1
        %vm1679 = vcmp.eq.s32.totalorder %v1647, 1
        %vm1680 = vcmp.eq.s32.totalorder %v1648, 1
        %vm1681 = vcmp.eq.s32.totalorder %v1649, 1
        %vm1682 = vcmp.eq.s32.totalorder %v1650, 1
        %vm1683 = vcmp.eq.s32.totalorder %v1651, 1
        %vm1684 = vcmp.eq.s32.totalorder %v1652, 1
        %vm1685 = vcmp.eq.s32.totalorder %v1653, 1
        %vm1686 = vcmp.eq.s32.totalorder %v1654, 1
        %vm1687 = vcmp.eq.s32.totalorder %v1655, 1
        %vm1688 = vcmp.eq.s32.totalorder %v1656, 1
        %vm1689 = vcmp.eq.s32.totalorder %v1657, 1
        %vm1690 = vcmp.eq.s32.totalorder %v1658, 1
        %vm1691 = vcmp.eq.s32.totalorder %v1659, 1
        %vm1692 = vcmp.eq.s32.totalorder %v1660, 1
        %vm1693 = vcmp.eq.s32.totalorder %v1661, 1
        %vm1694 = vcmp.eq.s32.totalorder %v1662, 1
        %vm1695 = vcmp.eq.s32.totalorder %v1663, 1
        %vm1696 = vcmp.eq.s32.totalorder %v1664, 1
        %vm1697 = vcmp.eq.s32.totalorder %v1665, 1
        %vm1698 = vcmp.eq.s32.totalorder %v1666, 1
        %vm1699 = vcmp.eq.s32.totalorder %v1667, 1
        %vm1700 = vcmp.eq.s32.totalorder %v1668, 1
        %vm1701 = vcmp.eq.s32.totalorder %v1669, 1
        %vm1702 = vcmp.eq.s32.totalorder %v1670, 1
        %vm1703 = vcmp.eq.s32.totalorder %v1671, 1
        %vm1704 = vcmp.eq.s32.totalorder %v1672, 1
        %vm1705 = vcmp.eq.s32.totalorder %v1673, 1
        %vm1706 = vcmp.eq.s32.totalorder %v1674, 1
        %vm1707 = vcmp.eq.s32.totalorder %v1675, 1
        %vm1708 = vcmp.eq.s32.totalorder %v1676, 1
        %v1709 = vsel %vm1677, %v1581, 0.0
        %v1710 = vsel %vm1678, %v1582, 0.0
        %v1711 = vsel %vm1679, %v1583, 0.0
        %v1712 = vsel %vm1680, %v1584, 0.0
        %v1713 = vsel %vm1681, %v1585, 0.0
        %v1714 = vsel %vm1682, %v1586, 0.0
        %v1715 = vsel %vm1683, %v1587, 0.0
        %v1716 = vsel %vm1684, %v1588, 0.0
        %v1717 = vsel %vm1685, %v1589, 0.0
        %v1718 = vsel %vm1686, %v1590, 0.0
        %v1719 = vsel %vm1687, %v1591, 0.0
        %v1720 = vsel %vm1688, %v1592, 0.0
        %v1721 = vsel %vm1689, %v1593, 0.0
        %v1722 = vsel %vm1690, %v1594, 0.0
        %v1723 = vsel %vm1691, %v1595, 0.0
        %v1724 = vsel %vm1692, %v1596, 0.0
        %v1725 = vsel %vm1693, %v1597, 0.0
        %v1726 = vsel %vm1694, %v1598, 0.0
        %v1727 = vsel %vm1695, %v1599, 0.0
        %v1728 = vsel %vm1696, %v1600, 0.0
        %v1729 = vsel %vm1697, %v1601, 0.0
        %v1730 = vsel %vm1698, %v1602, 0.0
        %v1731 = vsel %vm1699, %v1603, 0.0
        %v1732 = vsel %vm1700, %v1604, 0.0
        %v1733 = vsel %vm1701, %v1605, 0.0
        %v1734 = vsel %vm1702, %v1606, 0.0
        %v1735 = vsel %vm1703, %v1607, 0.0
        %v1736 = vsel %vm1704, %v1608, 0.0
        %v1737 = vsel %vm1705, %v1609, 0.0
        %v1738 = vsel %vm1706, %v1610, 0.0
        %v1739 = vsel %vm1707, %v1611, 0.0
        %v1740 = vsel %vm1708, %v1612, 0.0
        %s1741 = scalar_lea.vmem %s1, 8
        %v1742 = vld [vmem:[%s1741] sm:$0x7]
        %v1744 = vsel %vm504, %v1709, 0
        %v1747 = vsel %vm504, %v1710, 0
        %v1750 = vsel %vm504, %v1711, 0
        %v1753 = vsel %vm504, %v1712, 0
        %v1756 = vsel %vm504, %v1713, 0
        %v1759 = vsel %vm504, %v1714, 0
        %v1762 = vsel %vm504, %v1715, 0
        %v1765 = vsel %vm504, %v1716, 0
        %v1768 = vsel %vm504, %v1717, 0
        %v1771 = vsel %vm504, %v1718, 0
        %v1774 = vsel %vm504, %v1719, 0
        %v1777 = vsel %vm504, %v1720, 0
        %v1780 = vsel %vm504, %v1721, 0
        %v1783 = vsel %vm504, %v1722, 0
        %v1786 = vsel %vm504, %v1723, 0
        %v1789 = vsel %vm504, %v1724, 0
        %v1792 = vsel %vm504, %v1725, 0
        %v1795 = vsel %vm504, %v1726, 0
        %v1798 = vsel %vm504, %v1727, 0
        %v1801 = vsel %vm504, %v1728, 0
        %v1804 = vsel %vm504, %v1729, 0
        %v1807 = vsel %vm504, %v1730, 0
        %v1810 = vsel %vm504, %v1731, 0
        %v1813 = vsel %vm504, %v1732, 0
        %v1816 = vsel %vm504, %v1733, 0
        %v1819 = vsel %vm504, %v1734, 0
        %v1822 = vsel %vm504, %v1735, 0
        %v1825 = vsel %vm504, %v1736, 0
        %v1828 = vsel %vm504, %v1737, 0
        %v1831 = vsel %vm504, %v1738, 0
        %v1834 = vsel %vm504, %v1739, 0
        %v1837 = vsel %vm504, %v1740, 0
        %v1840 = vsel %vm1252, %v1742, 0
        %1842 = vmatpush.msra.mxu0 0.0
        %1843 = vmatpush.msra.mxu0 0.0
        %1844 = vmatpush.msra.mxu0 0.0
        %1845 = vmatpush.msra.mxu0 0.0
        %1846 = vmatpush.msra.mxu0 0.0
        %1847 = vmatpush.msra.mxu0 0.0
        %1848 = vmatpush.msra.mxu0 0.0
        %1849 = vmatpush.msra.mxu0 0.0
        %1850 = vmatpush.msra.mxu0 0.0
        %1851 = vmatpush.msra.mxu0 0.0
        %1852 = vmatpush.msra.mxu0 0.0
        %1853 = vmatpush.msra.mxu0 0.0
        %1854 = vmatpush.msra.mxu0 0.0
        %1855 = vmatpush.msra.mxu0 0.0
        %1856 = vmatpush.msra.mxu0 0.0
        %1857 = vmatpush.msra.mxu0 %v1840
        %1858 = vmatmul.f32.gmra.mxu0 %v1744
        %v1859 = vpop.f32.mrf.mxu0
        %v1860 = vadd.f32 0.0, %v1859
        %1861 = vmatmul.f32.gmra.mxu0 %v1747
        %v1862 = vpop.f32.mrf.mxu0
        %v1863 = vadd.f32 0.0, %v1862
        %1864 = vmatmul.f32.gmra.mxu0 %v1750
        %v1865 = vpop.f32.mrf.mxu0
        %v1866 = vadd.f32 0.0, %v1865
        %1867 = vmatmul.f32.gmra.mxu0 %v1753
        %v1868 = vpop.f32.mrf.mxu0
        %v1869 = vadd.f32 0.0, %v1868
        %1870 = vmatmul.f32.gmra.mxu0 %v1756
        %v1871 = vpop.f32.mrf.mxu0
        %v1872 = vadd.f32 0.0, %v1871
        %1873 = vmatmul.f32.gmra.mxu0 %v1759
        %v1874 = vpop.f32.mrf.mxu0
        %v1875 = vadd.f32 0.0, %v1874
        %1876 = vmatmul.f32.gmra.mxu0 %v1762
        %v1877 = vpop.f32.mrf.mxu0
        %v1878 = vadd.f32 0.0, %v1877
        %1879 = vmatmul.f32.gmra.mxu0 %v1765
        %v1880 = vpop.f32.mrf.mxu0
        %v1881 = vadd.f32 0.0, %v1880
        %1882 = vmatmul.f32.gmra.mxu0 %v1768
        %v1883 = vpop.f32.mrf.mxu0
        %v1884 = vadd.f32 0.0, %v1883
        %1885 = vmatmul.f32.gmra.mxu0 %v1771
        %v1886 = vpop.f32.mrf.mxu0
        %v1887 = vadd.f32 0.0, %v1886
        %1888 = vmatmul.f32.gmra.mxu0 %v1774
        %v1889 = vpop.f32.mrf.mxu0
        %v1890 = vadd.f32 0.0, %v1889
        %1891 = vmatmul.f32.gmra.mxu0 %v1777
        %v1892 = vpop.f32.mrf.mxu0
        %v1893 = vadd.f32 0.0, %v1892
        %1894 = vmatmul.f32.gmra.mxu0 %v1780
        %v1895 = vpop.f32.mrf.mxu0
        %v1896 = vadd.f32 0.0, %v1895
        %1897 = vmatmul.f32.gmra.mxu0 %v1783
        %v1898 = vpop.f32.mrf.mxu0
        %v1899 = vadd.f32 0.0, %v1898
        %1900 = vmatmul.f32.gmra.mxu0 %v1786
        %v1901 = vpop.f32.mrf.mxu0
        %v1902 = vadd.f32 0.0, %v1901
        %1903 = vmatmul.f32.gmra.mxu0 %v1789
        %v1904 = vpop.f32.mrf.mxu0
        %v1905 = vadd.f32 0.0, %v1904
        %1906 = vmatmul.f32.gmra.mxu0 %v1792
        %v1907 = vpop.f32.mrf.mxu0
        %v1908 = vadd.f32 0.0, %v1907
        %1909 = vmatmul.f32.gmra.mxu0 %v1795
        %v1910 = vpop.f32.mrf.mxu0
        %v1911 = vadd.f32 0.0, %v1910
        %1912 = vmatmul.f32.gmra.mxu0 %v1798
        %v1913 = vpop.f32.mrf.mxu0
        %v1914 = vadd.f32 0.0, %v1913
        %1915 = vmatmul.f32.gmra.mxu0 %v1801
        %v1916 = vpop.f32.mrf.mxu0
        %v1917 = vadd.f32 0.0, %v1916
        %1918 = vmatmul.f32.gmra.mxu0 %v1804
        %v1919 = vpop.f32.mrf.mxu0
        %v1920 = vadd.f32 0.0, %v1919
        %1921 = vmatmul.f32.gmra.mxu0 %v1807
        %v1922 = vpop.f32.mrf.mxu0
        %v1923 = vadd.f32 0.0, %v1922
        %1924 = vmatmul.f32.gmra.mxu0 %v1810
        %v1925 = vpop.f32.mrf.mxu0
        %v1926 = vadd.f32 0.0, %v1925
        %1927 = vmatmul.f32.gmra.mxu0 %v1813
        %v1928 = vpop.f32.mrf.mxu0
        %v1929 = vadd.f32 0.0, %v1928
        %1930 = vmatmul.f32.gmra.mxu0 %v1816
        %v1931 = vpop.f32.mrf.mxu0
        %v1932 = vadd.f32 0.0, %v1931
        %1933 = vmatmul.f32.gmra.mxu0 %v1819
        %v1934 = vpop.f32.mrf.mxu0
        %v1935 = vadd.f32 0.0, %v1934
        %1936 = vmatmul.f32.gmra.mxu0 %v1822
        %v1937 = vpop.f32.mrf.mxu0
        %v1938 = vadd.f32 0.0, %v1937
        %1939 = vmatmul.f32.gmra.mxu0 %v1825
        %v1940 = vpop.f32.mrf.mxu0
        %v1941 = vadd.f32 0.0, %v1940
        %1942 = vmatmul.f32.gmra.mxu0 %v1828
        %v1943 = vpop.f32.mrf.mxu0
        %v1944 = vadd.f32 0.0, %v1943
        %1945 = vmatmul.f32.gmra.mxu0 %v1831
        %v1946 = vpop.f32.mrf.mxu0
        %v1947 = vadd.f32 0.0, %v1946
        %1948 = vmatmul.f32.gmra.mxu0 %v1834
        %v1949 = vpop.f32.mrf.mxu0
        %v1950 = vadd.f32 0.0, %v1949
        %1951 = vmatmul.f32.gmra.mxu0 %v1837
        %v1952 = vpop.f32.mrf.mxu0
        %v1953 = vadd.f32 0.0, %v1952
        %1954 = vdwg.mxu0
        %v1955 = vadd.f32 %v1486, %v1860
        %v1956 = vadd.f32 %v1489, %v1863
        %v1957 = vadd.f32 %v1492, %v1866
        %v1958 = vadd.f32 %v1495, %v1869
        %v1959 = vadd.f32 %v1498, %v1872
        %v1960 = vadd.f32 %v1501, %v1875
        %v1961 = vadd.f32 %v1504, %v1878
        %v1962 = vadd.f32 %v1507, %v1881
        %v1963 = vadd.f32 %v1510, %v1884
        %v1964 = vadd.f32 %v1513, %v1887
        %v1965 = vadd.f32 %v1516, %v1890
        %v1966 = vadd.f32 %v1519, %v1893
        %v1967 = vadd.f32 %v1522, %v1896
        %v1968 = vadd.f32 %v1525, %v1899
        %v1969 = vadd.f32 %v1528, %v1902
        %v1970 = vadd.f32 %v1531, %v1905
        %v1971 = vadd.f32 %v1534, %v1908
        %v1972 = vadd.f32 %v1537, %v1911
        %v1973 = vadd.f32 %v1540, %v1914
        %v1974 = vadd.f32 %v1543, %v1917
        %v1975 = vadd.f32 %v1546, %v1920
        %v1976 = vadd.f32 %v1549, %v1923
        %v1977 = vadd.f32 %v1552, %v1926
        %v1978 = vadd.f32 %v1555, %v1929
        %v1979 = vadd.f32 %v1558, %v1932
        %v1980 = vadd.f32 %v1561, %v1935
        %v1981 = vadd.f32 %v1564, %v1938
        %v1982 = vadd.f32 %v1567, %v1941
        %v1983 = vadd.f32 %v1570, %v1944
        %v1984 = vadd.f32 %v1573, %v1947
        %v1985 = vadd.f32 %v1576, %v1950
        %v1986 = vadd.f32 %v1579, %v1953
        %v1987 = vld [vmem:[#allocation2 + $0x10] sm:$0xff]
        %v1988 = vld [vmem:[#allocation2 + $0x18] sm:$0xff]
        %v1989 = vld [vmem:[#allocation2 + $0x20] sm:$0xff]
        %v1990 = vld [vmem:[#allocation2 + $0x28] sm:$0xff]
        %v1991 = vld [vmem:[#allocation2 + $0x30] sm:$0xff]
        %v1992 = vld [vmem:[#allocation2 + $0x38] sm:$0xff]
        %v1993 = vld [vmem:[#allocation2 + $0x40] sm:$0xff]
        %v1994 = vld [vmem:[#allocation2 + $0x48] sm:$0xff]
        %v1995 = vld [vmem:[#allocation2 + $0x50] sm:$0xff]
        %v1996 = vld [vmem:[#allocation2 + $0x58] sm:$0xff]
        %v1997 = vld [vmem:[#allocation2 + $0x60] sm:$0xff]
        %v1998 = vld [vmem:[#allocation2 + $0x68] sm:$0xff]
        %v1999 = vld [vmem:[#allocation2 + $0x70] sm:$0xff]
        %v2000 = vld [vmem:[#allocation2 + $0x78] sm:$0xff]
        %v2001 = vld [vmem:[#allocation2 + $0x80] sm:$0xff]
        %v2002 = vld [vmem:[#allocation2 + $0x88] sm:$0xff]
        %v2003 = vld [vmem:[#allocation2 + $0x90] sm:$0xff]
        %v2004 = vld [vmem:[#allocation2 + $0x98] sm:$0xff]
        %v2005 = vld [vmem:[#allocation2 + $0xa0] sm:$0xff]
        %v2006 = vld [vmem:[#allocation2 + $0xa8] sm:$0xff]
        %v2007 = vld [vmem:[#allocation2 + $0xb0] sm:$0xff]
        %v2008 = vld [vmem:[#allocation2 + $0xb8] sm:$0xff]
        %v2009 = vld [vmem:[#allocation2 + $0xc0] sm:$0xff]
        %v2010 = vld [vmem:[#allocation2 + $0xc8] sm:$0xff]
        %v2011 = vld [vmem:[#allocation2 + $0xd0] sm:$0xff]
        %v2012 = vld [vmem:[#allocation2 + $0xd8] sm:$0xff]
        %v2013 = vld [vmem:[#allocation2 + $0xe0] sm:$0xff]
        %v2014 = vld [vmem:[#allocation2 + $0xe8] sm:$0xff]
        %v2015 = vld [vmem:[#allocation2 + $0xf0] sm:$0xff]
        %v2016 = vld [vmem:[#allocation2 + $0xf8] sm:$0xff]
        %v2017 = vld [vmem:[#allocation2 + $0x100] sm:$0xff]
        %v2018 = vld [vmem:[#allocation2 + $0x108] sm:$0xff]
        %v2019 = vsel %vm1057, %v1987, 0.0
        %v2020 = vsel %vm1058, %v1988, 0.0
        %v2021 = vsel %vm1059, %v1989, 0.0
        %v2022 = vsel %vm1060, %v1990, 0.0
        %v2023 = vsel %vm1061, %v1991, 0.0
        %v2024 = vsel %vm1062, %v1992, 0.0
        %v2025 = vsel %vm1063, %v1993, 0.0
        %v2026 = vsel %vm1064, %v1994, 0.0
        %v2027 = vsel %vm1065, %v1995, 0.0
        %v2028 = vsel %vm1066, %v1996, 0.0
        %v2029 = vsel %vm1067, %v1997, 0.0
        %v2030 = vsel %vm1068, %v1998, 0.0
        %v2031 = vsel %vm1069, %v1999, 0.0
        %v2032 = vsel %vm1070, %v2000, 0.0
        %v2033 = vsel %vm1071, %v2001, 0.0
        %v2034 = vsel %vm1072, %v2002, 0.0
        %v2035 = vsel %vm1073, %v2003, 0.0
        %v2036 = vsel %vm1074, %v2004, 0.0
        %v2037 = vsel %vm1075, %v2005, 0.0
        %v2038 = vsel %vm1076, %v2006, 0.0
        %v2039 = vsel %vm1077, %v2007, 0.0
        %v2040 = vsel %vm1078, %v2008, 0.0
        %v2041 = vsel %vm1079, %v2009, 0.0
        %v2042 = vsel %vm1080, %v2010, 0.0
        %v2043 = vsel %vm1081, %v2011, 0.0
        %v2044 = vsel %vm1082, %v2012, 0.0
        %v2045 = vsel %vm1083, %v2013, 0.0
        %v2046 = vsel %vm1084, %v2014, 0.0
        %v2047 = vsel %vm1085, %v2015, 0.0
        %v2048 = vsel %vm1086, %v2016, 0.0
        %v2049 = vsel %vm1087, %v2017, 0.0
        %v2050 = vsel %vm1088, %v2018, 0.0
        %s2051 = scalar_lea.vmem %s1, 12
        %v2052 = vld [vmem:[%s2051] sm:$0x7]
        %v2054 = vsel %vm504, %v2019, 0
        %v2057 = vsel %vm504, %v2020, 0
        %v2060 = vsel %vm504, %v2021, 0
        %v2063 = vsel %vm504, %v2022, 0
        %v2066 = vsel %vm504, %v2023, 0
        %v2069 = vsel %vm504, %v2024, 0
        %v2072 = vsel %vm504, %v2025, 0
        %v2075 = vsel %vm504, %v2026, 0
        %v2078 = vsel %vm504, %v2027, 0
        %v2081 = vsel %vm504, %v2028, 0
        %v2084 = vsel %vm504, %v2029, 0
        %v2087 = vsel %vm504, %v2030, 0
        %v2090 = vsel %vm504, %v2031, 0
        %v2093 = vsel %vm504, %v2032, 0
        %v2096 = vsel %vm504, %v2033, 0
        %v2099 = vsel %vm504, %v2034, 0
        %v2102 = vsel %vm504, %v2035, 0
        %v2105 = vsel %vm504, %v2036, 0
        %v2108 = vsel %vm504, %v2037, 0
        %v2111 = vsel %vm504, %v2038, 0
        %v2114 = vsel %vm504, %v2039, 0
        %v2117 = vsel %vm504, %v2040, 0
        %v2120 = vsel %vm504, %v2041, 0
        %v2123 = vsel %vm504, %v2042, 0
        %v2126 = vsel %vm504, %v2043, 0
        %v2129 = vsel %vm504, %v2044, 0
        %v2132 = vsel %vm504, %v2045, 0
        %v2135 = vsel %vm504, %v2046, 0
        %v2138 = vsel %vm504, %v2047, 0
        %v2141 = vsel %vm504, %v2048, 0
        %v2144 = vsel %vm504, %v2049, 0
        %v2147 = vsel %vm504, %v2050, 0
        %v2150 = vsel %vm1252, %v2052, 0
        %2152 = vmatpush.msra.mxu0 0.0
        %2153 = vmatpush.msra.mxu0 0.0
        %2154 = vmatpush.msra.mxu0 0.0
        %2155 = vmatpush.msra.mxu0 0.0
        %2156 = vmatpush.msra.mxu0 0.0
        %2157 = vmatpush.msra.mxu0 0.0
        %2158 = vmatpush.msra.mxu0 0.0
        %2159 = vmatpush.msra.mxu0 0.0
        %2160 = vmatpush.msra.mxu0 0.0
        %2161 = vmatpush.msra.mxu0 0.0
        %2162 = vmatpush.msra.mxu0 0.0
        %2163 = vmatpush.msra.mxu0 0.0
        %2164 = vmatpush.msra.mxu0 0.0
        %2165 = vmatpush.msra.mxu0 0.0
        %2166 = vmatpush.msra.mxu0 0.0
        %2167 = vmatpush.msra.mxu0 %v2150
        %2168 = vmatmul.f32.gmra.mxu0 %v2054
        %v2169 = vpop.f32.mrf.mxu0
        %v2170 = vadd.f32 0.0, %v2169
        %2171 = vmatmul.f32.gmra.mxu0 %v2057
        %v2172 = vpop.f32.mrf.mxu0
        %v2173 = vadd.f32 0.0, %v2172
        %2174 = vmatmul.f32.gmra.mxu0 %v2060
        %v2175 = vpop.f32.mrf.mxu0
        %v2176 = vadd.f32 0.0, %v2175
        %2177 = vmatmul.f32.gmra.mxu0 %v2063
        %v2178 = vpop.f32.mrf.mxu0
        %v2179 = vadd.f32 0.0, %v2178
        %2180 = vmatmul.f32.gmra.mxu0 %v2066
        %v2181 = vpop.f32.mrf.mxu0
        %v2182 = vadd.f32 0.0, %v2181
        %2183 = vmatmul.f32.gmra.mxu0 %v2069
        %v2184 = vpop.f32.mrf.mxu0
        %v2185 = vadd.f32 0.0, %v2184
        %2186 = vmatmul.f32.gmra.mxu0 %v2072
        %v2187 = vpop.f32.mrf.mxu0
        %v2188 = vadd.f32 0.0, %v2187
        %2189 = vmatmul.f32.gmra.mxu0 %v2075
        %v2190 = vpop.f32.mrf.mxu0
        %v2191 = vadd.f32 0.0, %v2190
        %2192 = vmatmul.f32.gmra.mxu0 %v2078
        %v2193 = vpop.f32.mrf.mxu0
        %v2194 = vadd.f32 0.0, %v2193
        %2195 = vmatmul.f32.gmra.mxu0 %v2081
        %v2196 = vpop.f32.mrf.mxu0
        %v2197 = vadd.f32 0.0, %v2196
        %2198 = vmatmul.f32.gmra.mxu0 %v2084
        %v2199 = vpop.f32.mrf.mxu0
        %v2200 = vadd.f32 0.0, %v2199
        %2201 = vmatmul.f32.gmra.mxu0 %v2087
        %v2202 = vpop.f32.mrf.mxu0
        %v2203 = vadd.f32 0.0, %v2202
        %2204 = vmatmul.f32.gmra.mxu0 %v2090
        %v2205 = vpop.f32.mrf.mxu0
        %v2206 = vadd.f32 0.0, %v2205
        %2207 = vmatmul.f32.gmra.mxu0 %v2093
        %v2208 = vpop.f32.mrf.mxu0
        %v2209 = vadd.f32 0.0, %v2208
        %2210 = vmatmul.f32.gmra.mxu0 %v2096
        %v2211 = vpop.f32.mrf.mxu0
        %v2212 = vadd.f32 0.0, %v2211
        %2213 = vmatmul.f32.gmra.mxu0 %v2099
        %v2214 = vpop.f32.mrf.mxu0
        %v2215 = vadd.f32 0.0, %v2214
        %2216 = vmatmul.f32.gmra.mxu0 %v2102
        %v2217 = vpop.f32.mrf.mxu0
        %v2218 = vadd.f32 0.0, %v2217
        %2219 = vmatmul.f32.gmra.mxu0 %v2105
        %v2220 = vpop.f32.mrf.mxu0
        %v2221 = vadd.f32 0.0, %v2220
        %2222 = vmatmul.f32.gmra.mxu0 %v2108
        %v2223 = vpop.f32.mrf.mxu0
        %v2224 = vadd.f32 0.0, %v2223
        %2225 = vmatmul.f32.gmra.mxu0 %v2111
        %v2226 = vpop.f32.mrf.mxu0
        %v2227 = vadd.f32 0.0, %v2226
        %2228 = vmatmul.f32.gmra.mxu0 %v2114
        %v2229 = vpop.f32.mrf.mxu0
        %v2230 = vadd.f32 0.0, %v2229
        %2231 = vmatmul.f32.gmra.mxu0 %v2117
        %v2232 = vpop.f32.mrf.mxu0
        %v2233 = vadd.f32 0.0, %v2232
        %2234 = vmatmul.f32.gmra.mxu0 %v2120
        %v2235 = vpop.f32.mrf.mxu0
        %v2236 = vadd.f32 0.0, %v2235
        %2237 = vmatmul.f32.gmra.mxu0 %v2123
        %v2238 = vpop.f32.mrf.mxu0
        %v2239 = vadd.f32 0.0, %v2238
        %2240 = vmatmul.f32.gmra.mxu0 %v2126
        %v2241 = vpop.f32.mrf.mxu0
        %v2242 = vadd.f32 0.0, %v2241
        %2243 = vmatmul.f32.gmra.mxu0 %v2129
        %v2244 = vpop.f32.mrf.mxu0
        %v2245 = vadd.f32 0.0, %v2244
        %2246 = vmatmul.f32.gmra.mxu0 %v2132
        %v2247 = vpop.f32.mrf.mxu0
        %v2248 = vadd.f32 0.0, %v2247
        %2249 = vmatmul.f32.gmra.mxu0 %v2135
        %v2250 = vpop.f32.mrf.mxu0
        %v2251 = vadd.f32 0.0, %v2250
        %2252 = vmatmul.f32.gmra.mxu0 %v2138
        %v2253 = vpop.f32.mrf.mxu0
        %v2254 = vadd.f32 0.0, %v2253
        %2255 = vmatmul.f32.gmra.mxu0 %v2141
        %v2256 = vpop.f32.mrf.mxu0
        %v2257 = vadd.f32 0.0, %v2256
        %2258 = vmatmul.f32.gmra.mxu0 %v2144
        %v2259 = vpop.f32.mrf.mxu0
        %v2260 = vadd.f32 0.0, %v2259
        %2261 = vmatmul.f32.gmra.mxu0 %v2147
        %v2262 = vpop.f32.mrf.mxu0
        %v2263 = vadd.f32 0.0, %v2262
        %2264 = vdwg.mxu0
        %v2265 = vadd.f32 %v1955, %v2170
        %v2266 = vadd.f32 %v1956, %v2173
        %v2267 = vadd.f32 %v1957, %v2176
        %v2268 = vadd.f32 %v1958, %v2179
        %v2269 = vadd.f32 %v1959, %v2182
        %v2270 = vadd.f32 %v1960, %v2185
        %v2271 = vadd.f32 %v1961, %v2188
        %v2272 = vadd.f32 %v1962, %v2191
        %v2273 = vadd.f32 %v1963, %v2194
        %v2274 = vadd.f32 %v1964, %v2197
        %v2275 = vadd.f32 %v1965, %v2200
        %v2276 = vadd.f32 %v1966, %v2203
        %v2277 = vadd.f32 %v1967, %v2206
        %v2278 = vadd.f32 %v1968, %v2209
        %v2279 = vadd.f32 %v1969, %v2212
        %v2280 = vadd.f32 %v1970, %v2215
        %v2281 = vadd.f32 %v1971, %v2218
        %v2282 = vadd.f32 %v1972, %v2221
        %v2283 = vadd.f32 %v1973, %v2224
        %v2284 = vadd.f32 %v1974, %v2227
        %v2285 = vadd.f32 %v1975, %v2230
        %v2286 = vadd.f32 %v1976, %v2233
        %v2287 = vadd.f32 %v1977, %v2236
        %v2288 = vadd.f32 %v1978, %v2239
        %v2289 = vadd.f32 %v1979, %v2242
        %v2290 = vadd.f32 %v1980, %v2245
        %v2291 = vadd.f32 %v1981, %v2248
        %v2292 = vadd.f32 %v1982, %v2251
        %v2293 = vadd.f32 %v1983, %v2254
        %v2294 = vadd.f32 %v1984, %v2257
        %v2295 = vadd.f32 %v1985, %v2260
        %v2296 = vadd.f32 %v1986, %v2263
        %v2297 = vld [vmem:[#allocation2 + $0x11] sm:$0xff]
        %v2298 = vld [vmem:[#allocation2 + $0x19] sm:$0xff]
        %v2299 = vld [vmem:[#allocation2 + $0x21] sm:$0xff]
        %v2300 = vld [vmem:[#allocation2 + $0x29] sm:$0xff]
        %v2301 = vld [vmem:[#allocation2 + $0x31] sm:$0xff]
        %v2302 = vld [vmem:[#allocation2 + $0x39] sm:$0xff]
        %v2303 = vld [vmem:[#allocation2 + $0x41] sm:$0xff]
        %v2304 = vld [vmem:[#allocation2 + $0x49] sm:$0xff]
        %v2305 = vld [vmem:[#allocation2 + $0x51] sm:$0xff]
        %v2306 = vld [vmem:[#allocation2 + $0x59] sm:$0xff]
        %v2307 = vld [vmem:[#allocation2 + $0x61] sm:$0xff]
        %v2308 = vld [vmem:[#allocation2 + $0x69] sm:$0xff]
        %v2309 = vld [vmem:[#allocation2 + $0x71] sm:$0xff]
        %v2310 = vld [vmem:[#allocation2 + $0x79] sm:$0xff]
        %v2311 = vld [vmem:[#allocation2 + $0x81] sm:$0xff]
        %v2312 = vld [vmem:[#allocation2 + $0x89] sm:$0xff]
        %v2313 = vld [vmem:[#allocation2 + $0x91] sm:$0xff]
        %v2314 = vld [vmem:[#allocation2 + $0x99] sm:$0xff]
        %v2315 = vld [vmem:[#allocation2 + $0xa1] sm:$0xff]
        %v2316 = vld [vmem:[#allocation2 + $0xa9] sm:$0xff]
        %v2317 = vld [vmem:[#allocation2 + $0xb1] sm:$0xff]
        %v2318 = vld [vmem:[#allocation2 + $0xb9] sm:$0xff]
        %v2319 = vld [vmem:[#allocation2 + $0xc1] sm:$0xff]
        %v2320 = vld [vmem:[#allocation2 + $0xc9] sm:$0xff]
        %v2321 = vld [vmem:[#allocation2 + $0xd1] sm:$0xff]
        %v2322 = vld [vmem:[#allocation2 + $0xd9] sm:$0xff]
        %v2323 = vld [vmem:[#allocation2 + $0xe1] sm:$0xff]
        %v2324 = vld [vmem:[#allocation2 + $0xe9] sm:$0xff]
        %v2325 = vld [vmem:[#allocation2 + $0xf1] sm:$0xff]
        %v2326 = vld [vmem:[#allocation2 + $0xf9] sm:$0xff]
        %v2327 = vld [vmem:[#allocation2 + $0x101] sm:$0xff]
        %v2328 = vld [vmem:[#allocation2 + $0x109] sm:$0xff]
        %s2329 = scalar_lea.vmem %s1, 16
        %v2330 = vld [vmem:[%s2329] sm:$0x7]
        %v2332 = vsel %vm504, %v2297, 0
        %v2335 = vsel %vm504, %v2298, 0
        %v2338 = vsel %vm504, %v2299, 0
        %v2341 = vsel %vm504, %v2300, 0
        %v2344 = vsel %vm504, %v2301, 0
        %v2347 = vsel %vm504, %v2302, 0
        %v2350 = vsel %vm504, %v2303, 0
        %v2353 = vsel %vm504, %v2304, 0
        %v2356 = vsel %vm504, %v2305, 0
        %v2359 = vsel %vm504, %v2306, 0
        %v2362 = vsel %vm504, %v2307, 0
        %v2365 = vsel %vm504, %v2308, 0
        %v2368 = vsel %vm504, %v2309, 0
        %v2371 = vsel %vm504, %v2310, 0
        %v2374 = vsel %vm504, %v2311, 0
        %v2377 = vsel %vm504, %v2312, 0
        %v2380 = vsel %vm504, %v2313, 0
        %v2383 = vsel %vm504, %v2314, 0
        %v2386 = vsel %vm504, %v2315, 0
        %v2389 = vsel %vm504, %v2316, 0
        %v2392 = vsel %vm504, %v2317, 0
        %v2395 = vsel %vm504, %v2318, 0
        %v2398 = vsel %vm504, %v2319, 0
        %v2401 = vsel %vm504, %v2320, 0
        %v2404 = vsel %vm504, %v2321, 0
        %v2407 = vsel %vm504, %v2322, 0
        %v2410 = vsel %vm504, %v2323, 0
        %v2413 = vsel %vm504, %v2324, 0
        %v2416 = vsel %vm504, %v2325, 0
        %v2419 = vsel %vm504, %v2326, 0
        %v2422 = vsel %vm504, %v2327, 0
        %v2425 = vsel %vm504, %v2328, 0
        %v2428 = vsel %vm1252, %v2330, 0
        %2430 = vmatpush.msra.mxu0 0.0
        %2431 = vmatpush.msra.mxu0 0.0
        %2432 = vmatpush.msra.mxu0 0.0
        %2433 = vmatpush.msra.mxu0 0.0
        %2434 = vmatpush.msra.mxu0 0.0
        %2435 = vmatpush.msra.mxu0 0.0
        %2436 = vmatpush.msra.mxu0 0.0
        %2437 = vmatpush.msra.mxu0 0.0
        %2438 = vmatpush.msra.mxu0 0.0
        %2439 = vmatpush.msra.mxu0 0.0
        %2440 = vmatpush.msra.mxu0 0.0
        %2441 = vmatpush.msra.mxu0 0.0
        %2442 = vmatpush.msra.mxu0 0.0
        %2443 = vmatpush.msra.mxu0 0.0
        %2444 = vmatpush.msra.mxu0 0.0
        %2445 = vmatpush.msra.mxu0 %v2428
        %2446 = vmatmul.f32.gmra.mxu0 %v2332
        %v2447 = vpop.f32.mrf.mxu0
        %v2448 = vadd.f32 0.0, %v2447
        %2449 = vmatmul.f32.gmra.mxu0 %v2335
        %v2450 = vpop.f32.mrf.mxu0
        %v2451 = vadd.f32 0.0, %v2450
        %2452 = vmatmul.f32.gmra.mxu0 %v2338
        %v2453 = vpop.f32.mrf.mxu0
        %v2454 = vadd.f32 0.0, %v2453
        %2455 = vmatmul.f32.gmra.mxu0 %v2341
        %v2456 = vpop.f32.mrf.mxu0
        %v2457 = vadd.f32 0.0, %v2456
        %2458 = vmatmul.f32.gmra.mxu0 %v2344
        %v2459 = vpop.f32.mrf.mxu0
        %v2460 = vadd.f32 0.0, %v2459
        %2461 = vmatmul.f32.gmra.mxu0 %v2347
        %v2462 = vpop.f32.mrf.mxu0
        %v2463 = vadd.f32 0.0, %v2462
        %2464 = vmatmul.f32.gmra.mxu0 %v2350
        %v2465 = vpop.f32.mrf.mxu0
        %v2466 = vadd.f32 0.0, %v2465
        %2467 = vmatmul.f32.gmra.mxu0 %v2353
        %v2468 = vpop.f32.mrf.mxu0
        %v2469 = vadd.f32 0.0, %v2468
        %2470 = vmatmul.f32.gmra.mxu0 %v2356
        %v2471 = vpop.f32.mrf.mxu0
        %v2472 = vadd.f32 0.0, %v2471
        %2473 = vmatmul.f32.gmra.mxu0 %v2359
        %v2474 = vpop.f32.mrf.mxu0
        %v2475 = vadd.f32 0.0, %v2474
        %2476 = vmatmul.f32.gmra.mxu0 %v2362
        %v2477 = vpop.f32.mrf.mxu0
        %v2478 = vadd.f32 0.0, %v2477
        %2479 = vmatmul.f32.gmra.mxu0 %v2365
        %v2480 = vpop.f32.mrf.mxu0
        %v2481 = vadd.f32 0.0, %v2480
        %2482 = vmatmul.f32.gmra.mxu0 %v2368
        %v2483 = vpop.f32.mrf.mxu0
        %v2484 = vadd.f32 0.0, %v2483
        %2485 = vmatmul.f32.gmra.mxu0 %v2371
        %v2486 = vpop.f32.mrf.mxu0
        %v2487 = vadd.f32 0.0, %v2486
        %2488 = vmatmul.f32.gmra.mxu0 %v2374
        %v2489 = vpop.f32.mrf.mxu0
        %v2490 = vadd.f32 0.0, %v2489
        %2491 = vmatmul.f32.gmra.mxu0 %v2377
        %v2492 = vpop.f32.mrf.mxu0
        %v2493 = vadd.f32 0.0, %v2492
        %2494 = vmatmul.f32.gmra.mxu0 %v2380
        %v2495 = vpop.f32.mrf.mxu0
        %v2496 = vadd.f32 0.0, %v2495
        %2497 = vmatmul.f32.gmra.mxu0 %v2383
        %v2498 = vpop.f32.mrf.mxu0
        %v2499 = vadd.f32 0.0, %v2498
        %2500 = vmatmul.f32.gmra.mxu0 %v2386
        %v2501 = vpop.f32.mrf.mxu0
        %v2502 = vadd.f32 0.0, %v2501
        %2503 = vmatmul.f32.gmra.mxu0 %v2389
        %v2504 = vpop.f32.mrf.mxu0
        %v2505 = vadd.f32 0.0, %v2504
        %2506 = vmatmul.f32.gmra.mxu0 %v2392
        %v2507 = vpop.f32.mrf.mxu0
        %v2508 = vadd.f32 0.0, %v2507
        %2509 = vmatmul.f32.gmra.mxu0 %v2395
        %v2510 = vpop.f32.mrf.mxu0
        %v2511 = vadd.f32 0.0, %v2510
        %2512 = vmatmul.f32.gmra.mxu0 %v2398
        %v2513 = vpop.f32.mrf.mxu0
        %v2514 = vadd.f32 0.0, %v2513
        %2515 = vmatmul.f32.gmra.mxu0 %v2401
        %v2516 = vpop.f32.mrf.mxu0
        %v2517 = vadd.f32 0.0, %v2516
        %2518 = vmatmul.f32.gmra.mxu0 %v2404
        %v2519 = vpop.f32.mrf.mxu0
        %v2520 = vadd.f32 0.0, %v2519
        %2521 = vmatmul.f32.gmra.mxu0 %v2407
        %v2522 = vpop.f32.mrf.mxu0
        %v2523 = vadd.f32 0.0, %v2522
        %2524 = vmatmul.f32.gmra.mxu0 %v2410
        %v2525 = vpop.f32.mrf.mxu0
        %v2526 = vadd.f32 0.0, %v2525
        %2527 = vmatmul.f32.gmra.mxu0 %v2413
        %v2528 = vpop.f32.mrf.mxu0
        %v2529 = vadd.f32 0.0, %v2528
        %2530 = vmatmul.f32.gmra.mxu0 %v2416
        %v2531 = vpop.f32.mrf.mxu0
        %v2532 = vadd.f32 0.0, %v2531
        %2533 = vmatmul.f32.gmra.mxu0 %v2419
        %v2534 = vpop.f32.mrf.mxu0
        %v2535 = vadd.f32 0.0, %v2534
        %2536 = vmatmul.f32.gmra.mxu0 %v2422
        %v2537 = vpop.f32.mrf.mxu0
        %v2538 = vadd.f32 0.0, %v2537
        %2539 = vmatmul.f32.gmra.mxu0 %v2425
        %v2540 = vpop.f32.mrf.mxu0
        %v2541 = vadd.f32 0.0, %v2540
        %2542 = vdwg.mxu0
        %v2543 = vadd.f32 %v2265, %v2448
        %v2544 = vadd.f32 %v2266, %v2451
        %v2545 = vadd.f32 %v2267, %v2454
        %v2546 = vadd.f32 %v2268, %v2457
        %v2547 = vadd.f32 %v2269, %v2460
        %v2548 = vadd.f32 %v2270, %v2463
        %v2549 = vadd.f32 %v2271, %v2466
        %v2550 = vadd.f32 %v2272, %v2469
        %v2551 = vadd.f32 %v2273, %v2472
        %v2552 = vadd.f32 %v2274, %v2475
        %v2553 = vadd.f32 %v2275, %v2478
        %v2554 = vadd.f32 %v2276, %v2481
        %v2555 = vadd.f32 %v2277, %v2484
        %v2556 = vadd.f32 %v2278, %v2487
        %v2557 = vadd.f32 %v2279, %v2490
        %v2558 = vadd.f32 %v2280, %v2493
        %v2559 = vadd.f32 %v2281, %v2496
        %v2560 = vadd.f32 %v2282, %v2499
        %v2561 = vadd.f32 %v2283, %v2502
        %v2562 = vadd.f32 %v2284, %v2505
        %v2563 = vadd.f32 %v2285, %v2508
        %v2564 = vadd.f32 %v2286, %v2511
        %v2565 = vadd.f32 %v2287, %v2514
        %v2566 = vadd.f32 %v2288, %v2517
        %v2567 = vadd.f32 %v2289, %v2520
        %v2568 = vadd.f32 %v2290, %v2523
        %v2569 = vadd.f32 %v2291, %v2526
        %v2570 = vadd.f32 %v2292, %v2529
        %v2571 = vadd.f32 %v2293, %v2532
        %v2572 = vadd.f32 %v2294, %v2535
        %v2573 = vadd.f32 %v2295, %v2538
        %v2574 = vadd.f32 %v2296, %v2541
        %v2575 = vld [vmem:[#allocation2 + $0x12] sm:$0xff]
        %v2576 = vld [vmem:[#allocation2 + $0x1a] sm:$0xff]
        %v2577 = vld [vmem:[#allocation2 + $0x22] sm:$0xff]
        %v2578 = vld [vmem:[#allocation2 + $0x2a] sm:$0xff]
        %v2579 = vld [vmem:[#allocation2 + $0x32] sm:$0xff]
        %v2580 = vld [vmem:[#allocation2 + $0x3a] sm:$0xff]
        %v2581 = vld [vmem:[#allocation2 + $0x42] sm:$0xff]
        %v2582 = vld [vmem:[#allocation2 + $0x4a] sm:$0xff]
        %v2583 = vld [vmem:[#allocation2 + $0x52] sm:$0xff]
        %v2584 = vld [vmem:[#allocation2 + $0x5a] sm:$0xff]
        %v2585 = vld [vmem:[#allocation2 + $0x62] sm:$0xff]
        %v2586 = vld [vmem:[#allocation2 + $0x6a] sm:$0xff]
        %v2587 = vld [vmem:[#allocation2 + $0x72] sm:$0xff]
        %v2588 = vld [vmem:[#allocation2 + $0x7a] sm:$0xff]
        %v2589 = vld [vmem:[#allocation2 + $0x82] sm:$0xff]
        %v2590 = vld [vmem:[#allocation2 + $0x8a] sm:$0xff]
        %v2591 = vld [vmem:[#allocation2 + $0x92] sm:$0xff]
        %v2592 = vld [vmem:[#allocation2 + $0x9a] sm:$0xff]
        %v2593 = vld [vmem:[#allocation2 + $0xa2] sm:$0xff]
        %v2594 = vld [vmem:[#allocation2 + $0xaa] sm:$0xff]
        %v2595 = vld [vmem:[#allocation2 + $0xb2] sm:$0xff]
        %v2596 = vld [vmem:[#allocation2 + $0xba] sm:$0xff]
        %v2597 = vld [vmem:[#allocation2 + $0xc2] sm:$0xff]
        %v2598 = vld [vmem:[#allocation2 + $0xca] sm:$0xff]
        %v2599 = vld [vmem:[#allocation2 + $0xd2] sm:$0xff]
        %v2600 = vld [vmem:[#allocation2 + $0xda] sm:$0xff]
        %v2601 = vld [vmem:[#allocation2 + $0xe2] sm:$0xff]
        %v2602 = vld [vmem:[#allocation2 + $0xea] sm:$0xff]
        %v2603 = vld [vmem:[#allocation2 + $0xf2] sm:$0xff]
        %v2604 = vld [vmem:[#allocation2 + $0xfa] sm:$0xff]
        %v2605 = vld [vmem:[#allocation2 + $0x102] sm:$0xff]
        %v2606 = vld [vmem:[#allocation2 + $0x10a] sm:$0xff]
        %v2607 = vsel %vm1677, %v2575, 0.0
        %v2608 = vsel %vm1678, %v2576, 0.0
        %v2609 = vsel %vm1679, %v2577, 0.0
        %v2610 = vsel %vm1680, %v2578, 0.0
        %v2611 = vsel %vm1681, %v2579, 0.0
        %v2612 = vsel %vm1682, %v2580, 0.0
        %v2613 = vsel %vm1683, %v2581, 0.0
        %v2614 = vsel %vm1684, %v2582, 0.0
        %v2615 = vsel %vm1685, %v2583, 0.0
        %v2616 = vsel %vm1686, %v2584, 0.0
        %v2617 = vsel %vm1687, %v2585, 0.0
        %v2618 = vsel %vm1688, %v2586, 0.0
        %v2619 = vsel %vm1689, %v2587, 0.0
        %v2620 = vsel %vm1690, %v2588, 0.0
        %v2621 = vsel %vm1691, %v2589, 0.0
        %v2622 = vsel %vm1692, %v2590, 0.0
        %v2623 = vsel %vm1693, %v2591, 0.0
        %v2624 = vsel %vm1694, %v2592, 0.0
        %v2625 = vsel %vm1695, %v2593, 0.0
        %v2626 = vsel %vm1696, %v2594, 0.0
        %v2627 = vsel %vm1697, %v2595, 0.0
        %v2628 = vsel %vm1698, %v2596, 0.0
        %v2629 = vsel %vm1699, %v2597, 0.0
        %v2630 = vsel %vm1700, %v2598, 0.0
        %v2631 = vsel %vm1701, %v2599, 0.0
        %v2632 = vsel %vm1702, %v2600, 0.0
        %v2633 = vsel %vm1703, %v2601, 0.0
        %v2634 = vsel %vm1704, %v2602, 0.0
        %v2635 = vsel %vm1705, %v2603, 0.0
        %v2636 = vsel %vm1706, %v2604, 0.0
        %v2637 = vsel %vm1707, %v2605, 0.0
        %v2638 = vsel %vm1708, %v2606, 0.0
        %s2639 = scalar_lea.vmem %s1, 20
        %v2640 = vld [vmem:[%s2639] sm:$0x7]
        %v2642 = vsel %vm504, %v2607, 0
        %v2645 = vsel %vm504, %v2608, 0
        %v2648 = vsel %vm504, %v2609, 0
        %v2651 = vsel %vm504, %v2610, 0
        %v2654 = vsel %vm504, %v2611, 0
        %v2657 = vsel %vm504, %v2612, 0
        %v2660 = vsel %vm504, %v2613, 0
        %v2663 = vsel %vm504, %v2614, 0
        %v2666 = vsel %vm504, %v2615, 0
        %v2669 = vsel %vm504, %v2616, 0
        %v2672 = vsel %vm504, %v2617, 0
        %v2675 = vsel %vm504, %v2618, 0
        %v2678 = vsel %vm504, %v2619, 0
        %v2681 = vsel %vm504, %v2620, 0
        %v2684 = vsel %vm504, %v2621, 0
        %v2687 = vsel %vm504, %v2622, 0
        %v2690 = vsel %vm504, %v2623, 0
        %v2693 = vsel %vm504, %v2624, 0
        %v2696 = vsel %vm504, %v2625, 0
        %v2699 = vsel %vm504, %v2626, 0
        %v2702 = vsel %vm504, %v2627, 0
        %v2705 = vsel %vm504, %v2628, 0
        %v2708 = vsel %vm504, %v2629, 0
        %v2711 = vsel %vm504, %v2630, 0
        %v2714 = vsel %vm504, %v2631, 0
        %v2717 = vsel %vm504, %v2632, 0
        %v2720 = vsel %vm504, %v2633, 0
        %v2723 = vsel %vm504, %v2634, 0
        %v2726 = vsel %vm504, %v2635, 0
        %v2729 = vsel %vm504, %v2636, 0
        %v2732 = vsel %vm504, %v2637, 0
        %v2735 = vsel %vm504, %v2638, 0
        %v2738 = vsel %vm1252, %v2640, 0
        %2740 = vmatpush.msra.mxu0 0.0
        %2741 = vmatpush.msra.mxu0 0.0
        %2742 = vmatpush.msra.mxu0 0.0
        %2743 = vmatpush.msra.mxu0 0.0
        %2744 = vmatpush.msra.mxu0 0.0
        %2745 = vmatpush.msra.mxu0 0.0
        %2746 = vmatpush.msra.mxu0 0.0
        %2747 = vmatpush.msra.mxu0 0.0
        %2748 = vmatpush.msra.mxu0 0.0
        %2749 = vmatpush.msra.mxu0 0.0
        %2750 = vmatpush.msra.mxu0 0.0
        %2751 = vmatpush.msra.mxu0 0.0
        %2752 = vmatpush.msra.mxu0 0.0
        %2753 = vmatpush.msra.mxu0 0.0
        %2754 = vmatpush.msra.mxu0 0.0
        %2755 = vmatpush.msra.mxu0 %v2738
        %2756 = vmatmul.f32.gmra.mxu0 %v2642
        %v2757 = vpop.f32.mrf.mxu0
        %v2758 = vadd.f32 0.0, %v2757
        %2759 = vmatmul.f32.gmra.mxu0 %v2645
        %v2760 = vpop.f32.mrf.mxu0
        %v2761 = vadd.f32 0.0, %v2760
        %2762 = vmatmul.f32.gmra.mxu0 %v2648
        %v2763 = vpop.f32.mrf.mxu0
        %v2764 = vadd.f32 0.0, %v2763
        %2765 = vmatmul.f32.gmra.mxu0 %v2651
        %v2766 = vpop.f32.mrf.mxu0
        %v2767 = vadd.f32 0.0, %v2766
        %2768 = vmatmul.f32.gmra.mxu0 %v2654
        %v2769 = vpop.f32.mrf.mxu0
        %v2770 = vadd.f32 0.0, %v2769
        %2771 = vmatmul.f32.gmra.mxu0 %v2657
        %v2772 = vpop.f32.mrf.mxu0
        %v2773 = vadd.f32 0.0, %v2772
        %2774 = vmatmul.f32.gmra.mxu0 %v2660
        %v2775 = vpop.f32.mrf.mxu0
        %v2776 = vadd.f32 0.0, %v2775
        %2777 = vmatmul.f32.gmra.mxu0 %v2663
        %v2778 = vpop.f32.mrf.mxu0
        %v2779 = vadd.f32 0.0, %v2778
        %2780 = vmatmul.f32.gmra.mxu0 %v2666
        %v2781 = vpop.f32.mrf.mxu0
        %v2782 = vadd.f32 0.0, %v2781
        %2783 = vmatmul.f32.gmra.mxu0 %v2669
        %v2784 = vpop.f32.mrf.mxu0
        %v2785 = vadd.f32 0.0, %v2784
        %2786 = vmatmul.f32.gmra.mxu0 %v2672
        %v2787 = vpop.f32.mrf.mxu0
        %v2788 = vadd.f32 0.0, %v2787
        %2789 = vmatmul.f32.gmra.mxu0 %v2675
        %v2790 = vpop.f32.mrf.mxu0
        %v2791 = vadd.f32 0.0, %v2790
        %2792 = vmatmul.f32.gmra.mxu0 %v2678
        %v2793 = vpop.f32.mrf.mxu0
        %v2794 = vadd.f32 0.0, %v2793
        %2795 = vmatmul.f32.gmra.mxu0 %v2681
        %v2796 = vpop.f32.mrf.mxu0
        %v2797 = vadd.f32 0.0, %v2796
        %2798 = vmatmul.f32.gmra.mxu0 %v2684
        %v2799 = vpop.f32.mrf.mxu0
        %v2800 = vadd.f32 0.0, %v2799
        %2801 = vmatmul.f32.gmra.mxu0 %v2687
        %v2802 = vpop.f32.mrf.mxu0
        %v2803 = vadd.f32 0.0, %v2802
        %2804 = vmatmul.f32.gmra.mxu0 %v2690
        %v2805 = vpop.f32.mrf.mxu0
        %v2806 = vadd.f32 0.0, %v2805
        %2807 = vmatmul.f32.gmra.mxu0 %v2693
        %v2808 = vpop.f32.mrf.mxu0
        %v2809 = vadd.f32 0.0, %v2808
        %2810 = vmatmul.f32.gmra.mxu0 %v2696
        %v2811 = vpop.f32.mrf.mxu0
        %v2812 = vadd.f32 0.0, %v2811
        %2813 = vmatmul.f32.gmra.mxu0 %v2699
        %v2814 = vpop.f32.mrf.mxu0
        %v2815 = vadd.f32 0.0, %v2814
        %2816 = vmatmul.f32.gmra.mxu0 %v2702
        %v2817 = vpop.f32.mrf.mxu0
        %v2818 = vadd.f32 0.0, %v2817
        %2819 = vmatmul.f32.gmra.mxu0 %v2705
        %v2820 = vpop.f32.mrf.mxu0
        %v2821 = vadd.f32 0.0, %v2820
        %2822 = vmatmul.f32.gmra.mxu0 %v2708
        %v2823 = vpop.f32.mrf.mxu0
        %v2824 = vadd.f32 0.0, %v2823
        %2825 = vmatmul.f32.gmra.mxu0 %v2711
        %v2826 = vpop.f32.mrf.mxu0
        %v2827 = vadd.f32 0.0, %v2826
        %2828 = vmatmul.f32.gmra.mxu0 %v2714
        %v2829 = vpop.f32.mrf.mxu0
        %v2830 = vadd.f32 0.0, %v2829
        %2831 = vmatmul.f32.gmra.mxu0 %v2717
        %v2832 = vpop.f32.mrf.mxu0
        %v2833 = vadd.f32 0.0, %v2832
        %2834 = vmatmul.f32.gmra.mxu0 %v2720
        %v2835 = vpop.f32.mrf.mxu0
        %v2836 = vadd.f32 0.0, %v2835
        %2837 = vmatmul.f32.gmra.mxu0 %v2723
        %v2838 = vpop.f32.mrf.mxu0
        %v2839 = vadd.f32 0.0, %v2838
        %2840 = vmatmul.f32.gmra.mxu0 %v2726
        %v2841 = vpop.f32.mrf.mxu0
        %v2842 = vadd.f32 0.0, %v2841
        %2843 = vmatmul.f32.gmra.mxu0 %v2729
        %v2844 = vpop.f32.mrf.mxu0
        %v2845 = vadd.f32 0.0, %v2844
        %2846 = vmatmul.f32.gmra.mxu0 %v2732
        %v2847 = vpop.f32.mrf.mxu0
        %v2848 = vadd.f32 0.0, %v2847
        %2849 = vmatmul.f32.gmra.mxu0 %v2735
        %v2850 = vpop.f32.mrf.mxu0
        %v2851 = vadd.f32 0.0, %v2850
        %2852 = vdwg.mxu0
        %v2853 = vadd.f32 %v2543, %v2758
        %v2854 = vadd.f32 %v2544, %v2761
        %v2855 = vadd.f32 %v2545, %v2764
        %v2856 = vadd.f32 %v2546, %v2767
        %v2857 = vadd.f32 %v2547, %v2770
        %v2858 = vadd.f32 %v2548, %v2773
        %v2859 = vadd.f32 %v2549, %v2776
        %v2860 = vadd.f32 %v2550, %v2779
        %v2861 = vadd.f32 %v2551, %v2782
        %v2862 = vadd.f32 %v2552, %v2785
        %v2863 = vadd.f32 %v2553, %v2788
        %v2864 = vadd.f32 %v2554, %v2791
        %v2865 = vadd.f32 %v2555, %v2794
        %v2866 = vadd.f32 %v2556, %v2797
        %v2867 = vadd.f32 %v2557, %v2800
        %v2868 = vadd.f32 %v2558, %v2803
        %v2869 = vadd.f32 %v2559, %v2806
        %v2870 = vadd.f32 %v2560, %v2809
        %v2871 = vadd.f32 %v2561, %v2812
        %v2872 = vadd.f32 %v2562, %v2815
        %v2873 = vadd.f32 %v2563, %v2818
        %v2874 = vadd.f32 %v2564, %v2821
        %v2875 = vadd.f32 %v2565, %v2824
        %v2876 = vadd.f32 %v2566, %v2827
        %v2877 = vadd.f32 %v2567, %v2830
        %v2878 = vadd.f32 %v2568, %v2833
        %v2879 = vadd.f32 %v2569, %v2836
        %v2880 = vadd.f32 %v2570, %v2839
        %v2881 = vadd.f32 %v2571, %v2842
        %v2882 = vadd.f32 %v2572, %v2845
        %v2883 = vadd.f32 %v2573, %v2848
        %v2884 = vadd.f32 %v2574, %v2851
        %v2885 = vld [vmem:[#allocation2 + $0x20] sm:$0xff]
        %v2886 = vld [vmem:[#allocation2 + $0x28] sm:$0xff]
        %v2887 = vld [vmem:[#allocation2 + $0x30] sm:$0xff]
        %v2888 = vld [vmem:[#allocation2 + $0x38] sm:$0xff]
        %v2889 = vld [vmem:[#allocation2 + $0x40] sm:$0xff]
        %v2890 = vld [vmem:[#allocation2 + $0x48] sm:$0xff]
        %v2891 = vld [vmem:[#allocation2 + $0x50] sm:$0xff]
        %v2892 = vld [vmem:[#allocation2 + $0x58] sm:$0xff]
        %v2893 = vld [vmem:[#allocation2 + $0x60] sm:$0xff]
        %v2894 = vld [vmem:[#allocation2 + $0x68] sm:$0xff]
        %v2895 = vld [vmem:[#allocation2 + $0x70] sm:$0xff]
        %v2896 = vld [vmem:[#allocation2 + $0x78] sm:$0xff]
        %v2897 = vld [vmem:[#allocation2 + $0x80] sm:$0xff]
        %v2898 = vld [vmem:[#allocation2 + $0x88] sm:$0xff]
        %v2899 = vld [vmem:[#allocation2 + $0x90] sm:$0xff]
        %v2900 = vld [vmem:[#allocation2 + $0x98] sm:$0xff]
        %v2901 = vld [vmem:[#allocation2 + $0xa0] sm:$0xff]
        %v2902 = vld [vmem:[#allocation2 + $0xa8] sm:$0xff]
        %v2903 = vld [vmem:[#allocation2 + $0xb0] sm:$0xff]
        %v2904 = vld [vmem:[#allocation2 + $0xb8] sm:$0xff]
        %v2905 = vld [vmem:[#allocation2 + $0xc0] sm:$0xff]
        %v2906 = vld [vmem:[#allocation2 + $0xc8] sm:$0xff]
        %v2907 = vld [vmem:[#allocation2 + $0xd0] sm:$0xff]
        %v2908 = vld [vmem:[#allocation2 + $0xd8] sm:$0xff]
        %v2909 = vld [vmem:[#allocation2 + $0xe0] sm:$0xff]
        %v2910 = vld [vmem:[#allocation2 + $0xe8] sm:$0xff]
        %v2911 = vld [vmem:[#allocation2 + $0xf0] sm:$0xff]
        %v2912 = vld [vmem:[#allocation2 + $0xf8] sm:$0xff]
        %v2913 = vld [vmem:[#allocation2 + $0x100] sm:$0xff]
        %v2914 = vld [vmem:[#allocation2 + $0x108] sm:$0xff]
        %v2915 = vld [vmem:[#allocation2 + $0x110] sm:$0xff]
        %v2916 = vld [vmem:[#allocation2 + $0x118] sm:$0xff]
        %v2917 = vsel %vm1057, %v2885, 0.0
        %v2918 = vsel %vm1058, %v2886, 0.0
        %v2919 = vsel %vm1059, %v2887, 0.0
        %v2920 = vsel %vm1060, %v2888, 0.0
        %v2921 = vsel %vm1061, %v2889, 0.0
        %v2922 = vsel %vm1062, %v2890, 0.0
        %v2923 = vsel %vm1063, %v2891, 0.0
        %v2924 = vsel %vm1064, %v2892, 0.0
        %v2925 = vsel %vm1065, %v2893, 0.0
        %v2926 = vsel %vm1066, %v2894, 0.0
        %v2927 = vsel %vm1067, %v2895, 0.0
        %v2928 = vsel %vm1068, %v2896, 0.0
        %v2929 = vsel %vm1069, %v2897, 0.0
        %v2930 = vsel %vm1070, %v2898, 0.0
        %v2931 = vsel %vm1071, %v2899, 0.0
        %v2932 = vsel %vm1072, %v2900, 0.0
        %v2933 = vsel %vm1073, %v2901, 0.0
        %v2934 = vsel %vm1074, %v2902, 0.0
        %v2935 = vsel %vm1075, %v2903, 0.0
        %v2936 = vsel %vm1076, %v2904, 0.0
        %v2937 = vsel %vm1077, %v2905, 0.0
        %v2938 = vsel %vm1078, %v2906, 0.0
        %v2939 = vsel %vm1079, %v2907, 0.0
        %v2940 = vsel %vm1080, %v2908, 0.0
        %v2941 = vsel %vm1081, %v2909, 0.0
        %v2942 = vsel %vm1082, %v2910, 0.0
        %v2943 = vsel %vm1083, %v2911, 0.0
        %v2944 = vsel %vm1084, %v2912, 0.0
        %v2945 = vsel %vm1085, %v2913, 0.0
        %v2946 = vsel %vm1086, %v2914, 0.0
        %v2947 = vsel %vm1087, %v2915, 0.0
        %v2948 = vsel %vm1088, %v2916, 0.0
        %s2949 = scalar_lea.vmem %s1, 24
        %v2950 = vld [vmem:[%s2949] sm:$0x7]
        %v2952 = vsel %vm504, %v2917, 0
        %v2955 = vsel %vm504, %v2918, 0
        %v2958 = vsel %vm504, %v2919, 0
        %v2961 = vsel %vm504, %v2920, 0
        %v2964 = vsel %vm504, %v2921, 0
        %v2967 = vsel %vm504, %v2922, 0
        %v2970 = vsel %vm504, %v2923, 0
        %v2973 = vsel %vm504, %v2924, 0
        %v2976 = vsel %vm504, %v2925, 0
        %v2979 = vsel %vm504, %v2926, 0
        %v2982 = vsel %vm504, %v2927, 0
        %v2985 = vsel %vm504, %v2928, 0
        %v2988 = vsel %vm504, %v2929, 0
        %v2991 = vsel %vm504, %v2930, 0
        %v2994 = vsel %vm504, %v2931, 0
        %v2997 = vsel %vm504, %v2932, 0
        %v3000 = vsel %vm504, %v2933, 0
        %v3003 = vsel %vm504, %v2934, 0
        %v3006 = vsel %vm504, %v2935, 0
        %v3009 = vsel %vm504, %v2936, 0
        %v3012 = vsel %vm504, %v2937, 0
        %v3015 = vsel %vm504, %v2938, 0
        %v3018 = vsel %vm504, %v2939, 0
        %v3021 = vsel %vm504, %v2940, 0
        %v3024 = vsel %vm504, %v2941, 0
        %v3027 = vsel %vm504, %v2942, 0
        %v3030 = vsel %vm504, %v2943, 0
        %v3033 = vsel %vm504, %v2944, 0
        %v3036 = vsel %vm504, %v2945, 0
        %v3039 = vsel %vm504, %v2946, 0
        %v3042 = vsel %vm504, %v2947, 0
        %v3045 = vsel %vm504, %v2948, 0
        %v3048 = vsel %vm1252, %v2950, 0
        %3050 = vmatpush.msra.mxu0 0.0
        %3051 = vmatpush.msra.mxu0 0.0
        %3052 = vmatpush.msra.mxu0 0.0
        %3053 = vmatpush.msra.mxu0 0.0
        %3054 = vmatpush.msra.mxu0 0.0
        %3055 = vmatpush.msra.mxu0 0.0
        %3056 = vmatpush.msra.mxu0 0.0
        %3057 = vmatpush.msra.mxu0 0.0
        %3058 = vmatpush.msra.mxu0 0.0
        %3059 = vmatpush.msra.mxu0 0.0
        %3060 = vmatpush.msra.mxu0 0.0
        %3061 = vmatpush.msra.mxu0 0.0
        %3062 = vmatpush.msra.mxu0 0.0
        %3063 = vmatpush.msra.mxu0 0.0
        %3064 = vmatpush.msra.mxu0 0.0
        %3065 = vmatpush.msra.mxu0 %v3048
        %3066 = vmatmul.f32.gmra.mxu0 %v2952
        %v3067 = vpop.f32.mrf.mxu0
        %v3068 = vadd.f32 0.0, %v3067
        %3069 = vmatmul.f32.gmra.mxu0 %v2955
        %v3070 = vpop.f32.mrf.mxu0
        %v3071 = vadd.f32 0.0, %v3070
        %3072 = vmatmul.f32.gmra.mxu0 %v2958
        %v3073 = vpop.f32.mrf.mxu0
        %v3074 = vadd.f32 0.0, %v3073
        %3075 = vmatmul.f32.gmra.mxu0 %v2961
        %v3076 = vpop.f32.mrf.mxu0
        %v3077 = vadd.f32 0.0, %v3076
        %3078 = vmatmul.f32.gmra.mxu0 %v2964
        %v3079 = vpop.f32.mrf.mxu0
        %v3080 = vadd.f32 0.0, %v3079
        %3081 = vmatmul.f32.gmra.mxu0 %v2967
        %v3082 = vpop.f32.mrf.mxu0
        %v3083 = vadd.f32 0.0, %v3082
        %3084 = vmatmul.f32.gmra.mxu0 %v2970
        %v3085 = vpop.f32.mrf.mxu0
        %v3086 = vadd.f32 0.0, %v3085
        %3087 = vmatmul.f32.gmra.mxu0 %v2973
        %v3088 = vpop.f32.mrf.mxu0
        %v3089 = vadd.f32 0.0, %v3088
        %3090 = vmatmul.f32.gmra.mxu0 %v2976
        %v3091 = vpop.f32.mrf.mxu0
        %v3092 = vadd.f32 0.0, %v3091
        %3093 = vmatmul.f32.gmra.mxu0 %v2979
        %v3094 = vpop.f32.mrf.mxu0
        %v3095 = vadd.f32 0.0, %v3094
        %3096 = vmatmul.f32.gmra.mxu0 %v2982
        %v3097 = vpop.f32.mrf.mxu0
        %v3098 = vadd.f32 0.0, %v3097
        %3099 = vmatmul.f32.gmra.mxu0 %v2985
        %v3100 = vpop.f32.mrf.mxu0
        %v3101 = vadd.f32 0.0, %v3100
        %3102 = vmatmul.f32.gmra.mxu0 %v2988
        %v3103 = vpop.f32.mrf.mxu0
        %v3104 = vadd.f32 0.0, %v3103
        %3105 = vmatmul.f32.gmra.mxu0 %v2991
        %v3106 = vpop.f32.mrf.mxu0
        %v3107 = vadd.f32 0.0, %v3106
        %3108 = vmatmul.f32.gmra.mxu0 %v2994
        %v3109 = vpop.f32.mrf.mxu0
        %v3110 = vadd.f32 0.0, %v3109
        %3111 = vmatmul.f32.gmra.mxu0 %v2997
        %v3112 = vpop.f32.mrf.mxu0
        %v3113 = vadd.f32 0.0, %v3112
        %3114 = vmatmul.f32.gmra.mxu0 %v3000
        %v3115 = vpop.f32.mrf.mxu0
        %v3116 = vadd.f32 0.0, %v3115
        %3117 = vmatmul.f32.gmra.mxu0 %v3003
        %v3118 = vpop.f32.mrf.mxu0
        %v3119 = vadd.f32 0.0, %v3118
        %3120 = vmatmul.f32.gmra.mxu0 %v3006
        %v3121 = vpop.f32.mrf.mxu0
        %v3122 = vadd.f32 0.0, %v3121
        %3123 = vmatmul.f32.gmra.mxu0 %v3009
        %v3124 = vpop.f32.mrf.mxu0
        %v3125 = vadd.f32 0.0, %v3124
        %3126 = vmatmul.f32.gmra.mxu0 %v3012
        %v3127 = vpop.f32.mrf.mxu0
        %v3128 = vadd.f32 0.0, %v3127
        %3129 = vmatmul.f32.gmra.mxu0 %v3015
        %v3130 = vpop.f32.mrf.mxu0
        %v3131 = vadd.f32 0.0, %v3130
        %3132 = vmatmul.f32.gmra.mxu0 %v3018
        %v3133 = vpop.f32.mrf.mxu0
        %v3134 = vadd.f32 0.0, %v3133
        %3135 = vmatmul.f32.gmra.mxu0 %v3021
        %v3136 = vpop.f32.mrf.mxu0
        %v3137 = vadd.f32 0.0, %v3136
        %3138 = vmatmul.f32.gmra.mxu0 %v3024
        %v3139 = vpop.f32.mrf.mxu0
        %v3140 = vadd.f32 0.0, %v3139
        %3141 = vmatmul.f32.gmra.mxu0 %v3027
        %v3142 = vpop.f32.mrf.mxu0
        %v3143 = vadd.f32 0.0, %v3142
        %3144 = vmatmul.f32.gmra.mxu0 %v3030
        %v3145 = vpop.f32.mrf.mxu0
        %v3146 = vadd.f32 0.0, %v3145
        %3147 = vmatmul.f32.gmra.mxu0 %v3033
        %v3148 = vpop.f32.mrf.mxu0
        %v3149 = vadd.f32 0.0, %v3148
        %3150 = vmatmul.f32.gmra.mxu0 %v3036
        %v3151 = vpop.f32.mrf.mxu0
        %v3152 = vadd.f32 0.0, %v3151
        %3153 = vmatmul.f32.gmra.mxu0 %v3039
        %v3154 = vpop.f32.mrf.mxu0
        %v3155 = vadd.f32 0.0, %v3154
        %3156 = vmatmul.f32.gmra.mxu0 %v3042
        %v3157 = vpop.f32.mrf.mxu0
        %v3158 = vadd.f32 0.0, %v3157
        %3159 = vmatmul.f32.gmra.mxu0 %v3045
        %v3160 = vpop.f32.mrf.mxu0
        %v3161 = vadd.f32 0.0, %v3160
        %3162 = vdwg.mxu0
        %v3163 = vadd.f32 %v2853, %v3068
        %v3164 = vadd.f32 %v2854, %v3071
        %v3165 = vadd.f32 %v2855, %v3074
        %v3166 = vadd.f32 %v2856, %v3077
        %v3167 = vadd.f32 %v2857, %v3080
        %v3168 = vadd.f32 %v2858, %v3083
        %v3169 = vadd.f32 %v2859, %v3086
        %v3170 = vadd.f32 %v2860, %v3089
        %v3171 = vadd.f32 %v2861, %v3092
        %v3172 = vadd.f32 %v2862, %v3095
        %v3173 = vadd.f32 %v2863, %v3098
        %v3174 = vadd.f32 %v2864, %v3101
        %v3175 = vadd.f32 %v2865, %v3104
        %v3176 = vadd.f32 %v2866, %v3107
        %v3177 = vadd.f32 %v2867, %v3110
        %v3178 = vadd.f32 %v2868, %v3113
        %v3179 = vadd.f32 %v2869, %v3116
        %v3180 = vadd.f32 %v2870, %v3119
        %v3181 = vadd.f32 %v2871, %v3122
        %v3182 = vadd.f32 %v2872, %v3125
        %v3183 = vadd.f32 %v2873, %v3128
        %v3184 = vadd.f32 %v2874, %v3131
        %v3185 = vadd.f32 %v2875, %v3134
        %v3186 = vadd.f32 %v2876, %v3137
        %v3187 = vadd.f32 %v2877, %v3140
        %v3188 = vadd.f32 %v2878, %v3143
        %v3189 = vadd.f32 %v2879, %v3146
        %v3190 = vadd.f32 %v2880, %v3149
        %v3191 = vadd.f32 %v2881, %v3152
        %v3192 = vadd.f32 %v2882, %v3155
        %v3193 = vadd.f32 %v2883, %v3158
        %v3194 = vadd.f32 %v2884, %v3161
        %v3195 = vld [vmem:[#allocation2 + $0x21] sm:$0xff]
        %v3196 = vld [vmem:[#allocation2 + $0x29] sm:$0xff]
        %v3197 = vld [vmem:[#allocation2 + $0x31] sm:$0xff]
        %v3198 = vld [vmem:[#allocation2 + $0x39] sm:$0xff]
        %v3199 = vld [vmem:[#allocation2 + $0x41] sm:$0xff]
        %v3200 = vld [vmem:[#allocation2 + $0x49] sm:$0xff]
        %v3201 = vld [vmem:[#allocation2 + $0x51] sm:$0xff]
        %v3202 = vld [vmem:[#allocation2 + $0x59] sm:$0xff]
        %v3203 = vld [vmem:[#allocation2 + $0x61] sm:$0xff]
        %v3204 = vld [vmem:[#allocation2 + $0x69] sm:$0xff]
        %v3205 = vld [vmem:[#allocation2 + $0x71] sm:$0xff]
        %v3206 = vld [vmem:[#allocation2 + $0x79] sm:$0xff]
        %v3207 = vld [vmem:[#allocation2 + $0x81] sm:$0xff]
        %v3208 = vld [vmem:[#allocation2 + $0x89] sm:$0xff]
        %v3209 = vld [vmem:[#allocation2 + $0x91] sm:$0xff]
        %v3210 = vld [vmem:[#allocation2 + $0x99] sm:$0xff]
        %v3211 = vld [vmem:[#allocation2 + $0xa1] sm:$0xff]
        %v3212 = vld [vmem:[#allocation2 + $0xa9] sm:$0xff]
        %v3213 = vld [vmem:[#allocation2 + $0xb1] sm:$0xff]
        %v3214 = vld [vmem:[#allocation2 + $0xb9] sm:$0xff]
        %v3215 = vld [vmem:[#allocation2 + $0xc1] sm:$0xff]
        %v3216 = vld [vmem:[#allocation2 + $0xc9] sm:$0xff]
        %v3217 = vld [vmem:[#allocation2 + $0xd1] sm:$0xff]
        %v3218 = vld [vmem:[#allocation2 + $0xd9] sm:$0xff]
        %v3219 = vld [vmem:[#allocation2 + $0xe1] sm:$0xff]
        %v3220 = vld [vmem:[#allocation2 + $0xe9] sm:$0xff]
        %v3221 = vld [vmem:[#allocation2 + $0xf1] sm:$0xff]
        %v3222 = vld [vmem:[#allocation2 + $0xf9] sm:$0xff]
        %v3223 = vld [vmem:[#allocation2 + $0x101] sm:$0xff]
        %v3224 = vld [vmem:[#allocation2 + $0x109] sm:$0xff]
        %v3225 = vld [vmem:[#allocation2 + $0x111] sm:$0xff]
        %v3226 = vld [vmem:[#allocation2 + $0x119] sm:$0xff]
        %s3227 = scalar_lea.vmem %s1, 28
        %v3228 = vld [vmem:[%s3227] sm:$0x7]
        %v3230 = vsel %vm504, %v3195, 0
        %v3233 = vsel %vm504, %v3196, 0
        %v3236 = vsel %vm504, %v3197, 0
        %v3239 = vsel %vm504, %v3198, 0
        %v3242 = vsel %vm504, %v3199, 0
        %v3245 = vsel %vm504, %v3200, 0
        %v3248 = vsel %vm504, %v3201, 0
        %v3251 = vsel %vm504, %v3202, 0
        %v3254 = vsel %vm504, %v3203, 0
        %v3257 = vsel %vm504, %v3204, 0
        %v3260 = vsel %vm504, %v3205, 0
        %v3263 = vsel %vm504, %v3206, 0
        %v3266 = vsel %vm504, %v3207, 0
        %v3269 = vsel %vm504, %v3208, 0
        %v3272 = vsel %vm504, %v3209, 0
        %v3275 = vsel %vm504, %v3210, 0
        %v3278 = vsel %vm504, %v3211, 0
        %v3281 = vsel %vm504, %v3212, 0
        %v3284 = vsel %vm504, %v3213, 0
        %v3287 = vsel %vm504, %v3214, 0
        %v3290 = vsel %vm504, %v3215, 0
        %v3293 = vsel %vm504, %v3216, 0
        %v3296 = vsel %vm504, %v3217, 0
        %v3299 = vsel %vm504, %v3218, 0
        %v3302 = vsel %vm504, %v3219, 0
        %v3305 = vsel %vm504, %v3220, 0
        %v3308 = vsel %vm504, %v3221, 0
        %v3311 = vsel %vm504, %v3222, 0
        %v3314 = vsel %vm504, %v3223, 0
        %v3317 = vsel %vm504, %v3224, 0
        %v3320 = vsel %vm504, %v3225, 0
        %v3323 = vsel %vm504, %v3226, 0
        %v3326 = vsel %vm1252, %v3228, 0
        %3328 = vmatpush.msra.mxu0 0.0
        %3329 = vmatpush.msra.mxu0 0.0
        %3330 = vmatpush.msra.mxu0 0.0
        %3331 = vmatpush.msra.mxu0 0.0
        %3332 = vmatpush.msra.mxu0 0.0
        %3333 = vmatpush.msra.mxu0 0.0
        %3334 = vmatpush.msra.mxu0 0.0
        %3335 = vmatpush.msra.mxu0 0.0
        %3336 = vmatpush.msra.mxu0 0.0
        %3337 = vmatpush.msra.mxu0 0.0
        %3338 = vmatpush.msra.mxu0 0.0
        %3339 = vmatpush.msra.mxu0 0.0
        %3340 = vmatpush.msra.mxu0 0.0
        %3341 = vmatpush.msra.mxu0 0.0
        %3342 = vmatpush.msra.mxu0 0.0
        %3343 = vmatpush.msra.mxu0 %v3326
        %3344 = vmatmul.f32.gmra.mxu0 %v3230
        %v3345 = vpop.f32.mrf.mxu0
        %v3346 = vadd.f32 0.0, %v3345
        %3347 = vmatmul.f32.gmra.mxu0 %v3233
        %v3348 = vpop.f32.mrf.mxu0
        %v3349 = vadd.f32 0.0, %v3348
        %3350 = vmatmul.f32.gmra.mxu0 %v3236
        %v3351 = vpop.f32.mrf.mxu0
        %v3352 = vadd.f32 0.0, %v3351
        %3353 = vmatmul.f32.gmra.mxu0 %v3239
        %v3354 = vpop.f32.mrf.mxu0
        %v3355 = vadd.f32 0.0, %v3354
        %3356 = vmatmul.f32.gmra.mxu0 %v3242
        %v3357 = vpop.f32.mrf.mxu0
        %v3358 = vadd.f32 0.0, %v3357
        %3359 = vmatmul.f32.gmra.mxu0 %v3245
        %v3360 = vpop.f32.mrf.mxu0
        %v3361 = vadd.f32 0.0, %v3360
        %3362 = vmatmul.f32.gmra.mxu0 %v3248
        %v3363 = vpop.f32.mrf.mxu0
        %v3364 = vadd.f32 0.0, %v3363
        %3365 = vmatmul.f32.gmra.mxu0 %v3251
        %v3366 = vpop.f32.mrf.mxu0
        %v3367 = vadd.f32 0.0, %v3366
        %3368 = vmatmul.f32.gmra.mxu0 %v3254
        %v3369 = vpop.f32.mrf.mxu0
        %v3370 = vadd.f32 0.0, %v3369
        %3371 = vmatmul.f32.gmra.mxu0 %v3257
        %v3372 = vpop.f32.mrf.mxu0
        %v3373 = vadd.f32 0.0, %v3372
        %3374 = vmatmul.f32.gmra.mxu0 %v3260
        %v3375 = vpop.f32.mrf.mxu0
        %v3376 = vadd.f32 0.0, %v3375
        %3377 = vmatmul.f32.gmra.mxu0 %v3263
        %v3378 = vpop.f32.mrf.mxu0
        %v3379 = vadd.f32 0.0, %v3378
        %3380 = vmatmul.f32.gmra.mxu0 %v3266
        %v3381 = vpop.f32.mrf.mxu0
        %v3382 = vadd.f32 0.0, %v3381
        %3383 = vmatmul.f32.gmra.mxu0 %v3269
        %v3384 = vpop.f32.mrf.mxu0
        %v3385 = vadd.f32 0.0, %v3384
        %3386 = vmatmul.f32.gmra.mxu0 %v3272
        %v3387 = vpop.f32.mrf.mxu0
        %v3388 = vadd.f32 0.0, %v3387
        %3389 = vmatmul.f32.gmra.mxu0 %v3275
        %v3390 = vpop.f32.mrf.mxu0
        %v3391 = vadd.f32 0.0, %v3390
        %3392 = vmatmul.f32.gmra.mxu0 %v3278
        %v3393 = vpop.f32.mrf.mxu0
        %v3394 = vadd.f32 0.0, %v3393
        %3395 = vmatmul.f32.gmra.mxu0 %v3281
        %v3396 = vpop.f32.mrf.mxu0
        %v3397 = vadd.f32 0.0, %v3396
        %3398 = vmatmul.f32.gmra.mxu0 %v3284
        %v3399 = vpop.f32.mrf.mxu0
        %v3400 = vadd.f32 0.0, %v3399
        %3401 = vmatmul.f32.gmra.mxu0 %v3287
        %v3402 = vpop.f32.mrf.mxu0
        %v3403 = vadd.f32 0.0, %v3402
        %3404 = vmatmul.f32.gmra.mxu0 %v3290
        %v3405 = vpop.f32.mrf.mxu0
        %v3406 = vadd.f32 0.0, %v3405
        %3407 = vmatmul.f32.gmra.mxu0 %v3293
        %v3408 = vpop.f32.mrf.mxu0
        %v3409 = vadd.f32 0.0, %v3408
        %3410 = vmatmul.f32.gmra.mxu0 %v3296
        %v3411 = vpop.f32.mrf.mxu0
        %v3412 = vadd.f32 0.0, %v3411
        %3413 = vmatmul.f32.gmra.mxu0 %v3299
        %v3414 = vpop.f32.mrf.mxu0
        %v3415 = vadd.f32 0.0, %v3414
        %3416 = vmatmul.f32.gmra.mxu0 %v3302
        %v3417 = vpop.f32.mrf.mxu0
        %v3418 = vadd.f32 0.0, %v3417
        %3419 = vmatmul.f32.gmra.mxu0 %v3305
        %v3420 = vpop.f32.mrf.mxu0
        %v3421 = vadd.f32 0.0, %v3420
        %3422 = vmatmul.f32.gmra.mxu0 %v3308
        %v3423 = vpop.f32.mrf.mxu0
        %v3424 = vadd.f32 0.0, %v3423
        %3425 = vmatmul.f32.gmra.mxu0 %v3311
        %v3426 = vpop.f32.mrf.mxu0
        %v3427 = vadd.f32 0.0, %v3426
        %3428 = vmatmul.f32.gmra.mxu0 %v3314
        %v3429 = vpop.f32.mrf.mxu0
        %v3430 = vadd.f32 0.0, %v3429
        %3431 = vmatmul.f32.gmra.mxu0 %v3317
        %v3432 = vpop.f32.mrf.mxu0
        %v3433 = vadd.f32 0.0, %v3432
        %3434 = vmatmul.f32.gmra.mxu0 %v3320
        %v3435 = vpop.f32.mrf.mxu0
        %v3436 = vadd.f32 0.0, %v3435
        %3437 = vmatmul.f32.gmra.mxu0 %v3323
        %v3438 = vpop.f32.mrf.mxu0
        %v3439 = vadd.f32 0.0, %v3438
        %3440 = vdwg.mxu0
        %v3441 = vadd.f32 %v3163, %v3346
        %v3442 = vadd.f32 %v3164, %v3349
        %v3443 = vadd.f32 %v3165, %v3352
        %v3444 = vadd.f32 %v3166, %v3355
        %v3445 = vadd.f32 %v3167, %v3358
        %v3446 = vadd.f32 %v3168, %v3361
        %v3447 = vadd.f32 %v3169, %v3364
        %v3448 = vadd.f32 %v3170, %v3367
        %v3449 = vadd.f32 %v3171, %v3370
        %v3450 = vadd.f32 %v3172, %v3373
        %v3451 = vadd.f32 %v3173, %v3376
        %v3452 = vadd.f32 %v3174, %v3379
        %v3453 = vadd.f32 %v3175, %v3382
        %v3454 = vadd.f32 %v3176, %v3385
        %v3455 = vadd.f32 %v3177, %v3388
        %v3456 = vadd.f32 %v3178, %v3391
        %v3457 = vadd.f32 %v3179, %v3394
        %v3458 = vadd.f32 %v3180, %v3397
        %v3459 = vadd.f32 %v3181, %v3400
        %v3460 = vadd.f32 %v3182, %v3403
        %v3461 = vadd.f32 %v3183, %v3406
        %v3462 = vadd.f32 %v3184, %v3409
        %v3463 = vadd.f32 %v3185, %v3412
        %v3464 = vadd.f32 %v3186, %v3415
        %v3465 = vadd.f32 %v3187, %v3418
        %v3466 = vadd.f32 %v3188, %v3421
        %v3467 = vadd.f32 %v3189, %v3424
        %v3468 = vadd.f32 %v3190, %v3427
        %v3469 = vadd.f32 %v3191, %v3430
        %v3470 = vadd.f32 %v3192, %v3433
        %v3471 = vadd.f32 %v3193, %v3436
        %v3472 = vadd.f32 %v3194, %v3439
        %v3473 = vld [vmem:[#allocation2 + $0x22] sm:$0xff]
        %v3474 = vld [vmem:[#allocation2 + $0x2a] sm:$0xff]
        %v3475 = vld [vmem:[#allocation2 + $0x32] sm:$0xff]
        %v3476 = vld [vmem:[#allocation2 + $0x3a] sm:$0xff]
        %v3477 = vld [vmem:[#allocation2 + $0x42] sm:$0xff]
        %v3478 = vld [vmem:[#allocation2 + $0x4a] sm:$0xff]
        %v3479 = vld [vmem:[#allocation2 + $0x52] sm:$0xff]
        %v3480 = vld [vmem:[#allocation2 + $0x5a] sm:$0xff]
        %v3481 = vld [vmem:[#allocation2 + $0x62] sm:$0xff]
        %v3482 = vld [vmem:[#allocation2 + $0x6a] sm:$0xff]
        %v3483 = vld [vmem:[#allocation2 + $0x72] sm:$0xff]
        %v3484 = vld [vmem:[#allocation2 + $0x7a] sm:$0xff]
        %v3485 = vld [vmem:[#allocation2 + $0x82] sm:$0xff]
        %v3486 = vld [vmem:[#allocation2 + $0x8a] sm:$0xff]
        %v3487 = vld [vmem:[#allocation2 + $0x92] sm:$0xff]
        %v3488 = vld [vmem:[#allocation2 + $0x9a] sm:$0xff]
        %v3489 = vld [vmem:[#allocation2 + $0xa2] sm:$0xff]
        %v3490 = vld [vmem:[#allocation2 + $0xaa] sm:$0xff]
        %v3491 = vld [vmem:[#allocation2 + $0xb2] sm:$0xff]
        %v3492 = vld [vmem:[#allocation2 + $0xba] sm:$0xff]
        %v3493 = vld [vmem:[#allocation2 + $0xc2] sm:$0xff]
        %v3494 = vld [vmem:[#allocation2 + $0xca] sm:$0xff]
        %v3495 = vld [vmem:[#allocation2 + $0xd2] sm:$0xff]
        %v3496 = vld [vmem:[#allocation2 + $0xda] sm:$0xff]
        %v3497 = vld [vmem:[#allocation2 + $0xe2] sm:$0xff]
        %v3498 = vld [vmem:[#allocation2 + $0xea] sm:$0xff]
        %v3499 = vld [vmem:[#allocation2 + $0xf2] sm:$0xff]
        %v3500 = vld [vmem:[#allocation2 + $0xfa] sm:$0xff]
        %v3501 = vld [vmem:[#allocation2 + $0x102] sm:$0xff]
        %v3502 = vld [vmem:[#allocation2 + $0x10a] sm:$0xff]
        %v3503 = vld [vmem:[#allocation2 + $0x112] sm:$0xff]
        %v3504 = vld [vmem:[#allocation2 + $0x11a] sm:$0xff]
        %v3505 = vsel %vm1677, %v3473, 0.0
        %v3506 = vsel %vm1678, %v3474, 0.0
        %v3507 = vsel %vm1679, %v3475, 0.0
        %v3508 = vsel %vm1680, %v3476, 0.0
        %v3509 = vsel %vm1681, %v3477, 0.0
        %v3510 = vsel %vm1682, %v3478, 0.0
        %v3511 = vsel %vm1683, %v3479, 0.0
        %v3512 = vsel %vm1684, %v3480, 0.0
        %v3513 = vsel %vm1685, %v3481, 0.0
        %v3514 = vsel %vm1686, %v3482, 0.0
        %v3515 = vsel %vm1687, %v3483, 0.0
        %v3516 = vsel %vm1688, %v3484, 0.0
        %v3517 = vsel %vm1689, %v3485, 0.0
        %v3518 = vsel %vm1690, %v3486, 0.0
        %v3519 = vsel %vm1691, %v3487, 0.0
        %v3520 = vsel %vm1692, %v3488, 0.0
        %v3521 = vsel %vm1693, %v3489, 0.0
        %v3522 = vsel %vm1694, %v3490, 0.0
        %v3523 = vsel %vm1695, %v3491, 0.0
        %v3524 = vsel %vm1696, %v3492, 0.0
        %v3525 = vsel %vm1697, %v3493, 0.0
        %v3526 = vsel %vm1698, %v3494, 0.0
        %v3527 = vsel %vm1699, %v3495, 0.0
        %v3528 = vsel %vm1700, %v3496, 0.0
        %v3529 = vsel %vm1701, %v3497, 0.0
        %v3530 = vsel %vm1702, %v3498, 0.0
        %v3531 = vsel %vm1703, %v3499, 0.0
        %v3532 = vsel %vm1704, %v3500, 0.0
        %v3533 = vsel %vm1705, %v3501, 0.0
        %v3534 = vsel %vm1706, %v3502, 0.0
        %v3535 = vsel %vm1707, %v3503, 0.0
        %v3536 = vsel %vm1708, %v3504, 0.0
        %s3537 = scalar_lea.vmem %s1, 32
        %v3538 = vld [vmem:[%s3537] sm:$0x7]
        %v3540 = vsel %vm504, %v3505, 0
        %v3543 = vsel %vm504, %v3506, 0
        %v3546 = vsel %vm504, %v3507, 0
        %v3549 = vsel %vm504, %v3508, 0
        %v3552 = vsel %vm504, %v3509, 0
        %v3555 = vsel %vm504, %v3510, 0
        %v3558 = vsel %vm504, %v3511, 0
        %v3561 = vsel %vm504, %v3512, 0
        %v3564 = vsel %vm504, %v3513, 0
        %v3567 = vsel %vm504, %v3514, 0
        %v3570 = vsel %vm504, %v3515, 0
        %v3573 = vsel %vm504, %v3516, 0
        %v3576 = vsel %vm504, %v3517, 0
        %v3579 = vsel %vm504, %v3518, 0
        %v3582 = vsel %vm504, %v3519, 0
        %v3585 = vsel %vm504, %v3520, 0
        %v3588 = vsel %vm504, %v3521, 0
        %v3591 = vsel %vm504, %v3522, 0
        %v3594 = vsel %vm504, %v3523, 0
        %v3597 = vsel %vm504, %v3524, 0
        %v3600 = vsel %vm504, %v3525, 0
        %v3603 = vsel %vm504, %v3526, 0
        %v3606 = vsel %vm504, %v3527, 0
        %v3609 = vsel %vm504, %v3528, 0
        %v3612 = vsel %vm504, %v3529, 0
        %v3615 = vsel %vm504, %v3530, 0
        %v3618 = vsel %vm504, %v3531, 0
        %v3621 = vsel %vm504, %v3532, 0
        %v3624 = vsel %vm504, %v3533, 0
        %v3627 = vsel %vm504, %v3534, 0
        %v3630 = vsel %vm504, %v3535, 0
        %v3633 = vsel %vm504, %v3536, 0
        %v3636 = vsel %vm1252, %v3538, 0
        %3638 = vmatpush.msra.mxu0 0.0
        %3639 = vmatpush.msra.mxu0 0.0
        %3640 = vmatpush.msra.mxu0 0.0
        %3641 = vmatpush.msra.mxu0 0.0
        %3642 = vmatpush.msra.mxu0 0.0
        %3643 = vmatpush.msra.mxu0 0.0
        %3644 = vmatpush.msra.mxu0 0.0
        %3645 = vmatpush.msra.mxu0 0.0
        %3646 = vmatpush.msra.mxu0 0.0
        %3647 = vmatpush.msra.mxu0 0.0
        %3648 = vmatpush.msra.mxu0 0.0
        %3649 = vmatpush.msra.mxu0 0.0
        %3650 = vmatpush.msra.mxu0 0.0
        %3651 = vmatpush.msra.mxu0 0.0
        %3652 = vmatpush.msra.mxu0 0.0
        %3653 = vmatpush.msra.mxu0 %v3636
        %3654 = vmatmul.f32.gmra.mxu0 %v3540
        %v3655 = vpop.f32.mrf.mxu0
        %v3656 = vadd.f32 0.0, %v3655
        %3657 = vmatmul.f32.gmra.mxu0 %v3543
        %v3658 = vpop.f32.mrf.mxu0
        %v3659 = vadd.f32 0.0, %v3658
        %3660 = vmatmul.f32.gmra.mxu0 %v3546
        %v3661 = vpop.f32.mrf.mxu0
        %v3662 = vadd.f32 0.0, %v3661
        %3663 = vmatmul.f32.gmra.mxu0 %v3549
        %v3664 = vpop.f32.mrf.mxu0
        %v3665 = vadd.f32 0.0, %v3664
        %3666 = vmatmul.f32.gmra.mxu0 %v3552
        %v3667 = vpop.f32.mrf.mxu0
        %v3668 = vadd.f32 0.0, %v3667
        %3669 = vmatmul.f32.gmra.mxu0 %v3555
        %v3670 = vpop.f32.mrf.mxu0
        %v3671 = vadd.f32 0.0, %v3670
        %3672 = vmatmul.f32.gmra.mxu0 %v3558
        %v3673 = vpop.f32.mrf.mxu0
        %v3674 = vadd.f32 0.0, %v3673
        %3675 = vmatmul.f32.gmra.mxu0 %v3561
        %v3676 = vpop.f32.mrf.mxu0
        %v3677 = vadd.f32 0.0, %v3676
        %3678 = vmatmul.f32.gmra.mxu0 %v3564
        %v3679 = vpop.f32.mrf.mxu0
        %v3680 = vadd.f32 0.0, %v3679
        %3681 = vmatmul.f32.gmra.mxu0 %v3567
        %v3682 = vpop.f32.mrf.mxu0
        %v3683 = vadd.f32 0.0, %v3682
        %3684 = vmatmul.f32.gmra.mxu0 %v3570
        %v3685 = vpop.f32.mrf.mxu0
        %v3686 = vadd.f32 0.0, %v3685
        %3687 = vmatmul.f32.gmra.mxu0 %v3573
        %v3688 = vpop.f32.mrf.mxu0
        %v3689 = vadd.f32 0.0, %v3688
        %3690 = vmatmul.f32.gmra.mxu0 %v3576
        %v3691 = vpop.f32.mrf.mxu0
        %v3692 = vadd.f32 0.0, %v3691
        %3693 = vmatmul.f32.gmra.mxu0 %v3579
        %v3694 = vpop.f32.mrf.mxu0
        %v3695 = vadd.f32 0.0, %v3694
        %3696 = vmatmul.f32.gmra.mxu0 %v3582
        %v3697 = vpop.f32.mrf.mxu0
        %v3698 = vadd.f32 0.0, %v3697
        %3699 = vmatmul.f32.gmra.mxu0 %v3585
        %v3700 = vpop.f32.mrf.mxu0
        %v3701 = vadd.f32 0.0, %v3700
        %3702 = vmatmul.f32.gmra.mxu0 %v3588
        %v3703 = vpop.f32.mrf.mxu0
        %v3704 = vadd.f32 0.0, %v3703
        %3705 = vmatmul.f32.gmra.mxu0 %v3591
        %v3706 = vpop.f32.mrf.mxu0
        %v3707 = vadd.f32 0.0, %v3706
        %3708 = vmatmul.f32.gmra.mxu0 %v3594
        %v3709 = vpop.f32.mrf.mxu0
        %v3710 = vadd.f32 0.0, %v3709
        %3711 = vmatmul.f32.gmra.mxu0 %v3597
        %v3712 = vpop.f32.mrf.mxu0
        %v3713 = vadd.f32 0.0, %v3712
        %3714 = vmatmul.f32.gmra.mxu0 %v3600
        %v3715 = vpop.f32.mrf.mxu0
        %v3716 = vadd.f32 0.0, %v3715
        %3717 = vmatmul.f32.gmra.mxu0 %v3603
        %v3718 = vpop.f32.mrf.mxu0
        %v3719 = vadd.f32 0.0, %v3718
        %3720 = vmatmul.f32.gmra.mxu0 %v3606
        %v3721 = vpop.f32.mrf.mxu0
        %v3722 = vadd.f32 0.0, %v3721
        %3723 = vmatmul.f32.gmra.mxu0 %v3609
        %v3724 = vpop.f32.mrf.mxu0
        %v3725 = vadd.f32 0.0, %v3724
        %3726 = vmatmul.f32.gmra.mxu0 %v3612
        %v3727 = vpop.f32.mrf.mxu0
        %v3728 = vadd.f32 0.0, %v3727
        %3729 = vmatmul.f32.gmra.mxu0 %v3615
        %v3730 = vpop.f32.mrf.mxu0
        %v3731 = vadd.f32 0.0, %v3730
        %3732 = vmatmul.f32.gmra.mxu0 %v3618
        %v3733 = vpop.f32.mrf.mxu0
        %v3734 = vadd.f32 0.0, %v3733
        %3735 = vmatmul.f32.gmra.mxu0 %v3621
        %v3736 = vpop.f32.mrf.mxu0
        %v3737 = vadd.f32 0.0, %v3736
        %3738 = vmatmul.f32.gmra.mxu0 %v3624
        %v3739 = vpop.f32.mrf.mxu0
        %v3740 = vadd.f32 0.0, %v3739
        %3741 = vmatmul.f32.gmra.mxu0 %v3627
        %v3742 = vpop.f32.mrf.mxu0
        %v3743 = vadd.f32 0.0, %v3742
        %3744 = vmatmul.f32.gmra.mxu0 %v3630
        %v3745 = vpop.f32.mrf.mxu0
        %v3746 = vadd.f32 0.0, %v3745
        %3747 = vmatmul.f32.gmra.mxu0 %v3633
        %v3748 = vpop.f32.mrf.mxu0
        %v3749 = vadd.f32 0.0, %v3748
        %3750 = vdwg.mxu0
        %v3751 = vadd.f32 %v3441, %v3656
        %v3752 = vadd.f32 %v3442, %v3659
        %v3753 = vadd.f32 %v3443, %v3662
        %v3754 = vadd.f32 %v3444, %v3665
        %v3755 = vadd.f32 %v3445, %v3668
        %v3756 = vadd.f32 %v3446, %v3671
        %v3757 = vadd.f32 %v3447, %v3674
        %v3758 = vadd.f32 %v3448, %v3677
        %v3759 = vadd.f32 %v3449, %v3680
        %v3760 = vadd.f32 %v3450, %v3683
        %v3761 = vadd.f32 %v3451, %v3686
        %v3762 = vadd.f32 %v3452, %v3689
        %v3763 = vadd.f32 %v3453, %v3692
        %v3764 = vadd.f32 %v3454, %v3695
        %v3765 = vadd.f32 %v3455, %v3698
        %v3766 = vadd.f32 %v3456, %v3701
        %v3767 = vadd.f32 %v3457, %v3704
        %v3768 = vadd.f32 %v3458, %v3707
        %v3769 = vadd.f32 %v3459, %v3710
        %v3770 = vadd.f32 %v3460, %v3713
        %v3771 = vadd.f32 %v3461, %v3716
        %v3772 = vadd.f32 %v3462, %v3719
        %v3773 = vadd.f32 %v3463, %v3722
        %v3774 = vadd.f32 %v3464, %v3725
        %v3775 = vadd.f32 %v3465, %v3728
        %v3776 = vadd.f32 %v3466, %v3731
        %v3777 = vadd.f32 %v3467, %v3734
        %v3778 = vadd.f32 %v3468, %v3737
        %v3779 = vadd.f32 %v3469, %v3740
        %v3780 = vadd.f32 %v3470, %v3743
        %v3781 = vadd.f32 %v3471, %v3746
        %v3782 = vadd.f32 %v3472, %v3749
        %v3783 = vld [vmem:[%s2] sm:$0x1]
        %v3785 = vperm.slane %v3783, 0
        %v3787 = vadd.f32 %v3751, %v3785
        %v3788 = vadd.f32 %v3752, %v3785
        %v3789 = vadd.f32 %v3753, %v3785
        %v3790 = vadd.f32 %v3754, %v3785
        %v3791 = vadd.f32 %v3755, %v3785
        %v3792 = vadd.f32 %v3756, %v3785
        %v3793 = vadd.f32 %v3757, %v3785
        %v3794 = vadd.f32 %v3758, %v3785
        %v3795 = vadd.f32 %v3759, %v3785
        %v3796 = vadd.f32 %v3760, %v3785
        %v3797 = vadd.f32 %v3761, %v3785
        %v3798 = vadd.f32 %v3762, %v3785
        %v3799 = vadd.f32 %v3763, %v3785
        %v3800 = vadd.f32 %v3764, %v3785
        %v3801 = vadd.f32 %v3765, %v3785
        %v3802 = vadd.f32 %v3766, %v3785
        %v3803 = vadd.f32 %v3767, %v3785
        %v3804 = vadd.f32 %v3768, %v3785
        %v3805 = vadd.f32 %v3769, %v3785
        %v3806 = vadd.f32 %v3770, %v3785
        %v3807 = vadd.f32 %v3771, %v3785
        %v3808 = vadd.f32 %v3772, %v3785
        %v3809 = vadd.f32 %v3773, %v3785
        %v3810 = vadd.f32 %v3774, %v3785
        %v3811 = vadd.f32 %v3775, %v3785
        %v3812 = vadd.f32 %v3776, %v3785
        %v3813 = vadd.f32 %v3777, %v3785
        %v3814 = vadd.f32 %v3778, %v3785
        %v3815 = vadd.f32 %v3779, %v3785
        %v3816 = vadd.f32 %v3780, %v3785
        %v3817 = vadd.f32 %v3781, %v3785
        %v3818 = vadd.f32 %v3782, %v3785
        %v3819 = vmax.f32 %v3787, 0.0
        %v3820 = vmax.f32 %v3788, 0.0
        %v3821 = vmax.f32 %v3789, 0.0
        %v3822 = vmax.f32 %v3790, 0.0
        %v3823 = vmax.f32 %v3791, 0.0
        %v3824 = vmax.f32 %v3792, 0.0
        %v3825 = vmax.f32 %v3793, 0.0
        %v3826 = vmax.f32 %v3794, 0.0
        %v3827 = vmax.f32 %v3795, 0.0
        %v3828 = vmax.f32 %v3796, 0.0
        %v3829 = vmax.f32 %v3797, 0.0
        %v3830 = vmax.f32 %v3798, 0.0
        %v3831 = vmax.f32 %v3799, 0.0
        %v3832 = vmax.f32 %v3800, 0.0
        %v3833 = vmax.f32 %v3801, 0.0
        %v3834 = vmax.f32 %v3802, 0.0
        %v3835 = vmax.f32 %v3803, 0.0
        %v3836 = vmax.f32 %v3804, 0.0
        %v3837 = vmax.f32 %v3805, 0.0
        %v3838 = vmax.f32 %v3806, 0.0
        %v3839 = vmax.f32 %v3807, 0.0
        %v3840 = vmax.f32 %v3808, 0.0
        %v3841 = vmax.f32 %v3809, 0.0
        %v3842 = vmax.f32 %v3810, 0.0
        %v3843 = vmax.f32 %v3811, 0.0
        %v3844 = vmax.f32 %v3812, 0.0
        %v3845 = vmax.f32 %v3813, 0.0
        %v3846 = vmax.f32 %v3814, 0.0
        %v3847 = vmax.f32 %v3815, 0.0
        %v3848 = vmax.f32 %v3816, 0.0
        %v3849 = vmax.f32 %v3817, 0.0
        %v3850 = vmax.f32 %v3818, 0.0
        %vm3851 = vcmask 64512
        %3852 = vst.msk [vmem:[#allocation6] sm:$0xff] %vm3851, %v3819
        %3853 = vst.msk [vmem:[#allocation6 + $0x8] sm:$0xff] %vm3851, %v3820
        %3854 = vst.msk [vmem:[#allocation6 + $0x10] sm:$0xff] %vm3851, %v3821
        %3855 = vst.msk [vmem:[#allocation6 + $0x18] sm:$0xff] %vm3851, %v3822
        %3856 = vst.msk [vmem:[#allocation6 + $0x20] sm:$0xff] %vm3851, %v3823
        %3857 = vst.msk [vmem:[#allocation6 + $0x28] sm:$0xff] %vm3851, %v3824
        %3858 = vst.msk [vmem:[#allocation6 + $0x30] sm:$0xff] %vm3851, %v3825
        %3859 = vst.msk [vmem:[#allocation6 + $0x38] sm:$0xff] %vm3851, %v3826
        %3860 = vst.msk [vmem:[#allocation6 + $0x40] sm:$0xff] %vm3851, %v3827
        %3861 = vst.msk [vmem:[#allocation6 + $0x48] sm:$0xff] %vm3851, %v3828
        %3862 = vst.msk [vmem:[#allocation6 + $0x50] sm:$0xff] %vm3851, %v3829
        %3863 = vst.msk [vmem:[#allocation6 + $0x58] sm:$0xff] %vm3851, %v3830
        %3864 = vst.msk [vmem:[#allocation6 + $0x60] sm:$0xff] %vm3851, %v3831
        %3865 = vst.msk [vmem:[#allocation6 + $0x68] sm:$0xff] %vm3851, %v3832
        %3866 = vst.msk [vmem:[#allocation6 + $0x70] sm:$0xff] %vm3851, %v3833
        %3867 = vst.msk [vmem:[#allocation6 + $0x78] sm:$0xff] %vm3851, %v3834
        %3868 = vst.msk [vmem:[#allocation6 + $0x80] sm:$0xff] %vm3851, %v3835
        %3869 = vst.msk [vmem:[#allocation6 + $0x88] sm:$0xff] %vm3851, %v3836
        %3870 = vst.msk [vmem:[#allocation6 + $0x90] sm:$0xff] %vm3851, %v3837
        %3871 = vst.msk [vmem:[#allocation6 + $0x98] sm:$0xff] %vm3851, %v3838
        %3872 = vst.msk [vmem:[#allocation6 + $0xa0] sm:$0xff] %vm3851, %v3839
        %3873 = vst.msk [vmem:[#allocation6 + $0xa8] sm:$0xff] %vm3851, %v3840
        %3874 = vst.msk [vmem:[#allocation6 + $0xb0] sm:$0xff] %vm3851, %v3841
        %3875 = vst.msk [vmem:[#allocation6 + $0xb8] sm:$0xff] %vm3851, %v3842
        %3876 = vst.msk [vmem:[#allocation6 + $0xc0] sm:$0xff] %vm3851, %v3843
        %3877 = vst.msk [vmem:[#allocation6 + $0xc8] sm:$0xff] %vm3851, %v3844
        %3878 = vst.msk [vmem:[#allocation6 + $0xd0] sm:$0xff] %vm3851, %v3845
        %3879 = vst.msk [vmem:[#allocation6 + $0xd8] sm:$0xff] %vm3851, %v3846
        %3880 = vst.msk [vmem:[#allocation6 + $0xe0] sm:$0xff] %vm3851, %v3847
        %3881 = vst.msk [vmem:[#allocation6 + $0xe8] sm:$0xff] %vm3851, %v3848
        %3882 = vst.msk [vmem:[#allocation6 + $0xf0] sm:$0xff] %vm3851, %v3849
        %3883 = vst.msk [vmem:[#allocation6 + $0xf8] sm:$0xff] %vm3851, %v3850
        %v3884 = vld [vmem:[#allocation6] ss:$2 sm:$0xff]
        %s3885 = scalar_lea.vmem [#allocation6], 16
        %v3886 = vld [vmem:[%s3885] ss:$2 sm:$0xff]
        %s3887 = scalar_lea.vmem [#allocation6], 32
        %v3888 = vld [vmem:[%s3887] ss:$2 sm:$0xff]
        %s3889 = scalar_lea.vmem [#allocation6], 48
        %v3890 = vld [vmem:[%s3889] ss:$2 sm:$0xff]
        %s3891 = scalar_lea.vmem [#allocation6], 64
        %v3892 = vld [vmem:[%s3891] ss:$2 sm:$0xff]
        %s3893 = scalar_lea.vmem [#allocation6], 80
        %v3894 = vld [vmem:[%s3893] ss:$2 sm:$0xff]
        %s3895 = scalar_lea.vmem [#allocation6], 96
        %v3896 = vld [vmem:[%s3895] ss:$2 sm:$0xff]
        %s3897 = scalar_lea.vmem [#allocation6], 112
        %v3898 = vld [vmem:[%s3897] ss:$2 sm:$0xff]
        %s3899 = scalar_lea.vmem [#allocation6], 128
        %v3900 = vld [vmem:[%s3899] ss:$2 sm:$0xff]
        %s3901 = scalar_lea.vmem [#allocation6], 144
        %v3902 = vld [vmem:[%s3901] ss:$2 sm:$0xff]
        %s3903 = scalar_lea.vmem [#allocation6], 160
        %v3904 = vld [vmem:[%s3903] ss:$2 sm:$0xff]
        %s3905 = scalar_lea.vmem [#allocation6], 176
        %v3906 = vld [vmem:[%s3905] ss:$2 sm:$0xff]
        %s3907 = scalar_lea.vmem [#allocation6], 192
        %v3908 = vld [vmem:[%s3907] ss:$2 sm:$0xff]
        %s3909 = scalar_lea.vmem [#allocation6], 208
        %v3910 = vld [vmem:[%s3909] ss:$2 sm:$0xff]
        %s3911 = scalar_lea.vmem [#allocation6], 224
        %v3912 = vld [vmem:[%s3911] ss:$2 sm:$0xff]
        %s3913 = scalar_lea.vmem [#allocation6], 240
        %v3914 = vld [vmem:[%s3913] ss:$2 sm:$0xff]
        %s3915 = scalar_lea.vmem [#allocation6], 1
        %v3916 = vld [vmem:[%s3915] ss:$2 sm:$0xff]
        %s3917 = scalar_lea.vmem [#allocation6], 17
        %v3918 = vld [vmem:[%s3917] ss:$2 sm:$0xff]
        %s3919 = scalar_lea.vmem [#allocation6], 33
        %v3920 = vld [vmem:[%s3919] ss:$2 sm:$0xff]
        %s3921 = scalar_lea.vmem [#allocation6], 49
        %v3922 = vld [vmem:[%s3921] ss:$2 sm:$0xff]
        %s3923 = scalar_lea.vmem [#allocation6], 65
        %v3924 = vld [vmem:[%s3923] ss:$2 sm:$0xff]
        %s3925 = scalar_lea.vmem [#allocation6], 81
        %v3926 = vld [vmem:[%s3925] ss:$2 sm:$0xff]
        %s3927 = scalar_lea.vmem [#allocation6], 97
        %v3928 = vld [vmem:[%s3927] ss:$2 sm:$0xff]
        %s3929 = scalar_lea.vmem [#allocation6], 113
        %v3930 = vld [vmem:[%s3929] ss:$2 sm:$0xff]
        %s3931 = scalar_lea.vmem [#allocation6], 129
        %v3932 = vld [vmem:[%s3931] ss:$2 sm:$0xff]
        %s3933 = scalar_lea.vmem [#allocation6], 145
        %v3934 = vld [vmem:[%s3933] ss:$2 sm:$0xff]
        %s3935 = scalar_lea.vmem [#allocation6], 161
        %v3936 = vld [vmem:[%s3935] ss:$2 sm:$0xff]
        %s3937 = scalar_lea.vmem [#allocation6], 177
        %v3938 = vld [vmem:[%s3937] ss:$2 sm:$0xff]
        %s3939 = scalar_lea.vmem [#allocation6], 193
        %v3940 = vld [vmem:[%s3939] ss:$2 sm:$0xff]
        %s3941 = scalar_lea.vmem [#allocation6], 209
        %v3942 = vld [vmem:[%s3941] ss:$2 sm:$0xff]
        %s3943 = scalar_lea.vmem [#allocation6], 225
        %v3944 = vld [vmem:[%s3943] ss:$2 sm:$0xff]
        %s3945 = scalar_lea.vmem [#allocation6], 241
        %v3946 = vld [vmem:[%s3945] ss:$2 sm:$0xff]
        %v3947 = vmax.f32 %v3884, %v3916
        %v3948 = vmax.f32 %v3886, %v3918
        %v3949 = vmax.f32 %v3888, %v3920
        %v3950 = vmax.f32 %v3890, %v3922
        %v3951 = vmax.f32 %v3892, %v3924
        %v3952 = vmax.f32 %v3894, %v3926
        %v3953 = vmax.f32 %v3896, %v3928
        %v3954 = vmax.f32 %v3898, %v3930
        %v3955 = vmax.f32 %v3900, %v3932
        %v3956 = vmax.f32 %v3902, %v3934
        %v3957 = vmax.f32 %v3904, %v3936
        %v3958 = vmax.f32 %v3906, %v3938
        %v3959 = vmax.f32 %v3908, %v3940
        %v3960 = vmax.f32 %v3910, %v3942
        %v3961 = vmax.f32 %v3912, %v3944
        %v3962 = vmax.f32 %v3914, %v3946
        %v3963 = vmax.f32 %v3947, %v3948
        %v3964 = vmax.f32 %v3949, %v3950
        %v3965 = vmax.f32 %v3951, %v3952
        %v3966 = vmax.f32 %v3953, %v3954
        %v3967 = vmax.f32 %v3955, %v3956
        %v3968 = vmax.f32 %v3957, %v3958
        %v3969 = vmax.f32 %v3959, %v3960
        %v3970 = vmax.f32 %v3961, %v3962
        %3971 = vst.msk [vmem:[#allocation3] sm:$0xff] %vm3851, 0.0
        %vm3972 = vcmask 57344
        %3973 = vst.msk [vmem:[#allocation3 + $0x8] sm:$0x1] %vm3972, 0.0
        %3974 = vst.msk [vmem:[#allocation3 + $0x49] sm:$0xff] %vm3851, 0.0
        %3975 = vst.msk [vmem:[#allocation3 + $0x51] sm:$0x1] %vm3972, 0.0
        %3976 = vst.msk [vmem:[#allocation3 + $0x9] sm:$0xff] %vm3851, %v3963
        %3977 = vst.msk [vmem:[#allocation3 + $0x11] sm:$0xff] %vm3851, %v3964
        %3978 = vst.msk [vmem:[#allocation3 + $0x19] sm:$0xff] %vm3851, %v3965
        %3979 = vst.msk [vmem:[#allocation3 + $0x21] sm:$0xff] %vm3851, %v3966
        %3980 = vst.msk [vmem:[#allocation3 + $0x29] sm:$0xff] %vm3851, %v3967
        %3981 = vst.msk [vmem:[#allocation3 + $0x31] sm:$0xff] %vm3851, %v3968
        %3982 = vst.msk [vmem:[#allocation3 + $0x39] sm:$0xff] %vm3851, %v3969
        %3983 = vst.msk [vmem:[#allocation3 + $0x41] sm:$0xff] %vm3851, %v3970
        %vm3984 = vcmp.lt.s32.totalorder %v545, 0
        %v3985 = vsub.s32 0, %v545
        %v3986 = vsel %vm3984, %v3985, %v545
        %v3987 = vshrl.u32 %v3986, 3
        %v3988 = vand.u32 %v3986, 7
        %v3989 = vsub.s32 0, %v3988
        %v3990 = vsel %vm3984, %v3989, %v3988
        %vm3991 = vcmp.lt.s32.totalorder %v546, 0
        %v3992 = vsub.s32 0, %v546
        %v3993 = vsel %vm3991, %v3992, %v546
        %v3994 = vshrl.u32 %v3993, 3
        %v3995 = vand.u32 %v3993, 7
        %v3996 = vsub.s32 0, %v3995
        %v3997 = vsel %vm3991, %v3996, %v3995
        %vm3998 = vcmp.lt.s32.totalorder %v547, 0
        %v3999 = vsub.s32 0, %v547
        %v4000 = vsel %vm3998, %v3999, %v547
        %v4001 = vshrl.u32 %v4000, 3
        %v4002 = vand.u32 %v4000, 7
        %v4003 = vsub.s32 0, %v4002
        %v4004 = vsel %vm3998, %v4003, %v4002
        %vm4005 = vcmp.lt.s32.totalorder %v548, 0
        %v4006 = vsub.s32 0, %v548
        %v4007 = vsel %vm4005, %v4006, %v548
        %v4008 = vshrl.u32 %v4007, 3
        %v4009 = vand.u32 %v4007, 7
        %v4010 = vsub.s32 0, %v4009
        %v4011 = vsel %vm4005, %v4010, %v4009
        %vm4012 = vcmp.lt.s32.totalorder %v549, 0
        %v4013 = vsub.s32 0, %v549
        %v4014 = vsel %vm4012, %v4013, %v549
        %v4015 = vshrl.u32 %v4014, 3
        %v4016 = vand.u32 %v4014, 7
        %v4017 = vsub.s32 0, %v4016
        %v4018 = vsel %vm4012, %v4017, %v4016
        %vm4019 = vcmp.lt.s32.totalorder %v550, 0
        %v4020 = vsub.s32 0, %v550
        %v4021 = vsel %vm4019, %v4020, %v550
        %v4022 = vshrl.u32 %v4021, 3
        %v4023 = vand.u32 %v4021, 7
        %v4024 = vsub.s32 0, %v4023
        %v4025 = vsel %vm4019, %v4024, %v4023
        %vm4026 = vcmp.lt.s32.totalorder %v551, 0
        %v4027 = vsub.s32 0, %v551
        %v4028 = vsel %vm4026, %v4027, %v551
        %v4029 = vshrl.u32 %v4028, 3
        %v4030 = vand.u32 %v4028, 7
        %v4031 = vsub.s32 0, %v4030
        %v4032 = vsel %vm4026, %v4031, %v4030
        %vm4033 = vcmp.lt.s32.totalorder %v552, 0
        %v4034 = vsub.s32 0, %v552
        %v4035 = vsel %vm4033, %v4034, %v552
        %v4036 = vshrl.u32 %v4035, 3
        %v4037 = vand.u32 %v4035, 7
        %v4038 = vsub.s32 0, %v4037
        %v4039 = vsel %vm4033, %v4038, %v4037
        %vm4040 = vcmp.ne.s32.totalorder %v3990, 0
        %vm4041 = vcmp.ne.s32.totalorder %v3997, 0
        %vm4042 = vcmp.ne.s32.totalorder %v4004, 0
        %vm4043 = vcmp.ne.s32.totalorder %v4011, 0
        %vm4044 = vcmp.ne.s32.totalorder %v4018, 0
        %vm4045 = vcmp.ne.s32.totalorder %v4025, 0
        %vm4046 = vcmp.ne.s32.totalorder %v4032, 0
        %vm4047 = vcmp.ne.s32.totalorder %v4039, 0
        %vm4048 = vcmp.lt.s32.totalorder %v3990, 0
        %vm4049 = vcmp.lt.s32.totalorder %v3997, 0
        %vm4050 = vcmp.lt.s32.totalorder %v4004, 0
        %vm4051 = vcmp.lt.s32.totalorder %v4011, 0
        %vm4052 = vcmp.lt.s32.totalorder %v4018, 0
        %vm4053 = vcmp.lt.s32.totalorder %v4025, 0
        %vm4054 = vcmp.lt.s32.totalorder %v4032, 0
        %vm4055 = vcmp.lt.s32.totalorder %v4039, 0
        %vm4056 = vmand %vm4048, %vm4040
        %vm4057 = vmand %vm4049, %vm4041
        %vm4058 = vmand %vm4050, %vm4042
        %vm4059 = vmand %vm4051, %vm4043
        %vm4060 = vmand %vm4052, %vm4044
        %vm4061 = vmand %vm4053, %vm4045
        %vm4062 = vmand %vm4054, %vm4046
        %vm4063 = vmand %vm4055, %vm4047
        %v4064 = vadd.s32 %v3990, 8
        %v4065 = vadd.s32 %v3997, 8
        %v4066 = vadd.s32 %v4004, 8
        %v4067 = vadd.s32 %v4011, 8
        %v4068 = vadd.s32 %v4018, 8
        %v4069 = vadd.s32 %v4025, 8
        %v4070 = vadd.s32 %v4032, 8
        %v4071 = vadd.s32 %v4039, 8
        %v4072 = vsel %vm4056, %v4064, %v3990
        %v4073 = vsel %vm4057, %v4065, %v3997
        %v4074 = vsel %vm4058, %v4066, %v4004
        %v4075 = vsel %vm4059, %v4067, %v4011
        %v4076 = vsel %vm4060, %v4068, %v4018
        %v4077 = vsel %vm4061, %v4069, %v4025
        %v4078 = vsel %vm4062, %v4070, %v4032
        %v4079 = vsel %vm4063, %v4071, %v4039
        %v4080 = vld [vmem:[#allocation3] sm:$0xff]
        %v4081 = vld [vmem:[#allocation3 + $0x8] sm:$0xff]
        %v4082 = vld [vmem:[#allocation3 + $0x10] sm:$0xff]
        %v4083 = vld [vmem:[#allocation3 + $0x18] sm:$0xff]
        %v4084 = vld [vmem:[#allocation3 + $0x20] sm:$0xff]
        %v4085 = vld [vmem:[#allocation3 + $0x28] sm:$0xff]
        %v4086 = vld [vmem:[#allocation3 + $0x30] sm:$0xff]
        %v4087 = vld [vmem:[#allocation3 + $0x38] sm:$0xff]
        %vm4088 = vcmp.ge.s32.totalorder %v4072, 1
        %vm4089 = vcmp.ge.s32.totalorder %v4073, 1
        %vm4090 = vcmp.ge.s32.totalorder %v4074, 1
        %vm4091 = vcmp.ge.s32.totalorder %v4075, 1
        %vm4092 = vcmp.ge.s32.totalorder %v4076, 1
        %vm4093 = vcmp.ge.s32.totalorder %v4077, 1
        %vm4094 = vcmp.ge.s32.totalorder %v4078, 1
        %vm4095 = vcmp.ge.s32.totalorder %v4079, 1
        %v4096 = vsel %vm4088, 1, 0
        %v4097 = vsel %vm4089, 1, 0
        %v4098 = vsel %vm4090, 1, 0
        %v4099 = vsel %vm4091, 1, 0
        %v4100 = vsel %vm4092, 1, 0
        %v4101 = vsel %vm4093, 1, 0
        %v4102 = vsel %vm4094, 1, 0
        %v4103 = vsel %vm4095, 1, 0
        %vm4104 = vcmp.eq.s32.totalorder %v4096, 1
        %vm4105 = vcmp.eq.s32.totalorder %v4097, 1
        %vm4106 = vcmp.eq.s32.totalorder %v4098, 1
        %vm4107 = vcmp.eq.s32.totalorder %v4099, 1
        %vm4108 = vcmp.eq.s32.totalorder %v4100, 1
        %vm4109 = vcmp.eq.s32.totalorder %v4101, 1
        %vm4110 = vcmp.eq.s32.totalorder %v4102, 1
        %vm4111 = vcmp.eq.s32.totalorder %v4103, 1
        %v4112 = vsel %vm4104, %v4080, 0.0
        %v4113 = vsel %vm4105, %v4081, 0.0
        %v4114 = vsel %vm4106, %v4082, 0.0
        %v4115 = vsel %vm4107, %v4083, 0.0
        %v4116 = vsel %vm4108, %v4084, 0.0
        %v4117 = vsel %vm4109, %v4085, 0.0
        %v4118 = vsel %vm4110, %v4086, 0.0
        %v4119 = vsel %vm4111, %v4087, 0.0
        %v4120 = vld [vmem:[#allocation9] sm:$0xff]
        %v4121 = vld [vmem:[#allocation3 + $0x1] sm:$0xff]
        %v4122 = vld [vmem:[#allocation3 + $0x9] sm:$0xff]
        %v4123 = vld [vmem:[#allocation3 + $0x11] sm:$0xff]
        %v4124 = vld [vmem:[#allocation3 + $0x19] sm:$0xff]
        %v4125 = vld [vmem:[#allocation3 + $0x21] sm:$0xff]
        %v4126 = vld [vmem:[#allocation3 + $0x29] sm:$0xff]
        %v4127 = vld [vmem:[#allocation3 + $0x31] sm:$0xff]
        %v4128 = vld [vmem:[#allocation3 + $0x39] sm:$0xff]
        %s4129 = scalar_lea.vmem [#allocation9], 8
        %v4130 = vld [vmem:[%s4129] sm:$0xff]
        %v4132 = vsel %vm3851, %v4121, 0
        %v4135 = vsel %vm3851, %v4122, 0
        %v4138 = vsel %vm3851, %v4123, 0
        %v4141 = vsel %vm3851, %v4124, 0
        %v4144 = vsel %vm3851, %v4125, 0
        %v4147 = vsel %vm3851, %v4126, 0
        %v4150 = vsel %vm3851, %v4127, 0
        %v4153 = vsel %vm3851, %v4128, 0
        %4155 = vmatpush.msra.mxu0 0.0
        %4156 = vmatpush.msra.mxu0 0.0
        %4157 = vmatpush.msra.mxu0 0.0
        %4158 = vmatpush.msra.mxu0 0.0
        %4159 = vmatpush.msra.mxu0 0.0
        %4160 = vmatpush.msra.mxu0 0.0
        %4161 = vmatpush.msra.mxu0 0.0
        %4162 = vmatpush.msra.mxu0 0.0
        %4163 = vmatpush.msra.mxu0 0.0
        %4164 = vmatpush.msra.mxu0 0.0
        %4165 = vmatpush.msra.mxu0 0.0
        %4166 = vmatpush.msra.mxu0 0.0
        %4167 = vmatpush.msra.mxu0 0.0
        %4168 = vmatpush.msra.mxu0 0.0
        %4169 = vmatpush.msra.mxu0 0.0
        %4170 = vmatpush.msra.mxu0 %v4130
        %4171 = vmatmul.f32.gmra.mxu0 %v4132
        %v4172 = vpop.f32.mrf.mxu0
        %v4173 = vadd.f32 0.0, %v4172
        %4174 = vmatmul.f32.gmra.mxu0 %v4135
        %v4175 = vpop.f32.mrf.mxu0
        %v4176 = vadd.f32 0.0, %v4175
        %4177 = vmatmul.f32.gmra.mxu0 %v4138
        %v4178 = vpop.f32.mrf.mxu0
        %v4179 = vadd.f32 0.0, %v4178
        %4180 = vmatmul.f32.gmra.mxu0 %v4141
        %v4181 = vpop.f32.mrf.mxu0
        %v4182 = vadd.f32 0.0, %v4181
        %4183 = vmatmul.f32.gmra.mxu0 %v4144
        %v4184 = vpop.f32.mrf.mxu0
        %v4185 = vadd.f32 0.0, %v4184
        %4186 = vmatmul.f32.gmra.mxu0 %v4147
        %v4187 = vpop.f32.mrf.mxu0
        %v4188 = vadd.f32 0.0, %v4187
        %4189 = vmatmul.f32.gmra.mxu0 %v4150
        %v4190 = vpop.f32.mrf.mxu0
        %v4191 = vadd.f32 0.0, %v4190
        %4192 = vmatmul.f32.gmra.mxu0 %v4153
        %v4193 = vpop.f32.mrf.mxu0
        %v4194 = vadd.f32 0.0, %v4193
        %4195 = vdwg.mxu0
        %v4197 = vsel %vm3851, %v4112, 0
        %v4200 = vsel %vm3851, %v4113, 0
        %v4203 = vsel %vm3851, %v4114, 0
        %v4206 = vsel %vm3851, %v4115, 0
        %v4209 = vsel %vm3851, %v4116, 0
        %v4212 = vsel %vm3851, %v4117, 0
        %v4215 = vsel %vm3851, %v4118, 0
        %v4218 = vsel %vm3851, %v4119, 0
        %4220 = vmatpush.msra.mxu0 0.0
        %4221 = vmatpush.msra.mxu0 0.0
        %4222 = vmatpush.msra.mxu0 0.0
        %4223 = vmatpush.msra.mxu0 0.0
        %4224 = vmatpush.msra.mxu0 0.0
        %4225 = vmatpush.msra.mxu0 0.0
        %4226 = vmatpush.msra.mxu0 0.0
        %4227 = vmatpush.msra.mxu0 0.0
        %4228 = vmatpush.msra.mxu0 0.0
        %4229 = vmatpush.msra.mxu0 0.0
        %4230 = vmatpush.msra.mxu0 0.0
        %4231 = vmatpush.msra.mxu0 0.0
        %4232 = vmatpush.msra.mxu0 0.0
        %4233 = vmatpush.msra.mxu0 0.0
        %4234 = vmatpush.msra.mxu0 0.0
        %4235 = vmatpush.msra.mxu0 %v4120
        %4236 = vmatmul.f32.gmra.mxu0 %v4197
        %v4237 = vpop.f32.mrf.mxu0
        %v4238 = vadd.f32 %v4173, %v4237
        %4239 = vmatmul.f32.gmra.mxu0 %v4200
        %v4240 = vpop.f32.mrf.mxu0
        %v4241 = vadd.f32 %v4176, %v4240
        %4242 = vmatmul.f32.gmra.mxu0 %v4203
        %v4243 = vpop.f32.mrf.mxu0
        %v4244 = vadd.f32 %v4179, %v4243
        %4245 = vmatmul.f32.gmra.mxu0 %v4206
        %v4246 = vpop.f32.mrf.mxu0
        %v4247 = vadd.f32 %v4182, %v4246
        %4248 = vmatmul.f32.gmra.mxu0 %v4209
        %v4249 = vpop.f32.mrf.mxu0
        %v4250 = vadd.f32 %v4185, %v4249
        %4251 = vmatmul.f32.gmra.mxu0 %v4212
        %v4252 = vpop.f32.mrf.mxu0
        %v4253 = vadd.f32 %v4188, %v4252
        %4254 = vmatmul.f32.gmra.mxu0 %v4215
        %v4255 = vpop.f32.mrf.mxu0
        %v4256 = vadd.f32 %v4191, %v4255
        %4257 = vmatmul.f32.gmra.mxu0 %v4218
        %v4258 = vpop.f32.mrf.mxu0
        %v4259 = vadd.f32 %v4194, %v4258
        %4260 = vdwg.mxu0
        %v4261 = vld [vmem:[#allocation3 + $0x2] sm:$0xff]
        %v4262 = vld [vmem:[#allocation3 + $0xa] sm:$0xff]
        %v4263 = vld [vmem:[#allocation3 + $0x12] sm:$0xff]
        %v4264 = vld [vmem:[#allocation3 + $0x1a] sm:$0xff]
        %v4265 = vld [vmem:[#allocation3 + $0x22] sm:$0xff]
        %v4266 = vld [vmem:[#allocation3 + $0x2a] sm:$0xff]
        %v4267 = vld [vmem:[#allocation3 + $0x32] sm:$0xff]
        %v4268 = vld [vmem:[#allocation3 + $0x3a] sm:$0xff]
        %vm4269 = vcmp.le.s32.totalorder %v4072, 6
        %vm4270 = vcmp.le.s32.totalorder %v4073, 6
        %vm4271 = vcmp.le.s32.totalorder %v4074, 6
        %vm4272 = vcmp.le.s32.totalorder %v4075, 6
        %vm4273 = vcmp.le.s32.totalorder %v4076, 6
        %vm4274 = vcmp.le.s32.totalorder %v4077, 6
        %vm4275 = vcmp.le.s32.totalorder %v4078, 6
        %vm4276 = vcmp.le.s32.totalorder %v4079, 6
        %v4277 = vsel %vm4269, 1, 0
        %v4278 = vsel %vm4270, 1, 0
        %v4279 = vsel %vm4271, 1, 0
        %v4280 = vsel %vm4272, 1, 0
        %v4281 = vsel %vm4273, 1, 0
        %v4282 = vsel %vm4274, 1, 0
        %v4283 = vsel %vm4275, 1, 0
        %v4284 = vsel %vm4276, 1, 0
        %vm4285 = vcmp.eq.s32.totalorder %v4277, 1
        %vm4286 = vcmp.eq.s32.totalorder %v4278, 1
        %vm4287 = vcmp.eq.s32.totalorder %v4279, 1
        %vm4288 = vcmp.eq.s32.totalorder %v4280, 1
        %vm4289 = vcmp.eq.s32.totalorder %v4281, 1
        %vm4290 = vcmp.eq.s32.totalorder %v4282, 1
        %vm4291 = vcmp.eq.s32.totalorder %v4283, 1
        %vm4292 = vcmp.eq.s32.totalorder %v4284, 1
        %v4293 = vsel %vm4285, %v4261, 0.0
        %v4294 = vsel %vm4286, %v4262, 0.0
        %v4295 = vsel %vm4287, %v4263, 0.0
        %v4296 = vsel %vm4288, %v4264, 0.0
        %v4297 = vsel %vm4289, %v4265, 0.0
        %v4298 = vsel %vm4290, %v4266, 0.0
        %v4299 = vsel %vm4291, %v4267, 0.0
        %v4300 = vsel %vm4292, %v4268, 0.0
        %s4301 = scalar_lea.vmem [#allocation9], 16
        %v4302 = vld [vmem:[%s4301] sm:$0xff]
        %v4304 = vsel %vm3851, %v4293, 0
        %v4307 = vsel %vm3851, %v4294, 0
        %v4310 = vsel %vm3851, %v4295, 0
        %v4313 = vsel %vm3851, %v4296, 0
        %v4316 = vsel %vm3851, %v4297, 0
        %v4319 = vsel %vm3851, %v4298, 0
        %v4322 = vsel %vm3851, %v4299, 0
        %v4325 = vsel %vm3851, %v4300, 0
        %4327 = vmatpush.msra.mxu0 0.0
        %4328 = vmatpush.msra.mxu0 0.0
        %4329 = vmatpush.msra.mxu0 0.0
        %4330 = vmatpush.msra.mxu0 0.0
        %4331 = vmatpush.msra.mxu0 0.0
        %4332 = vmatpush.msra.mxu0 0.0
        %4333 = vmatpush.msra.mxu0 0.0
        %4334 = vmatpush.msra.mxu0 0.0
        %4335 = vmatpush.msra.mxu0 0.0
        %4336 = vmatpush.msra.mxu0 0.0
        %4337 = vmatpush.msra.mxu0 0.0
        %4338 = vmatpush.msra.mxu0 0.0
        %4339 = vmatpush.msra.mxu0 0.0
        %4340 = vmatpush.msra.mxu0 0.0
        %4341 = vmatpush.msra.mxu0 0.0
        %4342 = vmatpush.msra.mxu0 %v4302
        %4343 = vmatmul.f32.gmra.mxu0 %v4304
        %v4344 = vpop.f32.mrf.mxu0
        %v4345 = vadd.f32 0.0, %v4344
        %4346 = vmatmul.f32.gmra.mxu0 %v4307
        %v4347 = vpop.f32.mrf.mxu0
        %v4348 = vadd.f32 0.0, %v4347
        %4349 = vmatmul.f32.gmra.mxu0 %v4310
        %v4350 = vpop.f32.mrf.mxu0
        %v4351 = vadd.f32 0.0, %v4350
        %4352 = vmatmul.f32.gmra.mxu0 %v4313
        %v4353 = vpop.f32.mrf.mxu0
        %v4354 = vadd.f32 0.0, %v4353
        %4355 = vmatmul.f32.gmra.mxu0 %v4316
        %v4356 = vpop.f32.mrf.mxu0
        %v4357 = vadd.f32 0.0, %v4356
        %4358 = vmatmul.f32.gmra.mxu0 %v4319
        %v4359 = vpop.f32.mrf.mxu0
        %v4360 = vadd.f32 0.0, %v4359
        %4361 = vmatmul.f32.gmra.mxu0 %v4322
        %v4362 = vpop.f32.mrf.mxu0
        %v4363 = vadd.f32 0.0, %v4362
        %4364 = vmatmul.f32.gmra.mxu0 %v4325
        %v4365 = vpop.f32.mrf.mxu0
        %v4366 = vadd.f32 0.0, %v4365
        %4367 = vdwg.mxu0
        %v4368 = vadd.f32 %v4238, %v4345
        %v4369 = vadd.f32 %v4241, %v4348
        %v4370 = vadd.f32 %v4244, %v4351
        %v4371 = vadd.f32 %v4247, %v4354
        %v4372 = vadd.f32 %v4250, %v4357
        %v4373 = vadd.f32 %v4253, %v4360
        %v4374 = vadd.f32 %v4256, %v4363
        %v4375 = vadd.f32 %v4259, %v4366
        %v4376 = vld [vmem:[#allocation3 + $0x8] sm:$0xff]
        %v4377 = vld [vmem:[#allocation3 + $0x10] sm:$0xff]
        %v4378 = vld [vmem:[#allocation3 + $0x18] sm:$0xff]
        %v4379 = vld [vmem:[#allocation3 + $0x20] sm:$0xff]
        %v4380 = vld [vmem:[#allocation3 + $0x28] sm:$0xff]
        %v4381 = vld [vmem:[#allocation3 + $0x30] sm:$0xff]
        %v4382 = vld [vmem:[#allocation3 + $0x38] sm:$0xff]
        %v4383 = vld [vmem:[#allocation3 + $0x40] sm:$0xff]
        %v4384 = vsel %vm4104, %v4376, 0.0
        %v4385 = vsel %vm4105, %v4377, 0.0
        %v4386 = vsel %vm4106, %v4378, 0.0
        %v4387 = vsel %vm4107, %v4379, 0.0
        %v4388 = vsel %vm4108, %v4380, 0.0
        %v4389 = vsel %vm4109, %v4381, 0.0
        %v4390 = vsel %vm4110, %v4382, 0.0
        %v4391 = vsel %vm4111, %v4383, 0.0
        %s4392 = scalar_lea.vmem [#allocation9], 24
        %v4393 = vld [vmem:[%s4392] sm:$0xff]
        %v4395 = vsel %vm3851, %v4384, 0
        %v4398 = vsel %vm3851, %v4385, 0
        %v4401 = vsel %vm3851, %v4386, 0
        %v4404 = vsel %vm3851, %v4387, 0
        %v4407 = vsel %vm3851, %v4388, 0
        %v4410 = vsel %vm3851, %v4389, 0
        %v4413 = vsel %vm3851, %v4390, 0
        %v4416 = vsel %vm3851, %v4391, 0
        %4418 = vmatpush.msra.mxu0 0.0
        %4419 = vmatpush.msra.mxu0 0.0
        %4420 = vmatpush.msra.mxu0 0.0
        %4421 = vmatpush.msra.mxu0 0.0
        %4422 = vmatpush.msra.mxu0 0.0
        %4423 = vmatpush.msra.mxu0 0.0
        %4424 = vmatpush.msra.mxu0 0.0
        %4425 = vmatpush.msra.mxu0 0.0
        %4426 = vmatpush.msra.mxu0 0.0
        %4427 = vmatpush.msra.mxu0 0.0
        %4428 = vmatpush.msra.mxu0 0.0
        %4429 = vmatpush.msra.mxu0 0.0
        %4430 = vmatpush.msra.mxu0 0.0
        %4431 = vmatpush.msra.mxu0 0.0
        %4432 = vmatpush.msra.mxu0 0.0
        %4433 = vmatpush.msra.mxu0 %v4393
        %4434 = vmatmul.f32.gmra.mxu0 %v4395
        %v4435 = vpop.f32.mrf.mxu0
        %v4436 = vadd.f32 0.0, %v4435
        %4437 = vmatmul.f32.gmra.mxu0 %v4398
        %v4438 = vpop.f32.mrf.mxu0
        %v4439 = vadd.f32 0.0, %v4438
        %4440 = vmatmul.f32.gmra.mxu0 %v4401
        %v4441 = vpop.f32.mrf.mxu0
        %v4442 = vadd.f32 0.0, %v4441
        %4443 = vmatmul.f32.gmra.mxu0 %v4404
        %v4444 = vpop.f32.mrf.mxu0
        %v4445 = vadd.f32 0.0, %v4444
        %4446 = vmatmul.f32.gmra.mxu0 %v4407
        %v4447 = vpop.f32.mrf.mxu0
        %v4448 = vadd.f32 0.0, %v4447
        %4449 = vmatmul.f32.gmra.mxu0 %v4410
        %v4450 = vpop.f32.mrf.mxu0
        %v4451 = vadd.f32 0.0, %v4450
        %4452 = vmatmul.f32.gmra.mxu0 %v4413
        %v4453 = vpop.f32.mrf.mxu0
        %v4454 = vadd.f32 0.0, %v4453
        %4455 = vmatmul.f32.gmra.mxu0 %v4416
        %v4456 = vpop.f32.mrf.mxu0
        %v4457 = vadd.f32 0.0, %v4456
        %4458 = vdwg.mxu0
        %v4459 = vadd.f32 %v4368, %v4436
        %v4460 = vadd.f32 %v4369, %v4439
        %v4461 = vadd.f32 %v4370, %v4442
        %v4462 = vadd.f32 %v4371, %v4445
        %v4463 = vadd.f32 %v4372, %v4448
        %v4464 = vadd.f32 %v4373, %v4451
        %v4465 = vadd.f32 %v4374, %v4454
        %v4466 = vadd.f32 %v4375, %v4457
        %v4467 = vld [vmem:[#allocation3 + $0x9] sm:$0xff]
        %v4468 = vld [vmem:[#allocation3 + $0x11] sm:$0xff]
        %v4469 = vld [vmem:[#allocation3 + $0x19] sm:$0xff]
        %v4470 = vld [vmem:[#allocation3 + $0x21] sm:$0xff]
        %v4471 = vld [vmem:[#allocation3 + $0x29] sm:$0xff]
        %v4472 = vld [vmem:[#allocation3 + $0x31] sm:$0xff]
        %v4473 = vld [vmem:[#allocation3 + $0x39] sm:$0xff]
        %v4474 = vld [vmem:[#allocation3 + $0x41] sm:$0xff]
        %s4475 = scalar_lea.vmem [#allocation9], 32
        %v4476 = vld [vmem:[%s4475] sm:$0xff]
        %v4478 = vsel %vm3851, %v4467, 0
        %v4481 = vsel %vm3851, %v4468, 0
        %v4484 = vsel %vm3851, %v4469, 0
        %v4487 = vsel %vm3851, %v4470, 0
        %v4490 = vsel %vm3851, %v4471, 0
        %v4493 = vsel %vm3851, %v4472, 0
        %v4496 = vsel %vm3851, %v4473, 0
        %v4499 = vsel %vm3851, %v4474, 0
        %4501 = vmatpush.msra.mxu0 0.0
        %4502 = vmatpush.msra.mxu0 0.0
        %4503 = vmatpush.msra.mxu0 0.0
        %4504 = vmatpush.msra.mxu0 0.0
        %4505 = vmatpush.msra.mxu0 0.0
        %4506 = vmatpush.msra.mxu0 0.0
        %4507 = vmatpush.msra.mxu0 0.0
        %4508 = vmatpush.msra.mxu0 0.0
        %4509 = vmatpush.msra.mxu0 0.0
        %4510 = vmatpush.msra.mxu0 0.0
        %4511 = vmatpush.msra.mxu0 0.0
        %4512 = vmatpush.msra.mxu0 0.0
        %4513 = vmatpush.msra.mxu0 0.0
        %4514 = vmatpush.msra.mxu0 0.0
        %4515 = vmatpush.msra.mxu0 0.0
        %4516 = vmatpush.msra.mxu0 %v4476
        %4517 = vmatmul.f32.gmra.mxu0 %v4478
        %v4518 = vpop.f32.mrf.mxu0
        %v4519 = vadd.f32 0.0, %v4518
        %4520 = vmatmul.f32.gmra.mxu0 %v4481
        %v4521 = vpop.f32.mrf.mxu0
        %v4522 = vadd.f32 0.0, %v4521
        %4523 = vmatmul.f32.gmra.mxu0 %v4484
        %v4524 = vpop.f32.mrf.mxu0
        %v4525 = vadd.f32 0.0, %v4524
        %4526 = vmatmul.f32.gmra.mxu0 %v4487
        %v4527 = vpop.f32.mrf.mxu0
        %v4528 = vadd.f32 0.0, %v4527
        %4529 = vmatmul.f32.gmra.mxu0 %v4490
        %v4530 = vpop.f32.mrf.mxu0
        %v4531 = vadd.f32 0.0, %v4530
        %4532 = vmatmul.f32.gmra.mxu0 %v4493
        %v4533 = vpop.f32.mrf.mxu0
        %v4534 = vadd.f32 0.0, %v4533
        %4535 = vmatmul.f32.gmra.mxu0 %v4496
        %v4536 = vpop.f32.mrf.mxu0
        %v4537 = vadd.f32 0.0, %v4536
        %4538 = vmatmul.f32.gmra.mxu0 %v4499
        %v4539 = vpop.f32.mrf.mxu0
        %v4540 = vadd.f32 0.0, %v4539
        %4541 = vdwg.mxu0
        %v4542 = vadd.f32 %v4459, %v4519
        %v4543 = vadd.f32 %v4460, %v4522
        %v4544 = vadd.f32 %v4461, %v4525
        %v4545 = vadd.f32 %v4462, %v4528
        %v4546 = vadd.f32 %v4463, %v4531
        %v4547 = vadd.f32 %v4464, %v4534
        %v4548 = vadd.f32 %v4465, %v4537
        %v4549 = vadd.f32 %v4466, %v4540
        %v4550 = vld [vmem:[#allocation3 + $0xa] sm:$0xff]
        %v4551 = vld [vmem:[#allocation3 + $0x12] sm:$0xff]
        %v4552 = vld [vmem:[#allocation3 + $0x1a] sm:$0xff]
        %v4553 = vld [vmem:[#allocation3 + $0x22] sm:$0xff]
        %v4554 = vld [vmem:[#allocation3 + $0x2a] sm:$0xff]
        %v4555 = vld [vmem:[#allocation3 + $0x32] sm:$0xff]
        %v4556 = vld [vmem:[#allocation3 + $0x3a] sm:$0xff]
        %v4557 = vld [vmem:[#allocation3 + $0x42] sm:$0xff]
        %v4558 = vsel %vm4285, %v4550, 0.0
        %v4559 = vsel %vm4286, %v4551, 0.0
        %v4560 = vsel %vm4287, %v4552, 0.0
        %v4561 = vsel %vm4288, %v4553, 0.0
        %v4562 = vsel %vm4289, %v4554, 0.0
        %v4563 = vsel %vm4290, %v4555, 0.0
        %v4564 = vsel %vm4291, %v4556, 0.0
        %v4565 = vsel %vm4292, %v4557, 0.0
        %s4566 = scalar_lea.vmem [#allocation9], 40
        %v4567 = vld [vmem:[%s4566] sm:$0xff]
        %v4569 = vsel %vm3851, %v4558, 0
        %v4572 = vsel %vm3851, %v4559, 0
        %v4575 = vsel %vm3851, %v4560, 0
        %v4578 = vsel %vm3851, %v4561, 0
        %v4581 = vsel %vm3851, %v4562, 0
        %v4584 = vsel %vm3851, %v4563, 0
        %v4587 = vsel %vm3851, %v4564, 0
        %v4590 = vsel %vm3851, %v4565, 0
        %4592 = vmatpush.msra.mxu0 0.0
        %4593 = vmatpush.msra.mxu0 0.0
        %4594 = vmatpush.msra.mxu0 0.0
        %4595 = vmatpush.msra.mxu0 0.0
        %4596 = vmatpush.msra.mxu0 0.0
        %4597 = vmatpush.msra.mxu0 0.0
        %4598 = vmatpush.msra.mxu0 0.0
        %4599 = vmatpush.msra.mxu0 0.0
        %4600 = vmatpush.msra.mxu0 0.0
        %4601 = vmatpush.msra.mxu0 0.0
        %4602 = vmatpush.msra.mxu0 0.0
        %4603 = vmatpush.msra.mxu0 0.0
        %4604 = vmatpush.msra.mxu0 0.0
        %4605 = vmatpush.msra.mxu0 0.0
        %4606 = vmatpush.msra.mxu0 0.0
        %4607 = vmatpush.msra.mxu0 %v4567
        %4608 = vmatmul.f32.gmra.mxu0 %v4569
        %v4609 = vpop.f32.mrf.mxu0
        %v4610 = vadd.f32 0.0, %v4609
        %4611 = vmatmul.f32.gmra.mxu0 %v4572
        %v4612 = vpop.f32.mrf.mxu0
        %v4613 = vadd.f32 0.0, %v4612
        %4614 = vmatmul.f32.gmra.mxu0 %v4575
        %v4615 = vpop.f32.mrf.mxu0
        %v4616 = vadd.f32 0.0, %v4615
        %4617 = vmatmul.f32.gmra.mxu0 %v4578
        %v4618 = vpop.f32.mrf.mxu0
        %v4619 = vadd.f32 0.0, %v4618
        %4620 = vmatmul.f32.gmra.mxu0 %v4581
        %v4621 = vpop.f32.mrf.mxu0
        %v4622 = vadd.f32 0.0, %v4621
        %4623 = vmatmul.f32.gmra.mxu0 %v4584
        %v4624 = vpop.f32.mrf.mxu0
        %v4625 = vadd.f32 0.0, %v4624
        %4626 = vmatmul.f32.gmra.mxu0 %v4587
        %v4627 = vpop.f32.mrf.mxu0
        %v4628 = vadd.f32 0.0, %v4627
        %4629 = vmatmul.f32.gmra.mxu0 %v4590
        %v4630 = vpop.f32.mrf.mxu0
        %v4631 = vadd.f32 0.0, %v4630
        %4632 = vdwg.mxu0
        %v4633 = vadd.f32 %v4542, %v4610
        %v4634 = vadd.f32 %v4543, %v4613
        %v4635 = vadd.f32 %v4544, %v4616
        %v4636 = vadd.f32 %v4545, %v4619
        %v4637 = vadd.f32 %v4546, %v4622
        %v4638 = vadd.f32 %v4547, %v4625
        %v4639 = vadd.f32 %v4548, %v4628
        %v4640 = vadd.f32 %v4549, %v4631
        %v4641 = vld [vmem:[#allocation3 + $0x10] sm:$0xff]
        %v4642 = vld [vmem:[#allocation3 + $0x18] sm:$0xff]
        %v4643 = vld [vmem:[#allocation3 + $0x20] sm:$0xff]
        %v4644 = vld [vmem:[#allocation3 + $0x28] sm:$0xff]
        %v4645 = vld [vmem:[#allocation3 + $0x30] sm:$0xff]
        %v4646 = vld [vmem:[#allocation3 + $0x38] sm:$0xff]
        %v4647 = vld [vmem:[#allocation3 + $0x40] sm:$0xff]
        %v4648 = vld [vmem:[#allocation3 + $0x48] sm:$0xff]
        %v4649 = vsel %vm4104, %v4641, 0.0
        %v4650 = vsel %vm4105, %v4642, 0.0
        %v4651 = vsel %vm4106, %v4643, 0.0
        %v4652 = vsel %vm4107, %v4644, 0.0
        %v4653 = vsel %vm4108, %v4645, 0.0
        %v4654 = vsel %vm4109, %v4646, 0.0
        %v4655 = vsel %vm4110, %v4647, 0.0
        %v4656 = vsel %vm4111, %v4648, 0.0
        %s4657 = scalar_lea.vmem [#allocation9], 48
        %v4658 = vld [vmem:[%s4657] sm:$0xff]
        %v4660 = vsel %vm3851, %v4649, 0
        %v4663 = vsel %vm3851, %v4650, 0
        %v4666 = vsel %vm3851, %v4651, 0
        %v4669 = vsel %vm3851, %v4652, 0
        %v4672 = vsel %vm3851, %v4653, 0
        %v4675 = vsel %vm3851, %v4654, 0
        %v4678 = vsel %vm3851, %v4655, 0
        %v4681 = vsel %vm3851, %v4656, 0
        %4683 = vmatpush.msra.mxu0 0.0
        %4684 = vmatpush.msra.mxu0 0.0
        %4685 = vmatpush.msra.mxu0 0.0
        %4686 = vmatpush.msra.mxu0 0.0
        %4687 = vmatpush.msra.mxu0 0.0
        %4688 = vmatpush.msra.mxu0 0.0
        %4689 = vmatpush.msra.mxu0 0.0
        %4690 = vmatpush.msra.mxu0 0.0
        %4691 = vmatpush.msra.mxu0 0.0
        %4692 = vmatpush.msra.mxu0 0.0
        %4693 = vmatpush.msra.mxu0 0.0
        %4694 = vmatpush.msra.mxu0 0.0
        %4695 = vmatpush.msra.mxu0 0.0
        %4696 = vmatpush.msra.mxu0 0.0
        %4697 = vmatpush.msra.mxu0 0.0
        %4698 = vmatpush.msra.mxu0 %v4658
        %4699 = vmatmul.f32.gmra.mxu0 %v4660
        %v4700 = vpop.f32.mrf.mxu0
        %v4701 = vadd.f32 0.0, %v4700
        %4702 = vmatmul.f32.gmra.mxu0 %v4663
        %v4703 = vpop.f32.mrf.mxu0
        %v4704 = vadd.f32 0.0, %v4703
        %4705 = vmatmul.f32.gmra.mxu0 %v4666
        %v4706 = vpop.f32.mrf.mxu0
        %v4707 = vadd.f32 0.0, %v4706
        %4708 = vmatmul.f32.gmra.mxu0 %v4669
        %v4709 = vpop.f32.mrf.mxu0
        %v4710 = vadd.f32 0.0, %v4709
        %4711 = vmatmul.f32.gmra.mxu0 %v4672
        %v4712 = vpop.f32.mrf.mxu0
        %v4713 = vadd.f32 0.0, %v4712
        %4714 = vmatmul.f32.gmra.mxu0 %v4675
        %v4715 = vpop.f32.mrf.mxu0
        %v4716 = vadd.f32 0.0, %v4715
        %4717 = vmatmul.f32.gmra.mxu0 %v4678
        %v4718 = vpop.f32.mrf.mxu0
        %v4719 = vadd.f32 0.0, %v4718
        %4720 = vmatmul.f32.gmra.mxu0 %v4681
        %v4721 = vpop.f32.mrf.mxu0
        %v4722 = vadd.f32 0.0, %v4721
        %4723 = vdwg.mxu0
        %v4724 = vadd.f32 %v4633, %v4701
        %v4725 = vadd.f32 %v4634, %v4704
        %v4726 = vadd.f32 %v4635, %v4707
        %v4727 = vadd.f32 %v4636, %v4710
        %v4728 = vadd.f32 %v4637, %v4713
        %v4729 = vadd.f32 %v4638, %v4716
        %v4730 = vadd.f32 %v4639, %v4719
        %v4731 = vadd.f32 %v4640, %v4722
        %v4732 = vld [vmem:[#allocation3 + $0x11] sm:$0xff]
        %v4733 = vld [vmem:[#allocation3 + $0x19] sm:$0xff]
        %v4734 = vld [vmem:[#allocation3 + $0x21] sm:$0xff]
        %v4735 = vld [vmem:[#allocation3 + $0x29] sm:$0xff]
        %v4736 = vld [vmem:[#allocation3 + $0x31] sm:$0xff]
        %v4737 = vld [vmem:[#allocation3 + $0x39] sm:$0xff]
        %v4738 = vld [vmem:[#allocation3 + $0x41] sm:$0xff]
        %v4739 = vld [vmem:[#allocation3 + $0x49] sm:$0xff]
        %s4740 = scalar_lea.vmem [#allocation9], 56
        %v4741 = vld [vmem:[%s4740] sm:$0xff]
        %v4743 = vsel %vm3851, %v4732, 0
        %v4746 = vsel %vm3851, %v4733, 0
        %v4749 = vsel %vm3851, %v4734, 0
        %v4752 = vsel %vm3851, %v4735, 0
        %v4755 = vsel %vm3851, %v4736, 0
        %v4758 = vsel %vm3851, %v4737, 0
        %v4761 = vsel %vm3851, %v4738, 0
        %v4764 = vsel %vm3851, %v4739, 0
        %4766 = vmatpush.msra.mxu0 0.0
        %4767 = vmatpush.msra.mxu0 0.0
        %4768 = vmatpush.msra.mxu0 0.0
        %4769 = vmatpush.msra.mxu0 0.0
        %4770 = vmatpush.msra.mxu0 0.0
        %4771 = vmatpush.msra.mxu0 0.0
        %4772 = vmatpush.msra.mxu0 0.0
        %4773 = vmatpush.msra.mxu0 0.0
        %4774 = vmatpush.msra.mxu0 0.0
        %4775 = vmatpush.msra.mxu0 0.0
        %4776 = vmatpush.msra.mxu0 0.0
        %4777 = vmatpush.msra.mxu0 0.0
        %4778 = vmatpush.msra.mxu0 0.0
        %4779 = vmatpush.msra.mxu0 0.0
        %4780 = vmatpush.msra.mxu0 0.0
        %4781 = vmatpush.msra.mxu0 %v4741
        %4782 = vmatmul.f32.gmra.mxu0 %v4743
        %v4783 = vpop.f32.mrf.mxu0
        %v4784 = vadd.f32 0.0, %v4783
        %4785 = vmatmul.f32.gmra.mxu0 %v4746
        %v4786 = vpop.f32.mrf.mxu0
        %v4787 = vadd.f32 0.0, %v4786
        %4788 = vmatmul.f32.gmra.mxu0 %v4749
        %v4789 = vpop.f32.mrf.mxu0
        %v4790 = vadd.f32 0.0, %v4789
        %4791 = vmatmul.f32.gmra.mxu0 %v4752
        %v4792 = vpop.f32.mrf.mxu0
        %v4793 = vadd.f32 0.0, %v4792
        %4794 = vmatmul.f32.gmra.mxu0 %v4755
        %v4795 = vpop.f32.mrf.mxu0
        %v4796 = vadd.f32 0.0, %v4795
        %4797 = vmatmul.f32.gmra.mxu0 %v4758
        %v4798 = vpop.f32.mrf.mxu0
        %v4799 = vadd.f32 0.0, %v4798
        %4800 = vmatmul.f32.gmra.mxu0 %v4761
        %v4801 = vpop.f32.mrf.mxu0
        %v4802 = vadd.f32 0.0, %v4801
        %4803 = vmatmul.f32.gmra.mxu0 %v4764
        %v4804 = vpop.f32.mrf.mxu0
        %v4805 = vadd.f32 0.0, %v4804
        %4806 = vdwg.mxu0
        %v4807 = vadd.f32 %v4724, %v4784
        %v4808 = vadd.f32 %v4725, %v4787
        %v4809 = vadd.f32 %v4726, %v4790
        %v4810 = vadd.f32 %v4727, %v4793
        %v4811 = vadd.f32 %v4728, %v4796
        %v4812 = vadd.f32 %v4729, %v4799
        %v4813 = vadd.f32 %v4730, %v4802
        %v4814 = vadd.f32 %v4731, %v4805
        %v4815 = vld [vmem:[#allocation3 + $0x12] sm:$0xff]
        %v4816 = vld [vmem:[#allocation3 + $0x1a] sm:$0xff]
        %v4817 = vld [vmem:[#allocation3 + $0x22] sm:$0xff]
        %v4818 = vld [vmem:[#allocation3 + $0x2a] sm:$0xff]
        %v4819 = vld [vmem:[#allocation3 + $0x32] sm:$0xff]
        %v4820 = vld [vmem:[#allocation3 + $0x3a] sm:$0xff]
        %v4821 = vld [vmem:[#allocation3 + $0x42] sm:$0xff]
        %v4822 = vld [vmem:[#allocation3 + $0x4a] sm:$0xff]
        %v4823 = vsel %vm4285, %v4815, 0.0
        %v4824 = vsel %vm4286, %v4816, 0.0
        %v4825 = vsel %vm4287, %v4817, 0.0
        %v4826 = vsel %vm4288, %v4818, 0.0
        %v4827 = vsel %vm4289, %v4819, 0.0
        %v4828 = vsel %vm4290, %v4820, 0.0
        %v4829 = vsel %vm4291, %v4821, 0.0
        %v4830 = vsel %vm4292, %v4822, 0.0
        %s4831 = scalar_lea.vmem [#allocation9], 64
        %v4832 = vld [vmem:[%s4831] sm:$0xff]
        %v4834 = vsel %vm3851, %v4823, 0
        %v4837 = vsel %vm3851, %v4824, 0
        %v4840 = vsel %vm3851, %v4825, 0
        %v4843 = vsel %vm3851, %v4826, 0
        %v4846 = vsel %vm3851, %v4827, 0
        %v4849 = vsel %vm3851, %v4828, 0
        %v4852 = vsel %vm3851, %v4829, 0
        %v4855 = vsel %vm3851, %v4830, 0
        %4857 = vmatpush.msra.mxu0 0.0
        %4858 = vmatpush.msra.mxu0 0.0
        %4859 = vmatpush.msra.mxu0 0.0
        %4860 = vmatpush.msra.mxu0 0.0
        %4861 = vmatpush.msra.mxu0 0.0
        %4862 = vmatpush.msra.mxu0 0.0
        %4863 = vmatpush.msra.mxu0 0.0
        %4864 = vmatpush.msra.mxu0 0.0
        %4865 = vmatpush.msra.mxu0 0.0
        %4866 = vmatpush.msra.mxu0 0.0
        %4867 = vmatpush.msra.mxu0 0.0
        %4868 = vmatpush.msra.mxu0 0.0
        %4869 = vmatpush.msra.mxu0 0.0
        %4870 = vmatpush.msra.mxu0 0.0
        %4871 = vmatpush.msra.mxu0 0.0
        %4872 = vmatpush.msra.mxu0 %v4832
        %4873 = vmatmul.f32.gmra.mxu0 %v4834
        %v4874 = vpop.f32.mrf.mxu0
        %v4875 = vadd.f32 0.0, %v4874
        %4876 = vmatmul.f32.gmra.mxu0 %v4837
        %v4877 = vpop.f32.mrf.mxu0
        %v4878 = vadd.f32 0.0, %v4877
        %4879 = vmatmul.f32.gmra.mxu0 %v4840
        %v4880 = vpop.f32.mrf.mxu0
        %v4881 = vadd.f32 0.0, %v4880
        %4882 = vmatmul.f32.gmra.mxu0 %v4843
        %v4883 = vpop.f32.mrf.mxu0
        %v4884 = vadd.f32 0.0, %v4883
        %4885 = vmatmul.f32.gmra.mxu0 %v4846
        %v4886 = vpop.f32.mrf.mxu0
        %v4887 = vadd.f32 0.0, %v4886
        %4888 = vmatmul.f32.gmra.mxu0 %v4849
        %v4889 = vpop.f32.mrf.mxu0
        %v4890 = vadd.f32 0.0, %v4889
        %4891 = vmatmul.f32.gmra.mxu0 %v4852
        %v4892 = vpop.f32.mrf.mxu0
        %v4893 = vadd.f32 0.0, %v4892
        %4894 = vmatmul.f32.gmra.mxu0 %v4855
        %v4895 = vpop.f32.mrf.mxu0
        %v4896 = vadd.f32 0.0, %v4895
        %4897 = vdwg.mxu0
        %v4898 = vadd.f32 %v4807, %v4875
        %v4899 = vadd.f32 %v4808, %v4878
        %v4900 = vadd.f32 %v4809, %v4881
        %v4901 = vadd.f32 %v4810, %v4884
        %v4902 = vadd.f32 %v4811, %v4887
        %v4903 = vadd.f32 %v4812, %v4890
        %v4904 = vadd.f32 %v4813, %v4893
        %v4905 = vadd.f32 %v4814, %v4896
        %v4906 = vld [vmem:[%s4] sm:$0x1]
        %v4908 = vperm.slane %v4906, 0
        %v4910 = vadd.f32 %v4898, %v4908
        %v4911 = vadd.f32 %v4899, %v4908
        %v4912 = vadd.f32 %v4900, %v4908
        %v4913 = vadd.f32 %v4901, %v4908
        %v4914 = vadd.f32 %v4902, %v4908
        %v4915 = vadd.f32 %v4903, %v4908
        %v4916 = vadd.f32 %v4904, %v4908
        %v4917 = vadd.f32 %v4905, %v4908
        %v4918 = vmax.f32 %v4910, 0.0
        %v4919 = vmax.f32 %v4911, 0.0
        %v4920 = vmax.f32 %v4912, 0.0
        %v4921 = vmax.f32 %v4913, 0.0
        %v4922 = vmax.f32 %v4914, 0.0
        %v4923 = vmax.f32 %v4915, 0.0
        %v4924 = vmax.f32 %v4916, 0.0
        %v4925 = vmax.f32 %v4917, 0.0
        %vm4926 = vcmask 130048
        %4927 = vst.msk [vmem:[#allocation7] sm:$0xff] %vm4926, %v4918
        %4928 = vst.msk [vmem:[#allocation7 + $0x8] sm:$0xff] %vm4926, %v4919
        %4929 = vst.msk [vmem:[#allocation7 + $0x10] sm:$0xff] %vm4926, %v4920
        %4930 = vst.msk [vmem:[#allocation7 + $0x18] sm:$0xff] %vm4926, %v4921
        %4931 = vst.msk [vmem:[#allocation7 + $0x20] sm:$0xff] %vm4926, %v4922
        %4932 = vst.msk [vmem:[#allocation7 + $0x28] sm:$0xff] %vm4926, %v4923
        %4933 = vst.msk [vmem:[#allocation7 + $0x30] sm:$0xff] %vm4926, %v4924
        %4934 = vst.msk [vmem:[#allocation7 + $0x38] sm:$0xff] %vm4926, %v4925
        %v4935 = vld [vmem:[#allocation7] ss:$2 sm:$0xff]
        %s4936 = scalar_lea.vmem [#allocation7], 16
        %v4937 = vld [vmem:[%s4936] ss:$2 sm:$0xff]
        %s4938 = scalar_lea.vmem [#allocation7], 32
        %v4939 = vld [vmem:[%s4938] ss:$2 sm:$0xff]
        %s4940 = scalar_lea.vmem [#allocation7], 48
        %v4941 = vld [vmem:[%s4940] ss:$2 sm:$0xff]
        %s4942 = scalar_lea.vmem [#allocation7], 1
        %v4943 = vld [vmem:[%s4942] ss:$2 sm:$0xff]
        %s4944 = scalar_lea.vmem [#allocation7], 17
        %v4945 = vld [vmem:[%s4944] ss:$2 sm:$0xff]
        %s4946 = scalar_lea.vmem [#allocation7], 33
        %v4947 = vld [vmem:[%s4946] ss:$2 sm:$0xff]
        %s4948 = scalar_lea.vmem [#allocation7], 49
        %v4949 = vld [vmem:[%s4948] ss:$2 sm:$0xff]
        %v4950 = vmax.f32 %v4935, %v4943
        %v4951 = vmax.f32 %v4937, %v4945
        %v4952 = vmax.f32 %v4939, %v4947
        %v4953 = vmax.f32 %v4941, %v4949
        %v4955 = vrot.slane %v4950, 4
        %v4957 = vmax.f32 %v4950, %v4955
        %v4959 = vrot.slane %v4951, 4
        %v4961 = vmax.f32 %v4951, %v4959
        %v4963 = vrot.slane %v4952, 4
        %v4965 = vmax.f32 %v4952, %v4963
        %v4967 = vrot.slane %v4953, 4
        %v4969 = vmax.f32 %v4953, %v4967
        %v4971 = vrot.slane %v4961, 4
        %v4974 = vrot.slane %v4969, 4
        %vm4976 = vcmask 1043456
        %v4977 = vsel %vm4976, %v4957, %v4971
        %v4978 = vsel %vm4976, %v4965, %v4974
        %vm4979 = vcmask 126976
        %4980 = vst.msk [vmem:[#allocation4] sm:$0x1f] %vm4979, 0.0
        %4981 = vst.msk [vmem:[#allocation4 + $0x15] sm:$0x1f] %vm4979, 0.0
        %4982 = vst.msk [vmem:[#allocation4 + $0x5] sm:$0xff] %vm4926, %v4977
        %4983 = vst.msk [vmem:[#allocation4 + $0xd] sm:$0xff] %vm4926, %v4978
        %vm4984 = vcmp.lt.s32.totalorder %v545, 0
        %v4985 = vsub.s32 0, %v545
        %v4986 = vsel %vm4984, %v4985, %v545
        %v4987 = vshrl.u32 %v4986, 2
        %v4988 = vand.u32 %v4986, 3
        %v4989 = vsub.s32 0, %v4988
        %v4990 = vsel %vm4984, %v4989, %v4988
        %vm4991 = vcmp.lt.s32.totalorder %v546, 0
        %v4992 = vsub.s32 0, %v546
        %v4993 = vsel %vm4991, %v4992, %v546
        %v4994 = vshrl.u32 %v4993, 2
        %v4995 = vand.u32 %v4993, 3
        %v4996 = vsub.s32 0, %v4995
        %v4997 = vsel %vm4991, %v4996, %v4995
        %vm4998 = vcmp.ne.s32.totalorder %v4990, 0
        %vm4999 = vcmp.ne.s32.totalorder %v4997, 0
        %vm5000 = vcmp.lt.s32.totalorder %v4990, 0
        %vm5001 = vcmp.lt.s32.totalorder %v4997, 0
        %vm5002 = vmand %vm5000, %vm4998
        %vm5003 = vmand %vm5001, %vm4999
        %v5004 = vadd.s32 %v4990, 4
        %v5005 = vadd.s32 %v4997, 4
        %v5006 = vsel %vm5002, %v5004, %v4990
        %v5007 = vsel %vm5003, %v5005, %v4997
        %v5008 = vld [vmem:[#allocation4] sm:$0xff]
        %v5009 = vld [vmem:[#allocation4 + $0x8] sm:$0xff]
        %vm5010 = vcmp.ge.s32.totalorder %v5006, 1
        %vm5011 = vcmp.ge.s32.totalorder %v5007, 1
        %v5012 = vsel %vm5010, 1, 0
        %v5013 = vsel %vm5011, 1, 0
        %vm5014 = vcmp.eq.s32.totalorder %v5012, 1
        %vm5015 = vcmp.eq.s32.totalorder %v5013, 1
        %v5016 = vsel %vm5014, %v5008, 0.0
        %v5017 = vsel %vm5015, %v5009, 0.0
        %v5018 = vld [vmem:[%s5] sm:$0xff]
        %v5019 = vld [vmem:[%s5 + $0x8] sm:$0xff]
        %v5020 = vld [vmem:[#allocation4 + $0x1] sm:$0xff]
        %v5021 = vld [vmem:[#allocation4 + $0x9] sm:$0xff]
        %s5022 = scalar_lea.vmem %s5, 16
        %v5023 = vld [vmem:[%s5022] sm:$0xff]
        %v5024 = vld [vmem:[%s5022 + $0x8] sm:$0xff]
        %v5026 = vsel %vm4926, %v5020, 0
        %v5029 = vsel %vm4926, %v5021, 0
        %5031 = vmatpush.msra.mxu0 0.0
        %5032 = vmatpush.msra.mxu0 0.0
        %5033 = vmatpush.msra.mxu0 0.0
        %5034 = vmatpush.msra.mxu0 0.0
        %5035 = vmatpush.msra.mxu0 0.0
        %5036 = vmatpush.msra.mxu0 0.0
        %5037 = vmatpush.msra.mxu0 0.0
        %5038 = vmatpush.msra.mxu0 0.0
        %5039 = vmatpush.msra.mxu0 0.0
        %5040 = vmatpush.msra.mxu0 0.0
        %5041 = vmatpush.msra.mxu0 0.0
        %5042 = vmatpush.msra.mxu0 0.0
        %5043 = vmatpush.msra.mxu0 0.0
        %5044 = vmatpush.msra.mxu0 0.0
        %5045 = vmatpush.msra.mxu0 %v5024
        %5046 = vmatpush.msra.mxu0 %v5023
        %5047 = vmatmul.f32.gmra.mxu0 %v5026
        %v5048 = vpop.f32.mrf.mxu0
        %v5049 = vadd.f32 0.0, %v5048
        %5050 = vmatmul.f32.gmra.mxu0 %v5029
        %v5051 = vpop.f32.mrf.mxu0
        %v5052 = vadd.f32 0.0, %v5051
        %5053 = vdwg.mxu0
        %v5055 = vsel %vm4926, %v5016, 0
        %v5058 = vsel %vm4926, %v5017, 0
        %5060 = vmatpush.msra.mxu0 0.0
        %5061 = vmatpush.msra.mxu0 0.0
        %5062 = vmatpush.msra.mxu0 0.0
        %5063 = vmatpush.msra.mxu0 0.0
        %5064 = vmatpush.msra.mxu0 0.0
        %5065 = vmatpush.msra.mxu0 0.0
        %5066 = vmatpush.msra.mxu0 0.0
        %5067 = vmatpush.msra.mxu0 0.0
        %5068 = vmatpush.msra.mxu0 0.0
        %5069 = vmatpush.msra.mxu0 0.0
        %5070 = vmatpush.msra.mxu0 0.0
        %5071 = vmatpush.msra.mxu0 0.0
        %5072 = vmatpush.msra.mxu0 0.0
        %5073 = vmatpush.msra.mxu0 0.0
        %5074 = vmatpush.msra.mxu0 %v5019
        %5075 = vmatpush.msra.mxu0 %v5018
        %5076 = vmatmul.f32.gmra.mxu0 %v5055
        %v5077 = vpop.f32.mrf.mxu0
        %v5078 = vadd.f32 %v5049, %v5077
        %5079 = vmatmul.f32.gmra.mxu0 %v5058
        %v5080 = vpop.f32.mrf.mxu0
        %v5081 = vadd.f32 %v5052, %v5080
        %5082 = vdwg.mxu0
        %v5083 = vld [vmem:[#allocation4 + $0x2] sm:$0xff]
        %v5084 = vld [vmem:[#allocation4 + $0xa] sm:$0xff]
        %vm5085 = vcmp.le.s32.totalorder %v5006, 2
        %vm5086 = vcmp.le.s32.totalorder %v5007, 2
        %v5087 = vsel %vm5085, 1, 0
        %v5088 = vsel %vm5086, 1, 0
        %vm5089 = vcmp.eq.s32.totalorder %v5087, 1
        %vm5090 = vcmp.eq.s32.totalorder %v5088, 1
        %v5091 = vsel %vm5089, %v5083, 0.0
        %v5092 = vsel %vm5090, %v5084, 0.0
        %s5093 = scalar_lea.vmem %s5, 32
        %v5094 = vld [vmem:[%s5093] sm:$0xff]
        %v5095 = vld [vmem:[%s5093 + $0x8] sm:$0xff]
        %v5097 = vsel %vm4926, %v5091, 0
        %v5100 = vsel %vm4926, %v5092, 0
        %5102 = vmatpush.msra.mxu0 0.0
        %5103 = vmatpush.msra.mxu0 0.0
        %5104 = vmatpush.msra.mxu0 0.0
        %5105 = vmatpush.msra.mxu0 0.0
        %5106 = vmatpush.msra.mxu0 0.0
        %5107 = vmatpush.msra.mxu0 0.0
        %5108 = vmatpush.msra.mxu0 0.0
        %5109 = vmatpush.msra.mxu0 0.0
        %5110 = vmatpush.msra.mxu0 0.0
        %5111 = vmatpush.msra.mxu0 0.0
        %5112 = vmatpush.msra.mxu0 0.0
        %5113 = vmatpush.msra.mxu0 0.0
        %5114 = vmatpush.msra.mxu0 0.0
        %5115 = vmatpush.msra.mxu0 0.0
        %5116 = vmatpush.msra.mxu0 %v5095
        %5117 = vmatpush.msra.mxu0 %v5094
        %5118 = vmatmul.f32.gmra.mxu0 %v5097
        %v5119 = vpop.f32.mrf.mxu0
        %v5120 = vadd.f32 0.0, %v5119
        %5121 = vmatmul.f32.gmra.mxu0 %v5100
        %v5122 = vpop.f32.mrf.mxu0
        %v5123 = vadd.f32 0.0, %v5122
        %5124 = vdwg.mxu0
        %v5125 = vadd.f32 %v5078, %v5120
        %v5126 = vadd.f32 %v5081, %v5123
        %v5127 = vld [vmem:[#allocation4 + $0x4] sm:$0xff]
        %v5128 = vld [vmem:[#allocation4 + $0xc] sm:$0xff]
        %v5129 = vsel %vm5014, %v5127, 0.0
        %v5130 = vsel %vm5015, %v5128, 0.0
        %s5131 = scalar_lea.vmem %s5, 48
        %v5132 = vld [vmem:[%s5131] sm:$0xff]
        %v5133 = vld [vmem:[%s5131 + $0x8] sm:$0xff]
        %v5135 = vsel %vm4926, %v5129, 0
        %v5138 = vsel %vm4926, %v5130, 0
        %5140 = vmatpush.msra.mxu0 0.0
        %5141 = vmatpush.msra.mxu0 0.0
        %5142 = vmatpush.msra.mxu0 0.0
        %5143 = vmatpush.msra.mxu0 0.0
        %5144 = vmatpush.msra.mxu0 0.0
        %5145 = vmatpush.msra.mxu0 0.0
        %5146 = vmatpush.msra.mxu0 0.0
        %5147 = vmatpush.msra.mxu0 0.0
        %5148 = vmatpush.msra.mxu0 0.0
        %5149 = vmatpush.msra.mxu0 0.0
        %5150 = vmatpush.msra.mxu0 0.0
        %5151 = vmatpush.msra.mxu0 0.0
        %5152 = vmatpush.msra.mxu0 0.0
        %5153 = vmatpush.msra.mxu0 0.0
        %5154 = vmatpush.msra.mxu0 %v5133
        %5155 = vmatpush.msra.mxu0 %v5132
        %5156 = vmatmul.f32.gmra.mxu0 %v5135
        %v5157 = vpop.f32.mrf.mxu0
        %v5158 = vadd.f32 0.0, %v5157
        %5159 = vmatmul.f32.gmra.mxu0 %v5138
        %v5160 = vpop.f32.mrf.mxu0
        %v5161 = vadd.f32 0.0, %v5160
        %5162 = vdwg.mxu0
        %v5163 = vadd.f32 %v5125, %v5158
        %v5164 = vadd.f32 %v5126, %v5161
        %v5165 = vld [vmem:[#allocation4 + $0x5] sm:$0xff]
        %v5166 = vld [vmem:[#allocation4 + $0xd] sm:$0xff]
        %s5167 = scalar_lea.vmem %s5, 64
        %v5168 = vld [vmem:[%s5167] sm:$0xff]
        %v5169 = vld [vmem:[%s5167 + $0x8] sm:$0xff]
        %v5171 = vsel %vm4926, %v5165, 0
        %v5174 = vsel %vm4926, %v5166, 0
        %5176 = vmatpush.msra.mxu0 0.0
        %5177 = vmatpush.msra.mxu0 0.0
        %5178 = vmatpush.msra.mxu0 0.0
        %5179 = vmatpush.msra.mxu0 0.0
        %5180 = vmatpush.msra.mxu0 0.0
        %5181 = vmatpush.msra.mxu0 0.0
        %5182 = vmatpush.msra.mxu0 0.0
        %5183 = vmatpush.msra.mxu0 0.0
        %5184 = vmatpush.msra.mxu0 0.0
        %5185 = vmatpush.msra.mxu0 0.0
        %5186 = vmatpush.msra.mxu0 0.0
        %5187 = vmatpush.msra.mxu0 0.0
        %5188 = vmatpush.msra.mxu0 0.0
        %5189 = vmatpush.msra.mxu0 0.0
        %5190 = vmatpush.msra.mxu0 %v5169
        %5191 = vmatpush.msra.mxu0 %v5168
        %5192 = vmatmul.f32.gmra.mxu0 %v5171
        %v5193 = vpop.f32.mrf.mxu0
        %v5194 = vadd.f32 0.0, %v5193
        %5195 = vmatmul.f32.gmra.mxu0 %v5174
        %v5196 = vpop.f32.mrf.mxu0
        %v5197 = vadd.f32 0.0, %v5196
        %5198 = vdwg.mxu0
        %v5199 = vadd.f32 %v5163, %v5194
        %v5200 = vadd.f32 %v5164, %v5197
        %v5201 = vld [vmem:[#allocation4 + $0x6] sm:$0xff]
        %v5202 = vld [vmem:[#allocation4 + $0xe] sm:$0xff]
        %v5203 = vsel %vm5089, %v5201, 0.0
        %v5204 = vsel %vm5090, %v5202, 0.0
        %s5205 = scalar_lea.vmem %s5, 80
        %v5206 = vld [vmem:[%s5205] sm:$0xff]
        %v5207 = vld [vmem:[%s5205 + $0x8] sm:$0xff]
        %v5209 = vsel %vm4926, %v5203, 0
        %v5212 = vsel %vm4926, %v5204, 0
        %5214 = vmatpush.msra.mxu0 0.0
        %5215 = vmatpush.msra.mxu0 0.0
        %5216 = vmatpush.msra.mxu0 0.0
        %5217 = vmatpush.msra.mxu0 0.0
        %5218 = vmatpush.msra.mxu0 0.0
        %5219 = vmatpush.msra.mxu0 0.0
        %5220 = vmatpush.msra.mxu0 0.0
        %5221 = vmatpush.msra.mxu0 0.0
        %5222 = vmatpush.msra.mxu0 0.0
        %5223 = vmatpush.msra.mxu0 0.0
        %5224 = vmatpush.msra.mxu0 0.0
        %5225 = vmatpush.msra.mxu0 0.0
        %5226 = vmatpush.msra.mxu0 0.0
        %5227 = vmatpush.msra.mxu0 0.0
        %5228 = vmatpush.msra.mxu0 %v5207
        %5229 = vmatpush.msra.mxu0 %v5206
        %5230 = vmatmul.f32.gmra.mxu0 %v5209
        %v5231 = vpop.f32.mrf.mxu0
        %v5232 = vadd.f32 0.0, %v5231
        %5233 = vmatmul.f32.gmra.mxu0 %v5212
        %v5234 = vpop.f32.mrf.mxu0
        %v5235 = vadd.f32 0.0, %v5234
        %5236 = vdwg.mxu0
        %v5237 = vadd.f32 %v5199, %v5232
        %v5238 = vadd.f32 %v5200, %v5235
        %v5239 = vld [vmem:[#allocation4 + $0x8] sm:$0xff]
        %v5240 = vld [vmem:[#allocation4 + $0x10] sm:$0xff]
        %v5241 = vsel %vm5014, %v5239, 0.0
        %v5242 = vsel %vm5015, %v5240, 0.0
        %s5243 = scalar_lea.vmem %s5, 96
        %v5244 = vld [vmem:[%s5243] sm:$0xff]
        %v5245 = vld [vmem:[%s5243 + $0x8] sm:$0xff]
        %v5247 = vsel %vm4926, %v5241, 0
        %v5250 = vsel %vm4926, %v5242, 0
        %5252 = vmatpush.msra.mxu0 0.0
        %5253 = vmatpush.msra.mxu0 0.0
        %5254 = vmatpush.msra.mxu0 0.0
        %5255 = vmatpush.msra.mxu0 0.0
        %5256 = vmatpush.msra.mxu0 0.0
        %5257 = vmatpush.msra.mxu0 0.0
        %5258 = vmatpush.msra.mxu0 0.0
        %5259 = vmatpush.msra.mxu0 0.0
        %5260 = vmatpush.msra.mxu0 0.0
        %5261 = vmatpush.msra.mxu0 0.0
        %5262 = vmatpush.msra.mxu0 0.0
        %5263 = vmatpush.msra.mxu0 0.0
        %5264 = vmatpush.msra.mxu0 0.0
        %5265 = vmatpush.msra.mxu0 0.0
        %5266 = vmatpush.msra.mxu0 %v5245
        %5267 = vmatpush.msra.mxu0 %v5244
        %5268 = vmatmul.f32.gmra.mxu0 %v5247
        %v5269 = vpop.f32.mrf.mxu0
        %v5270 = vadd.f32 0.0, %v5269
        %5271 = vmatmul.f32.gmra.mxu0 %v5250
        %v5272 = vpop.f32.mrf.mxu0
        %v5273 = vadd.f32 0.0, %v5272
        %5274 = vdwg.mxu0
        %v5275 = vadd.f32 %v5237, %v5270
        %v5276 = vadd.f32 %v5238, %v5273
        %v5277 = vld [vmem:[#allocation4 + $0x9] sm:$0xff]
        %v5278 = vld [vmem:[#allocation4 + $0x11] sm:$0xff]
        %s5279 = scalar_lea.vmem %s5, 112
        %v5280 = vld [vmem:[%s5279] sm:$0xff]
        %v5281 = vld [vmem:[%s5279 + $0x8] sm:$0xff]
        %v5283 = vsel %vm4926, %v5277, 0
        %v5286 = vsel %vm4926, %v5278, 0
        %5288 = vmatpush.msra.mxu0 0.0
        %5289 = vmatpush.msra.mxu0 0.0
        %5290 = vmatpush.msra.mxu0 0.0
        %5291 = vmatpush.msra.mxu0 0.0
        %5292 = vmatpush.msra.mxu0 0.0
        %5293 = vmatpush.msra.mxu0 0.0
        %5294 = vmatpush.msra.mxu0 0.0
        %5295 = vmatpush.msra.mxu0 0.0
        %5296 = vmatpush.msra.mxu0 0.0
        %5297 = vmatpush.msra.mxu0 0.0
        %5298 = vmatpush.msra.mxu0 0.0
        %5299 = vmatpush.msra.mxu0 0.0
        %5300 = vmatpush.msra.mxu0 0.0
        %5301 = vmatpush.msra.mxu0 0.0
        %5302 = vmatpush.msra.mxu0 %v5281
        %5303 = vmatpush.msra.mxu0 %v5280
        %5304 = vmatmul.f32.gmra.mxu0 %v5283
        %v5305 = vpop.f32.mrf.mxu0
        %v5306 = vadd.f32 0.0, %v5305
        %5307 = vmatmul.f32.gmra.mxu0 %v5286
        %v5308 = vpop.f32.mrf.mxu0
        %v5309 = vadd.f32 0.0, %v5308
        %5310 = vdwg.mxu0
        %v5311 = vadd.f32 %v5275, %v5306
        %v5312 = vadd.f32 %v5276, %v5309
        %v5313 = vld [vmem:[#allocation4 + $0xa] sm:$0xff]
        %v5314 = vld [vmem:[#allocation4 + $0x12] sm:$0xff]
        %v5315 = vsel %vm5089, %v5313, 0.0
        %v5316 = vsel %vm5090, %v5314, 0.0
        %s5317 = scalar_lea.vmem %s5, 128
        %v5318 = vld [vmem:[%s5317] sm:$0xff]
        %v5319 = vld [vmem:[%s5317 + $0x8] sm:$0xff]
        %v5321 = vsel %vm4926, %v5315, 0
        %v5324 = vsel %vm4926, %v5316, 0
        %5326 = vmatpush.msra.mxu0 0.0
        %5327 = vmatpush.msra.mxu0 0.0
        %5328 = vmatpush.msra.mxu0 0.0
        %5329 = vmatpush.msra.mxu0 0.0
        %5330 = vmatpush.msra.mxu0 0.0
        %5331 = vmatpush.msra.mxu0 0.0
        %5332 = vmatpush.msra.mxu0 0.0
        %5333 = vmatpush.msra.mxu0 0.0
        %5334 = vmatpush.msra.mxu0 0.0
        %5335 = vmatpush.msra.mxu0 0.0
        %5336 = vmatpush.msra.mxu0 0.0
        %5337 = vmatpush.msra.mxu0 0.0
        %5338 = vmatpush.msra.mxu0 0.0
        %5339 = vmatpush.msra.mxu0 0.0
        %5340 = vmatpush.msra.mxu0 %v5319
        %5341 = vmatpush.msra.mxu0 %v5318
        %5342 = vmatmul.f32.gmra.mxu0 %v5321
        %v5343 = vpop.f32.mrf.mxu0
        %v5344 = vadd.f32 0.0, %v5343
        %5345 = vmatmul.f32.gmra.mxu0 %v5324
        %v5346 = vpop.f32.mrf.mxu0
        %v5347 = vadd.f32 0.0, %v5346
        %5348 = vdwg.mxu0
        %v5349 = vadd.f32 %v5311, %v5344
        %v5350 = vadd.f32 %v5312, %v5347
        %v5351 = vld [vmem:[%s6] sm:$0x1]
        %v5353 = vperm.slane %v5351, 0
        %v5355 = vadd.f32 %v5349, %v5353
        %v5356 = vadd.f32 %v5350, %v5353
        %v5357 = vmax.f32 %v5355, 0.0
        %v5358 = vmax.f32 %v5356, 0.0
        %vm5359 = vcmask 258048
        %5360 = vst.msk [vmem:[#allocation5] sm:$0x1f] %vm5359, 0.0
        %5361 = vst.msk [vmem:[#allocation5 + $0x15] sm:$0x1f] %vm5359, 0.0
        %vm5362 = vcmask 261120
        %5363 = vst.msk [vmem:[#allocation5 + $0x5] sm:$0xff] %vm5362, %v5357
        %5364 = vst.msk [vmem:[#allocation5 + $0xd] sm:$0xff] %vm5362, %v5358
        %v5365 = vld [vmem:[#allocation5] sm:$0xff]
        %v5366 = vld [vmem:[#allocation5 + $0x8] sm:$0xff]
        %v5367 = vsel %vm5014, %v5365, 0.0
        %v5368 = vsel %vm5015, %v5366, 0.0
        %v5369 = vld [vmem:[%s7] sm:$0xff]
        %v5370 = vld [vmem:[%s7 + $0x8] sm:$0xff]
        %v5371 = vld [vmem:[%s7 + $0x10] sm:$0xff]
        %v5372 = vld [vmem:[%s7 + $0x18] sm:$0xff]
        %v5373 = vld [vmem:[#allocation5 + $0x1] sm:$0xff]
        %v5374 = vld [vmem:[#allocation5 + $0x9] sm:$0xff]
        %s5375 = scalar_lea.vmem %s7, 32
        %v5376 = vld [vmem:[%s5375] sm:$0xff]
        %v5377 = vld [vmem:[%s5375 + $0x8] sm:$0xff]
        %v5378 = vld [vmem:[%s5375 + $0x10] sm:$0xff]
        %v5379 = vld [vmem:[%s5375 + $0x18] sm:$0xff]
        %v5381 = vsel %vm5362, %v5373, 0
        %v5384 = vsel %vm5362, %v5374, 0
        %5386 = vmatpush.msra.mxu0 0.0
        %5387 = vmatpush.msra.mxu0 0.0
        %5388 = vmatpush.msra.mxu0 0.0
        %5389 = vmatpush.msra.mxu0 0.0
        %5390 = vmatpush.msra.mxu0 0.0
        %5391 = vmatpush.msra.mxu0 0.0
        %5392 = vmatpush.msra.mxu0 0.0
        %5393 = vmatpush.msra.mxu0 0.0
        %5394 = vmatpush.msra.mxu0 0.0
        %5395 = vmatpush.msra.mxu0 0.0
        %5396 = vmatpush.msra.mxu0 0.0
        %5397 = vmatpush.msra.mxu0 0.0
        %5398 = vmatpush.msra.mxu0 %v5379
        %5399 = vmatpush.msra.mxu0 %v5378
        %5400 = vmatpush.msra.mxu0 %v5377
        %5401 = vmatpush.msra.mxu0 %v5376
        %5402 = vmatmul.f32.gmra.mxu0 %v5381
        %v5403 = vpop.f32.mrf.mxu0
        %v5404 = vadd.f32 0.0, %v5403
        %5405 = vmatmul.f32.gmra.mxu0 %v5384
        %v5406 = vpop.f32.mrf.mxu0
        %v5407 = vadd.f32 0.0, %v5406
        %5408 = vdwg.mxu0
        %v5410 = vsel %vm5362, %v5367, 0
        %v5413 = vsel %vm5362, %v5368, 0
        %5415 = vmatpush.msra.mxu0 0.0
        %5416 = vmatpush.msra.mxu0 0.0
        %5417 = vmatpush.msra.mxu0 0.0
        %5418 = vmatpush.msra.mxu0 0.0
        %5419 = vmatpush.msra.mxu0 0.0
        %5420 = vmatpush.msra.mxu0 0.0
        %5421 = vmatpush.msra.mxu0 0.0
        %5422 = vmatpush.msra.mxu0 0.0
        %5423 = vmatpush.msra.mxu0 0.0
        %5424 = vmatpush.msra.mxu0 0.0
        %5425 = vmatpush.msra.mxu0 0.0
        %5426 = vmatpush.msra.mxu0 0.0
        %5427 = vmatpush.msra.mxu0 %v5372
        %5428 = vmatpush.msra.mxu0 %v5371
        %5429 = vmatpush.msra.mxu0 %v5370
        %5430 = vmatpush.msra.mxu0 %v5369
        %5431 = vmatmul.f32.gmra.mxu0 %v5410
        %v5432 = vpop.f32.mrf.mxu0
        %v5433 = vadd.f32 %v5404, %v5432
        %5434 = vmatmul.f32.gmra.mxu0 %v5413
        %v5435 = vpop.f32.mrf.mxu0
        %v5436 = vadd.f32 %v5407, %v5435
        %5437 = vdwg.mxu0
        %v5438 = vld [vmem:[#allocation5 + $0x2] sm:$0xff]
        %v5439 = vld [vmem:[#allocation5 + $0xa] sm:$0xff]
        %v5440 = vsel %vm5089, %v5438, 0.0
        %v5441 = vsel %vm5090, %v5439, 0.0
        %s5442 = scalar_lea.vmem %s7, 64
        %v5443 = vld [vmem:[%s5442] sm:$0xff]
        %v5444 = vld [vmem:[%s5442 + $0x8] sm:$0xff]
        %v5445 = vld [vmem:[%s5442 + $0x10] sm:$0xff]
        %v5446 = vld [vmem:[%s5442 + $0x18] sm:$0xff]
        %v5448 = vsel %vm5362, %v5440, 0
        %v5451 = vsel %vm5362, %v5441, 0
        %5453 = vmatpush.msra.mxu0 0.0
        %5454 = vmatpush.msra.mxu0 0.0
        %5455 = vmatpush.msra.mxu0 0.0
        %5456 = vmatpush.msra.mxu0 0.0
        %5457 = vmatpush.msra.mxu0 0.0
        %5458 = vmatpush.msra.mxu0 0.0
        %5459 = vmatpush.msra.mxu0 0.0
        %5460 = vmatpush.msra.mxu0 0.0
        %5461 = vmatpush.msra.mxu0 0.0
        %5462 = vmatpush.msra.mxu0 0.0
        %5463 = vmatpush.msra.mxu0 0.0
        %5464 = vmatpush.msra.mxu0 0.0
        %5465 = vmatpush.msra.mxu0 %v5446
        %5466 = vmatpush.msra.mxu0 %v5445
        %5467 = vmatpush.msra.mxu0 %v5444
        %5468 = vmatpush.msra.mxu0 %v5443
        %5469 = vmatmul.f32.gmra.mxu0 %v5448
        %v5470 = vpop.f32.mrf.mxu0
        %v5471 = vadd.f32 0.0, %v5470
        %5472 = vmatmul.f32.gmra.mxu0 %v5451
        %v5473 = vpop.f32.mrf.mxu0
        %v5474 = vadd.f32 0.0, %v5473
        %5475 = vdwg.mxu0
        %v5476 = vadd.f32 %v5433, %v5471
        %v5477 = vadd.f32 %v5436, %v5474
        %v5478 = vld [vmem:[#allocation5 + $0x4] sm:$0xff]
        %v5479 = vld [vmem:[#allocation5 + $0xc] sm:$0xff]
        %v5480 = vsel %vm5014, %v5478, 0.0
        %v5481 = vsel %vm5015, %v5479, 0.0
        %s5482 = scalar_lea.vmem %s7, 96
        %v5483 = vld [vmem:[%s5482] sm:$0xff]
        %v5484 = vld [vmem:[%s5482 + $0x8] sm:$0xff]
        %v5485 = vld [vmem:[%s5482 + $0x10] sm:$0xff]
        %v5486 = vld [vmem:[%s5482 + $0x18] sm:$0xff]
        %v5488 = vsel %vm5362, %v5480, 0
        %v5491 = vsel %vm5362, %v5481, 0
        %5493 = vmatpush.msra.mxu0 0.0
        %5494 = vmatpush.msra.mxu0 0.0
        %5495 = vmatpush.msra.mxu0 0.0
        %5496 = vmatpush.msra.mxu0 0.0
        %5497 = vmatpush.msra.mxu0 0.0
        %5498 = vmatpush.msra.mxu0 0.0
        %5499 = vmatpush.msra.mxu0 0.0
        %5500 = vmatpush.msra.mxu0 0.0
        %5501 = vmatpush.msra.mxu0 0.0
        %5502 = vmatpush.msra.mxu0 0.0
        %5503 = vmatpush.msra.mxu0 0.0
        %5504 = vmatpush.msra.mxu0 0.0
        %5505 = vmatpush.msra.mxu0 %v5486
        %5506 = vmatpush.msra.mxu0 %v5485
        %5507 = vmatpush.msra.mxu0 %v5484
        %5508 = vmatpush.msra.mxu0 %v5483
        %5509 = vmatmul.f32.gmra.mxu0 %v5488
        %v5510 = vpop.f32.mrf.mxu0
        %v5511 = vadd.f32 0.0, %v5510
        %5512 = vmatmul.f32.gmra.mxu0 %v5491
        %v5513 = vpop.f32.mrf.mxu0
        %v5514 = vadd.f32 0.0, %v5513
        %5515 = vdwg.mxu0
        %v5516 = vadd.f32 %v5476, %v5511
        %v5517 = vadd.f32 %v5477, %v5514
        %v5518 = vld [vmem:[#allocation5 + $0x5] sm:$0xff]
        %v5519 = vld [vmem:[#allocation5 + $0xd] sm:$0xff]
        %s5520 = scalar_lea.vmem %s7, 128
        %v5521 = vld [vmem:[%s5520] sm:$0xff]
        %v5522 = vld [vmem:[%s5520 + $0x8] sm:$0xff]
        %v5523 = vld [vmem:[%s5520 + $0x10] sm:$0xff]
        %v5524 = vld [vmem:[%s5520 + $0x18] sm:$0xff]
        %v5526 = vsel %vm5362, %v5518, 0
        %v5529 = vsel %vm5362, %v5519, 0
        %5531 = vmatpush.msra.mxu0 0.0
        %5532 = vmatpush.msra.mxu0 0.0
        %5533 = vmatpush.msra.mxu0 0.0
        %5534 = vmatpush.msra.mxu0 0.0
        %5535 = vmatpush.msra.mxu0 0.0
        %5536 = vmatpush.msra.mxu0 0.0
        %5537 = vmatpush.msra.mxu0 0.0
        %5538 = vmatpush.msra.mxu0 0.0
        %5539 = vmatpush.msra.mxu0 0.0
        %5540 = vmatpush.msra.mxu0 0.0
        %5541 = vmatpush.msra.mxu0 0.0
        %5542 = vmatpush.msra.mxu0 0.0
        %5543 = vmatpush.msra.mxu0 %v5524
        %5544 = vmatpush.msra.mxu0 %v5523
        %5545 = vmatpush.msra.mxu0 %v5522
        %5546 = vmatpush.msra.mxu0 %v5521
        %5547 = vmatmul.f32.gmra.mxu0 %v5526
        %v5548 = vpop.f32.mrf.mxu0
        %v5549 = vadd.f32 0.0, %v5548
        %5550 = vmatmul.f32.gmra.mxu0 %v5529
        %v5551 = vpop.f32.mrf.mxu0
        %v5552 = vadd.f32 0.0, %v5551
        %5553 = vdwg.mxu0
        %v5554 = vadd.f32 %v5516, %v5549
        %v5555 = vadd.f32 %v5517, %v5552
        %v5556 = vld [vmem:[#allocation5 + $0x6] sm:$0xff]
        %v5557 = vld [vmem:[#allocation5 + $0xe] sm:$0xff]
        %v5558 = vsel %vm5089, %v5556, 0.0
        %v5559 = vsel %vm5090, %v5557, 0.0
        %s5560 = scalar_lea.vmem %s7, 160
        %v5561 = vld [vmem:[%s5560] sm:$0xff]
        %v5562 = vld [vmem:[%s5560 + $0x8] sm:$0xff]
        %v5563 = vld [vmem:[%s5560 + $0x10] sm:$0xff]
        %v5564 = vld [vmem:[%s5560 + $0x18] sm:$0xff]
        %v5566 = vsel %vm5362, %v5558, 0
        %v5569 = vsel %vm5362, %v5559, 0
        %5571 = vmatpush.msra.mxu0 0.0
        %5572 = vmatpush.msra.mxu0 0.0
        %5573 = vmatpush.msra.mxu0 0.0
        %5574 = vmatpush.msra.mxu0 0.0
        %5575 = vmatpush.msra.mxu0 0.0
        %5576 = vmatpush.msra.mxu0 0.0
        %5577 = vmatpush.msra.mxu0 0.0
        %5578 = vmatpush.msra.mxu0 0.0
        %5579 = vmatpush.msra.mxu0 0.0
        %5580 = vmatpush.msra.mxu0 0.0
        %5581 = vmatpush.msra.mxu0 0.0
        %5582 = vmatpush.msra.mxu0 0.0
        %5583 = vmatpush.msra.mxu0 %v5564
        %5584 = vmatpush.msra.mxu0 %v5563
        %5585 = vmatpush.msra.mxu0 %v5562
        %5586 = vmatpush.msra.mxu0 %v5561
        %5587 = vmatmul.f32.gmra.mxu0 %v5566
        %v5588 = vpop.f32.mrf.mxu0
        %v5589 = vadd.f32 0.0, %v5588
        %5590 = vmatmul.f32.gmra.mxu0 %v5569
        %v5591 = vpop.f32.mrf.mxu0
        %v5592 = vadd.f32 0.0, %v5591
        %5593 = vdwg.mxu0
        %v5594 = vadd.f32 %v5554, %v5589
        %v5595 = vadd.f32 %v5555, %v5592
        %v5596 = vld [vmem:[#allocation5 + $0x8] sm:$0xff]
        %v5597 = vld [vmem:[#allocation5 + $0x10] sm:$0xff]
        %v5598 = vsel %vm5014, %v5596, 0.0
        %v5599 = vsel %vm5015, %v5597, 0.0
        %s5600 = scalar_lea.vmem %s7, 192
        %v5601 = vld [vmem:[%s5600] sm:$0xff]
        %v5602 = vld [vmem:[%s5600 + $0x8] sm:$0xff]
        %v5603 = vld [vmem:[%s5600 + $0x10] sm:$0xff]
        %v5604 = vld [vmem:[%s5600 + $0x18] sm:$0xff]
        %v5606 = vsel %vm5362, %v5598, 0
        %v5609 = vsel %vm5362, %v5599, 0
        %5611 = vmatpush.msra.mxu0 0.0
        %5612 = vmatpush.msra.mxu0 0.0
        %5613 = vmatpush.msra.mxu0 0.0
        %5614 = vmatpush.msra.mxu0 0.0
        %5615 = vmatpush.msra.mxu0 0.0
        %5616 = vmatpush.msra.mxu0 0.0
        %5617 = vmatpush.msra.mxu0 0.0
        %5618 = vmatpush.msra.mxu0 0.0
        %5619 = vmatpush.msra.mxu0 0.0
        %5620 = vmatpush.msra.mxu0 0.0
        %5621 = vmatpush.msra.mxu0 0.0
        %5622 = vmatpush.msra.mxu0 0.0
        %5623 = vmatpush.msra.mxu0 %v5604
        %5624 = vmatpush.msra.mxu0 %v5603
        %5625 = vmatpush.msra.mxu0 %v5602
        %5626 = vmatpush.msra.mxu0 %v5601
        %5627 = vmatmul.f32.gmra.mxu0 %v5606
        %v5628 = vpop.f32.mrf.mxu0
        %v5629 = vadd.f32 0.0, %v5628
        %5630 = vmatmul.f32.gmra.mxu0 %v5609
        %v5631 = vpop.f32.mrf.mxu0
        %v5632 = vadd.f32 0.0, %v5631
        %5633 = vdwg.mxu0
        %v5634 = vadd.f32 %v5594, %v5629
        %v5635 = vadd.f32 %v5595, %v5632
        %v5636 = vld [vmem:[#allocation5 + $0x9] sm:$0xff]
        %v5637 = vld [vmem:[#allocation5 + $0x11] sm:$0xff]
        %s5638 = scalar_lea.vmem %s7, 224
        %v5639 = vld [vmem:[%s5638] sm:$0xff]
        %v5640 = vld [vmem:[%s5638 + $0x8] sm:$0xff]
        %v5641 = vld [vmem:[%s5638 + $0x10] sm:$0xff]
        %v5642 = vld [vmem:[%s5638 + $0x18] sm:$0xff]
        %v5644 = vsel %vm5362, %v5636, 0
        %v5647 = vsel %vm5362, %v5637, 0
        %5649 = vmatpush.msra.mxu0 0.0
        %5650 = vmatpush.msra.mxu0 0.0
        %5651 = vmatpush.msra.mxu0 0.0
        %5652 = vmatpush.msra.mxu0 0.0
        %5653 = vmatpush.msra.mxu0 0.0
        %5654 = vmatpush.msra.mxu0 0.0
        %5655 = vmatpush.msra.mxu0 0.0
        %5656 = vmatpush.msra.mxu0 0.0
        %5657 = vmatpush.msra.mxu0 0.0
        %5658 = vmatpush.msra.mxu0 0.0
        %5659 = vmatpush.msra.mxu0 0.0
        %5660 = vmatpush.msra.mxu0 0.0
        %5661 = vmatpush.msra.mxu0 %v5642
        %5662 = vmatpush.msra.mxu0 %v5641
        %5663 = vmatpush.msra.mxu0 %v5640
        %5664 = vmatpush.msra.mxu0 %v5639
        %5665 = vmatmul.f32.gmra.mxu0 %v5644
        %v5666 = vpop.f32.mrf.mxu0
        %v5667 = vadd.f32 0.0, %v5666
        %5668 = vmatmul.f32.gmra.mxu0 %v5647
        %v5669 = vpop.f32.mrf.mxu0
        %v5670 = vadd.f32 0.0, %v5669
        %5671 = vdwg.mxu0
        %v5672 = vadd.f32 %v5634, %v5667
        %v5673 = vadd.f32 %v5635, %v5670
        %v5674 = vld [vmem:[#allocation5 + $0xa] sm:$0xff]
        %v5675 = vld [vmem:[#allocation5 + $0x12] sm:$0xff]
        %v5676 = vsel %vm5089, %v5674, 0.0
        %v5677 = vsel %vm5090, %v5675, 0.0
        %s5678 = scalar_lea.vmem %s7, 256
        %v5679 = vld [vmem:[%s5678] sm:$0xff]
        %v5680 = vld [vmem:[%s5678 + $0x8] sm:$0xff]
        %v5681 = vld [vmem:[%s5678 + $0x10] sm:$0xff]
        %v5682 = vld [vmem:[%s5678 + $0x18] sm:$0xff]
        %v5684 = vsel %vm5362, %v5676, 0
        %v5687 = vsel %vm5362, %v5677, 0
        %5689 = vmatpush.msra.mxu0 0.0
        %5690 = vmatpush.msra.mxu0 0.0
        %5691 = vmatpush.msra.mxu0 0.0
        %5692 = vmatpush.msra.mxu0 0.0
        %5693 = vmatpush.msra.mxu0 0.0
        %5694 = vmatpush.msra.mxu0 0.0
        %5695 = vmatpush.msra.mxu0 0.0
        %5696 = vmatpush.msra.mxu0 0.0
        %5697 = vmatpush.msra.mxu0 0.0
        %5698 = vmatpush.msra.mxu0 0.0
        %5699 = vmatpush.msra.mxu0 0.0
        %5700 = vmatpush.msra.mxu0 0.0
        %5701 = vmatpush.msra.mxu0 %v5682
        %5702 = vmatpush.msra.mxu0 %v5681
        %5703 = vmatpush.msra.mxu0 %v5680
        %5704 = vmatpush.msra.mxu0 %v5679
        %5705 = vmatmul.f32.gmra.mxu0 %v5684
        %v5706 = vpop.f32.mrf.mxu0
        %v5707 = vadd.f32 0.0, %v5706
        %5708 = vmatmul.f32.gmra.mxu0 %v5687
        %v5709 = vpop.f32.mrf.mxu0
        %v5710 = vadd.f32 0.0, %v5709
        %5711 = vdwg.mxu0
        %v5712 = vadd.f32 %v5672, %v5707
        %v5713 = vadd.f32 %v5673, %v5710
        %v5714 = vld [vmem:[%s8] sm:$0x1]
        %v5716 = vperm.slane %v5714, 0
        %v5718 = vadd.f32 %v5712, %v5716
        %v5719 = vadd.f32 %v5713, %v5716
        %v5720 = vmax.f32 %v5718, 0.0
        %v5721 = vmax.f32 %v5719, 0.0
        %5722 = vst.msk [vmem:[#allocation8] sm:$0xff] %vm5362, %v5720
        %5723 = vst.msk [vmem:[#allocation8 + $0x8] sm:$0xff] %vm5362, %v5721
        %v5724 = vld [vmem:[#allocation8] ss:$2 sm:$0xff]
        %s5725 = scalar_lea.vmem [#allocation8], 1
        %v5726 = vld [vmem:[%s5725] ss:$2 sm:$0xff]
        %v5727 = vmax.f32 %v5724, %v5726
        %v5729 = vrot.slane %v5727, 2
        %v5731 = vmax.f32 %v5727, %v5729
        %v5733 = vrot.slane %v5731, 2
        %vm5735 = vcmask 1041408
        %v5736 = vsel %vm5735, %v5731, %v5733
        %v5737 = vld [vmem:[%s9] sm:$0xff]
        %v5738 = vld [vmem:[%s9 + $0x8] sm:$0xff]
        %v5739 = vld [vmem:[%s9 + $0x10] sm:$0xff]
        %v5740 = vld [vmem:[%s9 + $0x18] sm:$0xff]
        %s5741 = scalar_lea.vmem %s9, 32
        %v5742 = vld [vmem:[%s5741] sm:$0xff]
        %v5743 = vld [vmem:[%s5741 + $0x8] sm:$0xff]
        %v5744 = vld [vmem:[%s5741 + $0x10] sm:$0xff]
        %v5745 = vld [vmem:[%s5741 + $0x18] sm:$0xff]
        %v5747 = vrot.slane %v5736, 1
        %v5748 = vsel %vm5362, %v5747, 0
        %5750 = vmatpush.msra.mxu0 0.0
        %5751 = vmatpush.msra.mxu0 0.0
        %5752 = vmatpush.msra.mxu0 0.0
        %5753 = vmatpush.msra.mxu0 0.0
        %5754 = vmatpush.msra.mxu0 0.0
        %5755 = vmatpush.msra.mxu0 0.0
        %5756 = vmatpush.msra.mxu0 0.0
        %5757 = vmatpush.msra.mxu0 0.0
        %5758 = vmatpush.msra.mxu0 0.0
        %5759 = vmatpush.msra.mxu0 0.0
        %5760 = vmatpush.msra.mxu0 0.0
        %5761 = vmatpush.msra.mxu0 0.0
        %5762 = vmatpush.msra.mxu0 %v5745
        %5763 = vmatpush.msra.mxu0 %v5744
        %5764 = vmatpush.msra.mxu0 %v5743
        %5765 = vmatpush.msra.mxu0 %v5742
        %5766 = vmatmul.f32.gmra.mxu0 %v5748
        %v5767 = vpop.f32.mrf.mxu0
        %v5768 = vadd.f32 0.0, %v5767
        %5769 = vdwg.mxu0
        %v5770 = vsel %vm5362, %v5736, 0
        %5772 = vmatpush.msra.mxu0 0.0
        %5773 = vmatpush.msra.mxu0 0.0
        %5774 = vmatpush.msra.mxu0 0.0
        %5775 = vmatpush.msra.mxu0 0.0
        %5776 = vmatpush.msra.mxu0 0.0
        %5777 = vmatpush.msra.mxu0 0.0
        %5778 = vmatpush.msra.mxu0 0.0
        %5779 = vmatpush.msra.mxu0 0.0
        %5780 = vmatpush.msra.mxu0 0.0
        %5781 = vmatpush.msra.mxu0 0.0
        %5782 = vmatpush.msra.mxu0 0.0
        %5783 = vmatpush.msra.mxu0 0.0
        %5784 = vmatpush.msra.mxu0 %v5740
        %5785 = vmatpush.msra.mxu0 %v5739
        %5786 = vmatpush.msra.mxu0 %v5738
        %5787 = vmatpush.msra.mxu0 %v5737
        %5788 = vmatmul.f32.gmra.mxu0 %v5770
        %v5789 = vpop.f32.mrf.mxu0
        %v5790 = vadd.f32 %v5768, %v5789
        %5791 = vdwg.mxu0
        %s5792 = scalar_lea.vmem %s9, 64
        %v5793 = vld [vmem:[%s5792] sm:$0xff]
        %v5794 = vld [vmem:[%s5792 + $0x8] sm:$0xff]
        %v5795 = vld [vmem:[%s5792 + $0x10] sm:$0xff]
        %v5796 = vld [vmem:[%s5792 + $0x18] sm:$0xff]
        %v5797 = vrot.slane %v5736, 2
        %v5798 = vsel %vm5362, %v5797, 0
        %5800 = vmatpush.msra.mxu0 0.0
        %5801 = vmatpush.msra.mxu0 0.0
        %5802 = vmatpush.msra.mxu0 0.0
        %5803 = vmatpush.msra.mxu0 0.0
        %5804 = vmatpush.msra.mxu0 0.0
        %5805 = vmatpush.msra.mxu0 0.0
        %5806 = vmatpush.msra.mxu0 0.0
        %5807 = vmatpush.msra.mxu0 0.0
        %5808 = vmatpush.msra.mxu0 0.0
        %5809 = vmatpush.msra.mxu0 0.0
        %5810 = vmatpush.msra.mxu0 0.0
        %5811 = vmatpush.msra.mxu0 0.0
        %5812 = vmatpush.msra.mxu0 %v5796
        %5813 = vmatpush.msra.mxu0 %v5795
        %5814 = vmatpush.msra.mxu0 %v5794
        %5815 = vmatpush.msra.mxu0 %v5793
        %5816 = vmatmul.f32.gmra.mxu0 %v5798
        %v5817 = vpop.f32.mrf.mxu0
        %v5818 = vadd.f32 0.0, %v5817
        %5819 = vdwg.mxu0
        %v5820 = vadd.f32 %v5790, %v5818
        %s5821 = scalar_lea.vmem %s9, 96
        %v5822 = vld [vmem:[%s5821] sm:$0xff]
        %v5823 = vld [vmem:[%s5821 + $0x8] sm:$0xff]
        %v5824 = vld [vmem:[%s5821 + $0x10] sm:$0xff]
        %v5825 = vld [vmem:[%s5821 + $0x18] sm:$0xff]
        %v5826 = vrot.slane %v5736, 3
        %v5827 = vsel %vm5362, %v5826, 0
        %5829 = vmatpush.msra.mxu0 0.0
        %5830 = vmatpush.msra.mxu0 0.0
        %5831 = vmatpush.msra.mxu0 0.0
        %5832 = vmatpush.msra.mxu0 0.0
        %5833 = vmatpush.msra.mxu0 0.0
        %5834 = vmatpush.msra.mxu0 0.0
        %5835 = vmatpush.msra.mxu0 0.0
        %5836 = vmatpush.msra.mxu0 0.0
        %5837 = vmatpush.msra.mxu0 0.0
        %5838 = vmatpush.msra.mxu0 0.0
        %5839 = vmatpush.msra.mxu0 0.0
        %5840 = vmatpush.msra.mxu0 0.0
        %5841 = vmatpush.msra.mxu0 %v5825
        %5842 = vmatpush.msra.mxu0 %v5824
        %5843 = vmatpush.msra.mxu0 %v5823
        %5844 = vmatpush.msra.mxu0 %v5822
        %5845 = vmatmul.f32.gmra.mxu0 %v5827
        %v5846 = vpop.f32.mrf.mxu0
        %v5847 = vadd.f32 0.0, %v5846
        %5848 = vdwg.mxu0
        %v5849 = vadd.f32 %v5820, %v5847
        %v5850 = vld [vmem:[%s10] sm:$0x1]
        %v5851 = vadd.f32 %v5849, %v5850
        %v5852 = vmax.f32 %v5851, 0.0
        %v5853 = vld [vmem:[#allocation12] sm:$0xff]
        %v5854 = vld [vmem:[#allocation12 + $0x8] sm:$0xff]
        %v5855 = vld [vmem:[#allocation12 + $0x10] sm:$0xff]
        %v5856 = vld [vmem:[#allocation12 + $0x18] sm:$0xff]
        %v5857 = vld [vmem:[#allocation12 + $0x20] sm:$0xff]
        %v5858 = vld [vmem:[#allocation12 + $0x28] sm:$0xff]
        %v5859 = vld [vmem:[#allocation12 + $0x30] sm:$0xff]
        %v5860 = vld [vmem:[#allocation12 + $0x38] sm:$0xff]
        %v5861 = vld [vmem:[#allocation12 + $0x40] sm:$0xff]
        %v5862 = vld [vmem:[#allocation12 + $0x48] sm:$0xff]
        %v5863 = vld [vmem:[#allocation12 + $0x50] sm:$0xff]
        %v5864 = vld [vmem:[#allocation12 + $0x58] sm:$0xff]
        %v5865 = vld [vmem:[#allocation12 + $0x60] sm:$0xff]
        %v5866 = vld [vmem:[#allocation12 + $0x68] sm:$0xff]
        %v5867 = vld [vmem:[#allocation12 + $0x70] sm:$0xff]
        %v5868 = vld [vmem:[#allocation12 + $0x78] sm:$0xff]
        %v5869 = vld [vmem:[%s12] sm:$0x1]
        %5870 = vmatpush.msra.mxu0 %v5868
        %5871 = vmatpush.msra.mxu0 %v5867
        %5872 = vmatpush.msra.mxu0 %v5866
        %5873 = vmatpush.msra.mxu0 %v5865
        %5874 = vmatpush.msra.mxu0 %v5864
        %5875 = vmatpush.msra.mxu0 %v5863
        %5876 = vmatpush.msra.mxu0 %v5862
        %5877 = vmatpush.msra.mxu0 %v5861
        %5878 = vmatpush.msra.mxu0 %v5860
        %5879 = vmatpush.msra.mxu0 %v5859
        %5880 = vmatpush.msra.mxu0 %v5858
        %5881 = vmatpush.msra.mxu0 %v5857
        %5882 = vmatpush.msra.mxu0 %v5856
        %5883 = vmatpush.msra.mxu0 %v5855
        %5884 = vmatpush.msra.mxu0 %v5854
        %5885 = vmatpush.msra.mxu0 %v5853
        %5886 = vmatmul.f32.gmra.mxu0 %v5852
        %v5887 = vpop.f32.mrf.mxu0
        %v5888 = vadd.f32 %v5869, %v5887
        %5889 = vdwg.mxu0
        %v5890 = vmax.f32 %v5888, 0.0
        %5891 = vst [vmem:[%s466] sm:$0x1] %v5890
        %s5892 = sand.u32 %s315, 1
        %s5893 = scalar_lea.sflag [#allocation11], %s5892
        %s5894 = sand.u32 %s315, 1
        %s5895 = scalar_lea.vmem [#allocation14], %s5894
        // Predicated region
        $region81: #{tpu_custom_call.1} parent=71 // pred_check
          %p5896 = pneg %p325
        $region82: #{tpu_custom_call.1} parent=71 // pred_check_branch
          %5898 = sbr.rel (%p5896) target = $region84
        $region83: #{tpu_custom_call.1} parent=71 // pred_region
          %5900 = vsyncadd %s5893, 0
          %s5901 = scalar_lea.hbm %s13, %s29
          %s5903 = sshll.u32 %s5895, 4
          %s5904 = int_to_ptr.vmem [resolvable:$true] %s5903
          %s5905 = sshll.u32 %s5901, 4
          %s5906 = int_to_ptr.hbm [resolvable:$true] %s5905
          %5908 = dma.vmem_to_hbm [thread:$0]  %s5904, 16, %s5906, %s5893
        $region84: #{tpu_custom_call.1} parent=71 // pred_fallthru
          _
      $region72: #{tpu_custom_call.1} parent=5 // pred_fallthru
        _
      %p5909 = scmp.le.s32.totalorder 2, %s24
      // Predicated region
      $region85: #{tpu_custom_call.1} parent=5 // pred_check
        %p5910 = pneg %p5909
      $region86: #{tpu_custom_call.1} parent=5 // pred_check_branch
        %5912 = sbr.rel (%p5910) target = $region88
      $region87: #{tpu_custom_call.1} parent=5 // pred_region
        %s5913 = ssub.s32 %s24, 2
        // Predicated region
        $region89: #{tpu_custom_call.1} parent=87 // pred_check
          %p5914 = pneg %p331
        $region90: #{tpu_custom_call.1} parent=87 // pred_check_branch
          %5916 = sbr.rel (%p5914) target = $region92
        $region91: #{tpu_custom_call.1} parent=87 // pred_region
          %s5917 = sand.u32 %s316, 1
          %s5918 = scalar_lea.sflag [#allocation11], %s5917
          %s5919 = sand.u32 %s316, 1
          %s5920 = scalar_lea.vmem [#allocation14], %s5919
          %5922 = dma.done %s5918, 16
        $region92: #{tpu_custom_call.1} parent=87 // pred_fallthru
          _
      $region88: #{tpu_custom_call.1} parent=5 // pred_fallthru
        _
    $region6: #{tpu_custom_call.1} parent=1 // loop_footer
      %s28 = sadd.s32 1, %s24
    $region7: #{tpu_custom_call.1} parent=1 // loop_footer_branch
      %23 = sbr.rel target = $region3
    $region8: #{tpu_custom_call.1} parent=1 // loop_exit
      _
    %5923 = vsyncpa [#allocation10], 1
    %s5924 = scalar_lea.sflag [#allocation10], 1
    %5925 = vsyncpa %s5924, 1
    %5926 = vsyncpa [#allocation13], 1
    %5927 = vsyncpa [#allocation11], 1
    %s5928 = scalar_lea.sflag [#allocation11], 1
    %5929 = vsyncpa %s5928, 1

</llo_original>
